<compile_context>
chip_gen: v6e
topology: v6e:2x2x1
jax: 0.10.0
libtpu: 0.0.40
codegen_flags: <defaults>
</compile_context>

<pallas_src>
import functools

import jax
import jax.numpy as jnp
import numpy as np
from jax.experimental import pallas as pl
from jax.experimental.pallas import tpu as pltpu

_VMEM = functools.partial(pl.BlockSpec, memory_space=pltpu.MemorySpace.VMEM)
_EPS = 1e-5


# ------------------------------ fused kernel --------------------------------
def _bn_relu(x, gamma, beta, eps):
    """Training-mode BatchNorm (biased batch stats over rows) + ReLU, f32 math.

    Two-pass variance (mean of centered squares) to avoid cancellation drift.
    """
    inv_m = 1.0 / x.shape[0]
    mean = jnp.sum(x, axis=0, keepdims=True) * inv_m
    ctr = x - mean
    var = jnp.sum(ctr * ctr, axis=0, keepdims=True) * inv_m
    return jnp.maximum(ctr * jax.lax.rsqrt(var + eps) * gamma + beta, 0.0)


def _residual_kernel(x_ref,
                     bn1g_ref, bn1b_ref, w1_ref, b1_ref,
                     bn2g_ref, bn2b_ref, w2_ref, b2_ref,
                     bn3g_ref, bn3b_ref, w3_ref, b3_ref,
                     o_ref, pad_ref,
                     *, N, H, W, cin, mid, cout, has_skip, eps):
    f32, bf16 = jnp.float32, jnp.bfloat16
    M = N * H * W
    W_pad = pad_ref.shape[2]

    x = x_ref[...].astype(f32).reshape(M, cin)

    # --- BN1 + ReLU + conv1x1 (cin -> mid) -----------------------------------
    a1 = _bn_relu(x, bn1g_ref[...], bn1b_ref[...], eps).astype(bf16)
    y1 = jnp.dot(a1, w1_ref[...], preferred_element_type=f32) + b1_ref[...]

    # --- BN2 + ReLU + conv3x3 (mid -> mid) via bf16 halo + single im2col dot --
    a2 = _bn_relu(y1, bn2g_ref[...], bn2b_ref[...], eps).astype(bf16)
    # Zero only the 1-pixel border of the halo scratch (not the whole buffer).
    zrow = jnp.zeros((N, 1, W_pad, mid), bf16)
    zcol = jnp.zeros((N, H, 1, mid), bf16)
    pad_ref[:, 0:1, :, :] = zrow
    pad_ref[:, H + 1:H + 2, :, :] = zrow
    pad_ref[:, 1:H + 1, 0:1, :] = zcol
    pad_ref[:, 1:H + 1, W + 1:W + 2, :] = zcol
    pad_ref[:, 1:H + 1, 1:W + 1, :] = a2.reshape(N, H, W, mid)   # interior

    # im2col: 9 shifted taps concatenated along channels -> one K=9*mid matmul.
    taps = [pad_ref[:, kh:kh + H, kw:kw + W, :].reshape(M, mid)
            for kh in range(3) for kw in range(3)]
    col = jnp.concatenate(taps, axis=-1)                          # (M, 9*mid) bf16
    y2 = jnp.dot(col, w2_ref[...], preferred_element_type=f32) + b2_ref[...]

    # --- BN3 + ReLU + conv1x1 (mid -> cout), fused with the skip path --------
    a3 = _bn_relu(y2, bn3g_ref[...], bn3b_ref[...], eps).astype(bf16)
    if has_skip:
        # skipConv fused: w3_ref = [w3; skip_w], b3_ref = b3 + skip_b (wrapper).
        a3 = jnp.concatenate([a3, x.astype(bf16)], axis=-1)       # (M, mid+cin)
        out = jnp.dot(a3, w3_ref[...], preferred_element_type=f32) + b3_ref[...]
    else:                                                         # identity skip
        out = jnp.dot(a3, w3_ref[...], preferred_element_type=f32) + b3_ref[...] + x

    o_ref[...] = out.reshape(N, H, W, cout).astype(o_ref.dtype)


# -------------------------------- wrappers -----------------------------------
def residual_forward_nhwc(params, x_nhwc):
    N, H, W, cin = x_nhwc.shape
    mid = params['w1'].shape[1]
    cout = params['w3'].shape[1]
    has_skip = 'skip_w' in params
    bf16 = jnp.bfloat16
    W_pad = 8 * ((W + 2 + 7) // 8)        # sublane-align the halo scratch rows

    w2_flat = params['w2'].reshape(9 * mid, mid).astype(bf16)     # (9*mid, mid)
    if has_skip:                                                  # fuse conv3 + skipConv
        w3 = jnp.concatenate([params['w3'], params['skip_w']], axis=0).astype(bf16)
        b3 = (params['b3'] + params['skip_b']).reshape(1, cout)
    else:
        w3 = params['w3'].astype(bf16)
        b3 = params['b3'].reshape(1, cout)

    args = [
        x_nhwc,
        params['bn1_g'].reshape(1, cin), params['bn1_b'].reshape(1, cin),
        params['w1'].astype(bf16), params['b1'].reshape(1, mid),
        params['bn2_g'].reshape(1, mid), params['bn2_b'].reshape(1, mid),
        w2_flat, params['b2'].reshape(1, mid),
        params['bn3_g'].reshape(1, mid), params['bn3_b'].reshape(1, mid),
        w3, b3,
    ]

    kern = functools.partial(_residual_kernel, N=N, H=H, W=W, cin=cin, mid=mid,
                             cout=cout, has_skip=has_skip, eps=_EPS)
    return pl.pallas_call(
        kern,
        out_shape=jax.ShapeDtypeStruct((N, H, W, cout), x_nhwc.dtype),
        in_specs=[_VMEM() for _ in args],
        out_specs=_VMEM(),
        scratch_shapes=[pltpu.VMEM((N, H + 2, W_pad, mid), jnp.bfloat16)],
    )(*args)


def residual_forward(params, x_nchw):
    """Public wrapper: NCHW in / NCHW out, like the PyTorch module."""
    x = jnp.transpose(x_nchw, (0, 2, 3, 1))      # NCHW -> NHWC
    y = residual_forward_nhwc(params, x)
    return jnp.transpose(y, (0, 3, 1, 2))        # NHWC -> NCHW


# ---------------------------- deterministic init ------------------------------
def _conv_params(key, fan_in, fan_out):
    kw, kb = jax.random.split(key)
    w = jax.random.normal(kw, (fan_in, fan_out), jnp.float32) / np.sqrt(fan_in)
    b = jax.random.normal(kb, (fan_out,), jnp.float32) * 0.01
    return w, b


def init_residual_params(key, ins, outs):
    mid = outs // 2
    k1, k2, k3, k4 = jax.random.split(key, 4)
    w1, b1 = _conv_params(k1, ins, mid)                 # 1x1: ins -> outs/2
    w2, b2 = _conv_params(k2, 9 * mid, mid)             # 3x3: outs/2 -> outs/2
    w2 = w2.reshape(9, mid, mid)                        # (kh*3+kw, cin, cout)
    w3, b3 = _conv_params(k3, mid, outs)                # 1x1: outs/2 -> outs
    p = dict(
        bn1_g=jnp.ones((ins,), jnp.float32), bn1_b=jnp.zeros((ins,), jnp.float32),
        w1=w1, b1=b1,
        bn2_g=jnp.ones((mid,), jnp.float32), bn2_b=jnp.zeros((mid,), jnp.float32),
        w2=w2, b2=b2,
        bn3_g=jnp.ones((mid,), jnp.float32), bn3_b=jnp.zeros((mid,), jnp.float32),
        w3=w3, b3=b3,
    )
    if ins != outs:
        sw, sb = _conv_params(k4, ins, outs)            # skipConv 1x1
        p['skip_w'] = sw
        p['skip_b'] = sb
    return p


# ------------------------------ plain-JAX reference ---------------------------
def residual_reference(params, x_nchw):
    """Independent reference (lax.conv); mirrors bf16 rounding of MXU operands."""
    bf = lambda a: a.astype(jnp.bfloat16).astype(jnp.float32)
    has_skip = 'skip_w' in params

    def bn_relu(t, g, b):
        mean = jnp.mean(t, axis=(0, 1, 2), keepdims=True)
        var = jnp.mean(jnp.square(t - mean), axis=(0, 1, 2), keepdims=True)
        return jnp.maximum((t - mean) * jax.lax.rsqrt(var + _EPS) * g + b, 0.0)

    x = jnp.transpose(x_nchw, (0, 2, 3, 1)).astype(jnp.float32)
    a1 = bn_relu(x, params['bn1_g'], params['bn1_b'])
    y1 = jnp.einsum('nhwc,co->nhwo', bf(a1), bf(params['w1'])) + params['b1']
    a2 = bn_relu(y1, params['bn2_g'], params['bn2_b'])
    w_hwio = params['w2'].reshape(3, 3, params['w2'].shape[1], params['w2'].shape[2])
    y2 = jax.lax.conv_general_dilated(
        bf(a2), bf(w_hwio), window_strides=(1, 1), padding=((1, 1), (1, 1)),
        dimension_numbers=('NHWC', 'HWIO', 'NHWC')) + params['b2']
    a3 = bn_relu(y2, params['bn3_g'], params['bn3_b'])
    out = jnp.einsum('nhwc,co->nhwo', bf(a3), bf(params['w3'])) + params['b3']
    if has_skip:
        out = out + jnp.einsum('nhwc,co->nhwo', bf(x), bf(params['skip_w'])) \
                  + params['skip_b']
    else:
        out = out + x
    return jnp.transpose(out, (0, 3, 1, 2))


# ----------------------------------- main --------------------------------------
if __name__ == "__main__":
    key = jax.random.PRNGKey(0)
    kx, kp1, kp2 = jax.random.split(key, 3)

    N, Cin, H, W = 2, 64, 16, 16
    Cout = 128
    x = jax.random.normal(kx, (N, Cin, H, W), jnp.float32)   # NCHW like PyTorch

    fwd = jax.jit(residual_forward)

    # Case 1: ins != outs  -> fused conv3 + skipConv path (Residual(64, 128))
    p1 = init_residual_params(kp1, Cin, Cout)
    out1 = jax.block_until_ready(fwd(p1, x))
    assert out1.shape == (N, Cout, H, W), out1.shape
    assert out1.dtype == jnp.float32
    ref1 = residual_reference(p1, x)
    np.testing.assert_allclose(np.asarray(out1), np.asarray(ref1),
                               rtol=5e-2, atol=5e-2)

    # Case 2: ins == outs -> identity skip (Residual(64, 64))
    p2 = init_residual_params(kp2, Cin, Cin)
    out2 = jax.block_until_ready(fwd(p2, x))
    assert out2.shape == (N, Cin, H, W), out2.shape
    ref2 = residual_reference(p2, x)
    np.testing.assert_allclose(np.asarray(out2), np.asarray(ref2),
                               rtol=5e-2, atol=5e-2)

    assert bool(jnp.all(jnp.isfinite(out1))) and bool(jnp.all(jnp.isfinite(out2)))
    print("KERNEL_OK")
</pallas_src>

<mosaic_0001>
module attributes {stable_mosaic.version = 11 : i64} {
  func.func @_residual_kernel(%arg0: memref<2x16x16x64xf32, #tpu.memory_space<vmem>>, %arg1: memref<1x64xf32, #tpu.memory_space<vmem>>, %arg2: memref<1x64xf32, #tpu.memory_space<vmem>>, %arg3: memref<64x64xbf16, #tpu.memory_space<vmem>>, %arg4: memref<1x64xf32, #tpu.memory_space<vmem>>, %arg5: memref<1x64xf32, #tpu.memory_space<vmem>>, %arg6: memref<1x64xf32, #tpu.memory_space<vmem>>, %arg7: memref<576x64xbf16, #tpu.memory_space<vmem>>, %arg8: memref<1x64xf32, #tpu.memory_space<vmem>>, %arg9: memref<1x64xf32, #tpu.memory_space<vmem>>, %arg10: memref<1x64xf32, #tpu.memory_space<vmem>>, %arg11: memref<128x128xbf16, #tpu.memory_space<vmem>>, %arg12: memref<1x128xf32, #tpu.memory_space<vmem>>, %arg13: memref<2x16x16x128xf32, #tpu.memory_space<vmem>>, %arg14: memref<2x18x24x64xbf16, #tpu.memory_space<vmem>>) attributes {dimension_semantics = [], scalar_prefetch = 0 : i64, scratch_operands = 1 : i64, tpu.core_type = #tpu.core_type<tc>} {
    %c0 = arith.constant 0 : index
    %c0_0 = arith.constant 0 : index
    %c0_1 = arith.constant 0 : index
    %c0_2 = arith.constant 0 : index
    %0 = vector.load %arg0[%c0, %c0_0, %c0_1, %c0_2] : memref<2x16x16x64xf32, #tpu.memory_space<vmem>>, vector<2x16x16x64xf32>
    %1 = vector.shape_cast %0 : vector<2x16x16x64xf32> to vector<512x64xf32>
    %c0_3 = arith.constant 0 : index
    %c0_4 = arith.constant 0 : index
    %2 = vector.load %arg1[%c0_3, %c0_4] : memref<1x64xf32, #tpu.memory_space<vmem>>, vector<1x64xf32>
    %c0_5 = arith.constant 0 : index
    %c0_6 = arith.constant 0 : index
    %3 = vector.load %arg2[%c0_5, %c0_6] : memref<1x64xf32, #tpu.memory_space<vmem>>, vector<1x64xf32>
    %cst = arith.constant dense<0.000000e+00> : vector<64xf32>
    %4 = vector.multi_reduction <add>, %1, %cst [0] : vector<512x64xf32> to vector<64xf32>
    %5 = vector.shape_cast %4 : vector<64xf32> to vector<1x64xf32>
    %cst_7 = arith.constant 0.001953125 : f32
    %6 = vector.broadcast %cst_7 : f32 to vector<1x64xf32>
    %7 = arith.mulf %5, %6 : vector<1x64xf32>
    %8 = vector.broadcast %7 : vector<1x64xf32> to vector<512x64xf32>
    %9 = arith.subf %1, %8 : vector<512x64xf32>
    %10 = arith.mulf %9, %9 : vector<512x64xf32>
    %cst_8 = arith.constant dense<0.000000e+00> : vector<64xf32>
    %11 = vector.multi_reduction <add>, %10, %cst_8 [0] : vector<512x64xf32> to vector<64xf32>
    %12 = vector.shape_cast %11 : vector<64xf32> to vector<1x64xf32>
    %cst_9 = arith.constant 0.001953125 : f32
    %13 = vector.broadcast %cst_9 : f32 to vector<1x64xf32>
    %14 = arith.mulf %12, %13 : vector<1x64xf32>
    %cst_10 = arith.constant 9.99999974E-6 : f32
    %15 = vector.broadcast %cst_10 : f32 to vector<1x64xf32>
    %16 = arith.addf %14, %15 : vector<1x64xf32>
    %17 = math.rsqrt %16 : vector<1x64xf32>
    %18 = vector.broadcast %17 : vector<1x64xf32> to vector<512x64xf32>
    %19 = arith.mulf %9, %18 : vector<512x64xf32>
    %20 = vector.broadcast %2 : vector<1x64xf32> to vector<512x64xf32>
    %21 = arith.mulf %19, %20 : vector<512x64xf32>
    %22 = vector.broadcast %3 : vector<1x64xf32> to vector<512x64xf32>
    %23 = arith.addf %21, %22 : vector<512x64xf32>
    %cst_11 = arith.constant 0.000000e+00 : f32
    %24 = vector.broadcast %cst_11 : f32 to vector<512x64xf32>
    %25 = arith.maximumf %23, %24 : vector<512x64xf32>
    %26 = arith.truncf %25 : vector<512x64xf32> to vector<512x64xbf16>
    %c0_12 = arith.constant 0 : index
    %c0_13 = arith.constant 0 : index
    %27 = vector.load %arg3[%c0_12, %c0_13] : memref<64x64xbf16, #tpu.memory_space<vmem>>, vector<64x64xbf16>
    %cst_14 = arith.constant dense<0.000000e+00> : vector<512x64xf32>
    %28 = tpu.matmul %26, %27, %cst_14 {dimension_numbers = #tpu.dot_dimension_numbers<[1], [0], [0], [1], [0, 0, 1, 1], [], []>} : vector<512x64xbf16>, vector<64x64xbf16>, vector<512x64xf32> -> vector<512x64xf32>
    %c0_15 = arith.constant 0 : index
    %c0_16 = arith.constant 0 : index
    %29 = vector.load %arg4[%c0_15, %c0_16] : memref<1x64xf32, #tpu.memory_space<vmem>>, vector<1x64xf32>
    %30 = vector.broadcast %29 : vector<1x64xf32> to vector<512x64xf32>
    %31 = arith.addf %28, %30 : vector<512x64xf32>
    %c0_17 = arith.constant 0 : index
    %c0_18 = arith.constant 0 : index
    %32 = vector.load %arg5[%c0_17, %c0_18] : memref<1x64xf32, #tpu.memory_space<vmem>>, vector<1x64xf32>
    %c0_19 = arith.constant 0 : index
    %c0_20 = arith.constant 0 : index
    %33 = vector.load %arg6[%c0_19, %c0_20] : memref<1x64xf32, #tpu.memory_space<vmem>>, vector<1x64xf32>
    %cst_21 = arith.constant dense<0.000000e+00> : vector<64xf32>
    %34 = vector.multi_reduction <add>, %31, %cst_21 [0] : vector<512x64xf32> to vector<64xf32>
    %35 = vector.shape_cast %34 : vector<64xf32> to vector<1x64xf32>
    %cst_22 = arith.constant 0.001953125 : f32
    %36 = vector.broadcast %cst_22 : f32 to vector<1x64xf32>
    %37 = arith.mulf %35, %36 : vector<1x64xf32>
    %38 = vector.broadcast %37 : vector<1x64xf32> to vector<512x64xf32>
    %39 = arith.subf %31, %38 : vector<512x64xf32>
    %40 = arith.mulf %39, %39 : vector<512x64xf32>
    %cst_23 = arith.constant dense<0.000000e+00> : vector<64xf32>
    %41 = vector.multi_reduction <add>, %40, %cst_23 [0] : vector<512x64xf32> to vector<64xf32>
    %42 = vector.shape_cast %41 : vector<64xf32> to vector<1x64xf32>
    %cst_24 = arith.constant 0.001953125 : f32
    %43 = vector.broadcast %cst_24 : f32 to vector<1x64xf32>
    %44 = arith.mulf %42, %43 : vector<1x64xf32>
    %cst_25 = arith.constant 9.99999974E-6 : f32
    %45 = vector.broadcast %cst_25 : f32 to vector<1x64xf32>
    %46 = arith.addf %44, %45 : vector<1x64xf32>
    %47 = math.rsqrt %46 : vector<1x64xf32>
    %48 = vector.broadcast %47 : vector<1x64xf32> to vector<512x64xf32>
    %49 = arith.mulf %39, %48 : vector<512x64xf32>
    %50 = vector.broadcast %32 : vector<1x64xf32> to vector<512x64xf32>
    %51 = arith.mulf %49, %50 : vector<512x64xf32>
    %52 = vector.broadcast %33 : vector<1x64xf32> to vector<512x64xf32>
    %53 = arith.addf %51, %52 : vector<512x64xf32>
    %cst_26 = arith.constant 0.000000e+00 : f32
    %54 = vector.broadcast %cst_26 : f32 to vector<512x64xf32>
    %55 = arith.maximumf %53, %54 : vector<512x64xf32>
    %56 = arith.truncf %55 : vector<512x64xf32> to vector<512x64xbf16>
    %cst_27 = arith.constant 0.000000e+00 : bf16
    %57 = vector.broadcast %cst_27 : bf16 to vector<2x1x24x64xbf16>
    %cst_28 = arith.constant 0.000000e+00 : bf16
    %58 = vector.broadcast %cst_28 : bf16 to vector<2x16x1x64xbf16>
    %c0_29 = arith.constant 0 : index
    %c0_30 = arith.constant 0 : index
    %c0_31 = arith.constant 0 : index
    %c0_32 = arith.constant 0 : index
    %59 = vector.load %arg14[%c0_29, %c0_30, %c0_31, %c0_32] : memref<2x18x24x64xbf16, #tpu.memory_space<vmem>>, vector<2x1x24x64xbf16>
    tpu.vector_store %arg14[%c0_29, %c0_30, %c0_31, %c0_32], %57 {strides = array<i32>} : memref<2x18x24x64xbf16, #tpu.memory_space<vmem>>, vector<2x1x24x64xbf16>,
    %c0_33 = arith.constant 0 : index
    %c17 = arith.constant 17 : index
    %c0_34 = arith.constant 0 : index
    %c0_35 = arith.constant 0 : index
    %60 = vector.load %arg14[%c0_33, %c17, %c0_34, %c0_35] : memref<2x18x24x64xbf16, #tpu.memory_space<vmem>>, vector<2x1x24x64xbf16>
    tpu.vector_store %arg14[%c0_33, %c17, %c0_34, %c0_35], %57 {strides = array<i32>} : memref<2x18x24x64xbf16, #tpu.memory_space<vmem>>, vector<2x1x24x64xbf16>,
    %c0_36 = arith.constant 0 : index
    %c1 = arith.constant 1 : index
    %c0_37 = arith.constant 0 : index
    %c0_38 = arith.constant 0 : index
    %61 = vector.load %arg14[%c0_36, %c1, %c0_37, %c0_38] : memref<2x18x24x64xbf16, #tpu.memory_space<vmem>>, vector<2x16x1x64xbf16>
    tpu.vector_store %arg14[%c0_36, %c1, %c0_37, %c0_38], %58 {strides = array<i32>} : memref<2x18x24x64xbf16, #tpu.memory_space<vmem>>, vector<2x16x1x64xbf16>,
    %c0_39 = arith.constant 0 : index
    %c1_40 = arith.constant 1 : index
    %c17_41 = arith.constant 17 : index
    %c0_42 = arith.constant 0 : index
    %62 = vector.load %arg14[%c0_39, %c1_40, %c17_41, %c0_42] : memref<2x18x24x64xbf16, #tpu.memory_space<vmem>>, vector<2x16x1x64xbf16>
    tpu.vector_store %arg14[%c0_39, %c1_40, %c17_41, %c0_42], %58 {strides = array<i32>} : memref<2x18x24x64xbf16, #tpu.memory_space<vmem>>, vector<2x16x1x64xbf16>,
    %63 = vector.shape_cast %56 : vector<512x64xbf16> to vector<2x16x16x64xbf16>
    %c0_43 = arith.constant 0 : index
    %c1_44 = arith.constant 1 : index
    %c1_45 = arith.constant 1 : index
    %c0_46 = arith.constant 0 : index
    %64 = vector.load %arg14[%c0_43, %c1_44, %c1_45, %c0_46] : memref<2x18x24x64xbf16, #tpu.memory_space<vmem>>, vector<2x16x16x64xbf16>
    tpu.vector_store %arg14[%c0_43, %c1_44, %c1_45, %c0_46], %63 {strides = array<i32>} : memref<2x18x24x64xbf16, #tpu.memory_space<vmem>>, vector<2x16x16x64xbf16>,
    %c0_47 = arith.constant 0 : index
    %c0_48 = arith.constant 0 : index
    %c0_49 = arith.constant 0 : index
    %c0_50 = arith.constant 0 : index
    %65 = vector.load %arg14[%c0_47, %c0_48, %c0_49, %c0_50] : memref<2x18x24x64xbf16, #tpu.memory_space<vmem>>, vector<2x16x16x64xbf16>
    %66 = vector.shape_cast %65 : vector<2x16x16x64xbf16> to vector<512x64xbf16>
    %c0_51 = arith.constant 0 : index
    %c0_52 = arith.constant 0 : index
    %c1_53 = arith.constant 1 : index
    %c0_54 = arith.constant 0 : index
    %67 = vector.load %arg14[%c0_51, %c0_52, %c1_53, %c0_54] : memref<2x18x24x64xbf16, #tpu.memory_space<vmem>>, vector<2x16x16x64xbf16>
    %68 = vector.shape_cast %67 : vector<2x16x16x64xbf16> to vector<512x64xbf16>
    %c0_55 = arith.constant 0 : index
    %c0_56 = arith.constant 0 : index
    %c2 = arith.constant 2 : index
    %c0_57 = arith.constant 0 : index
    %69 = vector.load %arg14[%c0_55, %c0_56, %c2, %c0_57] : memref<2x18x24x64xbf16, #tpu.memory_space<vmem>>, vector<2x16x16x64xbf16>
    %70 = vector.shape_cast %69 : vector<2x16x16x64xbf16> to vector<512x64xbf16>
    %c0_58 = arith.constant 0 : index
    %c1_59 = arith.constant 1 : index
    %c0_60 = arith.constant 0 : index
    %c0_61 = arith.constant 0 : index
    %71 = vector.load %arg14[%c0_58, %c1_59, %c0_60, %c0_61] : memref<2x18x24x64xbf16, #tpu.memory_space<vmem>>, vector<2x16x16x64xbf16>
    %72 = vector.shape_cast %71 : vector<2x16x16x64xbf16> to vector<512x64xbf16>
    %c0_62 = arith.constant 0 : index
    %c1_63 = arith.constant 1 : index
    %c1_64 = arith.constant 1 : index
    %c0_65 = arith.constant 0 : index
    %73 = vector.load %arg14[%c0_62, %c1_63, %c1_64, %c0_65] : memref<2x18x24x64xbf16, #tpu.memory_space<vmem>>, vector<2x16x16x64xbf16>
    %74 = vector.shape_cast %73 : vector<2x16x16x64xbf16> to vector<512x64xbf16>
    %c0_66 = arith.constant 0 : index
    %c1_67 = arith.constant 1 : index
    %c2_68 = arith.constant 2 : index
    %c0_69 = arith.constant 0 : index
    %75 = vector.load %arg14[%c0_66, %c1_67, %c2_68, %c0_69] : memref<2x18x24x64xbf16, #tpu.memory_space<vmem>>, vector<2x16x16x64xbf16>
    %76 = vector.shape_cast %75 : vector<2x16x16x64xbf16> to vector<512x64xbf16>
    %c0_70 = arith.constant 0 : index
    %c2_71 = arith.constant 2 : index
    %c0_72 = arith.constant 0 : index
    %c0_73 = arith.constant 0 : index
    %77 = vector.load %arg14[%c0_70, %c2_71, %c0_72, %c0_73] : memref<2x18x24x64xbf16, #tpu.memory_space<vmem>>, vector<2x16x16x64xbf16>
    %78 = vector.shape_cast %77 : vector<2x16x16x64xbf16> to vector<512x64xbf16>
    %c0_74 = arith.constant 0 : index
    %c2_75 = arith.constant 2 : index
    %c1_76 = arith.constant 1 : index
    %c0_77 = arith.constant 0 : index
    %79 = vector.load %arg14[%c0_74, %c2_75, %c1_76, %c0_77] : memref<2x18x24x64xbf16, #tpu.memory_space<vmem>>, vector<2x16x16x64xbf16>
    %80 = vector.shape_cast %79 : vector<2x16x16x64xbf16> to vector<512x64xbf16>
    %c0_78 = arith.constant 0 : index
    %c2_79 = arith.constant 2 : index
    %c2_80 = arith.constant 2 : index
    %c0_81 = arith.constant 0 : index
    %81 = vector.load %arg14[%c0_78, %c2_79, %c2_80, %c0_81] : memref<2x18x24x64xbf16, #tpu.memory_space<vmem>>, vector<2x16x16x64xbf16>
    %82 = vector.shape_cast %81 : vector<2x16x16x64xbf16> to vector<512x64xbf16>
    %83 = tpu.concatenate %66, %68, %70, %72, %74, %76, %78, %80, %82 in 1 : vector<512x64xbf16>, vector<512x64xbf16>, vector<512x64xbf16>, vector<512x64xbf16>, vector<512x64xbf16>, vector<512x64xbf16>, vector<512x64xbf16>, vector<512x64xbf16>, vector<512x64xbf16> -> vector<512x576xbf16>
    %c0_82 = arith.constant 0 : index
    %c0_83 = arith.constant 0 : index
    %84 = vector.load %arg7[%c0_82, %c0_83] : memref<576x64xbf16, #tpu.memory_space<vmem>>, vector<576x64xbf16>
    %cst_84 = arith.constant dense<0.000000e+00> : vector<512x64xf32>
    %85 = tpu.matmul %83, %84, %cst_84 {dimension_numbers = #tpu.dot_dimension_numbers<[1], [0], [0], [1], [0, 0, 1, 1], [], []>} : vector<512x576xbf16>, vector<576x64xbf16>, vector<512x64xf32> -> vector<512x64xf32>
    %c0_85 = arith.constant 0 : index
    %c0_86 = arith.constant 0 : index
    %86 = vector.load %arg8[%c0_85, %c0_86] : memref<1x64xf32, #tpu.memory_space<vmem>>, vector<1x64xf32>
    %87 = vector.broadcast %86 : vector<1x64xf32> to vector<512x64xf32>
    %88 = arith.addf %85, %87 : vector<512x64xf32>
    %c0_87 = arith.constant 0 : index
    %c0_88 = arith.constant 0 : index
    %89 = vector.load %arg9[%c0_87, %c0_88] : memref<1x64xf32, #tpu.memory_space<vmem>>, vector<1x64xf32>
    %c0_89 = arith.constant 0 : index
    %c0_90 = arith.constant 0 : index
    %90 = vector.load %arg10[%c0_89, %c0_90] : memref<1x64xf32, #tpu.memory_space<vmem>>, vector<1x64xf32>
    %cst_91 = arith.constant dense<0.000000e+00> : vector<64xf32>
    %91 = vector.multi_reduction <add>, %88, %cst_91 [0] : vector<512x64xf32> to vector<64xf32>
    %92 = vector.shape_cast %91 : vector<64xf32> to vector<1x64xf32>
    %cst_92 = arith.constant 0.001953125 : f32
    %93 = vector.broadcast %cst_92 : f32 to vector<1x64xf32>
    %94 = arith.mulf %92, %93 : vector<1x64xf32>
    %95 = vector.broadcast %94 : vector<1x64xf32> to vector<512x64xf32>
    %96 = arith.subf %88, %95 : vector<512x64xf32>
    %97 = arith.mulf %96, %96 : vector<512x64xf32>
    %cst_93 = arith.constant dense<0.000000e+00> : vector<64xf32>
    %98 = vector.multi_reduction <add>, %97, %cst_93 [0] : vector<512x64xf32> to vector<64xf32>
    %99 = vector.shape_cast %98 : vector<64xf32> to vector<1x64xf32>
    %cst_94 = arith.constant 0.001953125 : f32
    %100 = vector.broadcast %cst_94 : f32 to vector<1x64xf32>
    %101 = arith.mulf %99, %100 : vector<1x64xf32>
    %cst_95 = arith.constant 9.99999974E-6 : f32
    %102 = vector.broadcast %cst_95 : f32 to vector<1x64xf32>
    %103 = arith.addf %101, %102 : vector<1x64xf32>
    %104 = math.rsqrt %103 : vector<1x64xf32>
    %105 = vector.broadcast %104 : vector<1x64xf32> to vector<512x64xf32>
    %106 = arith.mulf %96, %105 : vector<512x64xf32>
    %107 = vector.broadcast %89 : vector<1x64xf32> to vector<512x64xf32>
    %108 = arith.mulf %106, %107 : vector<512x64xf32>
    %109 = vector.broadcast %90 : vector<1x64xf32> to vector<512x64xf32>
    %110 = arith.addf %108, %109 : vector<512x64xf32>
    %cst_96 = arith.constant 0.000000e+00 : f32
    %111 = vector.broadcast %cst_96 : f32 to vector<512x64xf32>
    %112 = arith.maximumf %110, %111 : vector<512x64xf32>
    %113 = arith.truncf %112 : vector<512x64xf32> to vector<512x64xbf16>
    %114 = arith.truncf %1 : vector<512x64xf32> to vector<512x64xbf16>
    %115 = tpu.concatenate %113, %114 in 1 : vector<512x64xbf16>, vector<512x64xbf16> -> vector<512x128xbf16>
    %c0_97 = arith.constant 0 : index
    %c0_98 = arith.constant 0 : index
    %116 = vector.load %arg11[%c0_97, %c0_98] : memref<128x128xbf16, #tpu.memory_space<vmem>>, vector<128x128xbf16>
    %cst_99 = arith.constant dense<0.000000e+00> : vector<512x128xf32>
    %117 = tpu.matmul %115, %116, %cst_99 {dimension_numbers = #tpu.dot_dimension_numbers<[1], [0], [0], [1], [0, 0, 1, 1], [], []>} : vector<512x128xbf16>, vector<128x128xbf16>, vector<512x128xf32> -> vector<512x128xf32>
    %c0_100 = arith.constant 0 : index
    %c0_101 = arith.constant 0 : index
    %118 = vector.load %arg12[%c0_100, %c0_101] : memref<1x128xf32, #tpu.memory_space<vmem>>, vector<1x128xf32>
    %119 = vector.broadcast %118 : vector<1x128xf32> to vector<512x128xf32>
    %120 = arith.addf %117, %119 : vector<512x128xf32>
    %121 = vector.shape_cast %120 : vector<512x128xf32> to vector<2x16x16x128xf32>
    %c0_102 = arith.constant 0 : index
    %c0_103 = arith.constant 0 : index
    %c0_104 = arith.constant 0 : index
    %c0_105 = arith.constant 0 : index
    %122 = vector.load %arg13[%c0_102, %c0_103, %c0_104, %c0_105] : memref<2x16x16x128xf32, #tpu.memory_space<vmem>>, vector<2x16x16x128xf32>
    tpu.vector_store %arg13[%c0_102, %c0_103, %c0_104, %c0_105], %121 {strides = array<i32>} : memref<2x16x16x128xf32, #tpu.memory_space<vmem>>, vector<2x16x16x128xf32>,
    return
  }
}

</mosaic_0001>

<llo_original>
// kernel: residual_forward.1
$region0: #{residual_forward.1}
  #allocation0 [shape = 'u32[]', space=smem, size = 0x4, offset = 0x4, fixed_abs, tag = 'smem constant byte address 0x4 - core index']
  #allocation1 [shape = 'u32[144,128]{1,0:T(1,128)}', space=vmem, size = 0x12000, scoped, tag = 'internal scratch']
  #allocation2 [shape = 'bf16[2,18,24,64]{3,2,1,0:T(8,128)(2,1)}', space=vmem, size = 0x36000, scoped, tag = 'scratch operand']
  %s0 = inlined_call_operand.vmem [shape: f32[2,16,16,64], index: 0, kind: input, shape index: {}]
  %s1 = inlined_call_operand.vmem [shape: f32[1,64], index: 1, kind: input, shape index: {}]
  %s2 = inlined_call_operand.vmem [shape: f32[1,64], index: 2, kind: input, shape index: {}]
  %s3 = inlined_call_operand.vmem [shape: bf16[64,64], index: 3, kind: input, shape index: {}]
  %s4 = inlined_call_operand.vmem [shape: f32[1,64], index: 4, kind: input, shape index: {}]
  %s5 = inlined_call_operand.vmem [shape: f32[1,64], index: 5, kind: input, shape index: {}]
  %s6 = inlined_call_operand.vmem [shape: f32[1,64], index: 6, kind: input, shape index: {}]
  %s7 = inlined_call_operand.vmem [shape: bf16[576,64], index: 7, kind: input, shape index: {}]
  %s8 = inlined_call_operand.vmem [shape: f32[1,64], index: 8, kind: input, shape index: {}]
  %s9 = inlined_call_operand.vmem [shape: f32[1,64], index: 9, kind: input, shape index: {}]
  %s10 = inlined_call_operand.vmem [shape: f32[1,64], index: 10, kind: input, shape index: {}]
  %s11 = inlined_call_operand.vmem [shape: bf16[128,128], index: 11, kind: input, shape index: {}]
  %s12 = inlined_call_operand.vmem [shape: f32[1,128], index: 12, kind: input, shape index: {}]
  %s13 = inlined_call_operand.hbm [shape: f32[2,16,16,128], index: 13, kind: output, shape index: {}]
  %s14 = sld [smem:[#allocation0]]
  $region62: #{residual_forward.1} parent=0
    _
  %s16 = ssub.s32 1, %s14
  %s17 = scalar_select 0, %s16, %s14
  $region1: #{residual_forward.1} parent=0
    #allocation3 [shape = 'u8[262144]{0}', space=vmem, size = 0x40000, scoped, tag = 'output window, operand 0, single buffered']
    #allocation4 [shape = 's32[1]{0}', space=sflag, size = 0x4, scoped, tag = 'scoped memory for residual_forward.1']
    %18 = vsyncpa [#allocation4], 0
    // Predicated region
    $region2: #{residual_forward.1} parent=1 // pred_check
      _
    $region3: #{residual_forward.1} parent=1 // pred_check_branch
      %20 = sbr.rel (0) target = $region5
    $region4: #{residual_forward.1} parent=1 // pred_region
      _
    $region5: #{residual_forward.1} parent=1 // pred_fallthru
      _
    // Predicated region
    $region6: #{residual_forward.1} parent=1 // pred_check
      _
    $region7: #{residual_forward.1} parent=1 // pred_check_branch
      %22 = sbr.rel (0) target = $region9
    $region8: #{residual_forward.1} parent=1 // pred_region
      _
    $region9: #{residual_forward.1} parent=1 // pred_fallthru
      _
    // Predicated region
    $region10: #{residual_forward.1} parent=1 // pred_check
      _
    $region11: #{residual_forward.1} parent=1 // pred_check_branch
      %24 = sbr.rel (0) target = $region13
    $region12: #{residual_forward.1} parent=1 // pred_region
      _
    $region13: #{residual_forward.1} parent=1 // pred_fallthru
      _
    // Predicated region
    $region14: #{residual_forward.1} parent=1 // pred_check
      _
    $region15: #{residual_forward.1} parent=1 // pred_check_branch
      %26 = sbr.rel (0) target = $region17
    $region16: #{residual_forward.1} parent=1 // pred_region
      _
    $region17: #{residual_forward.1} parent=1 // pred_fallthru
      _
    // Predicated region
    $region18: #{residual_forward.1} parent=1 // pred_check
      _
    $region19: #{residual_forward.1} parent=1 // pred_check_branch
      %28 = sbr.rel (0) target = $region21
    $region20: #{residual_forward.1} parent=1 // pred_region
      _
    $region21: #{residual_forward.1} parent=1 // pred_fallthru
      _
    // Predicated region
    $region22: #{residual_forward.1} parent=1 // pred_check
      _
    $region23: #{residual_forward.1} parent=1 // pred_check_branch
      %30 = sbr.rel (0) target = $region25
    $region24: #{residual_forward.1} parent=1 // pred_region
      _
    $region25: #{residual_forward.1} parent=1 // pred_fallthru
      _
    // Predicated region
    $region26: #{residual_forward.1} parent=1 // pred_check
      _
    $region27: #{residual_forward.1} parent=1 // pred_check_branch
      %32 = sbr.rel (0) target = $region29
    $region28: #{residual_forward.1} parent=1 // pred_region
      _
    $region29: #{residual_forward.1} parent=1 // pred_fallthru
      _
    // Predicated region
    $region30: #{residual_forward.1} parent=1 // pred_check
      _
    $region31: #{residual_forward.1} parent=1 // pred_check_branch
      %34 = sbr.rel (0) target = $region33
    $region32: #{residual_forward.1} parent=1 // pred_region
      _
    $region33: #{residual_forward.1} parent=1 // pred_fallthru
      _
    // Predicated region
    $region34: #{residual_forward.1} parent=1 // pred_check
      _
    $region35: #{residual_forward.1} parent=1 // pred_check_branch
      %36 = sbr.rel (0) target = $region37
    $region36: #{residual_forward.1} parent=1 // pred_region
      _
    $region37: #{residual_forward.1} parent=1 // pred_fallthru
      _
    // Predicated region
    $region38: #{residual_forward.1} parent=1 // pred_check
      _
    $region39: #{residual_forward.1} parent=1 // pred_check_branch
      %38 = sbr.rel (0) target = $region41
    $region40: #{residual_forward.1} parent=1 // pred_region
      _
    $region41: #{residual_forward.1} parent=1 // pred_fallthru
      _
    // Predicated region
    $region42: #{residual_forward.1} parent=1 // pred_check
      _
    $region43: #{residual_forward.1} parent=1 // pred_check_branch
      %40 = sbr.rel (0) target = $region45
    $region44: #{residual_forward.1} parent=1 // pred_region
      _
    $region45: #{residual_forward.1} parent=1 // pred_fallthru
      _
    // Predicated region
    $region46: #{residual_forward.1} parent=1 // pred_check
      _
    $region47: #{residual_forward.1} parent=1 // pred_check_branch
      %42 = sbr.rel (0) target = $region49
    $region48: #{residual_forward.1} parent=1 // pred_region
      _
    $region49: #{residual_forward.1} parent=1 // pred_fallthru
      _
    // Predicated region
    $region50: #{residual_forward.1} parent=1 // pred_check
      _
    $region51: #{residual_forward.1} parent=1 // pred_check_branch
      %44 = sbr.rel (0) target = $region53
    $region52: #{residual_forward.1} parent=1 // pred_region
      _
    $region53: #{residual_forward.1} parent=1 // pred_fallthru
      _
    %v46 = vld [vmem:[%s0] sm:$0xff]
    %v47 = vld [vmem:[%s0 + $0x8] sm:$0xff]
    %v48 = vld [vmem:[%s0 + $0x10] sm:$0xff]
    %v49 = vld [vmem:[%s0 + $0x18] sm:$0xff]
    %v50 = vld [vmem:[%s0 + $0x20] sm:$0xff]
    %v51 = vld [vmem:[%s0 + $0x28] sm:$0xff]
    %v52 = vld [vmem:[%s0 + $0x30] sm:$0xff]
    %v53 = vld [vmem:[%s0 + $0x38] sm:$0xff]
    %v54 = vld [vmem:[%s0 + $0x40] sm:$0xff]
    %v55 = vld [vmem:[%s0 + $0x48] sm:$0xff]
    %v56 = vld [vmem:[%s0 + $0x50] sm:$0xff]
    %v57 = vld [vmem:[%s0 + $0x58] sm:$0xff]
    %v58 = vld [vmem:[%s0 + $0x60] sm:$0xff]
    %v59 = vld [vmem:[%s0 + $0x68] sm:$0xff]
    %v60 = vld [vmem:[%s0 + $0x70] sm:$0xff]
    %v61 = vld [vmem:[%s0 + $0x78] sm:$0xff]
    %v62 = vld [vmem:[%s0 + $0x80] sm:$0xff]
    %v63 = vld [vmem:[%s0 + $0x88] sm:$0xff]
    %v64 = vld [vmem:[%s0 + $0x90] sm:$0xff]
    %v65 = vld [vmem:[%s0 + $0x98] sm:$0xff]
    %v66 = vld [vmem:[%s0 + $0xa0] sm:$0xff]
    %v67 = vld [vmem:[%s0 + $0xa8] sm:$0xff]
    %v68 = vld [vmem:[%s0 + $0xb0] sm:$0xff]
    %v69 = vld [vmem:[%s0 + $0xb8] sm:$0xff]
    %v70 = vld [vmem:[%s0 + $0xc0] sm:$0xff]
    %v71 = vld [vmem:[%s0 + $0xc8] sm:$0xff]
    %v72 = vld [vmem:[%s0 + $0xd0] sm:$0xff]
    %v73 = vld [vmem:[%s0 + $0xd8] sm:$0xff]
    %v74 = vld [vmem:[%s0 + $0xe0] sm:$0xff]
    %v75 = vld [vmem:[%s0 + $0xe8] sm:$0xff]
    %v76 = vld [vmem:[%s0 + $0xf0] sm:$0xff]
    %v77 = vld [vmem:[%s0 + $0xf8] sm:$0xff]
    %v78 = vld [vmem:[%s0 + $0x100] sm:$0xff]
    %v79 = vld [vmem:[%s0 + $0x108] sm:$0xff]
    %v80 = vld [vmem:[%s0 + $0x110] sm:$0xff]
    %v81 = vld [vmem:[%s0 + $0x118] sm:$0xff]
    %v82 = vld [vmem:[%s0 + $0x120] sm:$0xff]
    %v83 = vld [vmem:[%s0 + $0x128] sm:$0xff]
    %v84 = vld [vmem:[%s0 + $0x130] sm:$0xff]
    %v85 = vld [vmem:[%s0 + $0x138] sm:$0xff]
    %v86 = vld [vmem:[%s0 + $0x140] sm:$0xff]
    %v87 = vld [vmem:[%s0 + $0x148] sm:$0xff]
    %v88 = vld [vmem:[%s0 + $0x150] sm:$0xff]
    %v89 = vld [vmem:[%s0 + $0x158] sm:$0xff]
    %v90 = vld [vmem:[%s0 + $0x160] sm:$0xff]
    %v91 = vld [vmem:[%s0 + $0x168] sm:$0xff]
    %v92 = vld [vmem:[%s0 + $0x170] sm:$0xff]
    %v93 = vld [vmem:[%s0 + $0x178] sm:$0xff]
    %v94 = vld [vmem:[%s0 + $0x180] sm:$0xff]
    %v95 = vld [vmem:[%s0 + $0x188] sm:$0xff]
    %v96 = vld [vmem:[%s0 + $0x190] sm:$0xff]
    %v97 = vld [vmem:[%s0 + $0x198] sm:$0xff]
    %v98 = vld [vmem:[%s0 + $0x1a0] sm:$0xff]
    %v99 = vld [vmem:[%s0 + $0x1a8] sm:$0xff]
    %v100 = vld [vmem:[%s0 + $0x1b0] sm:$0xff]
    %v101 = vld [vmem:[%s0 + $0x1b8] sm:$0xff]
    %v102 = vld [vmem:[%s0 + $0x1c0] sm:$0xff]
    %v103 = vld [vmem:[%s0 + $0x1c8] sm:$0xff]
    %v104 = vld [vmem:[%s0 + $0x1d0] sm:$0xff]
    %v105 = vld [vmem:[%s0 + $0x1d8] sm:$0xff]
    %v106 = vld [vmem:[%s0 + $0x1e0] sm:$0xff]
    %v107 = vld [vmem:[%s0 + $0x1e8] sm:$0xff]
    %v108 = vld [vmem:[%s0 + $0x1f0] sm:$0xff]
    %v109 = vld [vmem:[%s0 + $0x1f8] sm:$0xff]
    %v110 = vld [vmem:[%s1] sm:$0x1]
    %v111 = vld [vmem:[%s2] sm:$0x1]
    %vm112 = vcmask 523264
    %v113 = vsel %vm112, %v46, 0.0
    %v114 = vsel %vm112, %v47, 0.0
    %v115 = vadd.f32 %v113, %v114
    %v116 = vsel %vm112, %v48, 0.0
    %v117 = vadd.f32 %v115, %v116
    %v118 = vsel %vm112, %v49, 0.0
    %v119 = vadd.f32 %v117, %v118
    %v120 = vsel %vm112, %v50, 0.0
    %v121 = vadd.f32 %v119, %v120
    %v122 = vsel %vm112, %v51, 0.0
    %v123 = vadd.f32 %v121, %v122
    %v124 = vsel %vm112, %v52, 0.0
    %v125 = vadd.f32 %v123, %v124
    %v126 = vsel %vm112, %v53, 0.0
    %v127 = vadd.f32 %v125, %v126
    %v128 = vsel %vm112, %v54, 0.0
    %v129 = vadd.f32 %v127, %v128
    %v130 = vsel %vm112, %v55, 0.0
    %v131 = vadd.f32 %v129, %v130
    %v132 = vsel %vm112, %v56, 0.0
    %v133 = vadd.f32 %v131, %v132
    %v134 = vsel %vm112, %v57, 0.0
    %v135 = vadd.f32 %v133, %v134
    %v136 = vsel %vm112, %v58, 0.0
    %v137 = vadd.f32 %v135, %v136
    %v138 = vsel %vm112, %v59, 0.0
    %v139 = vadd.f32 %v137, %v138
    %v140 = vsel %vm112, %v60, 0.0
    %v141 = vadd.f32 %v139, %v140
    %v142 = vsel %vm112, %v61, 0.0
    %v143 = vadd.f32 %v141, %v142
    %v144 = vsel %vm112, %v62, 0.0
    %v145 = vadd.f32 %v143, %v144
    %v146 = vsel %vm112, %v63, 0.0
    %v147 = vadd.f32 %v145, %v146
    %v148 = vsel %vm112, %v64, 0.0
    %v149 = vadd.f32 %v147, %v148
    %v150 = vsel %vm112, %v65, 0.0
    %v151 = vadd.f32 %v149, %v150
    %v152 = vsel %vm112, %v66, 0.0
    %v153 = vadd.f32 %v151, %v152
    %v154 = vsel %vm112, %v67, 0.0
    %v155 = vadd.f32 %v153, %v154
    %v156 = vsel %vm112, %v68, 0.0
    %v157 = vadd.f32 %v155, %v156
    %v158 = vsel %vm112, %v69, 0.0
    %v159 = vadd.f32 %v157, %v158
    %v160 = vsel %vm112, %v70, 0.0
    %v161 = vadd.f32 %v159, %v160
    %v162 = vsel %vm112, %v71, 0.0
    %v163 = vadd.f32 %v161, %v162
    %v164 = vsel %vm112, %v72, 0.0
    %v165 = vadd.f32 %v163, %v164
    %v166 = vsel %vm112, %v73, 0.0
    %v167 = vadd.f32 %v165, %v166
    %v168 = vsel %vm112, %v74, 0.0
    %v169 = vadd.f32 %v167, %v168
    %v170 = vsel %vm112, %v75, 0.0
    %v171 = vadd.f32 %v169, %v170
    %v172 = vsel %vm112, %v76, 0.0
    %v173 = vadd.f32 %v171, %v172
    %v174 = vsel %vm112, %v77, 0.0
    %v175 = vadd.f32 %v173, %v174
    %v176 = vsel %vm112, %v78, 0.0
    %v177 = vadd.f32 %v175, %v176
    %v178 = vsel %vm112, %v79, 0.0
    %v179 = vadd.f32 %v177, %v178
    %v180 = vsel %vm112, %v80, 0.0
    %v181 = vadd.f32 %v179, %v180
    %v182 = vsel %vm112, %v81, 0.0
    %v183 = vadd.f32 %v181, %v182
    %v184 = vsel %vm112, %v82, 0.0
    %v185 = vadd.f32 %v183, %v184
    %v186 = vsel %vm112, %v83, 0.0
    %v187 = vadd.f32 %v185, %v186
    %v188 = vsel %vm112, %v84, 0.0
    %v189 = vadd.f32 %v187, %v188
    %v190 = vsel %vm112, %v85, 0.0
    %v191 = vadd.f32 %v189, %v190
    %v192 = vsel %vm112, %v86, 0.0
    %v193 = vadd.f32 %v191, %v192
    %v194 = vsel %vm112, %v87, 0.0
    %v195 = vadd.f32 %v193, %v194
    %v196 = vsel %vm112, %v88, 0.0
    %v197 = vadd.f32 %v195, %v196
    %v198 = vsel %vm112, %v89, 0.0
    %v199 = vadd.f32 %v197, %v198
    %v200 = vsel %vm112, %v90, 0.0
    %v201 = vadd.f32 %v199, %v200
    %v202 = vsel %vm112, %v91, 0.0
    %v203 = vadd.f32 %v201, %v202
    %v204 = vsel %vm112, %v92, 0.0
    %v205 = vadd.f32 %v203, %v204
    %v206 = vsel %vm112, %v93, 0.0
    %v207 = vadd.f32 %v205, %v206
    %v208 = vsel %vm112, %v94, 0.0
    %v209 = vadd.f32 %v207, %v208
    %v210 = vsel %vm112, %v95, 0.0
    %v211 = vadd.f32 %v209, %v210
    %v212 = vsel %vm112, %v96, 0.0
    %v213 = vadd.f32 %v211, %v212
    %v214 = vsel %vm112, %v97, 0.0
    %v215 = vadd.f32 %v213, %v214
    %v216 = vsel %vm112, %v98, 0.0
    %v217 = vadd.f32 %v215, %v216
    %v218 = vsel %vm112, %v99, 0.0
    %v219 = vadd.f32 %v217, %v218
    %v220 = vsel %vm112, %v100, 0.0
    %v221 = vadd.f32 %v219, %v220
    %v222 = vsel %vm112, %v101, 0.0
    %v223 = vadd.f32 %v221, %v222
    %v224 = vsel %vm112, %v102, 0.0
    %v225 = vadd.f32 %v223, %v224
    %v226 = vsel %vm112, %v103, 0.0
    %v227 = vadd.f32 %v225, %v226
    %v228 = vsel %vm112, %v104, 0.0
    %v229 = vadd.f32 %v227, %v228
    %v230 = vsel %vm112, %v105, 0.0
    %v231 = vadd.f32 %v229, %v230
    %v232 = vsel %vm112, %v106, 0.0
    %v233 = vadd.f32 %v231, %v232
    %v234 = vsel %vm112, %v107, 0.0
    %v235 = vadd.f32 %v233, %v234
    %v236 = vsel %vm112, %v108, 0.0
    %v237 = vadd.f32 %v235, %v236
    %v238 = vsel %vm112, %v109, 0.0
    %v239 = vadd.f32 %v237, %v238
    %v240 = vrot.slane %v239, 4
    %v241 = vadd.f32 %v239, %v240
    %v242 = vrot.slane %v241, 2
    %v243 = vadd.f32 %v241, %v242
    %v244 = vrot.slane %v243, 1
    %v245 = vadd.f32 %v243, %v244
    %v246 = vmul.f32 %v245, 0.001953125
    %v247 = vsub.f32 %v46, %v246
    %v248 = vsub.f32 %v47, %v246
    %v249 = vsub.f32 %v48, %v246
    %v250 = vsub.f32 %v49, %v246
    %v251 = vsub.f32 %v50, %v246
    %v252 = vsub.f32 %v51, %v246
    %v253 = vsub.f32 %v52, %v246
    %v254 = vsub.f32 %v53, %v246
    %v255 = vsub.f32 %v54, %v246
    %v256 = vsub.f32 %v55, %v246
    %v257 = vsub.f32 %v56, %v246
    %v258 = vsub.f32 %v57, %v246
    %v259 = vsub.f32 %v58, %v246
    %v260 = vsub.f32 %v59, %v246
    %v261 = vsub.f32 %v60, %v246
    %v262 = vsub.f32 %v61, %v246
    %v263 = vsub.f32 %v62, %v246
    %v264 = vsub.f32 %v63, %v246
    %v265 = vsub.f32 %v64, %v246
    %v266 = vsub.f32 %v65, %v246
    %v267 = vsub.f32 %v66, %v246
    %v268 = vsub.f32 %v67, %v246
    %v269 = vsub.f32 %v68, %v246
    %v270 = vsub.f32 %v69, %v246
    %v271 = vsub.f32 %v70, %v246
    %v272 = vsub.f32 %v71, %v246
    %v273 = vsub.f32 %v72, %v246
    %v274 = vsub.f32 %v73, %v246
    %v275 = vsub.f32 %v74, %v246
    %v276 = vsub.f32 %v75, %v246
    %v277 = vsub.f32 %v76, %v246
    %v278 = vsub.f32 %v77, %v246
    %v279 = vsub.f32 %v78, %v246
    %v280 = vsub.f32 %v79, %v246
    %v281 = vsub.f32 %v80, %v246
    %v282 = vsub.f32 %v81, %v246
    %v283 = vsub.f32 %v82, %v246
    %v284 = vsub.f32 %v83, %v246
    %v285 = vsub.f32 %v84, %v246
    %v286 = vsub.f32 %v85, %v246
    %v287 = vsub.f32 %v86, %v246
    %v288 = vsub.f32 %v87, %v246
    %v289 = vsub.f32 %v88, %v246
    %v290 = vsub.f32 %v89, %v246
    %v291 = vsub.f32 %v90, %v246
    %v292 = vsub.f32 %v91, %v246
    %v293 = vsub.f32 %v92, %v246
    %v294 = vsub.f32 %v93, %v246
    %v295 = vsub.f32 %v94, %v246
    %v296 = vsub.f32 %v95, %v246
    %v297 = vsub.f32 %v96, %v246
    %v298 = vsub.f32 %v97, %v246
    %v299 = vsub.f32 %v98, %v246
    %v300 = vsub.f32 %v99, %v246
    %v301 = vsub.f32 %v100, %v246
    %v302 = vsub.f32 %v101, %v246
    %v303 = vsub.f32 %v102, %v246
    %v304 = vsub.f32 %v103, %v246
    %v305 = vsub.f32 %v104, %v246
    %v306 = vsub.f32 %v105, %v246
    %v307 = vsub.f32 %v106, %v246
    %v308 = vsub.f32 %v107, %v246
    %v309 = vsub.f32 %v108, %v246
    %v310 = vsub.f32 %v109, %v246
    %v311 = vmul.f32 %v247, %v247
    %v312 = vmul.f32 %v248, %v248
    %v313 = vmul.f32 %v249, %v249
    %v314 = vmul.f32 %v250, %v250
    %v315 = vmul.f32 %v251, %v251
    %v316 = vmul.f32 %v252, %v252
    %v317 = vmul.f32 %v253, %v253
    %v318 = vmul.f32 %v254, %v254
    %v319 = vmul.f32 %v255, %v255
    %v320 = vmul.f32 %v256, %v256
    %v321 = vmul.f32 %v257, %v257
    %v322 = vmul.f32 %v258, %v258
    %v323 = vmul.f32 %v259, %v259
    %v324 = vmul.f32 %v260, %v260
    %v325 = vmul.f32 %v261, %v261
    %v326 = vmul.f32 %v262, %v262
    %v327 = vmul.f32 %v263, %v263
    %v328 = vmul.f32 %v264, %v264
    %v329 = vmul.f32 %v265, %v265
    %v330 = vmul.f32 %v266, %v266
    %v331 = vmul.f32 %v267, %v267
    %v332 = vmul.f32 %v268, %v268
    %v333 = vmul.f32 %v269, %v269
    %v334 = vmul.f32 %v270, %v270
    %v335 = vmul.f32 %v271, %v271
    %v336 = vmul.f32 %v272, %v272
    %v337 = vmul.f32 %v273, %v273
    %v338 = vmul.f32 %v274, %v274
    %v339 = vmul.f32 %v275, %v275
    %v340 = vmul.f32 %v276, %v276
    %v341 = vmul.f32 %v277, %v277
    %v342 = vmul.f32 %v278, %v278
    %v343 = vmul.f32 %v279, %v279
    %v344 = vmul.f32 %v280, %v280
    %v345 = vmul.f32 %v281, %v281
    %v346 = vmul.f32 %v282, %v282
    %v347 = vmul.f32 %v283, %v283
    %v348 = vmul.f32 %v284, %v284
    %v349 = vmul.f32 %v285, %v285
    %v350 = vmul.f32 %v286, %v286
    %v351 = vmul.f32 %v287, %v287
    %v352 = vmul.f32 %v288, %v288
    %v353 = vmul.f32 %v289, %v289
    %v354 = vmul.f32 %v290, %v290
    %v355 = vmul.f32 %v291, %v291
    %v356 = vmul.f32 %v292, %v292
    %v357 = vmul.f32 %v293, %v293
    %v358 = vmul.f32 %v294, %v294
    %v359 = vmul.f32 %v295, %v295
    %v360 = vmul.f32 %v296, %v296
    %v361 = vmul.f32 %v297, %v297
    %v362 = vmul.f32 %v298, %v298
    %v363 = vmul.f32 %v299, %v299
    %v364 = vmul.f32 %v300, %v300
    %v365 = vmul.f32 %v301, %v301
    %v366 = vmul.f32 %v302, %v302
    %v367 = vmul.f32 %v303, %v303
    %v368 = vmul.f32 %v304, %v304
    %v369 = vmul.f32 %v305, %v305
    %v370 = vmul.f32 %v306, %v306
    %v371 = vmul.f32 %v307, %v307
    %v372 = vmul.f32 %v308, %v308
    %v373 = vmul.f32 %v309, %v309
    %v374 = vmul.f32 %v310, %v310
    %v375 = vsel %vm112, %v311, 0.0
    %v376 = vsel %vm112, %v312, 0.0
    %v377 = vadd.f32 %v375, %v376
    %v378 = vsel %vm112, %v313, 0.0
    %v379 = vadd.f32 %v377, %v378
    %v380 = vsel %vm112, %v314, 0.0
    %v381 = vadd.f32 %v379, %v380
    %v382 = vsel %vm112, %v315, 0.0
    %v383 = vadd.f32 %v381, %v382
    %v384 = vsel %vm112, %v316, 0.0
    %v385 = vadd.f32 %v383, %v384
    %v386 = vsel %vm112, %v317, 0.0
    %v387 = vadd.f32 %v385, %v386
    %v388 = vsel %vm112, %v318, 0.0
    %v389 = vadd.f32 %v387, %v388
    %v390 = vsel %vm112, %v319, 0.0
    %v391 = vadd.f32 %v389, %v390
    %v392 = vsel %vm112, %v320, 0.0
    %v393 = vadd.f32 %v391, %v392
    %v394 = vsel %vm112, %v321, 0.0
    %v395 = vadd.f32 %v393, %v394
    %v396 = vsel %vm112, %v322, 0.0
    %v397 = vadd.f32 %v395, %v396
    %v398 = vsel %vm112, %v323, 0.0
    %v399 = vadd.f32 %v397, %v398
    %v400 = vsel %vm112, %v324, 0.0
    %v401 = vadd.f32 %v399, %v400
    %v402 = vsel %vm112, %v325, 0.0
    %v403 = vadd.f32 %v401, %v402
    %v404 = vsel %vm112, %v326, 0.0
    %v405 = vadd.f32 %v403, %v404
    %v406 = vsel %vm112, %v327, 0.0
    %v407 = vadd.f32 %v405, %v406
    %v408 = vsel %vm112, %v328, 0.0
    %v409 = vadd.f32 %v407, %v408
    %v410 = vsel %vm112, %v329, 0.0
    %v411 = vadd.f32 %v409, %v410
    %v412 = vsel %vm112, %v330, 0.0
    %v413 = vadd.f32 %v411, %v412
    %v414 = vsel %vm112, %v331, 0.0
    %v415 = vadd.f32 %v413, %v414
    %v416 = vsel %vm112, %v332, 0.0
    %v417 = vadd.f32 %v415, %v416
    %v418 = vsel %vm112, %v333, 0.0
    %v419 = vadd.f32 %v417, %v418
    %v420 = vsel %vm112, %v334, 0.0
    %v421 = vadd.f32 %v419, %v420
    %v422 = vsel %vm112, %v335, 0.0
    %v423 = vadd.f32 %v421, %v422
    %v424 = vsel %vm112, %v336, 0.0
    %v425 = vadd.f32 %v423, %v424
    %v426 = vsel %vm112, %v337, 0.0
    %v427 = vadd.f32 %v425, %v426
    %v428 = vsel %vm112, %v338, 0.0
    %v429 = vadd.f32 %v427, %v428
    %v430 = vsel %vm112, %v339, 0.0
    %v431 = vadd.f32 %v429, %v430
    %v432 = vsel %vm112, %v340, 0.0
    %v433 = vadd.f32 %v431, %v432
    %v434 = vsel %vm112, %v341, 0.0
    %v435 = vadd.f32 %v433, %v434
    %v436 = vsel %vm112, %v342, 0.0
    %v437 = vadd.f32 %v435, %v436
    %v438 = vsel %vm112, %v343, 0.0
    %v439 = vadd.f32 %v437, %v438
    %v440 = vsel %vm112, %v344, 0.0
    %v441 = vadd.f32 %v439, %v440
    %v442 = vsel %vm112, %v345, 0.0
    %v443 = vadd.f32 %v441, %v442
    %v444 = vsel %vm112, %v346, 0.0
    %v445 = vadd.f32 %v443, %v444
    %v446 = vsel %vm112, %v347, 0.0
    %v447 = vadd.f32 %v445, %v446
    %v448 = vsel %vm112, %v348, 0.0
    %v449 = vadd.f32 %v447, %v448
    %v450 = vsel %vm112, %v349, 0.0
    %v451 = vadd.f32 %v449, %v450
    %v452 = vsel %vm112, %v350, 0.0
    %v453 = vadd.f32 %v451, %v452
    %v454 = vsel %vm112, %v351, 0.0
    %v455 = vadd.f32 %v453, %v454
    %v456 = vsel %vm112, %v352, 0.0
    %v457 = vadd.f32 %v455, %v456
    %v458 = vsel %vm112, %v353, 0.0
    %v459 = vadd.f32 %v457, %v458
    %v460 = vsel %vm112, %v354, 0.0
    %v461 = vadd.f32 %v459, %v460
    %v462 = vsel %vm112, %v355, 0.0
    %v463 = vadd.f32 %v461, %v462
    %v464 = vsel %vm112, %v356, 0.0
    %v465 = vadd.f32 %v463, %v464
    %v466 = vsel %vm112, %v357, 0.0
    %v467 = vadd.f32 %v465, %v466
    %v468 = vsel %vm112, %v358, 0.0
    %v469 = vadd.f32 %v467, %v468
    %v470 = vsel %vm112, %v359, 0.0
    %v471 = vadd.f32 %v469, %v470
    %v472 = vsel %vm112, %v360, 0.0
    %v473 = vadd.f32 %v471, %v472
    %v474 = vsel %vm112, %v361, 0.0
    %v475 = vadd.f32 %v473, %v474
    %v476 = vsel %vm112, %v362, 0.0
    %v477 = vadd.f32 %v475, %v476
    %v478 = vsel %vm112, %v363, 0.0
    %v479 = vadd.f32 %v477, %v478
    %v480 = vsel %vm112, %v364, 0.0
    %v481 = vadd.f32 %v479, %v480
    %v482 = vsel %vm112, %v365, 0.0
    %v483 = vadd.f32 %v481, %v482
    %v484 = vsel %vm112, %v366, 0.0
    %v485 = vadd.f32 %v483, %v484
    %v486 = vsel %vm112, %v367, 0.0
    %v487 = vadd.f32 %v485, %v486
    %v488 = vsel %vm112, %v368, 0.0
    %v489 = vadd.f32 %v487, %v488
    %v490 = vsel %vm112, %v369, 0.0
    %v491 = vadd.f32 %v489, %v490
    %v492 = vsel %vm112, %v370, 0.0
    %v493 = vadd.f32 %v491, %v492
    %v494 = vsel %vm112, %v371, 0.0
    %v495 = vadd.f32 %v493, %v494
    %v496 = vsel %vm112, %v372, 0.0
    %v497 = vadd.f32 %v495, %v496
    %v498 = vsel %vm112, %v373, 0.0
    %v499 = vadd.f32 %v497, %v498
    %v500 = vsel %vm112, %v374, 0.0
    %v501 = vadd.f32 %v499, %v500
    %v502 = vrot.slane %v501, 4
    %v503 = vadd.f32 %v501, %v502
    %v504 = vrot.slane %v503, 2
    %v505 = vadd.f32 %v503, %v504
    %v506 = vrot.slane %v505, 1
    %v507 = vadd.f32 %v505, %v506
    %v508 = vmul.f32 %v507, 0.001953125
    %v509 = vadd.f32 %v508, 1e-05
    %v510 = vrsqrt.pop %v509
    %v511 = vmul.f32 %v247, %v510
    %v512 = vmul.f32 %v248, %v510
    %v513 = vmul.f32 %v249, %v510
    %v514 = vmul.f32 %v250, %v510
    %v515 = vmul.f32 %v251, %v510
    %v516 = vmul.f32 %v252, %v510
    %v517 = vmul.f32 %v253, %v510
    %v518 = vmul.f32 %v254, %v510
    %v519 = vmul.f32 %v255, %v510
    %v520 = vmul.f32 %v256, %v510
    %v521 = vmul.f32 %v257, %v510
    %v522 = vmul.f32 %v258, %v510
    %v523 = vmul.f32 %v259, %v510
    %v524 = vmul.f32 %v260, %v510
    %v525 = vmul.f32 %v261, %v510
    %v526 = vmul.f32 %v262, %v510
    %v527 = vmul.f32 %v263, %v510
    %v528 = vmul.f32 %v264, %v510
    %v529 = vmul.f32 %v265, %v510
    %v530 = vmul.f32 %v266, %v510
    %v531 = vmul.f32 %v267, %v510
    %v532 = vmul.f32 %v268, %v510
    %v533 = vmul.f32 %v269, %v510
    %v534 = vmul.f32 %v270, %v510
    %v535 = vmul.f32 %v271, %v510
    %v536 = vmul.f32 %v272, %v510
    %v537 = vmul.f32 %v273, %v510
    %v538 = vmul.f32 %v274, %v510
    %v539 = vmul.f32 %v275, %v510
    %v540 = vmul.f32 %v276, %v510
    %v541 = vmul.f32 %v277, %v510
    %v542 = vmul.f32 %v278, %v510
    %v543 = vmul.f32 %v279, %v510
    %v544 = vmul.f32 %v280, %v510
    %v545 = vmul.f32 %v281, %v510
    %v546 = vmul.f32 %v282, %v510
    %v547 = vmul.f32 %v283, %v510
    %v548 = vmul.f32 %v284, %v510
    %v549 = vmul.f32 %v285, %v510
    %v550 = vmul.f32 %v286, %v510
    %v551 = vmul.f32 %v287, %v510
    %v552 = vmul.f32 %v288, %v510
    %v553 = vmul.f32 %v289, %v510
    %v554 = vmul.f32 %v290, %v510
    %v555 = vmul.f32 %v291, %v510
    %v556 = vmul.f32 %v292, %v510
    %v557 = vmul.f32 %v293, %v510
    %v558 = vmul.f32 %v294, %v510
    %v559 = vmul.f32 %v295, %v510
    %v560 = vmul.f32 %v296, %v510
    %v561 = vmul.f32 %v297, %v510
    %v562 = vmul.f32 %v298, %v510
    %v563 = vmul.f32 %v299, %v510
    %v564 = vmul.f32 %v300, %v510
    %v565 = vmul.f32 %v301, %v510
    %v566 = vmul.f32 %v302, %v510
    %v567 = vmul.f32 %v303, %v510
    %v568 = vmul.f32 %v304, %v510
    %v569 = vmul.f32 %v305, %v510
    %v570 = vmul.f32 %v306, %v510
    %v571 = vmul.f32 %v307, %v510
    %v572 = vmul.f32 %v308, %v510
    %v573 = vmul.f32 %v309, %v510
    %v574 = vmul.f32 %v310, %v510
    %v576 = vlaneseq
    %v577 = vshrl.u32 %v576, 7
    %v578 = vsub.s32 0, %v577
    %v579 = vrot.slane %v110, %v578
    %v581 = vmul.f32 %v511, %v579
    %v582 = vmul.f32 %v512, %v579
    %v583 = vmul.f32 %v513, %v579
    %v584 = vmul.f32 %v514, %v579
    %v585 = vmul.f32 %v515, %v579
    %v586 = vmul.f32 %v516, %v579
    %v587 = vmul.f32 %v517, %v579
    %v588 = vmul.f32 %v518, %v579
    %v589 = vmul.f32 %v519, %v579
    %v590 = vmul.f32 %v520, %v579
    %v591 = vmul.f32 %v521, %v579
    %v592 = vmul.f32 %v522, %v579
    %v593 = vmul.f32 %v523, %v579
    %v594 = vmul.f32 %v524, %v579
    %v595 = vmul.f32 %v525, %v579
    %v596 = vmul.f32 %v526, %v579
    %v597 = vmul.f32 %v527, %v579
    %v598 = vmul.f32 %v528, %v579
    %v599 = vmul.f32 %v529, %v579
    %v600 = vmul.f32 %v530, %v579
    %v601 = vmul.f32 %v531, %v579
    %v602 = vmul.f32 %v532, %v579
    %v603 = vmul.f32 %v533, %v579
    %v604 = vmul.f32 %v534, %v579
    %v605 = vmul.f32 %v535, %v579
    %v606 = vmul.f32 %v536, %v579
    %v607 = vmul.f32 %v537, %v579
    %v608 = vmul.f32 %v538, %v579
    %v609 = vmul.f32 %v539, %v579
    %v610 = vmul.f32 %v540, %v579
    %v611 = vmul.f32 %v541, %v579
    %v612 = vmul.f32 %v542, %v579
    %v613 = vmul.f32 %v543, %v579
    %v614 = vmul.f32 %v544, %v579
    %v615 = vmul.f32 %v545, %v579
    %v616 = vmul.f32 %v546, %v579
    %v617 = vmul.f32 %v547, %v579
    %v618 = vmul.f32 %v548, %v579
    %v619 = vmul.f32 %v549, %v579
    %v620 = vmul.f32 %v550, %v579
    %v621 = vmul.f32 %v551, %v579
    %v622 = vmul.f32 %v552, %v579
    %v623 = vmul.f32 %v553, %v579
    %v624 = vmul.f32 %v554, %v579
    %v625 = vmul.f32 %v555, %v579
    %v626 = vmul.f32 %v556, %v579
    %v627 = vmul.f32 %v557, %v579
    %v628 = vmul.f32 %v558, %v579
    %v629 = vmul.f32 %v559, %v579
    %v630 = vmul.f32 %v560, %v579
    %v631 = vmul.f32 %v561, %v579
    %v632 = vmul.f32 %v562, %v579
    %v633 = vmul.f32 %v563, %v579
    %v634 = vmul.f32 %v564, %v579
    %v635 = vmul.f32 %v565, %v579
    %v636 = vmul.f32 %v566, %v579
    %v637 = vmul.f32 %v567, %v579
    %v638 = vmul.f32 %v568, %v579
    %v639 = vmul.f32 %v569, %v579
    %v640 = vmul.f32 %v570, %v579
    %v641 = vmul.f32 %v571, %v579
    %v642 = vmul.f32 %v572, %v579
    %v643 = vmul.f32 %v573, %v579
    %v644 = vmul.f32 %v574, %v579
    %v646 = vlaneseq
    %v647 = vshrl.u32 %v646, 7
    %v648 = vsub.s32 0, %v647
    %v649 = vrot.slane %v111, %v648
    %v651 = vadd.f32 %v581, %v649
    %v652 = vadd.f32 %v582, %v649
    %v653 = vadd.f32 %v583, %v649
    %v654 = vadd.f32 %v584, %v649
    %v655 = vadd.f32 %v585, %v649
    %v656 = vadd.f32 %v586, %v649
    %v657 = vadd.f32 %v587, %v649
    %v658 = vadd.f32 %v588, %v649
    %v659 = vadd.f32 %v589, %v649
    %v660 = vadd.f32 %v590, %v649
    %v661 = vadd.f32 %v591, %v649
    %v662 = vadd.f32 %v592, %v649
    %v663 = vadd.f32 %v593, %v649
    %v664 = vadd.f32 %v594, %v649
    %v665 = vadd.f32 %v595, %v649
    %v666 = vadd.f32 %v596, %v649
    %v667 = vadd.f32 %v597, %v649
    %v668 = vadd.f32 %v598, %v649
    %v669 = vadd.f32 %v599, %v649
    %v670 = vadd.f32 %v600, %v649
    %v671 = vadd.f32 %v601, %v649
    %v672 = vadd.f32 %v602, %v649
    %v673 = vadd.f32 %v603, %v649
    %v674 = vadd.f32 %v604, %v649
    %v675 = vadd.f32 %v605, %v649
    %v676 = vadd.f32 %v606, %v649
    %v677 = vadd.f32 %v607, %v649
    %v678 = vadd.f32 %v608, %v649
    %v679 = vadd.f32 %v609, %v649
    %v680 = vadd.f32 %v610, %v649
    %v681 = vadd.f32 %v611, %v649
    %v682 = vadd.f32 %v612, %v649
    %v683 = vadd.f32 %v613, %v649
    %v684 = vadd.f32 %v614, %v649
    %v685 = vadd.f32 %v615, %v649
    %v686 = vadd.f32 %v616, %v649
    %v687 = vadd.f32 %v617, %v649
    %v688 = vadd.f32 %v618, %v649
    %v689 = vadd.f32 %v619, %v649
    %v690 = vadd.f32 %v620, %v649
    %v691 = vadd.f32 %v621, %v649
    %v692 = vadd.f32 %v622, %v649
    %v693 = vadd.f32 %v623, %v649
    %v694 = vadd.f32 %v624, %v649
    %v695 = vadd.f32 %v625, %v649
    %v696 = vadd.f32 %v626, %v649
    %v697 = vadd.f32 %v627, %v649
    %v698 = vadd.f32 %v628, %v649
    %v699 = vadd.f32 %v629, %v649
    %v700 = vadd.f32 %v630, %v649
    %v701 = vadd.f32 %v631, %v649
    %v702 = vadd.f32 %v632, %v649
    %v703 = vadd.f32 %v633, %v649
    %v704 = vadd.f32 %v634, %v649
    %v705 = vadd.f32 %v635, %v649
    %v706 = vadd.f32 %v636, %v649
    %v707 = vadd.f32 %v637, %v649
    %v708 = vadd.f32 %v638, %v649
    %v709 = vadd.f32 %v639, %v649
    %v710 = vadd.f32 %v640, %v649
    %v711 = vadd.f32 %v641, %v649
    %v712 = vadd.f32 %v642, %v649
    %v713 = vadd.f32 %v643, %v649
    %v714 = vadd.f32 %v644, %v649
    %v715 = vmax.f32 %v651, 0.0
    %v716 = vmax.f32 %v652, 0.0
    %v717 = vmax.f32 %v653, 0.0
    %v718 = vmax.f32 %v654, 0.0
    %v719 = vmax.f32 %v655, 0.0
    %v720 = vmax.f32 %v656, 0.0
    %v721 = vmax.f32 %v657, 0.0
    %v722 = vmax.f32 %v658, 0.0
    %v723 = vmax.f32 %v659, 0.0
    %v724 = vmax.f32 %v660, 0.0
    %v725 = vmax.f32 %v661, 0.0
    %v726 = vmax.f32 %v662, 0.0
    %v727 = vmax.f32 %v663, 0.0
    %v728 = vmax.f32 %v664, 0.0
    %v729 = vmax.f32 %v665, 0.0
    %v730 = vmax.f32 %v666, 0.0
    %v731 = vmax.f32 %v667, 0.0
    %v732 = vmax.f32 %v668, 0.0
    %v733 = vmax.f32 %v669, 0.0
    %v734 = vmax.f32 %v670, 0.0
    %v735 = vmax.f32 %v671, 0.0
    %v736 = vmax.f32 %v672, 0.0
    %v737 = vmax.f32 %v673, 0.0
    %v738 = vmax.f32 %v674, 0.0
    %v739 = vmax.f32 %v675, 0.0
    %v740 = vmax.f32 %v676, 0.0
    %v741 = vmax.f32 %v677, 0.0
    %v742 = vmax.f32 %v678, 0.0
    %v743 = vmax.f32 %v679, 0.0
    %v744 = vmax.f32 %v680, 0.0
    %v745 = vmax.f32 %v681, 0.0
    %v746 = vmax.f32 %v682, 0.0
    %v747 = vmax.f32 %v683, 0.0
    %v748 = vmax.f32 %v684, 0.0
    %v749 = vmax.f32 %v685, 0.0
    %v750 = vmax.f32 %v686, 0.0
    %v751 = vmax.f32 %v687, 0.0
    %v752 = vmax.f32 %v688, 0.0
    %v753 = vmax.f32 %v689, 0.0
    %v754 = vmax.f32 %v690, 0.0
    %v755 = vmax.f32 %v691, 0.0
    %v756 = vmax.f32 %v692, 0.0
    %v757 = vmax.f32 %v693, 0.0
    %v758 = vmax.f32 %v694, 0.0
    %v759 = vmax.f32 %v695, 0.0
    %v760 = vmax.f32 %v696, 0.0
    %v761 = vmax.f32 %v697, 0.0
    %v762 = vmax.f32 %v698, 0.0
    %v763 = vmax.f32 %v699, 0.0
    %v764 = vmax.f32 %v700, 0.0
    %v765 = vmax.f32 %v701, 0.0
    %v766 = vmax.f32 %v702, 0.0
    %v767 = vmax.f32 %v703, 0.0
    %v768 = vmax.f32 %v704, 0.0
    %v769 = vmax.f32 %v705, 0.0
    %v770 = vmax.f32 %v706, 0.0
    %v771 = vmax.f32 %v707, 0.0
    %v772 = vmax.f32 %v708, 0.0
    %v773 = vmax.f32 %v709, 0.0
    %v774 = vmax.f32 %v710, 0.0
    %v775 = vmax.f32 %v711, 0.0
    %v776 = vmax.f32 %v712, 0.0
    %v777 = vmax.f32 %v713, 0.0
    %v778 = vmax.f32 %v714, 0.0
    %v779 = vpack.c.bf16 %v716, %v715
    %v780 = vpack.c.bf16 %v718, %v717
    %v781 = vpack.c.bf16 %v720, %v719
    %v782 = vpack.c.bf16 %v722, %v721
    %v783 = vpack.c.bf16 %v724, %v723
    %v784 = vpack.c.bf16 %v726, %v725
    %v785 = vpack.c.bf16 %v728, %v727
    %v786 = vpack.c.bf16 %v730, %v729
    %v787 = vpack.c.bf16 %v732, %v731
    %v788 = vpack.c.bf16 %v734, %v733
    %v789 = vpack.c.bf16 %v736, %v735
    %v790 = vpack.c.bf16 %v738, %v737
    %v791 = vpack.c.bf16 %v740, %v739
    %v792 = vpack.c.bf16 %v742, %v741
    %v793 = vpack.c.bf16 %v744, %v743
    %v794 = vpack.c.bf16 %v746, %v745
    %v795 = vpack.c.bf16 %v748, %v747
    %v796 = vpack.c.bf16 %v750, %v749
    %v797 = vpack.c.bf16 %v752, %v751
    %v798 = vpack.c.bf16 %v754, %v753
    %v799 = vpack.c.bf16 %v756, %v755
    %v800 = vpack.c.bf16 %v758, %v757
    %v801 = vpack.c.bf16 %v760, %v759
    %v802 = vpack.c.bf16 %v762, %v761
    %v803 = vpack.c.bf16 %v764, %v763
    %v804 = vpack.c.bf16 %v766, %v765
    %v805 = vpack.c.bf16 %v768, %v767
    %v806 = vpack.c.bf16 %v770, %v769
    %v807 = vpack.c.bf16 %v772, %v771
    %v808 = vpack.c.bf16 %v774, %v773
    %v809 = vpack.c.bf16 %v776, %v775
    %v810 = vpack.c.bf16 %v778, %v777
    %v811 = vld [vmem:[%s3] sm:$0xf]
    %v812 = vld [vmem:[%s3 + $0x4] sm:$0xf]
    %v813 = vld [vmem:[%s3 + $0x8] sm:$0xf]
    %v814 = vld [vmem:[%s3 + $0xc] sm:$0xf]
    %v815 = vld [vmem:[%s3 + $0x10] sm:$0xf]
    %v816 = vld [vmem:[%s3 + $0x14] sm:$0xf]
    %v817 = vld [vmem:[%s3 + $0x18] sm:$0xf]
    %v818 = vld [vmem:[%s3 + $0x1c] sm:$0xf]
    %v819 = vld [vmem:[%s4] sm:$0x1]
    %v821 = vlaneseq
    %v822 = vshrl.u32 %v821, 7
    %v823 = vsub.s32 0, %v822
    %v824 = vrot.slane %v819, %v823
    %v834 = vunpack.c.l.b16 %v811
    %v835 = vunpack.c.l.b16 %v812
    %v836 = vunpack.c.l.b16 %v813
    %v837 = vunpack.c.l.b16 %v814
    %v838 = vunpack.c.l.b16 %v815
    %v839 = vunpack.c.l.b16 %v816
    %v840 = vunpack.c.l.b16 %v817
    %v841 = vunpack.c.l.b16 %v818
    %v842 = vpack.c.b16 %v835, %v834
    %v843 = vpack.c.b16 %v837, %v836
    %v844 = vpack.c.b16 %v839, %v838
    %v845 = vpack.c.b16 %v841, %v840
    %v851 = vsel %vm112, %v779, 0
    %v854 = vsel %vm112, %v780, 0
    %v857 = vsel %vm112, %v781, 0
    %v860 = vsel %vm112, %v782, 0
    %v863 = vsel %vm112, %v783, 0
    %v866 = vsel %vm112, %v784, 0
    %v869 = vsel %vm112, %v785, 0
    %v872 = vsel %vm112, %v786, 0
    %v875 = vsel %vm112, %v787, 0
    %v878 = vsel %vm112, %v788, 0
    %v881 = vsel %vm112, %v789, 0
    %v884 = vsel %vm112, %v790, 0
    %v887 = vsel %vm112, %v791, 0
    %v890 = vsel %vm112, %v792, 0
    %v893 = vsel %vm112, %v793, 0
    %v896 = vsel %vm112, %v794, 0
    %v899 = vsel %vm112, %v795, 0
    %v902 = vsel %vm112, %v796, 0
    %v905 = vsel %vm112, %v797, 0
    %v908 = vsel %vm112, %v798, 0
    %v911 = vsel %vm112, %v799, 0
    %v914 = vsel %vm112, %v800, 0
    %v917 = vsel %vm112, %v801, 0
    %v920 = vsel %vm112, %v802, 0
    %v923 = vsel %vm112, %v803, 0
    %v926 = vsel %vm112, %v804, 0
    %v929 = vsel %vm112, %v805, 0
    %v932 = vsel %vm112, %v806, 0
    %v935 = vsel %vm112, %v807, 0
    %v938 = vsel %vm112, %v808, 0
    %v941 = vsel %vm112, %v809, 0
    %v944 = vsel %vm112, %v810, 0
    %946 = vmatprep.subr.bf16.mxu0 0
    %947 = vmatpush1.bf16.msra.mxu0 0
    %948 = vmatprep.subr.bf16.mxu0 0
    %949 = vmatpush1.bf16.msra.mxu0 0
    %950 = vmatprep.subr.bf16.mxu0 0
    %951 = vmatpush1.bf16.msra.mxu0 0
    %952 = vmatprep.subr.bf16.mxu0 0
    %953 = vmatpush1.bf16.msra.mxu0 0
    %954 = vmatprep.subr.bf16.mxu0 0
    %955 = vmatpush1.bf16.msra.mxu0 %v845
    %956 = vmatprep.subr.bf16.mxu0 0
    %957 = vmatpush1.bf16.msra.mxu0 %v844
    %958 = vmatprep.subr.bf16.mxu0 0
    %959 = vmatpush1.bf16.msra.mxu0 %v843
    %960 = vmatprep.subr.bf16.mxu0 0
    %961 = vmatpush1.bf16.msra.mxu0 %v842
    %962 = vmatprep.subr.bf16.mxu0 0
    %963 = vmatpush2.bf16.msra.mxu0 0
    %964 = vmatprep.subr.bf16.mxu0 0
    %965 = vmatpush2.bf16.msra.mxu0 0
    %966 = vmatprep.subr.bf16.mxu0 0
    %967 = vmatpush2.bf16.msra.mxu0 0
    %968 = vmatprep.subr.bf16.mxu0 0
    %969 = vmatpush2.bf16.msra.mxu0 0
    %970 = vmatprep.subr.bf16.mxu0 0
    %971 = vmatpush2.bf16.msra.mxu0 0
    %972 = vmatprep.subr.bf16.mxu0 0
    %973 = vmatpush2.bf16.msra.mxu0 0
    %974 = vmatprep.subr.bf16.mxu0 0
    %975 = vmatpush2.bf16.msra.mxu0 0
    %976 = vmatprep.subr.bf16.mxu0 0
    %977 = vmatpush2.bf16.msra.mxu0 0
    %978 = vmatprep.mubr.bf16.mxu0 0
    %979 = vmatmul.mubr.bf16.gmra.mxu0 %v851
    %v980 = vpop.f32.mrf.mxu0
    %v981 = vadd.f32 %v824, %v980
    %v982 = vpop.f32.mrf.mxu0
    %v983 = vpop.f32.mrf.mxu0
    %v984 = vadd.f32 %v824, %v983
    %v985 = vpop.f32.mrf.mxu0
    %986 = vmatprep.mubr.bf16.mxu0 0
    %987 = vmatmul.mubr.bf16.gmra.mxu0 %v854
    %v988 = vpop.f32.mrf.mxu0
    %v989 = vadd.f32 %v824, %v988
    %v990 = vpop.f32.mrf.mxu0
    %v991 = vpop.f32.mrf.mxu0
    %v992 = vadd.f32 %v824, %v991
    %v993 = vpop.f32.mrf.mxu0
    %994 = vmatprep.mubr.bf16.mxu0 0
    %995 = vmatmul.mubr.bf16.gmra.mxu0 %v857
    %v996 = vpop.f32.mrf.mxu0
    %v997 = vadd.f32 %v824, %v996
    %v998 = vpop.f32.mrf.mxu0
    %v999 = vpop.f32.mrf.mxu0
    %v1000 = vadd.f32 %v824, %v999
    %v1001 = vpop.f32.mrf.mxu0
    %1002 = vmatprep.mubr.bf16.mxu0 0
    %1003 = vmatmul.mubr.bf16.gmra.mxu0 %v860
    %v1004 = vpop.f32.mrf.mxu0
    %v1005 = vadd.f32 %v824, %v1004
    %v1006 = vpop.f32.mrf.mxu0
    %v1007 = vpop.f32.mrf.mxu0
    %v1008 = vadd.f32 %v824, %v1007
    %v1009 = vpop.f32.mrf.mxu0
    %1010 = vmatprep.mubr.bf16.mxu0 0
    %1011 = vmatmul.mubr.bf16.gmra.mxu0 %v863
    %v1012 = vpop.f32.mrf.mxu0
    %v1013 = vadd.f32 %v824, %v1012
    %v1014 = vpop.f32.mrf.mxu0
    %v1015 = vpop.f32.mrf.mxu0
    %v1016 = vadd.f32 %v824, %v1015
    %v1017 = vpop.f32.mrf.mxu0
    %1018 = vmatprep.mubr.bf16.mxu0 0
    %1019 = vmatmul.mubr.bf16.gmra.mxu0 %v866
    %v1020 = vpop.f32.mrf.mxu0
    %v1021 = vadd.f32 %v824, %v1020
    %v1022 = vpop.f32.mrf.mxu0
    %v1023 = vpop.f32.mrf.mxu0
    %v1024 = vadd.f32 %v824, %v1023
    %v1025 = vpop.f32.mrf.mxu0
    %1026 = vmatprep.mubr.bf16.mxu0 0
    %1027 = vmatmul.mubr.bf16.gmra.mxu0 %v869
    %v1028 = vpop.f32.mrf.mxu0
    %v1029 = vadd.f32 %v824, %v1028
    %v1030 = vpop.f32.mrf.mxu0
    %v1031 = vpop.f32.mrf.mxu0
    %v1032 = vadd.f32 %v824, %v1031
    %v1033 = vpop.f32.mrf.mxu0
    %1034 = vmatprep.mubr.bf16.mxu0 0
    %1035 = vmatmul.mubr.bf16.gmra.mxu0 %v872
    %v1036 = vpop.f32.mrf.mxu0
    %v1037 = vadd.f32 %v824, %v1036
    %v1038 = vpop.f32.mrf.mxu0
    %v1039 = vpop.f32.mrf.mxu0
    %v1040 = vadd.f32 %v824, %v1039
    %v1041 = vpop.f32.mrf.mxu0
    %1042 = vmatprep.mubr.bf16.mxu0 0
    %1043 = vmatmul.mubr.bf16.gmra.mxu0 %v875
    %v1044 = vpop.f32.mrf.mxu0
    %v1045 = vadd.f32 %v824, %v1044
    %v1046 = vpop.f32.mrf.mxu0
    %v1047 = vpop.f32.mrf.mxu0
    %v1048 = vadd.f32 %v824, %v1047
    %v1049 = vpop.f32.mrf.mxu0
    %1050 = vmatprep.mubr.bf16.mxu0 0
    %1051 = vmatmul.mubr.bf16.gmra.mxu0 %v878
    %v1052 = vpop.f32.mrf.mxu0
    %v1053 = vadd.f32 %v824, %v1052
    %v1054 = vpop.f32.mrf.mxu0
    %v1055 = vpop.f32.mrf.mxu0
    %v1056 = vadd.f32 %v824, %v1055
    %v1057 = vpop.f32.mrf.mxu0
    %1058 = vmatprep.mubr.bf16.mxu0 0
    %1059 = vmatmul.mubr.bf16.gmra.mxu0 %v881
    %v1060 = vpop.f32.mrf.mxu0
    %v1061 = vadd.f32 %v824, %v1060
    %v1062 = vpop.f32.mrf.mxu0
    %v1063 = vpop.f32.mrf.mxu0
    %v1064 = vadd.f32 %v824, %v1063
    %v1065 = vpop.f32.mrf.mxu0
    %1066 = vmatprep.mubr.bf16.mxu0 0
    %1067 = vmatmul.mubr.bf16.gmra.mxu0 %v884
    %v1068 = vpop.f32.mrf.mxu0
    %v1069 = vadd.f32 %v824, %v1068
    %v1070 = vpop.f32.mrf.mxu0
    %v1071 = vpop.f32.mrf.mxu0
    %v1072 = vadd.f32 %v824, %v1071
    %v1073 = vpop.f32.mrf.mxu0
    %1074 = vmatprep.mubr.bf16.mxu0 0
    %1075 = vmatmul.mubr.bf16.gmra.mxu0 %v887
    %v1076 = vpop.f32.mrf.mxu0
    %v1077 = vadd.f32 %v824, %v1076
    %v1078 = vpop.f32.mrf.mxu0
    %v1079 = vpop.f32.mrf.mxu0
    %v1080 = vadd.f32 %v824, %v1079
    %v1081 = vpop.f32.mrf.mxu0
    %1082 = vmatprep.mubr.bf16.mxu0 0
    %1083 = vmatmul.mubr.bf16.gmra.mxu0 %v890
    %v1084 = vpop.f32.mrf.mxu0
    %v1085 = vadd.f32 %v824, %v1084
    %v1086 = vpop.f32.mrf.mxu0
    %v1087 = vpop.f32.mrf.mxu0
    %v1088 = vadd.f32 %v824, %v1087
    %v1089 = vpop.f32.mrf.mxu0
    %1090 = vmatprep.mubr.bf16.mxu0 0
    %1091 = vmatmul.mubr.bf16.gmra.mxu0 %v893
    %v1092 = vpop.f32.mrf.mxu0
    %v1093 = vadd.f32 %v824, %v1092
    %v1094 = vpop.f32.mrf.mxu0
    %v1095 = vpop.f32.mrf.mxu0
    %v1096 = vadd.f32 %v824, %v1095
    %v1097 = vpop.f32.mrf.mxu0
    %1098 = vmatprep.mubr.bf16.mxu0 0
    %1099 = vmatmul.mubr.bf16.gmra.mxu0 %v896
    %v1100 = vpop.f32.mrf.mxu0
    %v1101 = vadd.f32 %v824, %v1100
    %v1102 = vpop.f32.mrf.mxu0
    %v1103 = vpop.f32.mrf.mxu0
    %v1104 = vadd.f32 %v824, %v1103
    %v1105 = vpop.f32.mrf.mxu0
    %1106 = vmatprep.mubr.bf16.mxu0 0
    %1107 = vmatmul.mubr.bf16.gmra.mxu0 %v899
    %v1108 = vpop.f32.mrf.mxu0
    %v1109 = vadd.f32 %v824, %v1108
    %v1110 = vpop.f32.mrf.mxu0
    %v1111 = vpop.f32.mrf.mxu0
    %v1112 = vadd.f32 %v824, %v1111
    %v1113 = vpop.f32.mrf.mxu0
    %1114 = vmatprep.mubr.bf16.mxu0 0
    %1115 = vmatmul.mubr.bf16.gmra.mxu0 %v902
    %v1116 = vpop.f32.mrf.mxu0
    %v1117 = vadd.f32 %v824, %v1116
    %v1118 = vpop.f32.mrf.mxu0
    %v1119 = vpop.f32.mrf.mxu0
    %v1120 = vadd.f32 %v824, %v1119
    %v1121 = vpop.f32.mrf.mxu0
    %1122 = vmatprep.mubr.bf16.mxu0 0
    %1123 = vmatmul.mubr.bf16.gmra.mxu0 %v905
    %v1124 = vpop.f32.mrf.mxu0
    %v1125 = vadd.f32 %v824, %v1124
    %v1126 = vpop.f32.mrf.mxu0
    %v1127 = vpop.f32.mrf.mxu0
    %v1128 = vadd.f32 %v824, %v1127
    %v1129 = vpop.f32.mrf.mxu0
    %1130 = vmatprep.mubr.bf16.mxu0 0
    %1131 = vmatmul.mubr.bf16.gmra.mxu0 %v908
    %v1132 = vpop.f32.mrf.mxu0
    %v1133 = vadd.f32 %v824, %v1132
    %v1134 = vpop.f32.mrf.mxu0
    %v1135 = vpop.f32.mrf.mxu0
    %v1136 = vadd.f32 %v824, %v1135
    %v1137 = vpop.f32.mrf.mxu0
    %1138 = vmatprep.mubr.bf16.mxu0 0
    %1139 = vmatmul.mubr.bf16.gmra.mxu0 %v911
    %v1140 = vpop.f32.mrf.mxu0
    %v1141 = vadd.f32 %v824, %v1140
    %v1142 = vpop.f32.mrf.mxu0
    %v1143 = vpop.f32.mrf.mxu0
    %v1144 = vadd.f32 %v824, %v1143
    %v1145 = vpop.f32.mrf.mxu0
    %1146 = vmatprep.mubr.bf16.mxu0 0
    %1147 = vmatmul.mubr.bf16.gmra.mxu0 %v914
    %v1148 = vpop.f32.mrf.mxu0
    %v1149 = vadd.f32 %v824, %v1148
    %v1150 = vpop.f32.mrf.mxu0
    %v1151 = vpop.f32.mrf.mxu0
    %v1152 = vadd.f32 %v824, %v1151
    %v1153 = vpop.f32.mrf.mxu0
    %1154 = vmatprep.mubr.bf16.mxu0 0
    %1155 = vmatmul.mubr.bf16.gmra.mxu0 %v917
    %v1156 = vpop.f32.mrf.mxu0
    %v1157 = vadd.f32 %v824, %v1156
    %v1158 = vpop.f32.mrf.mxu0
    %v1159 = vpop.f32.mrf.mxu0
    %v1160 = vadd.f32 %v824, %v1159
    %v1161 = vpop.f32.mrf.mxu0
    %1162 = vmatprep.mubr.bf16.mxu0 0
    %1163 = vmatmul.mubr.bf16.gmra.mxu0 %v920
    %v1164 = vpop.f32.mrf.mxu0
    %v1165 = vadd.f32 %v824, %v1164
    %v1166 = vpop.f32.mrf.mxu0
    %v1167 = vpop.f32.mrf.mxu0
    %v1168 = vadd.f32 %v824, %v1167
    %v1169 = vpop.f32.mrf.mxu0
    %1170 = vmatprep.mubr.bf16.mxu0 0
    %1171 = vmatmul.mubr.bf16.gmra.mxu0 %v923
    %v1172 = vpop.f32.mrf.mxu0
    %v1173 = vadd.f32 %v824, %v1172
    %v1174 = vpop.f32.mrf.mxu0
    %v1175 = vpop.f32.mrf.mxu0
    %v1176 = vadd.f32 %v824, %v1175
    %v1177 = vpop.f32.mrf.mxu0
    %1178 = vmatprep.mubr.bf16.mxu0 0
    %1179 = vmatmul.mubr.bf16.gmra.mxu0 %v926
    %v1180 = vpop.f32.mrf.mxu0
    %v1181 = vadd.f32 %v824, %v1180
    %v1182 = vpop.f32.mrf.mxu0
    %v1183 = vpop.f32.mrf.mxu0
    %v1184 = vadd.f32 %v824, %v1183
    %v1185 = vpop.f32.mrf.mxu0
    %1186 = vmatprep.mubr.bf16.mxu0 0
    %1187 = vmatmul.mubr.bf16.gmra.mxu0 %v929
    %v1188 = vpop.f32.mrf.mxu0
    %v1189 = vadd.f32 %v824, %v1188
    %v1190 = vpop.f32.mrf.mxu0
    %v1191 = vpop.f32.mrf.mxu0
    %v1192 = vadd.f32 %v824, %v1191
    %v1193 = vpop.f32.mrf.mxu0
    %1194 = vmatprep.mubr.bf16.mxu0 0
    %1195 = vmatmul.mubr.bf16.gmra.mxu0 %v932
    %v1196 = vpop.f32.mrf.mxu0
    %v1197 = vadd.f32 %v824, %v1196
    %v1198 = vpop.f32.mrf.mxu0
    %v1199 = vpop.f32.mrf.mxu0
    %v1200 = vadd.f32 %v824, %v1199
    %v1201 = vpop.f32.mrf.mxu0
    %1202 = vmatprep.mubr.bf16.mxu0 0
    %1203 = vmatmul.mubr.bf16.gmra.mxu0 %v935
    %v1204 = vpop.f32.mrf.mxu0
    %v1205 = vadd.f32 %v824, %v1204
    %v1206 = vpop.f32.mrf.mxu0
    %v1207 = vpop.f32.mrf.mxu0
    %v1208 = vadd.f32 %v824, %v1207
    %v1209 = vpop.f32.mrf.mxu0
    %1210 = vmatprep.mubr.bf16.mxu0 0
    %1211 = vmatmul.mubr.bf16.gmra.mxu0 %v938
    %v1212 = vpop.f32.mrf.mxu0
    %v1213 = vadd.f32 %v824, %v1212
    %v1214 = vpop.f32.mrf.mxu0
    %v1215 = vpop.f32.mrf.mxu0
    %v1216 = vadd.f32 %v824, %v1215
    %v1217 = vpop.f32.mrf.mxu0
    %1218 = vmatprep.mubr.bf16.mxu0 0
    %1219 = vmatmul.mubr.bf16.gmra.mxu0 %v941
    %v1220 = vpop.f32.mrf.mxu0
    %v1221 = vadd.f32 %v824, %v1220
    %v1222 = vpop.f32.mrf.mxu0
    %v1223 = vpop.f32.mrf.mxu0
    %v1224 = vadd.f32 %v824, %v1223
    %v1225 = vpop.f32.mrf.mxu0
    %1226 = vmatprep.mubr.bf16.mxu0 0
    %1227 = vmatmul.mubr.bf16.gmra.mxu0 %v944
    %v1228 = vpop.f32.mrf.mxu0
    %v1229 = vadd.f32 %v824, %v1228
    %v1230 = vpop.f32.mrf.mxu0
    %v1231 = vpop.f32.mrf.mxu0
    %v1232 = vadd.f32 %v824, %v1231
    %v1233 = vpop.f32.mrf.mxu0
    %1234 = vdwg.mxu0
    %v1235 = vld [vmem:[%s5] sm:$0x1]
    %v1236 = vld [vmem:[%s6] sm:$0x1]
    %v1237 = vsel %vm112, %v981, 0.0
    %v1238 = vsel %vm112, %v984, 0.0
    %v1239 = vadd.f32 %v1237, %v1238
    %v1240 = vsel %vm112, %v989, 0.0
    %v1241 = vadd.f32 %v1239, %v1240
    %v1242 = vsel %vm112, %v992, 0.0
    %v1243 = vadd.f32 %v1241, %v1242
    %v1244 = vsel %vm112, %v997, 0.0
    %v1245 = vadd.f32 %v1243, %v1244
    %v1246 = vsel %vm112, %v1000, 0.0
    %v1247 = vadd.f32 %v1245, %v1246
    %v1248 = vsel %vm112, %v1005, 0.0
    %v1249 = vadd.f32 %v1247, %v1248
    %v1250 = vsel %vm112, %v1008, 0.0
    %v1251 = vadd.f32 %v1249, %v1250
    %v1252 = vsel %vm112, %v1013, 0.0
    %v1253 = vadd.f32 %v1251, %v1252
    %v1254 = vsel %vm112, %v1016, 0.0
    %v1255 = vadd.f32 %v1253, %v1254
    %v1256 = vsel %vm112, %v1021, 0.0
    %v1257 = vadd.f32 %v1255, %v1256
    %v1258 = vsel %vm112, %v1024, 0.0
    %v1259 = vadd.f32 %v1257, %v1258
    %v1260 = vsel %vm112, %v1029, 0.0
    %v1261 = vadd.f32 %v1259, %v1260
    %v1262 = vsel %vm112, %v1032, 0.0
    %v1263 = vadd.f32 %v1261, %v1262
    %v1264 = vsel %vm112, %v1037, 0.0
    %v1265 = vadd.f32 %v1263, %v1264
    %v1266 = vsel %vm112, %v1040, 0.0
    %v1267 = vadd.f32 %v1265, %v1266
    %v1268 = vsel %vm112, %v1045, 0.0
    %v1269 = vadd.f32 %v1267, %v1268
    %v1270 = vsel %vm112, %v1048, 0.0
    %v1271 = vadd.f32 %v1269, %v1270
    %v1272 = vsel %vm112, %v1053, 0.0
    %v1273 = vadd.f32 %v1271, %v1272
    %v1274 = vsel %vm112, %v1056, 0.0
    %v1275 = vadd.f32 %v1273, %v1274
    %v1276 = vsel %vm112, %v1061, 0.0
    %v1277 = vadd.f32 %v1275, %v1276
    %v1278 = vsel %vm112, %v1064, 0.0
    %v1279 = vadd.f32 %v1277, %v1278
    %v1280 = vsel %vm112, %v1069, 0.0
    %v1281 = vadd.f32 %v1279, %v1280
    %v1282 = vsel %vm112, %v1072, 0.0
    %v1283 = vadd.f32 %v1281, %v1282
    %v1284 = vsel %vm112, %v1077, 0.0
    %v1285 = vadd.f32 %v1283, %v1284
    %v1286 = vsel %vm112, %v1080, 0.0
    %v1287 = vadd.f32 %v1285, %v1286
    %v1288 = vsel %vm112, %v1085, 0.0
    %v1289 = vadd.f32 %v1287, %v1288
    %v1290 = vsel %vm112, %v1088, 0.0
    %v1291 = vadd.f32 %v1289, %v1290
    %v1292 = vsel %vm112, %v1093, 0.0
    %v1293 = vadd.f32 %v1291, %v1292
    %v1294 = vsel %vm112, %v1096, 0.0
    %v1295 = vadd.f32 %v1293, %v1294
    %v1296 = vsel %vm112, %v1101, 0.0
    %v1297 = vadd.f32 %v1295, %v1296
    %v1298 = vsel %vm112, %v1104, 0.0
    %v1299 = vadd.f32 %v1297, %v1298
    %v1300 = vsel %vm112, %v1109, 0.0
    %v1301 = vadd.f32 %v1299, %v1300
    %v1302 = vsel %vm112, %v1112, 0.0
    %v1303 = vadd.f32 %v1301, %v1302
    %v1304 = vsel %vm112, %v1117, 0.0
    %v1305 = vadd.f32 %v1303, %v1304
    %v1306 = vsel %vm112, %v1120, 0.0
    %v1307 = vadd.f32 %v1305, %v1306
    %v1308 = vsel %vm112, %v1125, 0.0
    %v1309 = vadd.f32 %v1307, %v1308
    %v1310 = vsel %vm112, %v1128, 0.0
    %v1311 = vadd.f32 %v1309, %v1310
    %v1312 = vsel %vm112, %v1133, 0.0
    %v1313 = vadd.f32 %v1311, %v1312
    %v1314 = vsel %vm112, %v1136, 0.0
    %v1315 = vadd.f32 %v1313, %v1314
    %v1316 = vsel %vm112, %v1141, 0.0
    %v1317 = vadd.f32 %v1315, %v1316
    %v1318 = vsel %vm112, %v1144, 0.0
    %v1319 = vadd.f32 %v1317, %v1318
    %v1320 = vsel %vm112, %v1149, 0.0
    %v1321 = vadd.f32 %v1319, %v1320
    %v1322 = vsel %vm112, %v1152, 0.0
    %v1323 = vadd.f32 %v1321, %v1322
    %v1324 = vsel %vm112, %v1157, 0.0
    %v1325 = vadd.f32 %v1323, %v1324
    %v1326 = vsel %vm112, %v1160, 0.0
    %v1327 = vadd.f32 %v1325, %v1326
    %v1328 = vsel %vm112, %v1165, 0.0
    %v1329 = vadd.f32 %v1327, %v1328
    %v1330 = vsel %vm112, %v1168, 0.0
    %v1331 = vadd.f32 %v1329, %v1330
    %v1332 = vsel %vm112, %v1173, 0.0
    %v1333 = vadd.f32 %v1331, %v1332
    %v1334 = vsel %vm112, %v1176, 0.0
    %v1335 = vadd.f32 %v1333, %v1334
    %v1336 = vsel %vm112, %v1181, 0.0
    %v1337 = vadd.f32 %v1335, %v1336
    %v1338 = vsel %vm112, %v1184, 0.0
    %v1339 = vadd.f32 %v1337, %v1338
    %v1340 = vsel %vm112, %v1189, 0.0
    %v1341 = vadd.f32 %v1339, %v1340
    %v1342 = vsel %vm112, %v1192, 0.0
    %v1343 = vadd.f32 %v1341, %v1342
    %v1344 = vsel %vm112, %v1197, 0.0
    %v1345 = vadd.f32 %v1343, %v1344
    %v1346 = vsel %vm112, %v1200, 0.0
    %v1347 = vadd.f32 %v1345, %v1346
    %v1348 = vsel %vm112, %v1205, 0.0
    %v1349 = vadd.f32 %v1347, %v1348
    %v1350 = vsel %vm112, %v1208, 0.0
    %v1351 = vadd.f32 %v1349, %v1350
    %v1352 = vsel %vm112, %v1213, 0.0
    %v1353 = vadd.f32 %v1351, %v1352
    %v1354 = vsel %vm112, %v1216, 0.0
    %v1355 = vadd.f32 %v1353, %v1354
    %v1356 = vsel %vm112, %v1221, 0.0
    %v1357 = vadd.f32 %v1355, %v1356
    %v1358 = vsel %vm112, %v1224, 0.0
    %v1359 = vadd.f32 %v1357, %v1358
    %v1360 = vsel %vm112, %v1229, 0.0
    %v1361 = vadd.f32 %v1359, %v1360
    %v1362 = vsel %vm112, %v1232, 0.0
    %v1363 = vadd.f32 %v1361, %v1362
    %v1364 = vrot.slane %v1363, 4
    %v1365 = vadd.f32 %v1363, %v1364
    %v1366 = vrot.slane %v1365, 2
    %v1367 = vadd.f32 %v1365, %v1366
    %v1368 = vrot.slane %v1367, 1
    %v1369 = vadd.f32 %v1367, %v1368
    %v1370 = vmul.f32 %v1369, 0.001953125
    %v1371 = vsub.f32 %v981, %v1370
    %v1372 = vsub.f32 %v984, %v1370
    %v1373 = vsub.f32 %v989, %v1370
    %v1374 = vsub.f32 %v992, %v1370
    %v1375 = vsub.f32 %v997, %v1370
    %v1376 = vsub.f32 %v1000, %v1370
    %v1377 = vsub.f32 %v1005, %v1370
    %v1378 = vsub.f32 %v1008, %v1370
    %v1379 = vsub.f32 %v1013, %v1370
    %v1380 = vsub.f32 %v1016, %v1370
    %v1381 = vsub.f32 %v1021, %v1370
    %v1382 = vsub.f32 %v1024, %v1370
    %v1383 = vsub.f32 %v1029, %v1370
    %v1384 = vsub.f32 %v1032, %v1370
    %v1385 = vsub.f32 %v1037, %v1370
    %v1386 = vsub.f32 %v1040, %v1370
    %v1387 = vsub.f32 %v1045, %v1370
    %v1388 = vsub.f32 %v1048, %v1370
    %v1389 = vsub.f32 %v1053, %v1370
    %v1390 = vsub.f32 %v1056, %v1370
    %v1391 = vsub.f32 %v1061, %v1370
    %v1392 = vsub.f32 %v1064, %v1370
    %v1393 = vsub.f32 %v1069, %v1370
    %v1394 = vsub.f32 %v1072, %v1370
    %v1395 = vsub.f32 %v1077, %v1370
    %v1396 = vsub.f32 %v1080, %v1370
    %v1397 = vsub.f32 %v1085, %v1370
    %v1398 = vsub.f32 %v1088, %v1370
    %v1399 = vsub.f32 %v1093, %v1370
    %v1400 = vsub.f32 %v1096, %v1370
    %v1401 = vsub.f32 %v1101, %v1370
    %v1402 = vsub.f32 %v1104, %v1370
    %v1403 = vsub.f32 %v1109, %v1370
    %v1404 = vsub.f32 %v1112, %v1370
    %v1405 = vsub.f32 %v1117, %v1370
    %v1406 = vsub.f32 %v1120, %v1370
    %v1407 = vsub.f32 %v1125, %v1370
    %v1408 = vsub.f32 %v1128, %v1370
    %v1409 = vsub.f32 %v1133, %v1370
    %v1410 = vsub.f32 %v1136, %v1370
    %v1411 = vsub.f32 %v1141, %v1370
    %v1412 = vsub.f32 %v1144, %v1370
    %v1413 = vsub.f32 %v1149, %v1370
    %v1414 = vsub.f32 %v1152, %v1370
    %v1415 = vsub.f32 %v1157, %v1370
    %v1416 = vsub.f32 %v1160, %v1370
    %v1417 = vsub.f32 %v1165, %v1370
    %v1418 = vsub.f32 %v1168, %v1370
    %v1419 = vsub.f32 %v1173, %v1370
    %v1420 = vsub.f32 %v1176, %v1370
    %v1421 = vsub.f32 %v1181, %v1370
    %v1422 = vsub.f32 %v1184, %v1370
    %v1423 = vsub.f32 %v1189, %v1370
    %v1424 = vsub.f32 %v1192, %v1370
    %v1425 = vsub.f32 %v1197, %v1370
    %v1426 = vsub.f32 %v1200, %v1370
    %v1427 = vsub.f32 %v1205, %v1370
    %v1428 = vsub.f32 %v1208, %v1370
    %v1429 = vsub.f32 %v1213, %v1370
    %v1430 = vsub.f32 %v1216, %v1370
    %v1431 = vsub.f32 %v1221, %v1370
    %v1432 = vsub.f32 %v1224, %v1370
    %v1433 = vsub.f32 %v1229, %v1370
    %v1434 = vsub.f32 %v1232, %v1370
    %v1435 = vmul.f32 %v1371, %v1371
    %v1436 = vmul.f32 %v1372, %v1372
    %v1437 = vmul.f32 %v1373, %v1373
    %v1438 = vmul.f32 %v1374, %v1374
    %v1439 = vmul.f32 %v1375, %v1375
    %v1440 = vmul.f32 %v1376, %v1376
    %v1441 = vmul.f32 %v1377, %v1377
    %v1442 = vmul.f32 %v1378, %v1378
    %v1443 = vmul.f32 %v1379, %v1379
    %v1444 = vmul.f32 %v1380, %v1380
    %v1445 = vmul.f32 %v1381, %v1381
    %v1446 = vmul.f32 %v1382, %v1382
    %v1447 = vmul.f32 %v1383, %v1383
    %v1448 = vmul.f32 %v1384, %v1384
    %v1449 = vmul.f32 %v1385, %v1385
    %v1450 = vmul.f32 %v1386, %v1386
    %v1451 = vmul.f32 %v1387, %v1387
    %v1452 = vmul.f32 %v1388, %v1388
    %v1453 = vmul.f32 %v1389, %v1389
    %v1454 = vmul.f32 %v1390, %v1390
    %v1455 = vmul.f32 %v1391, %v1391
    %v1456 = vmul.f32 %v1392, %v1392
    %v1457 = vmul.f32 %v1393, %v1393
    %v1458 = vmul.f32 %v1394, %v1394
    %v1459 = vmul.f32 %v1395, %v1395
    %v1460 = vmul.f32 %v1396, %v1396
    %v1461 = vmul.f32 %v1397, %v1397
    %v1462 = vmul.f32 %v1398, %v1398
    %v1463 = vmul.f32 %v1399, %v1399
    %v1464 = vmul.f32 %v1400, %v1400
    %v1465 = vmul.f32 %v1401, %v1401
    %v1466 = vmul.f32 %v1402, %v1402
    %v1467 = vmul.f32 %v1403, %v1403
    %v1468 = vmul.f32 %v1404, %v1404
    %v1469 = vmul.f32 %v1405, %v1405
    %v1470 = vmul.f32 %v1406, %v1406
    %v1471 = vmul.f32 %v1407, %v1407
    %v1472 = vmul.f32 %v1408, %v1408
    %v1473 = vmul.f32 %v1409, %v1409
    %v1474 = vmul.f32 %v1410, %v1410
    %v1475 = vmul.f32 %v1411, %v1411
    %v1476 = vmul.f32 %v1412, %v1412
    %v1477 = vmul.f32 %v1413, %v1413
    %v1478 = vmul.f32 %v1414, %v1414
    %v1479 = vmul.f32 %v1415, %v1415
    %v1480 = vmul.f32 %v1416, %v1416
    %v1481 = vmul.f32 %v1417, %v1417
    %v1482 = vmul.f32 %v1418, %v1418
    %v1483 = vmul.f32 %v1419, %v1419
    %v1484 = vmul.f32 %v1420, %v1420
    %v1485 = vmul.f32 %v1421, %v1421
    %v1486 = vmul.f32 %v1422, %v1422
    %v1487 = vmul.f32 %v1423, %v1423
    %v1488 = vmul.f32 %v1424, %v1424
    %v1489 = vmul.f32 %v1425, %v1425
    %v1490 = vmul.f32 %v1426, %v1426
    %v1491 = vmul.f32 %v1427, %v1427
    %v1492 = vmul.f32 %v1428, %v1428
    %v1493 = vmul.f32 %v1429, %v1429
    %v1494 = vmul.f32 %v1430, %v1430
    %v1495 = vmul.f32 %v1431, %v1431
    %v1496 = vmul.f32 %v1432, %v1432
    %v1497 = vmul.f32 %v1433, %v1433
    %v1498 = vmul.f32 %v1434, %v1434
    %v1499 = vsel %vm112, %v1435, 0.0
    %v1500 = vsel %vm112, %v1436, 0.0
    %v1501 = vadd.f32 %v1499, %v1500
    %v1502 = vsel %vm112, %v1437, 0.0
    %v1503 = vadd.f32 %v1501, %v1502
    %v1504 = vsel %vm112, %v1438, 0.0
    %v1505 = vadd.f32 %v1503, %v1504
    %v1506 = vsel %vm112, %v1439, 0.0
    %v1507 = vadd.f32 %v1505, %v1506
    %v1508 = vsel %vm112, %v1440, 0.0
    %v1509 = vadd.f32 %v1507, %v1508
    %v1510 = vsel %vm112, %v1441, 0.0
    %v1511 = vadd.f32 %v1509, %v1510
    %v1512 = vsel %vm112, %v1442, 0.0
    %v1513 = vadd.f32 %v1511, %v1512
    %v1514 = vsel %vm112, %v1443, 0.0
    %v1515 = vadd.f32 %v1513, %v1514
    %v1516 = vsel %vm112, %v1444, 0.0
    %v1517 = vadd.f32 %v1515, %v1516
    %v1518 = vsel %vm112, %v1445, 0.0
    %v1519 = vadd.f32 %v1517, %v1518
    %v1520 = vsel %vm112, %v1446, 0.0
    %v1521 = vadd.f32 %v1519, %v1520
    %v1522 = vsel %vm112, %v1447, 0.0
    %v1523 = vadd.f32 %v1521, %v1522
    %v1524 = vsel %vm112, %v1448, 0.0
    %v1525 = vadd.f32 %v1523, %v1524
    %v1526 = vsel %vm112, %v1449, 0.0
    %v1527 = vadd.f32 %v1525, %v1526
    %v1528 = vsel %vm112, %v1450, 0.0
    %v1529 = vadd.f32 %v1527, %v1528
    %v1530 = vsel %vm112, %v1451, 0.0
    %v1531 = vadd.f32 %v1529, %v1530
    %v1532 = vsel %vm112, %v1452, 0.0
    %v1533 = vadd.f32 %v1531, %v1532
    %v1534 = vsel %vm112, %v1453, 0.0
    %v1535 = vadd.f32 %v1533, %v1534
    %v1536 = vsel %vm112, %v1454, 0.0
    %v1537 = vadd.f32 %v1535, %v1536
    %v1538 = vsel %vm112, %v1455, 0.0
    %v1539 = vadd.f32 %v1537, %v1538
    %v1540 = vsel %vm112, %v1456, 0.0
    %v1541 = vadd.f32 %v1539, %v1540
    %v1542 = vsel %vm112, %v1457, 0.0
    %v1543 = vadd.f32 %v1541, %v1542
    %v1544 = vsel %vm112, %v1458, 0.0
    %v1545 = vadd.f32 %v1543, %v1544
    %v1546 = vsel %vm112, %v1459, 0.0
    %v1547 = vadd.f32 %v1545, %v1546
    %v1548 = vsel %vm112, %v1460, 0.0
    %v1549 = vadd.f32 %v1547, %v1548
    %v1550 = vsel %vm112, %v1461, 0.0
    %v1551 = vadd.f32 %v1549, %v1550
    %v1552 = vsel %vm112, %v1462, 0.0
    %v1553 = vadd.f32 %v1551, %v1552
    %v1554 = vsel %vm112, %v1463, 0.0
    %v1555 = vadd.f32 %v1553, %v1554
    %v1556 = vsel %vm112, %v1464, 0.0
    %v1557 = vadd.f32 %v1555, %v1556
    %v1558 = vsel %vm112, %v1465, 0.0
    %v1559 = vadd.f32 %v1557, %v1558
    %v1560 = vsel %vm112, %v1466, 0.0
    %v1561 = vadd.f32 %v1559, %v1560
    %v1562 = vsel %vm112, %v1467, 0.0
    %v1563 = vadd.f32 %v1561, %v1562
    %v1564 = vsel %vm112, %v1468, 0.0
    %v1565 = vadd.f32 %v1563, %v1564
    %v1566 = vsel %vm112, %v1469, 0.0
    %v1567 = vadd.f32 %v1565, %v1566
    %v1568 = vsel %vm112, %v1470, 0.0
    %v1569 = vadd.f32 %v1567, %v1568
    %v1570 = vsel %vm112, %v1471, 0.0
    %v1571 = vadd.f32 %v1569, %v1570
    %v1572 = vsel %vm112, %v1472, 0.0
    %v1573 = vadd.f32 %v1571, %v1572
    %v1574 = vsel %vm112, %v1473, 0.0
    %v1575 = vadd.f32 %v1573, %v1574
    %v1576 = vsel %vm112, %v1474, 0.0
    %v1577 = vadd.f32 %v1575, %v1576
    %v1578 = vsel %vm112, %v1475, 0.0
    %v1579 = vadd.f32 %v1577, %v1578
    %v1580 = vsel %vm112, %v1476, 0.0
    %v1581 = vadd.f32 %v1579, %v1580
    %v1582 = vsel %vm112, %v1477, 0.0
    %v1583 = vadd.f32 %v1581, %v1582
    %v1584 = vsel %vm112, %v1478, 0.0
    %v1585 = vadd.f32 %v1583, %v1584
    %v1586 = vsel %vm112, %v1479, 0.0
    %v1587 = vadd.f32 %v1585, %v1586
    %v1588 = vsel %vm112, %v1480, 0.0
    %v1589 = vadd.f32 %v1587, %v1588
    %v1590 = vsel %vm112, %v1481, 0.0
    %v1591 = vadd.f32 %v1589, %v1590
    %v1592 = vsel %vm112, %v1482, 0.0
    %v1593 = vadd.f32 %v1591, %v1592
    %v1594 = vsel %vm112, %v1483, 0.0
    %v1595 = vadd.f32 %v1593, %v1594
    %v1596 = vsel %vm112, %v1484, 0.0
    %v1597 = vadd.f32 %v1595, %v1596
    %v1598 = vsel %vm112, %v1485, 0.0
    %v1599 = vadd.f32 %v1597, %v1598
    %v1600 = vsel %vm112, %v1486, 0.0
    %v1601 = vadd.f32 %v1599, %v1600
    %v1602 = vsel %vm112, %v1487, 0.0
    %v1603 = vadd.f32 %v1601, %v1602
    %v1604 = vsel %vm112, %v1488, 0.0
    %v1605 = vadd.f32 %v1603, %v1604
    %v1606 = vsel %vm112, %v1489, 0.0
    %v1607 = vadd.f32 %v1605, %v1606
    %v1608 = vsel %vm112, %v1490, 0.0
    %v1609 = vadd.f32 %v1607, %v1608
    %v1610 = vsel %vm112, %v1491, 0.0
    %v1611 = vadd.f32 %v1609, %v1610
    %v1612 = vsel %vm112, %v1492, 0.0
    %v1613 = vadd.f32 %v1611, %v1612
    %v1614 = vsel %vm112, %v1493, 0.0
    %v1615 = vadd.f32 %v1613, %v1614
    %v1616 = vsel %vm112, %v1494, 0.0
    %v1617 = vadd.f32 %v1615, %v1616
    %v1618 = vsel %vm112, %v1495, 0.0
    %v1619 = vadd.f32 %v1617, %v1618
    %v1620 = vsel %vm112, %v1496, 0.0
    %v1621 = vadd.f32 %v1619, %v1620
    %v1622 = vsel %vm112, %v1497, 0.0
    %v1623 = vadd.f32 %v1621, %v1622
    %v1624 = vsel %vm112, %v1498, 0.0
    %v1625 = vadd.f32 %v1623, %v1624
    %v1626 = vrot.slane %v1625, 4
    %v1627 = vadd.f32 %v1625, %v1626
    %v1628 = vrot.slane %v1627, 2
    %v1629 = vadd.f32 %v1627, %v1628
    %v1630 = vrot.slane %v1629, 1
    %v1631 = vadd.f32 %v1629, %v1630
    %v1632 = vmul.f32 %v1631, 0.001953125
    %v1633 = vadd.f32 %v1632, 1e-05
    %v1634 = vrsqrt.pop %v1633
    %v1635 = vmul.f32 %v1371, %v1634
    %v1636 = vmul.f32 %v1372, %v1634
    %v1637 = vmul.f32 %v1373, %v1634
    %v1638 = vmul.f32 %v1374, %v1634
    %v1639 = vmul.f32 %v1375, %v1634
    %v1640 = vmul.f32 %v1376, %v1634
    %v1641 = vmul.f32 %v1377, %v1634
    %v1642 = vmul.f32 %v1378, %v1634
    %v1643 = vmul.f32 %v1379, %v1634
    %v1644 = vmul.f32 %v1380, %v1634
    %v1645 = vmul.f32 %v1381, %v1634
    %v1646 = vmul.f32 %v1382, %v1634
    %v1647 = vmul.f32 %v1383, %v1634
    %v1648 = vmul.f32 %v1384, %v1634
    %v1649 = vmul.f32 %v1385, %v1634
    %v1650 = vmul.f32 %v1386, %v1634
    %v1651 = vmul.f32 %v1387, %v1634
    %v1652 = vmul.f32 %v1388, %v1634
    %v1653 = vmul.f32 %v1389, %v1634
    %v1654 = vmul.f32 %v1390, %v1634
    %v1655 = vmul.f32 %v1391, %v1634
    %v1656 = vmul.f32 %v1392, %v1634
    %v1657 = vmul.f32 %v1393, %v1634
    %v1658 = vmul.f32 %v1394, %v1634
    %v1659 = vmul.f32 %v1395, %v1634
    %v1660 = vmul.f32 %v1396, %v1634
    %v1661 = vmul.f32 %v1397, %v1634
    %v1662 = vmul.f32 %v1398, %v1634
    %v1663 = vmul.f32 %v1399, %v1634
    %v1664 = vmul.f32 %v1400, %v1634
    %v1665 = vmul.f32 %v1401, %v1634
    %v1666 = vmul.f32 %v1402, %v1634
    %v1667 = vmul.f32 %v1403, %v1634
    %v1668 = vmul.f32 %v1404, %v1634
    %v1669 = vmul.f32 %v1405, %v1634
    %v1670 = vmul.f32 %v1406, %v1634
    %v1671 = vmul.f32 %v1407, %v1634
    %v1672 = vmul.f32 %v1408, %v1634
    %v1673 = vmul.f32 %v1409, %v1634
    %v1674 = vmul.f32 %v1410, %v1634
    %v1675 = vmul.f32 %v1411, %v1634
    %v1676 = vmul.f32 %v1412, %v1634
    %v1677 = vmul.f32 %v1413, %v1634
    %v1678 = vmul.f32 %v1414, %v1634
    %v1679 = vmul.f32 %v1415, %v1634
    %v1680 = vmul.f32 %v1416, %v1634
    %v1681 = vmul.f32 %v1417, %v1634
    %v1682 = vmul.f32 %v1418, %v1634
    %v1683 = vmul.f32 %v1419, %v1634
    %v1684 = vmul.f32 %v1420, %v1634
    %v1685 = vmul.f32 %v1421, %v1634
    %v1686 = vmul.f32 %v1422, %v1634
    %v1687 = vmul.f32 %v1423, %v1634
    %v1688 = vmul.f32 %v1424, %v1634
    %v1689 = vmul.f32 %v1425, %v1634
    %v1690 = vmul.f32 %v1426, %v1634
    %v1691 = vmul.f32 %v1427, %v1634
    %v1692 = vmul.f32 %v1428, %v1634
    %v1693 = vmul.f32 %v1429, %v1634
    %v1694 = vmul.f32 %v1430, %v1634
    %v1695 = vmul.f32 %v1431, %v1634
    %v1696 = vmul.f32 %v1432, %v1634
    %v1697 = vmul.f32 %v1433, %v1634
    %v1698 = vmul.f32 %v1434, %v1634
    %v1700 = vlaneseq
    %v1701 = vshrl.u32 %v1700, 7
    %v1702 = vsub.s32 0, %v1701
    %v1703 = vrot.slane %v1235, %v1702
    %v1705 = vmul.f32 %v1635, %v1703
    %v1706 = vmul.f32 %v1636, %v1703
    %v1707 = vmul.f32 %v1637, %v1703
    %v1708 = vmul.f32 %v1638, %v1703
    %v1709 = vmul.f32 %v1639, %v1703
    %v1710 = vmul.f32 %v1640, %v1703
    %v1711 = vmul.f32 %v1641, %v1703
    %v1712 = vmul.f32 %v1642, %v1703
    %v1713 = vmul.f32 %v1643, %v1703
    %v1714 = vmul.f32 %v1644, %v1703
    %v1715 = vmul.f32 %v1645, %v1703
    %v1716 = vmul.f32 %v1646, %v1703
    %v1717 = vmul.f32 %v1647, %v1703
    %v1718 = vmul.f32 %v1648, %v1703
    %v1719 = vmul.f32 %v1649, %v1703
    %v1720 = vmul.f32 %v1650, %v1703
    %v1721 = vmul.f32 %v1651, %v1703
    %v1722 = vmul.f32 %v1652, %v1703
    %v1723 = vmul.f32 %v1653, %v1703
    %v1724 = vmul.f32 %v1654, %v1703
    %v1725 = vmul.f32 %v1655, %v1703
    %v1726 = vmul.f32 %v1656, %v1703
    %v1727 = vmul.f32 %v1657, %v1703
    %v1728 = vmul.f32 %v1658, %v1703
    %v1729 = vmul.f32 %v1659, %v1703
    %v1730 = vmul.f32 %v1660, %v1703
    %v1731 = vmul.f32 %v1661, %v1703
    %v1732 = vmul.f32 %v1662, %v1703
    %v1733 = vmul.f32 %v1663, %v1703
    %v1734 = vmul.f32 %v1664, %v1703
    %v1735 = vmul.f32 %v1665, %v1703
    %v1736 = vmul.f32 %v1666, %v1703
    %v1737 = vmul.f32 %v1667, %v1703
    %v1738 = vmul.f32 %v1668, %v1703
    %v1739 = vmul.f32 %v1669, %v1703
    %v1740 = vmul.f32 %v1670, %v1703
    %v1741 = vmul.f32 %v1671, %v1703
    %v1742 = vmul.f32 %v1672, %v1703
    %v1743 = vmul.f32 %v1673, %v1703
    %v1744 = vmul.f32 %v1674, %v1703
    %v1745 = vmul.f32 %v1675, %v1703
    %v1746 = vmul.f32 %v1676, %v1703
    %v1747 = vmul.f32 %v1677, %v1703
    %v1748 = vmul.f32 %v1678, %v1703
    %v1749 = vmul.f32 %v1679, %v1703
    %v1750 = vmul.f32 %v1680, %v1703
    %v1751 = vmul.f32 %v1681, %v1703
    %v1752 = vmul.f32 %v1682, %v1703
    %v1753 = vmul.f32 %v1683, %v1703
    %v1754 = vmul.f32 %v1684, %v1703
    %v1755 = vmul.f32 %v1685, %v1703
    %v1756 = vmul.f32 %v1686, %v1703
    %v1757 = vmul.f32 %v1687, %v1703
    %v1758 = vmul.f32 %v1688, %v1703
    %v1759 = vmul.f32 %v1689, %v1703
    %v1760 = vmul.f32 %v1690, %v1703
    %v1761 = vmul.f32 %v1691, %v1703
    %v1762 = vmul.f32 %v1692, %v1703
    %v1763 = vmul.f32 %v1693, %v1703
    %v1764 = vmul.f32 %v1694, %v1703
    %v1765 = vmul.f32 %v1695, %v1703
    %v1766 = vmul.f32 %v1696, %v1703
    %v1767 = vmul.f32 %v1697, %v1703
    %v1768 = vmul.f32 %v1698, %v1703
    %v1770 = vlaneseq
    %v1771 = vshrl.u32 %v1770, 7
    %v1772 = vsub.s32 0, %v1771
    %v1773 = vrot.slane %v1236, %v1772
    %v1775 = vadd.f32 %v1705, %v1773
    %v1776 = vadd.f32 %v1706, %v1773
    %v1777 = vadd.f32 %v1707, %v1773
    %v1778 = vadd.f32 %v1708, %v1773
    %v1779 = vadd.f32 %v1709, %v1773
    %v1780 = vadd.f32 %v1710, %v1773
    %v1781 = vadd.f32 %v1711, %v1773
    %v1782 = vadd.f32 %v1712, %v1773
    %v1783 = vadd.f32 %v1713, %v1773
    %v1784 = vadd.f32 %v1714, %v1773
    %v1785 = vadd.f32 %v1715, %v1773
    %v1786 = vadd.f32 %v1716, %v1773
    %v1787 = vadd.f32 %v1717, %v1773
    %v1788 = vadd.f32 %v1718, %v1773
    %v1789 = vadd.f32 %v1719, %v1773
    %v1790 = vadd.f32 %v1720, %v1773
    %v1791 = vadd.f32 %v1721, %v1773
    %v1792 = vadd.f32 %v1722, %v1773
    %v1793 = vadd.f32 %v1723, %v1773
    %v1794 = vadd.f32 %v1724, %v1773
    %v1795 = vadd.f32 %v1725, %v1773
    %v1796 = vadd.f32 %v1726, %v1773
    %v1797 = vadd.f32 %v1727, %v1773
    %v1798 = vadd.f32 %v1728, %v1773
    %v1799 = vadd.f32 %v1729, %v1773
    %v1800 = vadd.f32 %v1730, %v1773
    %v1801 = vadd.f32 %v1731, %v1773
    %v1802 = vadd.f32 %v1732, %v1773
    %v1803 = vadd.f32 %v1733, %v1773
    %v1804 = vadd.f32 %v1734, %v1773
    %v1805 = vadd.f32 %v1735, %v1773
    %v1806 = vadd.f32 %v1736, %v1773
    %v1807 = vadd.f32 %v1737, %v1773
    %v1808 = vadd.f32 %v1738, %v1773
    %v1809 = vadd.f32 %v1739, %v1773
    %v1810 = vadd.f32 %v1740, %v1773
    %v1811 = vadd.f32 %v1741, %v1773
    %v1812 = vadd.f32 %v1742, %v1773
    %v1813 = vadd.f32 %v1743, %v1773
    %v1814 = vadd.f32 %v1744, %v1773
    %v1815 = vadd.f32 %v1745, %v1773
    %v1816 = vadd.f32 %v1746, %v1773
    %v1817 = vadd.f32 %v1747, %v1773
    %v1818 = vadd.f32 %v1748, %v1773
    %v1819 = vadd.f32 %v1749, %v1773
    %v1820 = vadd.f32 %v1750, %v1773
    %v1821 = vadd.f32 %v1751, %v1773
    %v1822 = vadd.f32 %v1752, %v1773
    %v1823 = vadd.f32 %v1753, %v1773
    %v1824 = vadd.f32 %v1754, %v1773
    %v1825 = vadd.f32 %v1755, %v1773
    %v1826 = vadd.f32 %v1756, %v1773
    %v1827 = vadd.f32 %v1757, %v1773
    %v1828 = vadd.f32 %v1758, %v1773
    %v1829 = vadd.f32 %v1759, %v1773
    %v1830 = vadd.f32 %v1760, %v1773
    %v1831 = vadd.f32 %v1761, %v1773
    %v1832 = vadd.f32 %v1762, %v1773
    %v1833 = vadd.f32 %v1763, %v1773
    %v1834 = vadd.f32 %v1764, %v1773
    %v1835 = vadd.f32 %v1765, %v1773
    %v1836 = vadd.f32 %v1766, %v1773
    %v1837 = vadd.f32 %v1767, %v1773
    %v1838 = vadd.f32 %v1768, %v1773
    %v1839 = vmax.f32 %v1775, 0.0
    %v1840 = vmax.f32 %v1776, 0.0
    %v1841 = vmax.f32 %v1777, 0.0
    %v1842 = vmax.f32 %v1778, 0.0
    %v1843 = vmax.f32 %v1779, 0.0
    %v1844 = vmax.f32 %v1780, 0.0
    %v1845 = vmax.f32 %v1781, 0.0
    %v1846 = vmax.f32 %v1782, 0.0
    %v1847 = vmax.f32 %v1783, 0.0
    %v1848 = vmax.f32 %v1784, 0.0
    %v1849 = vmax.f32 %v1785, 0.0
    %v1850 = vmax.f32 %v1786, 0.0
    %v1851 = vmax.f32 %v1787, 0.0
    %v1852 = vmax.f32 %v1788, 0.0
    %v1853 = vmax.f32 %v1789, 0.0
    %v1854 = vmax.f32 %v1790, 0.0
    %v1855 = vmax.f32 %v1791, 0.0
    %v1856 = vmax.f32 %v1792, 0.0
    %v1857 = vmax.f32 %v1793, 0.0
    %v1858 = vmax.f32 %v1794, 0.0
    %v1859 = vmax.f32 %v1795, 0.0
    %v1860 = vmax.f32 %v1796, 0.0
    %v1861 = vmax.f32 %v1797, 0.0
    %v1862 = vmax.f32 %v1798, 0.0
    %v1863 = vmax.f32 %v1799, 0.0
    %v1864 = vmax.f32 %v1800, 0.0
    %v1865 = vmax.f32 %v1801, 0.0
    %v1866 = vmax.f32 %v1802, 0.0
    %v1867 = vmax.f32 %v1803, 0.0
    %v1868 = vmax.f32 %v1804, 0.0
    %v1869 = vmax.f32 %v1805, 0.0
    %v1870 = vmax.f32 %v1806, 0.0
    %v1871 = vmax.f32 %v1807, 0.0
    %v1872 = vmax.f32 %v1808, 0.0
    %v1873 = vmax.f32 %v1809, 0.0
    %v1874 = vmax.f32 %v1810, 0.0
    %v1875 = vmax.f32 %v1811, 0.0
    %v1876 = vmax.f32 %v1812, 0.0
    %v1877 = vmax.f32 %v1813, 0.0
    %v1878 = vmax.f32 %v1814, 0.0
    %v1879 = vmax.f32 %v1815, 0.0
    %v1880 = vmax.f32 %v1816, 0.0
    %v1881 = vmax.f32 %v1817, 0.0
    %v1882 = vmax.f32 %v1818, 0.0
    %v1883 = vmax.f32 %v1819, 0.0
    %v1884 = vmax.f32 %v1820, 0.0
    %v1885 = vmax.f32 %v1821, 0.0
    %v1886 = vmax.f32 %v1822, 0.0
    %v1887 = vmax.f32 %v1823, 0.0
    %v1888 = vmax.f32 %v1824, 0.0
    %v1889 = vmax.f32 %v1825, 0.0
    %v1890 = vmax.f32 %v1826, 0.0
    %v1891 = vmax.f32 %v1827, 0.0
    %v1892 = vmax.f32 %v1828, 0.0
    %v1893 = vmax.f32 %v1829, 0.0
    %v1894 = vmax.f32 %v1830, 0.0
    %v1895 = vmax.f32 %v1831, 0.0
    %v1896 = vmax.f32 %v1832, 0.0
    %v1897 = vmax.f32 %v1833, 0.0
    %v1898 = vmax.f32 %v1834, 0.0
    %v1899 = vmax.f32 %v1835, 0.0
    %v1900 = vmax.f32 %v1836, 0.0
    %v1901 = vmax.f32 %v1837, 0.0
    %v1902 = vmax.f32 %v1838, 0.0
    %v1903 = vpack.c.bf16 %v1840, %v1839
    %v1904 = vpack.c.bf16 %v1842, %v1841
    %v1905 = vpack.c.bf16 %v1844, %v1843
    %v1906 = vpack.c.bf16 %v1846, %v1845
    %v1907 = vpack.c.bf16 %v1848, %v1847
    %v1908 = vpack.c.bf16 %v1850, %v1849
    %v1909 = vpack.c.bf16 %v1852, %v1851
    %v1910 = vpack.c.bf16 %v1854, %v1853
    %v1911 = vpack.c.bf16 %v1856, %v1855
    %v1912 = vpack.c.bf16 %v1858, %v1857
    %v1913 = vpack.c.bf16 %v1860, %v1859
    %v1914 = vpack.c.bf16 %v1862, %v1861
    %v1915 = vpack.c.bf16 %v1864, %v1863
    %v1916 = vpack.c.bf16 %v1866, %v1865
    %v1917 = vpack.c.bf16 %v1868, %v1867
    %v1918 = vpack.c.bf16 %v1870, %v1869
    %v1919 = vpack.c.bf16 %v1872, %v1871
    %v1920 = vpack.c.bf16 %v1874, %v1873
    %v1921 = vpack.c.bf16 %v1876, %v1875
    %v1922 = vpack.c.bf16 %v1878, %v1877
    %v1923 = vpack.c.bf16 %v1880, %v1879
    %v1924 = vpack.c.bf16 %v1882, %v1881
    %v1925 = vpack.c.bf16 %v1884, %v1883
    %v1926 = vpack.c.bf16 %v1886, %v1885
    %v1927 = vpack.c.bf16 %v1888, %v1887
    %v1928 = vpack.c.bf16 %v1890, %v1889
    %v1929 = vpack.c.bf16 %v1892, %v1891
    %v1930 = vpack.c.bf16 %v1894, %v1893
    %v1931 = vpack.c.bf16 %v1896, %v1895
    %v1932 = vpack.c.bf16 %v1898, %v1897
    %v1933 = vpack.c.bf16 %v1900, %v1899
    %v1934 = vpack.c.bf16 %v1902, %v1901
    %vm1935 = vcmask 519168
    %1936 = vst.msk [vmem:[#allocation2] sm:$0xf] %vm1935, 0
    %1937 = vst.msk [vmem:[#allocation2 + $0x4] sm:$0xf] %vm1935, 0
    %1938 = vst.msk [vmem:[#allocation2 + $0x8] sm:$0xf] %vm1935, 0
    %1939 = vst.msk [vmem:[#allocation2 + $0xd8] sm:$0xf] %vm1935, 0
    %1940 = vst.msk [vmem:[#allocation2 + $0xdc] sm:$0xf] %vm1935, 0
    %1941 = vst.msk [vmem:[#allocation2 + $0xe0] sm:$0xf] %vm1935, 0
    %s1942 = scalar_lea.vmem [#allocation2], 204
    %1943 = vst.msk [vmem:[%s1942] sm:$0xf] %vm1935, 0
    %1944 = vst.msk [vmem:[%s1942 + $0x4] sm:$0xf] %vm1935, 0
    %1945 = vst.msk [vmem:[%s1942 + $0x8] sm:$0xf] %vm1935, 0
    %1946 = vst.msk [vmem:[%s1942 + $0xd8] sm:$0xf] %vm1935, 0
    %1947 = vst.msk [vmem:[%s1942 + $0xdc] sm:$0xf] %vm1935, 0
    %1948 = vst.msk [vmem:[%s1942 + $0xe0] sm:$0xf] %vm1935, 0
    %s1949 = scalar_lea.vmem [#allocation2], 12
    %vm1950 = vcmask 516096
    %vm1951 = vsmask.f32 256
    %vm1952 = vmand %vm1950, %vm1951
    %v1953 = vld [vmem:[%s1949] sm:$0x1]
    %v1954 = vsel %vm1952, 0, %v1953
    %1955 = vst [vmem:[%s1949] sm:$0x1] %v1954
    %v1956 = vld [vmem:[%s1949 + $0xc] sm:$0x1]
    %v1957 = vsel %vm1952, 0, %v1956
    %1958 = vst [vmem:[%s1949 + $0xc] sm:$0x1] %v1957
    %v1959 = vld [vmem:[%s1949 + $0x18] sm:$0x1]
    %v1960 = vsel %vm1952, 0, %v1959
    %1961 = vst [vmem:[%s1949 + $0x18] sm:$0x1] %v1960
    %v1962 = vld [vmem:[%s1949 + $0x24] sm:$0x1]
    %v1963 = vsel %vm1952, 0, %v1962
    %1964 = vst [vmem:[%s1949 + $0x24] sm:$0x1] %v1963
    %v1965 = vld [vmem:[%s1949 + $0x30] sm:$0x1]
    %v1966 = vsel %vm1952, 0, %v1965
    %1967 = vst [vmem:[%s1949 + $0x30] sm:$0x1] %v1966
    %v1968 = vld [vmem:[%s1949 + $0x3c] sm:$0x1]
    %v1969 = vsel %vm1952, 0, %v1968
    %1970 = vst [vmem:[%s1949 + $0x3c] sm:$0x1] %v1969
    %v1971 = vld [vmem:[%s1949 + $0x48] sm:$0x1]
    %v1972 = vsel %vm1952, 0, %v1971
    %1973 = vst [vmem:[%s1949 + $0x48] sm:$0x1] %v1972
    %v1974 = vld [vmem:[%s1949 + $0x54] sm:$0x1]
    %v1975 = vsel %vm1952, 0, %v1974
    %1976 = vst [vmem:[%s1949 + $0x54] sm:$0x1] %v1975
    %v1977 = vld [vmem:[%s1949 + $0x60] sm:$0x1]
    %v1978 = vsel %vm1952, 0, %v1977
    %1979 = vst [vmem:[%s1949 + $0x60] sm:$0x1] %v1978
    %v1980 = vld [vmem:[%s1949 + $0x6c] sm:$0x1]
    %v1981 = vsel %vm1952, 0, %v1980
    %1982 = vst [vmem:[%s1949 + $0x6c] sm:$0x1] %v1981
    %v1983 = vld [vmem:[%s1949 + $0x78] sm:$0x1]
    %v1984 = vsel %vm1952, 0, %v1983
    %1985 = vst [vmem:[%s1949 + $0x78] sm:$0x1] %v1984
    %v1986 = vld [vmem:[%s1949 + $0x84] sm:$0x1]
    %v1987 = vsel %vm1952, 0, %v1986
    %1988 = vst [vmem:[%s1949 + $0x84] sm:$0x1] %v1987
    %v1989 = vld [vmem:[%s1949 + $0x90] sm:$0x1]
    %v1990 = vsel %vm1952, 0, %v1989
    %1991 = vst [vmem:[%s1949 + $0x90] sm:$0x1] %v1990
    %v1992 = vld [vmem:[%s1949 + $0x9c] sm:$0x1]
    %v1993 = vsel %vm1952, 0, %v1992
    %1994 = vst [vmem:[%s1949 + $0x9c] sm:$0x1] %v1993
    %v1995 = vld [vmem:[%s1949 + $0xa8] sm:$0x1]
    %v1996 = vsel %vm1952, 0, %v1995
    %1997 = vst [vmem:[%s1949 + $0xa8] sm:$0x1] %v1996
    %v1998 = vld [vmem:[%s1949 + $0xb4] sm:$0x1]
    %v1999 = vsel %vm1952, 0, %v1998
    %2000 = vst [vmem:[%s1949 + $0xb4] sm:$0x1] %v1999
    %v2001 = vld [vmem:[%s1949 + $0xd8] sm:$0x1]
    %v2002 = vsel %vm1952, 0, %v2001
    %2003 = vst [vmem:[%s1949 + $0xd8] sm:$0x1] %v2002
    %v2004 = vld [vmem:[%s1949 + $0xe4] sm:$0x1]
    %v2005 = vsel %vm1952, 0, %v2004
    %2006 = vst [vmem:[%s1949 + $0xe4] sm:$0x1] %v2005
    %v2007 = vld [vmem:[%s1949 + $0xf0] sm:$0x1]
    %v2008 = vsel %vm1952, 0, %v2007
    %2009 = vst [vmem:[%s1949 + $0xf0] sm:$0x1] %v2008
    %v2010 = vld [vmem:[%s1949 + $0xfc] sm:$0x1]
    %v2011 = vsel %vm1952, 0, %v2010
    %2012 = vst [vmem:[%s1949 + $0xfc] sm:$0x1] %v2011
    %v2013 = vld [vmem:[%s1949 + $0x108] sm:$0x1]
    %v2014 = vsel %vm1952, 0, %v2013
    %2015 = vst [vmem:[%s1949 + $0x108] sm:$0x1] %v2014
    %v2016 = vld [vmem:[%s1949 + $0x114] sm:$0x1]
    %v2017 = vsel %vm1952, 0, %v2016
    %2018 = vst [vmem:[%s1949 + $0x114] sm:$0x1] %v2017
    %v2019 = vld [vmem:[%s1949 + $0x120] sm:$0x1]
    %v2020 = vsel %vm1952, 0, %v2019
    %2021 = vst [vmem:[%s1949 + $0x120] sm:$0x1] %v2020
    %v2022 = vld [vmem:[%s1949 + $0x12c] sm:$0x1]
    %v2023 = vsel %vm1952, 0, %v2022
    %2024 = vst [vmem:[%s1949 + $0x12c] sm:$0x1] %v2023
    %v2025 = vld [vmem:[%s1949 + $0x138] sm:$0x1]
    %v2026 = vsel %vm1952, 0, %v2025
    %2027 = vst [vmem:[%s1949 + $0x138] sm:$0x1] %v2026
    %v2028 = vld [vmem:[%s1949 + $0x144] sm:$0x1]
    %v2029 = vsel %vm1952, 0, %v2028
    %2030 = vst [vmem:[%s1949 + $0x144] sm:$0x1] %v2029
    %v2031 = vld [vmem:[%s1949 + $0x150] sm:$0x1]
    %v2032 = vsel %vm1952, 0, %v2031
    %2033 = vst [vmem:[%s1949 + $0x150] sm:$0x1] %v2032
    %v2034 = vld [vmem:[%s1949 + $0x15c] sm:$0x1]
    %v2035 = vsel %vm1952, 0, %v2034
    %2036 = vst [vmem:[%s1949 + $0x15c] sm:$0x1] %v2035
    %v2037 = vld [vmem:[%s1949 + $0x168] sm:$0x1]
    %v2038 = vsel %vm1952, 0, %v2037
    %2039 = vst [vmem:[%s1949 + $0x168] sm:$0x1] %v2038
    %v2040 = vld [vmem:[%s1949 + $0x174] sm:$0x1]
    %v2041 = vsel %vm1952, 0, %v2040
    %2042 = vst [vmem:[%s1949 + $0x174] sm:$0x1] %v2041
    %v2043 = vld [vmem:[%s1949 + $0x180] sm:$0x1]
    %v2044 = vsel %vm1952, 0, %v2043
    %2045 = vst [vmem:[%s1949 + $0x180] sm:$0x1] %v2044
    %v2046 = vld [vmem:[%s1949 + $0x18c] sm:$0x1]
    %v2047 = vsel %vm1952, 0, %v2046
    %2048 = vst [vmem:[%s1949 + $0x18c] sm:$0x1] %v2047
    %vm2049 = vsmask.f32 7938
    %vm2050 = vmand %vm1950, %vm2049
    %v2051 = vld [vmem:[%s1949 + $0x8] sm:$0x1]
    %v2052 = vsel %vm2050, 0, %v2051
    %2053 = vst [vmem:[%s1949 + $0x8] sm:$0x1] %v2052
    %v2054 = vld [vmem:[%s1949 + $0x14] sm:$0x1]
    %v2055 = vsel %vm2050, 0, %v2054
    %2056 = vst [vmem:[%s1949 + $0x14] sm:$0x1] %v2055
    %v2057 = vld [vmem:[%s1949 + $0x20] sm:$0x1]
    %v2058 = vsel %vm2050, 0, %v2057
    %2059 = vst [vmem:[%s1949 + $0x20] sm:$0x1] %v2058
    %v2060 = vld [vmem:[%s1949 + $0x2c] sm:$0x1]
    %v2061 = vsel %vm2050, 0, %v2060
    %2062 = vst [vmem:[%s1949 + $0x2c] sm:$0x1] %v2061
    %v2063 = vld [vmem:[%s1949 + $0x38] sm:$0x1]
    %v2064 = vsel %vm2050, 0, %v2063
    %2065 = vst [vmem:[%s1949 + $0x38] sm:$0x1] %v2064
    %v2066 = vld [vmem:[%s1949 + $0x44] sm:$0x1]
    %v2067 = vsel %vm2050, 0, %v2066
    %2068 = vst [vmem:[%s1949 + $0x44] sm:$0x1] %v2067
    %v2069 = vld [vmem:[%s1949 + $0x50] sm:$0x1]
    %v2070 = vsel %vm2050, 0, %v2069
    %2071 = vst [vmem:[%s1949 + $0x50] sm:$0x1] %v2070
    %v2072 = vld [vmem:[%s1949 + $0x5c] sm:$0x1]
    %v2073 = vsel %vm2050, 0, %v2072
    %2074 = vst [vmem:[%s1949 + $0x5c] sm:$0x1] %v2073
    %v2075 = vld [vmem:[%s1949 + $0x68] sm:$0x1]
    %v2076 = vsel %vm2050, 0, %v2075
    %2077 = vst [vmem:[%s1949 + $0x68] sm:$0x1] %v2076
    %v2078 = vld [vmem:[%s1949 + $0x74] sm:$0x1]
    %v2079 = vsel %vm2050, 0, %v2078
    %2080 = vst [vmem:[%s1949 + $0x74] sm:$0x1] %v2079
    %v2081 = vld [vmem:[%s1949 + $0x80] sm:$0x1]
    %v2082 = vsel %vm2050, 0, %v2081
    %2083 = vst [vmem:[%s1949 + $0x80] sm:$0x1] %v2082
    %v2084 = vld [vmem:[%s1949 + $0x8c] sm:$0x1]
    %v2085 = vsel %vm2050, 0, %v2084
    %2086 = vst [vmem:[%s1949 + $0x8c] sm:$0x1] %v2085
    %v2087 = vld [vmem:[%s1949 + $0x98] sm:$0x1]
    %v2088 = vsel %vm2050, 0, %v2087
    %2089 = vst [vmem:[%s1949 + $0x98] sm:$0x1] %v2088
    %v2090 = vld [vmem:[%s1949 + $0xa4] sm:$0x1]
    %v2091 = vsel %vm2050, 0, %v2090
    %2092 = vst [vmem:[%s1949 + $0xa4] sm:$0x1] %v2091
    %v2093 = vld [vmem:[%s1949 + $0xb0] sm:$0x1]
    %v2094 = vsel %vm2050, 0, %v2093
    %2095 = vst [vmem:[%s1949 + $0xb0] sm:$0x1] %v2094
    %v2096 = vld [vmem:[%s1949 + $0xbc] sm:$0x1]
    %v2097 = vsel %vm2050, 0, %v2096
    %2098 = vst [vmem:[%s1949 + $0xbc] sm:$0x1] %v2097
    %v2099 = vld [vmem:[%s1949 + $0xe0] sm:$0x1]
    %v2100 = vsel %vm2050, 0, %v2099
    %2101 = vst [vmem:[%s1949 + $0xe0] sm:$0x1] %v2100
    %v2102 = vld [vmem:[%s1949 + $0xec] sm:$0x1]
    %v2103 = vsel %vm2050, 0, %v2102
    %2104 = vst [vmem:[%s1949 + $0xec] sm:$0x1] %v2103
    %v2105 = vld [vmem:[%s1949 + $0xf8] sm:$0x1]
    %v2106 = vsel %vm2050, 0, %v2105
    %2107 = vst [vmem:[%s1949 + $0xf8] sm:$0x1] %v2106
    %v2108 = vld [vmem:[%s1949 + $0x104] sm:$0x1]
    %v2109 = vsel %vm2050, 0, %v2108
    %2110 = vst [vmem:[%s1949 + $0x104] sm:$0x1] %v2109
    %v2111 = vld [vmem:[%s1949 + $0x110] sm:$0x1]
    %v2112 = vsel %vm2050, 0, %v2111
    %2113 = vst [vmem:[%s1949 + $0x110] sm:$0x1] %v2112
    %v2114 = vld [vmem:[%s1949 + $0x11c] sm:$0x1]
    %v2115 = vsel %vm2050, 0, %v2114
    %2116 = vst [vmem:[%s1949 + $0x11c] sm:$0x1] %v2115
    %v2117 = vld [vmem:[%s1949 + $0x128] sm:$0x1]
    %v2118 = vsel %vm2050, 0, %v2117
    %2119 = vst [vmem:[%s1949 + $0x128] sm:$0x1] %v2118
    %v2120 = vld [vmem:[%s1949 + $0x134] sm:$0x1]
    %v2121 = vsel %vm2050, 0, %v2120
    %2122 = vst [vmem:[%s1949 + $0x134] sm:$0x1] %v2121
    %v2123 = vld [vmem:[%s1949 + $0x140] sm:$0x1]
    %v2124 = vsel %vm2050, 0, %v2123
    %2125 = vst [vmem:[%s1949 + $0x140] sm:$0x1] %v2124
    %v2126 = vld [vmem:[%s1949 + $0x14c] sm:$0x1]
    %v2127 = vsel %vm2050, 0, %v2126
    %2128 = vst [vmem:[%s1949 + $0x14c] sm:$0x1] %v2127
    %v2129 = vld [vmem:[%s1949 + $0x158] sm:$0x1]
    %v2130 = vsel %vm2050, 0, %v2129
    %2131 = vst [vmem:[%s1949 + $0x158] sm:$0x1] %v2130
    %v2132 = vld [vmem:[%s1949 + $0x164] sm:$0x1]
    %v2133 = vsel %vm2050, 0, %v2132
    %2134 = vst [vmem:[%s1949 + $0x164] sm:$0x1] %v2133
    %v2135 = vld [vmem:[%s1949 + $0x170] sm:$0x1]
    %v2136 = vsel %vm2050, 0, %v2135
    %2137 = vst [vmem:[%s1949 + $0x170] sm:$0x1] %v2136
    %v2138 = vld [vmem:[%s1949 + $0x17c] sm:$0x1]
    %v2139 = vsel %vm2050, 0, %v2138
    %2140 = vst [vmem:[%s1949 + $0x17c] sm:$0x1] %v2139
    %v2141 = vld [vmem:[%s1949 + $0x188] sm:$0x1]
    %v2142 = vsel %vm2050, 0, %v2141
    %2143 = vst [vmem:[%s1949 + $0x188] sm:$0x1] %v2142
    %v2144 = vld [vmem:[%s1949 + $0x194] sm:$0x1]
    %v2145 = vsel %vm2050, 0, %v2144
    %2146 = vst [vmem:[%s1949 + $0x194] sm:$0x1] %v2145
    %v2179 = vunpack.c.l.b16 %v1903
    %v2180 = vunpack.c.h.b16 %v1903
    %v2181 = vunpack.c.l.b16 %v1904
    %v2182 = vunpack.c.h.b16 %v1904
    %v2183 = vunpack.c.l.b16 %v1905
    %v2184 = vunpack.c.h.b16 %v1905
    %v2185 = vunpack.c.l.b16 %v1906
    %v2186 = vunpack.c.h.b16 %v1906
    %v2187 = vunpack.c.l.b16 %v1907
    %v2188 = vunpack.c.h.b16 %v1907
    %v2189 = vunpack.c.l.b16 %v1908
    %v2190 = vunpack.c.h.b16 %v1908
    %v2191 = vunpack.c.l.b16 %v1909
    %v2192 = vunpack.c.h.b16 %v1909
    %v2193 = vunpack.c.l.b16 %v1910
    %v2194 = vunpack.c.h.b16 %v1910
    %v2195 = vunpack.c.l.b16 %v1911
    %v2196 = vunpack.c.h.b16 %v1911
    %v2197 = vunpack.c.l.b16 %v1912
    %v2198 = vunpack.c.h.b16 %v1912
    %v2199 = vunpack.c.l.b16 %v1913
    %v2200 = vunpack.c.h.b16 %v1913
    %v2201 = vunpack.c.l.b16 %v1914
    %v2202 = vunpack.c.h.b16 %v1914
    %v2203 = vunpack.c.l.b16 %v1915
    %v2204 = vunpack.c.h.b16 %v1915
    %v2205 = vunpack.c.l.b16 %v1916
    %v2206 = vunpack.c.h.b16 %v1916
    %v2207 = vunpack.c.l.b16 %v1917
    %v2208 = vunpack.c.h.b16 %v1917
    %v2209 = vunpack.c.l.b16 %v1918
    %v2210 = vunpack.c.h.b16 %v1918
    %v2211 = vunpack.c.l.b16 %v1919
    %v2212 = vunpack.c.h.b16 %v1919
    %v2213 = vunpack.c.l.b16 %v1920
    %v2214 = vunpack.c.h.b16 %v1920
    %v2215 = vunpack.c.l.b16 %v1921
    %v2216 = vunpack.c.h.b16 %v1921
    %v2217 = vunpack.c.l.b16 %v1922
    %v2218 = vunpack.c.h.b16 %v1922
    %v2219 = vunpack.c.l.b16 %v1923
    %v2220 = vunpack.c.h.b16 %v1923
    %v2221 = vunpack.c.l.b16 %v1924
    %v2222 = vunpack.c.h.b16 %v1924
    %v2223 = vunpack.c.l.b16 %v1925
    %v2224 = vunpack.c.h.b16 %v1925
    %v2225 = vunpack.c.l.b16 %v1926
    %v2226 = vunpack.c.h.b16 %v1926
    %v2227 = vunpack.c.l.b16 %v1927
    %v2228 = vunpack.c.h.b16 %v1927
    %v2229 = vunpack.c.l.b16 %v1928
    %v2230 = vunpack.c.h.b16 %v1928
    %v2231 = vunpack.c.l.b16 %v1929
    %v2232 = vunpack.c.h.b16 %v1929
    %v2233 = vunpack.c.l.b16 %v1930
    %v2234 = vunpack.c.h.b16 %v1930
    %v2235 = vunpack.c.l.b16 %v1931
    %v2236 = vunpack.c.h.b16 %v1931
    %v2237 = vunpack.c.l.b16 %v1932
    %v2238 = vunpack.c.h.b16 %v1932
    %v2239 = vunpack.c.l.b16 %v1933
    %v2240 = vunpack.c.h.b16 %v1933
    %v2241 = vunpack.c.l.b16 %v1934
    %v2242 = vunpack.c.h.b16 %v1934
    %v2243 = vpack.c.b16 %v2179, %v2179
    %v2244 = vpack.c.b16 %v2180, %v2180
    %v2245 = vpack.c.b16 %v2181, %v2181
    %v2246 = vpack.c.b16 %v2182, %v2182
    %v2247 = vpack.c.b16 %v2183, %v2183
    %v2248 = vpack.c.b16 %v2184, %v2184
    %v2249 = vpack.c.b16 %v2185, %v2185
    %v2250 = vpack.c.b16 %v2186, %v2186
    %v2251 = vpack.c.b16 %v2187, %v2187
    %v2252 = vpack.c.b16 %v2188, %v2188
    %v2253 = vpack.c.b16 %v2189, %v2189
    %v2254 = vpack.c.b16 %v2190, %v2190
    %v2255 = vpack.c.b16 %v2191, %v2191
    %v2256 = vpack.c.b16 %v2192, %v2192
    %v2257 = vpack.c.b16 %v2193, %v2193
    %v2258 = vpack.c.b16 %v2194, %v2194
    %v2259 = vpack.c.b16 %v2195, %v2195
    %v2260 = vpack.c.b16 %v2196, %v2196
    %v2261 = vpack.c.b16 %v2197, %v2197
    %v2262 = vpack.c.b16 %v2198, %v2198
    %v2263 = vpack.c.b16 %v2199, %v2199
    %v2264 = vpack.c.b16 %v2200, %v2200
    %v2265 = vpack.c.b16 %v2201, %v2201
    %v2266 = vpack.c.b16 %v2202, %v2202
    %v2267 = vpack.c.b16 %v2203, %v2203
    %v2268 = vpack.c.b16 %v2204, %v2204
    %v2269 = vpack.c.b16 %v2205, %v2205
    %v2270 = vpack.c.b16 %v2206, %v2206
    %v2271 = vpack.c.b16 %v2207, %v2207
    %v2272 = vpack.c.b16 %v2208, %v2208
    %v2273 = vpack.c.b16 %v2209, %v2209
    %v2274 = vpack.c.b16 %v2210, %v2210
    %v2275 = vpack.c.b16 %v2211, %v2211
    %v2276 = vpack.c.b16 %v2212, %v2212
    %v2277 = vpack.c.b16 %v2213, %v2213
    %v2278 = vpack.c.b16 %v2214, %v2214
    %v2279 = vpack.c.b16 %v2215, %v2215
    %v2280 = vpack.c.b16 %v2216, %v2216
    %v2281 = vpack.c.b16 %v2217, %v2217
    %v2282 = vpack.c.b16 %v2218, %v2218
    %v2283 = vpack.c.b16 %v2219, %v2219
    %v2284 = vpack.c.b16 %v2220, %v2220
    %v2285 = vpack.c.b16 %v2221, %v2221
    %v2286 = vpack.c.b16 %v2222, %v2222
    %v2287 = vpack.c.b16 %v2223, %v2223
    %v2288 = vpack.c.b16 %v2224, %v2224
    %v2289 = vpack.c.b16 %v2225, %v2225
    %v2290 = vpack.c.b16 %v2226, %v2226
    %v2291 = vpack.c.b16 %v2227, %v2227
    %v2292 = vpack.c.b16 %v2228, %v2228
    %v2293 = vpack.c.b16 %v2229, %v2229
    %v2294 = vpack.c.b16 %v2230, %v2230
    %v2295 = vpack.c.b16 %v2231, %v2231
    %v2296 = vpack.c.b16 %v2232, %v2232
    %v2297 = vpack.c.b16 %v2233, %v2233
    %v2298 = vpack.c.b16 %v2234, %v2234
    %v2299 = vpack.c.b16 %v2235, %v2235
    %v2300 = vpack.c.b16 %v2236, %v2236
    %v2301 = vpack.c.b16 %v2237, %v2237
    %v2302 = vpack.c.b16 %v2238, %v2238
    %v2303 = vpack.c.b16 %v2239, %v2239
    %v2304 = vpack.c.b16 %v2240, %v2240
    %v2305 = vpack.c.b16 %v2241, %v2241
    %v2306 = vpack.c.b16 %v2242, %v2242
    %vm2307 = vsmask.f32 4368
    %vm2308 = vmor %vm1951, %vm2307
    %v2310 = vshrl.u32 %v2243, 16
    %v2312 = vrot.slane %v2310, 7
    %v2313 = vshll.u32 %v2243, 16
    %v2315 = vor.u32 %v2312, %v2313
    %v2316 = vrot.slane %v2312, 4
    %v2318 = vshrl.u32 %v2244, 16
    %v2320 = vrot.slane %v2318, 7
    %v2321 = vshll.u32 %v2244, 16
    %v2323 = vor.u32 %v2320, %v2321
    %v2324 = vsel %vm2308, %v2316, %v2323
    %v2325 = vrot.slane %v2320, 4
    %v2327 = vshrl.u32 %v2245, 16
    %v2329 = vrot.slane %v2327, 7
    %v2330 = vshll.u32 %v2245, 16
    %v2332 = vor.u32 %v2329, %v2330
    %v2333 = vrot.slane %v2329, 4
    %v2335 = vshrl.u32 %v2246, 16
    %v2337 = vrot.slane %v2335, 7
    %v2338 = vshll.u32 %v2246, 16
    %v2340 = vor.u32 %v2337, %v2338
    %v2341 = vsel %vm2308, %v2333, %v2340
    %v2342 = vrot.slane %v2337, 4
    %v2344 = vshrl.u32 %v2247, 16
    %v2346 = vrot.slane %v2344, 7
    %v2347 = vshll.u32 %v2247, 16
    %v2349 = vor.u32 %v2346, %v2347
    %v2350 = vrot.slane %v2346, 4
    %v2352 = vshrl.u32 %v2248, 16
    %v2354 = vrot.slane %v2352, 7
    %v2355 = vshll.u32 %v2248, 16
    %v2357 = vor.u32 %v2354, %v2355
    %v2358 = vsel %vm2308, %v2350, %v2357
    %v2359 = vrot.slane %v2354, 4
    %v2361 = vshrl.u32 %v2249, 16
    %v2363 = vrot.slane %v2361, 7
    %v2364 = vshll.u32 %v2249, 16
    %v2366 = vor.u32 %v2363, %v2364
    %v2367 = vrot.slane %v2363, 4
    %v2369 = vshrl.u32 %v2250, 16
    %v2371 = vrot.slane %v2369, 7
    %v2372 = vshll.u32 %v2250, 16
    %v2374 = vor.u32 %v2371, %v2372
    %v2375 = vsel %vm2308, %v2367, %v2374
    %v2376 = vrot.slane %v2371, 4
    %v2378 = vshrl.u32 %v2251, 16
    %v2380 = vrot.slane %v2378, 7
    %v2381 = vshll.u32 %v2251, 16
    %v2383 = vor.u32 %v2380, %v2381
    %v2384 = vrot.slane %v2380, 4
    %v2386 = vshrl.u32 %v2252, 16
    %v2388 = vrot.slane %v2386, 7
    %v2389 = vshll.u32 %v2252, 16
    %v2391 = vor.u32 %v2388, %v2389
    %v2392 = vsel %vm2308, %v2384, %v2391
    %v2393 = vrot.slane %v2388, 4
    %v2395 = vshrl.u32 %v2253, 16
    %v2397 = vrot.slane %v2395, 7
    %v2398 = vshll.u32 %v2253, 16
    %v2400 = vor.u32 %v2397, %v2398
    %v2401 = vrot.slane %v2397, 4
    %v2403 = vshrl.u32 %v2254, 16
    %v2405 = vrot.slane %v2403, 7
    %v2406 = vshll.u32 %v2254, 16
    %v2408 = vor.u32 %v2405, %v2406
    %v2409 = vsel %vm2308, %v2401, %v2408
    %v2410 = vrot.slane %v2405, 4
    %v2412 = vshrl.u32 %v2255, 16
    %v2414 = vrot.slane %v2412, 7
    %v2415 = vshll.u32 %v2255, 16
    %v2417 = vor.u32 %v2414, %v2415
    %v2418 = vrot.slane %v2414, 4
    %v2420 = vshrl.u32 %v2256, 16
    %v2422 = vrot.slane %v2420, 7
    %v2423 = vshll.u32 %v2256, 16
    %v2425 = vor.u32 %v2422, %v2423
    %v2426 = vsel %vm2308, %v2418, %v2425
    %v2427 = vrot.slane %v2422, 4
    %v2429 = vshrl.u32 %v2257, 16
    %v2431 = vrot.slane %v2429, 7
    %v2432 = vshll.u32 %v2257, 16
    %v2434 = vor.u32 %v2431, %v2432
    %v2435 = vrot.slane %v2431, 4
    %v2437 = vshrl.u32 %v2258, 16
    %v2439 = vrot.slane %v2437, 7
    %v2440 = vshll.u32 %v2258, 16
    %v2442 = vor.u32 %v2439, %v2440
    %v2443 = vsel %vm2308, %v2435, %v2442
    %v2444 = vrot.slane %v2439, 4
    %v2446 = vshrl.u32 %v2259, 16
    %v2448 = vrot.slane %v2446, 7
    %v2449 = vshll.u32 %v2259, 16
    %v2451 = vor.u32 %v2448, %v2449
    %v2452 = vrot.slane %v2448, 4
    %v2454 = vshrl.u32 %v2260, 16
    %v2456 = vrot.slane %v2454, 7
    %v2457 = vshll.u32 %v2260, 16
    %v2459 = vor.u32 %v2456, %v2457
    %v2460 = vsel %vm2308, %v2452, %v2459
    %v2461 = vrot.slane %v2456, 4
    %v2463 = vshrl.u32 %v2261, 16
    %v2465 = vrot.slane %v2463, 7
    %v2466 = vshll.u32 %v2261, 16
    %v2468 = vor.u32 %v2465, %v2466
    %v2469 = vrot.slane %v2465, 4
    %v2471 = vshrl.u32 %v2262, 16
    %v2473 = vrot.slane %v2471, 7
    %v2474 = vshll.u32 %v2262, 16
    %v2476 = vor.u32 %v2473, %v2474
    %v2477 = vsel %vm2308, %v2469, %v2476
    %v2478 = vrot.slane %v2473, 4
    %v2480 = vshrl.u32 %v2263, 16
    %v2482 = vrot.slane %v2480, 7
    %v2483 = vshll.u32 %v2263, 16
    %v2485 = vor.u32 %v2482, %v2483
    %v2486 = vrot.slane %v2482, 4
    %v2488 = vshrl.u32 %v2264, 16
    %v2490 = vrot.slane %v2488, 7
    %v2491 = vshll.u32 %v2264, 16
    %v2493 = vor.u32 %v2490, %v2491
    %v2494 = vsel %vm2308, %v2486, %v2493
    %v2495 = vrot.slane %v2490, 4
    %v2497 = vshrl.u32 %v2265, 16
    %v2499 = vrot.slane %v2497, 7
    %v2500 = vshll.u32 %v2265, 16
    %v2502 = vor.u32 %v2499, %v2500
    %v2503 = vrot.slane %v2499, 4
    %v2505 = vshrl.u32 %v2266, 16
    %v2507 = vrot.slane %v2505, 7
    %v2508 = vshll.u32 %v2266, 16
    %v2510 = vor.u32 %v2507, %v2508
    %v2511 = vsel %vm2308, %v2503, %v2510
    %v2512 = vrot.slane %v2507, 4
    %v2514 = vshrl.u32 %v2267, 16
    %v2516 = vrot.slane %v2514, 7
    %v2517 = vshll.u32 %v2267, 16
    %v2519 = vor.u32 %v2516, %v2517
    %v2520 = vrot.slane %v2516, 4
    %v2522 = vshrl.u32 %v2268, 16
    %v2524 = vrot.slane %v2522, 7
    %v2525 = vshll.u32 %v2268, 16
    %v2527 = vor.u32 %v2524, %v2525
    %v2528 = vsel %vm2308, %v2520, %v2527
    %v2529 = vrot.slane %v2524, 4
    %v2531 = vshrl.u32 %v2269, 16
    %v2533 = vrot.slane %v2531, 7
    %v2534 = vshll.u32 %v2269, 16
    %v2536 = vor.u32 %v2533, %v2534
    %v2537 = vrot.slane %v2533, 4
    %v2539 = vshrl.u32 %v2270, 16
    %v2541 = vrot.slane %v2539, 7
    %v2542 = vshll.u32 %v2270, 16
    %v2544 = vor.u32 %v2541, %v2542
    %v2545 = vsel %vm2308, %v2537, %v2544
    %v2546 = vrot.slane %v2541, 4
    %v2548 = vshrl.u32 %v2271, 16
    %v2550 = vrot.slane %v2548, 7
    %v2551 = vshll.u32 %v2271, 16
    %v2553 = vor.u32 %v2550, %v2551
    %v2554 = vrot.slane %v2550, 4
    %v2556 = vshrl.u32 %v2272, 16
    %v2558 = vrot.slane %v2556, 7
    %v2559 = vshll.u32 %v2272, 16
    %v2561 = vor.u32 %v2558, %v2559
    %v2562 = vsel %vm2308, %v2554, %v2561
    %v2563 = vrot.slane %v2558, 4
    %v2565 = vshrl.u32 %v2273, 16
    %v2567 = vrot.slane %v2565, 7
    %v2568 = vshll.u32 %v2273, 16
    %v2570 = vor.u32 %v2567, %v2568
    %v2571 = vrot.slane %v2567, 4
    %v2573 = vshrl.u32 %v2274, 16
    %v2575 = vrot.slane %v2573, 7
    %v2576 = vshll.u32 %v2274, 16
    %v2578 = vor.u32 %v2575, %v2576
    %v2579 = vsel %vm2308, %v2571, %v2578
    %v2580 = vrot.slane %v2575, 4
    %v2582 = vshrl.u32 %v2275, 16
    %v2584 = vrot.slane %v2582, 7
    %v2585 = vshll.u32 %v2275, 16
    %v2587 = vor.u32 %v2584, %v2585
    %v2588 = vrot.slane %v2584, 4
    %v2590 = vshrl.u32 %v2276, 16
    %v2592 = vrot.slane %v2590, 7
    %v2593 = vshll.u32 %v2276, 16
    %v2595 = vor.u32 %v2592, %v2593
    %v2596 = vsel %vm2308, %v2588, %v2595
    %v2597 = vrot.slane %v2592, 4
    %v2599 = vshrl.u32 %v2277, 16
    %v2601 = vrot.slane %v2599, 7
    %v2602 = vshll.u32 %v2277, 16
    %v2604 = vor.u32 %v2601, %v2602
    %v2605 = vrot.slane %v2601, 4
    %v2607 = vshrl.u32 %v2278, 16
    %v2609 = vrot.slane %v2607, 7
    %v2610 = vshll.u32 %v2278, 16
    %v2612 = vor.u32 %v2609, %v2610
    %v2613 = vsel %vm2308, %v2605, %v2612
    %v2614 = vrot.slane %v2609, 4
    %v2616 = vshrl.u32 %v2279, 16
    %v2618 = vrot.slane %v2616, 7
    %v2619 = vshll.u32 %v2279, 16
    %v2621 = vor.u32 %v2618, %v2619
    %v2622 = vrot.slane %v2618, 4
    %v2624 = vshrl.u32 %v2280, 16
    %v2626 = vrot.slane %v2624, 7
    %v2627 = vshll.u32 %v2280, 16
    %v2629 = vor.u32 %v2626, %v2627
    %v2630 = vsel %vm2308, %v2622, %v2629
    %v2631 = vrot.slane %v2626, 4
    %v2633 = vshrl.u32 %v2281, 16
    %v2635 = vrot.slane %v2633, 7
    %v2636 = vshll.u32 %v2281, 16
    %v2638 = vor.u32 %v2635, %v2636
    %v2639 = vrot.slane %v2635, 4
    %v2641 = vshrl.u32 %v2282, 16
    %v2643 = vrot.slane %v2641, 7
    %v2644 = vshll.u32 %v2282, 16
    %v2646 = vor.u32 %v2643, %v2644
    %v2647 = vsel %vm2308, %v2639, %v2646
    %v2648 = vrot.slane %v2643, 4
    %v2650 = vshrl.u32 %v2283, 16
    %v2652 = vrot.slane %v2650, 7
    %v2653 = vshll.u32 %v2283, 16
    %v2655 = vor.u32 %v2652, %v2653
    %v2656 = vrot.slane %v2652, 4
    %v2658 = vshrl.u32 %v2284, 16
    %v2660 = vrot.slane %v2658, 7
    %v2661 = vshll.u32 %v2284, 16
    %v2663 = vor.u32 %v2660, %v2661
    %v2664 = vsel %vm2308, %v2656, %v2663
    %v2665 = vrot.slane %v2660, 4
    %v2667 = vshrl.u32 %v2285, 16
    %v2669 = vrot.slane %v2667, 7
    %v2670 = vshll.u32 %v2285, 16
    %v2672 = vor.u32 %v2669, %v2670
    %v2673 = vrot.slane %v2669, 4
    %v2675 = vshrl.u32 %v2286, 16
    %v2677 = vrot.slane %v2675, 7
    %v2678 = vshll.u32 %v2286, 16
    %v2680 = vor.u32 %v2677, %v2678
    %v2681 = vsel %vm2308, %v2673, %v2680
    %v2682 = vrot.slane %v2677, 4
    %v2684 = vshrl.u32 %v2287, 16
    %v2686 = vrot.slane %v2684, 7
    %v2687 = vshll.u32 %v2287, 16
    %v2689 = vor.u32 %v2686, %v2687
    %v2690 = vrot.slane %v2686, 4
    %v2692 = vshrl.u32 %v2288, 16
    %v2694 = vrot.slane %v2692, 7
    %v2695 = vshll.u32 %v2288, 16
    %v2697 = vor.u32 %v2694, %v2695
    %v2698 = vsel %vm2308, %v2690, %v2697
    %v2699 = vrot.slane %v2694, 4
    %v2701 = vshrl.u32 %v2289, 16
    %v2703 = vrot.slane %v2701, 7
    %v2704 = vshll.u32 %v2289, 16
    %v2706 = vor.u32 %v2703, %v2704
    %v2707 = vrot.slane %v2703, 4
    %v2709 = vshrl.u32 %v2290, 16
    %v2711 = vrot.slane %v2709, 7
    %v2712 = vshll.u32 %v2290, 16
    %v2714 = vor.u32 %v2711, %v2712
    %v2715 = vsel %vm2308, %v2707, %v2714
    %v2716 = vrot.slane %v2711, 4
    %v2718 = vshrl.u32 %v2291, 16
    %v2720 = vrot.slane %v2718, 7
    %v2721 = vshll.u32 %v2291, 16
    %v2723 = vor.u32 %v2720, %v2721
    %v2724 = vrot.slane %v2720, 4
    %v2726 = vshrl.u32 %v2292, 16
    %v2728 = vrot.slane %v2726, 7
    %v2729 = vshll.u32 %v2292, 16
    %v2731 = vor.u32 %v2728, %v2729
    %v2732 = vsel %vm2308, %v2724, %v2731
    %v2733 = vrot.slane %v2728, 4
    %v2735 = vshrl.u32 %v2293, 16
    %v2737 = vrot.slane %v2735, 7
    %v2738 = vshll.u32 %v2293, 16
    %v2740 = vor.u32 %v2737, %v2738
    %v2741 = vrot.slane %v2737, 4
    %v2743 = vshrl.u32 %v2294, 16
    %v2745 = vrot.slane %v2743, 7
    %v2746 = vshll.u32 %v2294, 16
    %v2748 = vor.u32 %v2745, %v2746
    %v2749 = vsel %vm2308, %v2741, %v2748
    %v2750 = vrot.slane %v2745, 4
    %v2752 = vshrl.u32 %v2295, 16
    %v2754 = vrot.slane %v2752, 7
    %v2755 = vshll.u32 %v2295, 16
    %v2757 = vor.u32 %v2754, %v2755
    %v2758 = vrot.slane %v2754, 4
    %v2760 = vshrl.u32 %v2296, 16
    %v2762 = vrot.slane %v2760, 7
    %v2763 = vshll.u32 %v2296, 16
    %v2765 = vor.u32 %v2762, %v2763
    %v2766 = vsel %vm2308, %v2758, %v2765
    %v2767 = vrot.slane %v2762, 4
    %v2769 = vshrl.u32 %v2297, 16
    %v2771 = vrot.slane %v2769, 7
    %v2772 = vshll.u32 %v2297, 16
    %v2774 = vor.u32 %v2771, %v2772
    %v2775 = vrot.slane %v2771, 4
    %v2777 = vshrl.u32 %v2298, 16
    %v2779 = vrot.slane %v2777, 7
    %v2780 = vshll.u32 %v2298, 16
    %v2782 = vor.u32 %v2779, %v2780
    %v2783 = vsel %vm2308, %v2775, %v2782
    %v2784 = vrot.slane %v2779, 4
    %v2786 = vshrl.u32 %v2299, 16
    %v2788 = vrot.slane %v2786, 7
    %v2789 = vshll.u32 %v2299, 16
    %v2791 = vor.u32 %v2788, %v2789
    %v2792 = vrot.slane %v2788, 4
    %v2794 = vshrl.u32 %v2300, 16
    %v2796 = vrot.slane %v2794, 7
    %v2797 = vshll.u32 %v2300, 16
    %v2799 = vor.u32 %v2796, %v2797
    %v2800 = vsel %vm2308, %v2792, %v2799
    %v2801 = vrot.slane %v2796, 4
    %v2803 = vshrl.u32 %v2301, 16
    %v2805 = vrot.slane %v2803, 7
    %v2806 = vshll.u32 %v2301, 16
    %v2808 = vor.u32 %v2805, %v2806
    %v2809 = vrot.slane %v2805, 4
    %v2811 = vshrl.u32 %v2302, 16
    %v2813 = vrot.slane %v2811, 7
    %v2814 = vshll.u32 %v2302, 16
    %v2816 = vor.u32 %v2813, %v2814
    %v2817 = vsel %vm2308, %v2809, %v2816
    %v2818 = vrot.slane %v2813, 4
    %v2820 = vshrl.u32 %v2303, 16
    %v2822 = vrot.slane %v2820, 7
    %v2823 = vshll.u32 %v2303, 16
    %v2825 = vor.u32 %v2822, %v2823
    %v2826 = vrot.slane %v2822, 4
    %v2828 = vshrl.u32 %v2304, 16
    %v2830 = vrot.slane %v2828, 7
    %v2831 = vshll.u32 %v2304, 16
    %v2833 = vor.u32 %v2830, %v2831
    %v2834 = vsel %vm2308, %v2826, %v2833
    %v2835 = vrot.slane %v2830, 4
    %v2837 = vshrl.u32 %v2305, 16
    %v2839 = vrot.slane %v2837, 7
    %v2840 = vshll.u32 %v2305, 16
    %v2842 = vor.u32 %v2839, %v2840
    %v2843 = vrot.slane %v2839, 4
    %v2845 = vshrl.u32 %v2306, 16
    %v2847 = vrot.slane %v2845, 7
    %v2848 = vshll.u32 %v2306, 16
    %v2850 = vor.u32 %v2847, %v2848
    %v2851 = vsel %vm2308, %v2843, %v2850
    %v2852 = vrot.slane %v2847, 4
    %vm2949 = vcmask 519168
    %vm2950 = vmand %vm2949, %vm2049
    %v2951 = vld [vmem:[%s1949] sm:$0xf]
    %v2952 = vsel %vm2950, %v2315, %v2951
    %2953 = vst [vmem:[%s1949] sm:$0xf] %v2952
    %2954 = vst.msk [vmem:[%s1949 + $0x4] sm:$0xf] %vm1935, %v2324
    %v2955 = vld [vmem:[%s1949 + $0x8] sm:$0x1]
    %v2956 = vsel %vm1952, %v2325, %v2955
    %2957 = vst [vmem:[%s1949 + $0x8] sm:$0x1] %v2956
    %v2958 = vld [vmem:[%s1949 + $0xc] sm:$0xf]
    %v2959 = vsel %vm2950, %v2332, %v2958
    %2960 = vst [vmem:[%s1949 + $0xc] sm:$0xf] %v2959
    %2961 = vst.msk [vmem:[%s1949 + $0x10] sm:$0xf] %vm1935, %v2341
    %v2962 = vld [vmem:[%s1949 + $0x14] sm:$0x1]
    %v2963 = vsel %vm1952, %v2342, %v2962
    %2964 = vst [vmem:[%s1949 + $0x14] sm:$0x1] %v2963
    %v2965 = vld [vmem:[%s1949 + $0x18] sm:$0xf]
    %v2966 = vsel %vm2950, %v2349, %v2965
    %2967 = vst [vmem:[%s1949 + $0x18] sm:$0xf] %v2966
    %2968 = vst.msk [vmem:[%s1949 + $0x1c] sm:$0xf] %vm1935, %v2358
    %v2969 = vld [vmem:[%s1949 + $0x20] sm:$0x1]
    %v2970 = vsel %vm1952, %v2359, %v2969
    %2971 = vst [vmem:[%s1949 + $0x20] sm:$0x1] %v2970
    %v2972 = vld [vmem:[%s1949 + $0x24] sm:$0xf]
    %v2973 = vsel %vm2950, %v2366, %v2972
    %2974 = vst [vmem:[%s1949 + $0x24] sm:$0xf] %v2973
    %2975 = vst.msk [vmem:[%s1949 + $0x28] sm:$0xf] %vm1935, %v2375
    %v2976 = vld [vmem:[%s1949 + $0x2c] sm:$0x1]
    %v2977 = vsel %vm1952, %v2376, %v2976
    %2978 = vst [vmem:[%s1949 + $0x2c] sm:$0x1] %v2977
    %v2979 = vld [vmem:[%s1949 + $0x30] sm:$0xf]
    %v2980 = vsel %vm2950, %v2383, %v2979
    %2981 = vst [vmem:[%s1949 + $0x30] sm:$0xf] %v2980
    %2982 = vst.msk [vmem:[%s1949 + $0x34] sm:$0xf] %vm1935, %v2392
    %v2983 = vld [vmem:[%s1949 + $0x38] sm:$0x1]
    %v2984 = vsel %vm1952, %v2393, %v2983
    %2985 = vst [vmem:[%s1949 + $0x38] sm:$0x1] %v2984
    %v2986 = vld [vmem:[%s1949 + $0x3c] sm:$0xf]
    %v2987 = vsel %vm2950, %v2400, %v2986
    %2988 = vst [vmem:[%s1949 + $0x3c] sm:$0xf] %v2987
    %2989 = vst.msk [vmem:[%s1949 + $0x40] sm:$0xf] %vm1935, %v2409
    %v2990 = vld [vmem:[%s1949 + $0x44] sm:$0x1]
    %v2991 = vsel %vm1952, %v2410, %v2990
    %2992 = vst [vmem:[%s1949 + $0x44] sm:$0x1] %v2991
    %v2993 = vld [vmem:[%s1949 + $0x48] sm:$0xf]
    %v2994 = vsel %vm2950, %v2417, %v2993
    %2995 = vst [vmem:[%s1949 + $0x48] sm:$0xf] %v2994
    %2996 = vst.msk [vmem:[%s1949 + $0x4c] sm:$0xf] %vm1935, %v2426
    %v2997 = vld [vmem:[%s1949 + $0x50] sm:$0x1]
    %v2998 = vsel %vm1952, %v2427, %v2997
    %2999 = vst [vmem:[%s1949 + $0x50] sm:$0x1] %v2998
    %v3000 = vld [vmem:[%s1949 + $0x54] sm:$0xf]
    %v3001 = vsel %vm2950, %v2434, %v3000
    %3002 = vst [vmem:[%s1949 + $0x54] sm:$0xf] %v3001
    %3003 = vst.msk [vmem:[%s1949 + $0x58] sm:$0xf] %vm1935, %v2443
    %v3004 = vld [vmem:[%s1949 + $0x5c] sm:$0x1]
    %v3005 = vsel %vm1952, %v2444, %v3004
    %3006 = vst [vmem:[%s1949 + $0x5c] sm:$0x1] %v3005
    %v3007 = vld [vmem:[%s1949 + $0x60] sm:$0xf]
    %v3008 = vsel %vm2950, %v2451, %v3007
    %3009 = vst [vmem:[%s1949 + $0x60] sm:$0xf] %v3008
    %3010 = vst.msk [vmem:[%s1949 + $0x64] sm:$0xf] %vm1935, %v2460
    %v3011 = vld [vmem:[%s1949 + $0x68] sm:$0x1]
    %v3012 = vsel %vm1952, %v2461, %v3011
    %3013 = vst [vmem:[%s1949 + $0x68] sm:$0x1] %v3012
    %v3014 = vld [vmem:[%s1949 + $0x6c] sm:$0xf]
    %v3015 = vsel %vm2950, %v2468, %v3014
    %3016 = vst [vmem:[%s1949 + $0x6c] sm:$0xf] %v3015
    %3017 = vst.msk [vmem:[%s1949 + $0x70] sm:$0xf] %vm1935, %v2477
    %v3018 = vld [vmem:[%s1949 + $0x74] sm:$0x1]
    %v3019 = vsel %vm1952, %v2478, %v3018
    %3020 = vst [vmem:[%s1949 + $0x74] sm:$0x1] %v3019
    %v3021 = vld [vmem:[%s1949 + $0x78] sm:$0xf]
    %v3022 = vsel %vm2950, %v2485, %v3021
    %3023 = vst [vmem:[%s1949 + $0x78] sm:$0xf] %v3022
    %3024 = vst.msk [vmem:[%s1949 + $0x7c] sm:$0xf] %vm1935, %v2494
    %v3025 = vld [vmem:[%s1949 + $0x80] sm:$0x1]
    %v3026 = vsel %vm1952, %v2495, %v3025
    %3027 = vst [vmem:[%s1949 + $0x80] sm:$0x1] %v3026
    %v3028 = vld [vmem:[%s1949 + $0x84] sm:$0xf]
    %v3029 = vsel %vm2950, %v2502, %v3028
    %3030 = vst [vmem:[%s1949 + $0x84] sm:$0xf] %v3029
    %3031 = vst.msk [vmem:[%s1949 + $0x88] sm:$0xf] %vm1935, %v2511
    %v3032 = vld [vmem:[%s1949 + $0x8c] sm:$0x1]
    %v3033 = vsel %vm1952, %v2512, %v3032
    %3034 = vst [vmem:[%s1949 + $0x8c] sm:$0x1] %v3033
    %v3035 = vld [vmem:[%s1949 + $0x90] sm:$0xf]
    %v3036 = vsel %vm2950, %v2519, %v3035
    %3037 = vst [vmem:[%s1949 + $0x90] sm:$0xf] %v3036
    %3038 = vst.msk [vmem:[%s1949 + $0x94] sm:$0xf] %vm1935, %v2528
    %v3039 = vld [vmem:[%s1949 + $0x98] sm:$0x1]
    %v3040 = vsel %vm1952, %v2529, %v3039
    %3041 = vst [vmem:[%s1949 + $0x98] sm:$0x1] %v3040
    %v3042 = vld [vmem:[%s1949 + $0x9c] sm:$0xf]
    %v3043 = vsel %vm2950, %v2536, %v3042
    %3044 = vst [vmem:[%s1949 + $0x9c] sm:$0xf] %v3043
    %3045 = vst.msk [vmem:[%s1949 + $0xa0] sm:$0xf] %vm1935, %v2545
    %v3046 = vld [vmem:[%s1949 + $0xa4] sm:$0x1]
    %v3047 = vsel %vm1952, %v2546, %v3046
    %3048 = vst [vmem:[%s1949 + $0xa4] sm:$0x1] %v3047
    %v3049 = vld [vmem:[%s1949 + $0xa8] sm:$0xf]
    %v3050 = vsel %vm2950, %v2553, %v3049
    %3051 = vst [vmem:[%s1949 + $0xa8] sm:$0xf] %v3050
    %3052 = vst.msk [vmem:[%s1949 + $0xac] sm:$0xf] %vm1935, %v2562
    %v3053 = vld [vmem:[%s1949 + $0xb0] sm:$0x1]
    %v3054 = vsel %vm1952, %v2563, %v3053
    %3055 = vst [vmem:[%s1949 + $0xb0] sm:$0x1] %v3054
    %v3056 = vld [vmem:[%s1949 + $0xb4] sm:$0xf]
    %v3057 = vsel %vm2950, %v2570, %v3056
    %3058 = vst [vmem:[%s1949 + $0xb4] sm:$0xf] %v3057
    %3059 = vst.msk [vmem:[%s1949 + $0xb8] sm:$0xf] %vm1935, %v2579
    %v3060 = vld [vmem:[%s1949 + $0xbc] sm:$0x1]
    %v3061 = vsel %vm1952, %v2580, %v3060
    %3062 = vst [vmem:[%s1949 + $0xbc] sm:$0x1] %v3061
    %v3063 = vld [vmem:[%s1949 + $0xd8] sm:$0xf]
    %v3064 = vsel %vm2950, %v2587, %v3063
    %3065 = vst [vmem:[%s1949 + $0xd8] sm:$0xf] %v3064
    %3066 = vst.msk [vmem:[%s1949 + $0xdc] sm:$0xf] %vm1935, %v2596
    %v3067 = vld [vmem:[%s1949 + $0xe0] sm:$0x1]
    %v3068 = vsel %vm1952, %v2597, %v3067
    %3069 = vst [vmem:[%s1949 + $0xe0] sm:$0x1] %v3068
    %v3070 = vld [vmem:[%s1949 + $0xe4] sm:$0xf]
    %v3071 = vsel %vm2950, %v2604, %v3070
    %3072 = vst [vmem:[%s1949 + $0xe4] sm:$0xf] %v3071
    %3073 = vst.msk [vmem:[%s1949 + $0xe8] sm:$0xf] %vm1935, %v2613
    %v3074 = vld [vmem:[%s1949 + $0xec] sm:$0x1]
    %v3075 = vsel %vm1952, %v2614, %v3074
    %3076 = vst [vmem:[%s1949 + $0xec] sm:$0x1] %v3075
    %v3077 = vld [vmem:[%s1949 + $0xf0] sm:$0xf]
    %v3078 = vsel %vm2950, %v2621, %v3077
    %3079 = vst [vmem:[%s1949 + $0xf0] sm:$0xf] %v3078
    %3080 = vst.msk [vmem:[%s1949 + $0xf4] sm:$0xf] %vm1935, %v2630
    %v3081 = vld [vmem:[%s1949 + $0xf8] sm:$0x1]
    %v3082 = vsel %vm1952, %v2631, %v3081
    %3083 = vst [vmem:[%s1949 + $0xf8] sm:$0x1] %v3082
    %v3084 = vld [vmem:[%s1949 + $0xfc] sm:$0xf]
    %v3085 = vsel %vm2950, %v2638, %v3084
    %3086 = vst [vmem:[%s1949 + $0xfc] sm:$0xf] %v3085
    %3087 = vst.msk [vmem:[%s1949 + $0x100] sm:$0xf] %vm1935, %v2647
    %v3088 = vld [vmem:[%s1949 + $0x104] sm:$0x1]
    %v3089 = vsel %vm1952, %v2648, %v3088
    %3090 = vst [vmem:[%s1949 + $0x104] sm:$0x1] %v3089
    %v3091 = vld [vmem:[%s1949 + $0x108] sm:$0xf]
    %v3092 = vsel %vm2950, %v2655, %v3091
    %3093 = vst [vmem:[%s1949 + $0x108] sm:$0xf] %v3092
    %3094 = vst.msk [vmem:[%s1949 + $0x10c] sm:$0xf] %vm1935, %v2664
    %v3095 = vld [vmem:[%s1949 + $0x110] sm:$0x1]
    %v3096 = vsel %vm1952, %v2665, %v3095
    %3097 = vst [vmem:[%s1949 + $0x110] sm:$0x1] %v3096
    %v3098 = vld [vmem:[%s1949 + $0x114] sm:$0xf]
    %v3099 = vsel %vm2950, %v2672, %v3098
    %3100 = vst [vmem:[%s1949 + $0x114] sm:$0xf] %v3099
    %3101 = vst.msk [vmem:[%s1949 + $0x118] sm:$0xf] %vm1935, %v2681
    %v3102 = vld [vmem:[%s1949 + $0x11c] sm:$0x1]
    %v3103 = vsel %vm1952, %v2682, %v3102
    %3104 = vst [vmem:[%s1949 + $0x11c] sm:$0x1] %v3103
    %v3105 = vld [vmem:[%s1949 + $0x120] sm:$0xf]
    %v3106 = vsel %vm2950, %v2689, %v3105
    %3107 = vst [vmem:[%s1949 + $0x120] sm:$0xf] %v3106
    %3108 = vst.msk [vmem:[%s1949 + $0x124] sm:$0xf] %vm1935, %v2698
    %v3109 = vld [vmem:[%s1949 + $0x128] sm:$0x1]
    %v3110 = vsel %vm1952, %v2699, %v3109
    %3111 = vst [vmem:[%s1949 + $0x128] sm:$0x1] %v3110
    %v3112 = vld [vmem:[%s1949 + $0x12c] sm:$0xf]
    %v3113 = vsel %vm2950, %v2706, %v3112
    %3114 = vst [vmem:[%s1949 + $0x12c] sm:$0xf] %v3113
    %3115 = vst.msk [vmem:[%s1949 + $0x130] sm:$0xf] %vm1935, %v2715
    %v3116 = vld [vmem:[%s1949 + $0x134] sm:$0x1]
    %v3117 = vsel %vm1952, %v2716, %v3116
    %3118 = vst [vmem:[%s1949 + $0x134] sm:$0x1] %v3117
    %v3119 = vld [vmem:[%s1949 + $0x138] sm:$0xf]
    %v3120 = vsel %vm2950, %v2723, %v3119
    %3121 = vst [vmem:[%s1949 + $0x138] sm:$0xf] %v3120
    %3122 = vst.msk [vmem:[%s1949 + $0x13c] sm:$0xf] %vm1935, %v2732
    %v3123 = vld [vmem:[%s1949 + $0x140] sm:$0x1]
    %v3124 = vsel %vm1952, %v2733, %v3123
    %3125 = vst [vmem:[%s1949 + $0x140] sm:$0x1] %v3124
    %v3126 = vld [vmem:[%s1949 + $0x144] sm:$0xf]
    %v3127 = vsel %vm2950, %v2740, %v3126
    %3128 = vst [vmem:[%s1949 + $0x144] sm:$0xf] %v3127
    %3129 = vst.msk [vmem:[%s1949 + $0x148] sm:$0xf] %vm1935, %v2749
    %v3130 = vld [vmem:[%s1949 + $0x14c] sm:$0x1]
    %v3131 = vsel %vm1952, %v2750, %v3130
    %3132 = vst [vmem:[%s1949 + $0x14c] sm:$0x1] %v3131
    %v3133 = vld [vmem:[%s1949 + $0x150] sm:$0xf]
    %v3134 = vsel %vm2950, %v2757, %v3133
    %3135 = vst [vmem:[%s1949 + $0x150] sm:$0xf] %v3134
    %3136 = vst.msk [vmem:[%s1949 + $0x154] sm:$0xf] %vm1935, %v2766
    %v3137 = vld [vmem:[%s1949 + $0x158] sm:$0x1]
    %v3138 = vsel %vm1952, %v2767, %v3137
    %3139 = vst [vmem:[%s1949 + $0x158] sm:$0x1] %v3138
    %v3140 = vld [vmem:[%s1949 + $0x15c] sm:$0xf]
    %v3141 = vsel %vm2950, %v2774, %v3140
    %3142 = vst [vmem:[%s1949 + $0x15c] sm:$0xf] %v3141
    %3143 = vst.msk [vmem:[%s1949 + $0x160] sm:$0xf] %vm1935, %v2783
    %v3144 = vld [vmem:[%s1949 + $0x164] sm:$0x1]
    %v3145 = vsel %vm1952, %v2784, %v3144
    %3146 = vst [vmem:[%s1949 + $0x164] sm:$0x1] %v3145
    %v3147 = vld [vmem:[%s1949 + $0x168] sm:$0xf]
    %v3148 = vsel %vm2950, %v2791, %v3147
    %3149 = vst [vmem:[%s1949 + $0x168] sm:$0xf] %v3148
    %3150 = vst.msk [vmem:[%s1949 + $0x16c] sm:$0xf] %vm1935, %v2800
    %v3151 = vld [vmem:[%s1949 + $0x170] sm:$0x1]
    %v3152 = vsel %vm1952, %v2801, %v3151
    %3153 = vst [vmem:[%s1949 + $0x170] sm:$0x1] %v3152
    %v3154 = vld [vmem:[%s1949 + $0x174] sm:$0xf]
    %v3155 = vsel %vm2950, %v2808, %v3154
    %3156 = vst [vmem:[%s1949 + $0x174] sm:$0xf] %v3155
    %3157 = vst.msk [vmem:[%s1949 + $0x178] sm:$0xf] %vm1935, %v2817
    %v3158 = vld [vmem:[%s1949 + $0x17c] sm:$0x1]
    %v3159 = vsel %vm1952, %v2818, %v3158
    %3160 = vst [vmem:[%s1949 + $0x17c] sm:$0x1] %v3159
    %v3161 = vld [vmem:[%s1949 + $0x180] sm:$0xf]
    %v3162 = vsel %vm2950, %v2825, %v3161
    %3163 = vst [vmem:[%s1949 + $0x180] sm:$0xf] %v3162
    %3164 = vst.msk [vmem:[%s1949 + $0x184] sm:$0xf] %vm1935, %v2834
    %v3165 = vld [vmem:[%s1949 + $0x188] sm:$0x1]
    %v3166 = vsel %vm1952, %v2835, %v3165
    %3167 = vst [vmem:[%s1949 + $0x188] sm:$0x1] %v3166
    %v3168 = vld [vmem:[%s1949 + $0x18c] sm:$0xf]
    %v3169 = vsel %vm2950, %v2842, %v3168
    %3170 = vst [vmem:[%s1949 + $0x18c] sm:$0xf] %v3169
    %3171 = vst.msk [vmem:[%s1949 + $0x190] sm:$0xf] %vm1935, %v2851
    %v3172 = vld [vmem:[%s1949 + $0x194] sm:$0x1]
    %v3173 = vsel %vm1952, %v2852, %v3172
    %3174 = vst [vmem:[%s1949 + $0x194] sm:$0x1] %v3173
    %v3175 = vld [vmem:[#allocation2] sm:$0xf]
    %v3176 = vld [vmem:[#allocation2 + $0x4] sm:$0xf]
    %v3177 = vld [vmem:[#allocation2 + $0xc] sm:$0xf]
    %v3178 = vld [vmem:[#allocation2 + $0x10] sm:$0xf]
    %v3179 = vld [vmem:[#allocation2 + $0x18] sm:$0xf]
    %v3180 = vld [vmem:[#allocation2 + $0x1c] sm:$0xf]
    %v3181 = vld [vmem:[#allocation2 + $0x24] sm:$0xf]
    %v3182 = vld [vmem:[#allocation2 + $0x28] sm:$0xf]
    %v3183 = vld [vmem:[#allocation2 + $0x30] sm:$0xf]
    %v3184 = vld [vmem:[#allocation2 + $0x34] sm:$0xf]
    %v3185 = vld [vmem:[#allocation2 + $0x3c] sm:$0xf]
    %v3186 = vld [vmem:[#allocation2 + $0x40] sm:$0xf]
    %v3187 = vld [vmem:[#allocation2 + $0x48] sm:$0xf]
    %v3188 = vld [vmem:[#allocation2 + $0x4c] sm:$0xf]
    %v3189 = vld [vmem:[#allocation2 + $0x54] sm:$0xf]
    %v3190 = vld [vmem:[#allocation2 + $0x58] sm:$0xf]
    %v3191 = vld [vmem:[#allocation2 + $0x60] sm:$0xf]
    %v3192 = vld [vmem:[#allocation2 + $0x64] sm:$0xf]
    %v3193 = vld [vmem:[#allocation2 + $0x6c] sm:$0xf]
    %v3194 = vld [vmem:[#allocation2 + $0x70] sm:$0xf]
    %v3195 = vld [vmem:[#allocation2 + $0x78] sm:$0xf]
    %v3196 = vld [vmem:[#allocation2 + $0x7c] sm:$0xf]
    %v3197 = vld [vmem:[#allocation2 + $0x84] sm:$0xf]
    %v3198 = vld [vmem:[#allocation2 + $0x88] sm:$0xf]
    %v3199 = vld [vmem:[#allocation2 + $0x90] sm:$0xf]
    %v3200 = vld [vmem:[#allocation2 + $0x94] sm:$0xf]
    %v3201 = vld [vmem:[#allocation2 + $0x9c] sm:$0xf]
    %v3202 = vld [vmem:[#allocation2 + $0xa0] sm:$0xf]
    %v3203 = vld [vmem:[#allocation2 + $0xa8] sm:$0xf]
    %v3204 = vld [vmem:[#allocation2 + $0xac] sm:$0xf]
    %v3205 = vld [vmem:[#allocation2 + $0xb4] sm:$0xf]
    %v3206 = vld [vmem:[#allocation2 + $0xb8] sm:$0xf]
    %v3207 = vld [vmem:[#allocation2 + $0xd8] sm:$0xf]
    %v3208 = vld [vmem:[#allocation2 + $0xdc] sm:$0xf]
    %v3209 = vld [vmem:[#allocation2 + $0xe4] sm:$0xf]
    %v3210 = vld [vmem:[#allocation2 + $0xe8] sm:$0xf]
    %v3211 = vld [vmem:[#allocation2 + $0xf0] sm:$0xf]
    %v3212 = vld [vmem:[#allocation2 + $0xf4] sm:$0xf]
    %v3213 = vld [vmem:[#allocation2 + $0xfc] sm:$0xf]
    %v3214 = vld [vmem:[#allocation2 + $0x100] sm:$0xf]
    %v3215 = vld [vmem:[#allocation2 + $0x108] sm:$0xf]
    %v3216 = vld [vmem:[#allocation2 + $0x10c] sm:$0xf]
    %v3217 = vld [vmem:[#allocation2 + $0x114] sm:$0xf]
    %v3218 = vld [vmem:[#allocation2 + $0x118] sm:$0xf]
    %v3219 = vld [vmem:[#allocation2 + $0x120] sm:$0xf]
    %v3220 = vld [vmem:[#allocation2 + $0x124] sm:$0xf]
    %v3221 = vld [vmem:[#allocation2 + $0x12c] sm:$0xf]
    %v3222 = vld [vmem:[#allocation2 + $0x130] sm:$0xf]
    %v3223 = vld [vmem:[#allocation2 + $0x138] sm:$0xf]
    %v3224 = vld [vmem:[#allocation2 + $0x13c] sm:$0xf]
    %v3225 = vld [vmem:[#allocation2 + $0x144] sm:$0xf]
    %v3226 = vld [vmem:[#allocation2 + $0x148] sm:$0xf]
    %v3227 = vld [vmem:[#allocation2 + $0x150] sm:$0xf]
    %v3228 = vld [vmem:[#allocation2 + $0x154] sm:$0xf]
    %v3229 = vld [vmem:[#allocation2 + $0x15c] sm:$0xf]
    %v3230 = vld [vmem:[#allocation2 + $0x160] sm:$0xf]
    %v3231 = vld [vmem:[#allocation2 + $0x168] sm:$0xf]
    %v3232 = vld [vmem:[#allocation2 + $0x16c] sm:$0xf]
    %v3233 = vld [vmem:[#allocation2 + $0x174] sm:$0xf]
    %v3234 = vld [vmem:[#allocation2 + $0x178] sm:$0xf]
    %v3235 = vld [vmem:[#allocation2 + $0x180] sm:$0xf]
    %v3236 = vld [vmem:[#allocation2 + $0x184] sm:$0xf]
    %v3237 = vld [vmem:[#allocation2 + $0x18c] sm:$0xf]
    %v3238 = vld [vmem:[#allocation2 + $0x190] sm:$0xf]
    %v3239 = vld [vmem:[#allocation2 + $0x8] sm:$0x1]
    %v3240 = vld [vmem:[#allocation2 + $0x14] sm:$0x1]
    %v3241 = vld [vmem:[#allocation2 + $0x20] sm:$0x1]
    %v3242 = vld [vmem:[#allocation2 + $0x2c] sm:$0x1]
    %v3243 = vld [vmem:[#allocation2 + $0x38] sm:$0x1]
    %v3244 = vld [vmem:[#allocation2 + $0x44] sm:$0x1]
    %v3245 = vld [vmem:[#allocation2 + $0x50] sm:$0x1]
    %v3246 = vld [vmem:[#allocation2 + $0x5c] sm:$0x1]
    %v3247 = vld [vmem:[#allocation2 + $0x68] sm:$0x1]
    %v3248 = vld [vmem:[#allocation2 + $0x74] sm:$0x1]
    %v3249 = vld [vmem:[#allocation2 + $0x80] sm:$0x1]
    %v3250 = vld [vmem:[#allocation2 + $0x8c] sm:$0x1]
    %v3251 = vld [vmem:[#allocation2 + $0x98] sm:$0x1]
    %v3252 = vld [vmem:[#allocation2 + $0xa4] sm:$0x1]
    %v3253 = vld [vmem:[#allocation2 + $0xb0] sm:$0x1]
    %v3254 = vld [vmem:[#allocation2 + $0xbc] sm:$0x1]
    %v3255 = vld [vmem:[#allocation2 + $0xe0] sm:$0x1]
    %v3256 = vld [vmem:[#allocation2 + $0xec] sm:$0x1]
    %v3257 = vld [vmem:[#allocation2 + $0xf8] sm:$0x1]
    %v3258 = vld [vmem:[#allocation2 + $0x104] sm:$0x1]
    %v3259 = vld [vmem:[#allocation2 + $0x110] sm:$0x1]
    %v3260 = vld [vmem:[#allocation2 + $0x11c] sm:$0x1]
    %v3261 = vld [vmem:[#allocation2 + $0x128] sm:$0x1]
    %v3262 = vld [vmem:[#allocation2 + $0x134] sm:$0x1]
    %v3263 = vld [vmem:[#allocation2 + $0x140] sm:$0x1]
    %v3264 = vld [vmem:[#allocation2 + $0x14c] sm:$0x1]
    %v3265 = vld [vmem:[#allocation2 + $0x158] sm:$0x1]
    %v3266 = vld [vmem:[#allocation2 + $0x164] sm:$0x1]
    %v3267 = vld [vmem:[#allocation2 + $0x170] sm:$0x1]
    %v3268 = vld [vmem:[#allocation2 + $0x17c] sm:$0x1]
    %v3269 = vld [vmem:[#allocation2 + $0x188] sm:$0x1]
    %v3270 = vld [vmem:[#allocation2 + $0x194] sm:$0x1]
    %vm3271 = vsmask.f32 3328
    %vm3272 = vsmask.f32 7440
    %vm3273 = vmor %vm3271, %vm3272
    %v3275 = vshrl.u32 %v3175, 16
    %v3277 = vrot.slane %v3275, 4
    %v3278 = vshll.u32 %v3175, 16
    %v3280 = vrot.slane %v3278, 5
    %v3281 = vor.u32 %v3277, %v3280
    %v3282 = vrot.slane %v3281, 4
    %v3284 = vshll.u32 %v3176, 16
    %v3286 = vrot.slane %v3284, 5
    %v3287 = vsel %vm3273, %v3282, %v3286
    %v3288 = vshrl.u32 %v3176, 16
    %v3290 = vrot.slane %v3288, 4
    %v3291 = vor.u32 %v3290, %v3286
    %v3292 = vrot.slane %v3291, 4
    %v3294 = vshll.u32 %v3239, 16
    %v3296 = vrot.slane %v3294, 5
    %v3297 = vsel %vm3273, %v3292, %v3296
    %v3299 = vshrl.u32 %v3177, 16
    %v3301 = vrot.slane %v3299, 4
    %v3302 = vshll.u32 %v3177, 16
    %v3304 = vrot.slane %v3302, 5
    %v3305 = vor.u32 %v3301, %v3304
    %v3306 = vrot.slane %v3305, 4
    %v3308 = vshll.u32 %v3178, 16
    %v3310 = vrot.slane %v3308, 5
    %v3311 = vsel %vm3273, %v3306, %v3310
    %v3312 = vshrl.u32 %v3178, 16
    %v3314 = vrot.slane %v3312, 4
    %v3315 = vor.u32 %v3314, %v3310
    %v3316 = vrot.slane %v3315, 4
    %v3318 = vshll.u32 %v3240, 16
    %v3320 = vrot.slane %v3318, 5
    %v3321 = vsel %vm3273, %v3316, %v3320
    %v3323 = vshrl.u32 %v3179, 16
    %v3325 = vrot.slane %v3323, 4
    %v3326 = vshll.u32 %v3179, 16
    %v3328 = vrot.slane %v3326, 5
    %v3329 = vor.u32 %v3325, %v3328
    %v3330 = vrot.slane %v3329, 4
    %v3332 = vshll.u32 %v3180, 16
    %v3334 = vrot.slane %v3332, 5
    %v3335 = vsel %vm3273, %v3330, %v3334
    %v3336 = vshrl.u32 %v3180, 16
    %v3338 = vrot.slane %v3336, 4
    %v3339 = vor.u32 %v3338, %v3334
    %v3340 = vrot.slane %v3339, 4
    %v3342 = vshll.u32 %v3241, 16
    %v3344 = vrot.slane %v3342, 5
    %v3345 = vsel %vm3273, %v3340, %v3344
    %v3347 = vshrl.u32 %v3181, 16
    %v3349 = vrot.slane %v3347, 4
    %v3350 = vshll.u32 %v3181, 16
    %v3352 = vrot.slane %v3350, 5
    %v3353 = vor.u32 %v3349, %v3352
    %v3354 = vrot.slane %v3353, 4
    %v3356 = vshll.u32 %v3182, 16
    %v3358 = vrot.slane %v3356, 5
    %v3359 = vsel %vm3273, %v3354, %v3358
    %v3360 = vshrl.u32 %v3182, 16
    %v3362 = vrot.slane %v3360, 4
    %v3363 = vor.u32 %v3362, %v3358
    %v3364 = vrot.slane %v3363, 4
    %v3366 = vshll.u32 %v3242, 16
    %v3368 = vrot.slane %v3366, 5
    %v3369 = vsel %vm3273, %v3364, %v3368
    %v3371 = vshrl.u32 %v3183, 16
    %v3373 = vrot.slane %v3371, 4
    %v3374 = vshll.u32 %v3183, 16
    %v3376 = vrot.slane %v3374, 5
    %v3377 = vor.u32 %v3373, %v3376
    %v3378 = vrot.slane %v3377, 4
    %v3380 = vshll.u32 %v3184, 16
    %v3382 = vrot.slane %v3380, 5
    %v3383 = vsel %vm3273, %v3378, %v3382
    %v3384 = vshrl.u32 %v3184, 16
    %v3386 = vrot.slane %v3384, 4
    %v3387 = vor.u32 %v3386, %v3382
    %v3388 = vrot.slane %v3387, 4
    %v3390 = vshll.u32 %v3243, 16
    %v3392 = vrot.slane %v3390, 5
    %v3393 = vsel %vm3273, %v3388, %v3392
    %v3395 = vshrl.u32 %v3185, 16
    %v3397 = vrot.slane %v3395, 4
    %v3398 = vshll.u32 %v3185, 16
    %v3400 = vrot.slane %v3398, 5
    %v3401 = vor.u32 %v3397, %v3400
    %v3402 = vrot.slane %v3401, 4
    %v3404 = vshll.u32 %v3186, 16
    %v3406 = vrot.slane %v3404, 5
    %v3407 = vsel %vm3273, %v3402, %v3406
    %v3408 = vshrl.u32 %v3186, 16
    %v3410 = vrot.slane %v3408, 4
    %v3411 = vor.u32 %v3410, %v3406
    %v3412 = vrot.slane %v3411, 4
    %v3414 = vshll.u32 %v3244, 16
    %v3416 = vrot.slane %v3414, 5
    %v3417 = vsel %vm3273, %v3412, %v3416
    %v3419 = vshrl.u32 %v3187, 16
    %v3421 = vrot.slane %v3419, 4
    %v3422 = vshll.u32 %v3187, 16
    %v3424 = vrot.slane %v3422, 5
    %v3425 = vor.u32 %v3421, %v3424
    %v3426 = vrot.slane %v3425, 4
    %v3428 = vshll.u32 %v3188, 16
    %v3430 = vrot.slane %v3428, 5
    %v3431 = vsel %vm3273, %v3426, %v3430
    %v3432 = vshrl.u32 %v3188, 16
    %v3434 = vrot.slane %v3432, 4
    %v3435 = vor.u32 %v3434, %v3430
    %v3436 = vrot.slane %v3435, 4
    %v3438 = vshll.u32 %v3245, 16
    %v3440 = vrot.slane %v3438, 5
    %v3441 = vsel %vm3273, %v3436, %v3440
    %v3443 = vshrl.u32 %v3189, 16
    %v3445 = vrot.slane %v3443, 4
    %v3446 = vshll.u32 %v3189, 16
    %v3448 = vrot.slane %v3446, 5
    %v3449 = vor.u32 %v3445, %v3448
    %v3450 = vrot.slane %v3449, 4
    %v3452 = vshll.u32 %v3190, 16
    %v3454 = vrot.slane %v3452, 5
    %v3455 = vsel %vm3273, %v3450, %v3454
    %v3456 = vshrl.u32 %v3190, 16
    %v3458 = vrot.slane %v3456, 4
    %v3459 = vor.u32 %v3458, %v3454
    %v3460 = vrot.slane %v3459, 4
    %v3462 = vshll.u32 %v3246, 16
    %v3464 = vrot.slane %v3462, 5
    %v3465 = vsel %vm3273, %v3460, %v3464
    %v3467 = vshrl.u32 %v3191, 16
    %v3469 = vrot.slane %v3467, 4
    %v3470 = vshll.u32 %v3191, 16
    %v3472 = vrot.slane %v3470, 5
    %v3473 = vor.u32 %v3469, %v3472
    %v3474 = vrot.slane %v3473, 4
    %v3476 = vshll.u32 %v3192, 16
    %v3478 = vrot.slane %v3476, 5
    %v3479 = vsel %vm3273, %v3474, %v3478
    %v3480 = vshrl.u32 %v3192, 16
    %v3482 = vrot.slane %v3480, 4
    %v3483 = vor.u32 %v3482, %v3478
    %v3484 = vrot.slane %v3483, 4
    %v3486 = vshll.u32 %v3247, 16
    %v3488 = vrot.slane %v3486, 5
    %v3489 = vsel %vm3273, %v3484, %v3488
    %v3491 = vshrl.u32 %v3193, 16
    %v3493 = vrot.slane %v3491, 4
    %v3494 = vshll.u32 %v3193, 16
    %v3496 = vrot.slane %v3494, 5
    %v3497 = vor.u32 %v3493, %v3496
    %v3498 = vrot.slane %v3497, 4
    %v3500 = vshll.u32 %v3194, 16
    %v3502 = vrot.slane %v3500, 5
    %v3503 = vsel %vm3273, %v3498, %v3502
    %v3504 = vshrl.u32 %v3194, 16
    %v3506 = vrot.slane %v3504, 4
    %v3507 = vor.u32 %v3506, %v3502
    %v3508 = vrot.slane %v3507, 4
    %v3510 = vshll.u32 %v3248, 16
    %v3512 = vrot.slane %v3510, 5
    %v3513 = vsel %vm3273, %v3508, %v3512
    %v3515 = vshrl.u32 %v3195, 16
    %v3517 = vrot.slane %v3515, 4
    %v3518 = vshll.u32 %v3195, 16
    %v3520 = vrot.slane %v3518, 5
    %v3521 = vor.u32 %v3517, %v3520
    %v3522 = vrot.slane %v3521, 4
    %v3524 = vshll.u32 %v3196, 16
    %v3526 = vrot.slane %v3524, 5
    %v3527 = vsel %vm3273, %v3522, %v3526
    %v3528 = vshrl.u32 %v3196, 16
    %v3530 = vrot.slane %v3528, 4
    %v3531 = vor.u32 %v3530, %v3526
    %v3532 = vrot.slane %v3531, 4
    %v3534 = vshll.u32 %v3249, 16
    %v3536 = vrot.slane %v3534, 5
    %v3537 = vsel %vm3273, %v3532, %v3536
    %v3539 = vshrl.u32 %v3197, 16
    %v3541 = vrot.slane %v3539, 4
    %v3542 = vshll.u32 %v3197, 16
    %v3544 = vrot.slane %v3542, 5
    %v3545 = vor.u32 %v3541, %v3544
    %v3546 = vrot.slane %v3545, 4
    %v3548 = vshll.u32 %v3198, 16
    %v3550 = vrot.slane %v3548, 5
    %v3551 = vsel %vm3273, %v3546, %v3550
    %v3552 = vshrl.u32 %v3198, 16
    %v3554 = vrot.slane %v3552, 4
    %v3555 = vor.u32 %v3554, %v3550
    %v3556 = vrot.slane %v3555, 4
    %v3558 = vshll.u32 %v3250, 16
    %v3560 = vrot.slane %v3558, 5
    %v3561 = vsel %vm3273, %v3556, %v3560
    %v3563 = vshrl.u32 %v3199, 16
    %v3565 = vrot.slane %v3563, 4
    %v3566 = vshll.u32 %v3199, 16
    %v3568 = vrot.slane %v3566, 5
    %v3569 = vor.u32 %v3565, %v3568
    %v3570 = vrot.slane %v3569, 4
    %v3572 = vshll.u32 %v3200, 16
    %v3574 = vrot.slane %v3572, 5
    %v3575 = vsel %vm3273, %v3570, %v3574
    %v3576 = vshrl.u32 %v3200, 16
    %v3578 = vrot.slane %v3576, 4
    %v3579 = vor.u32 %v3578, %v3574
    %v3580 = vrot.slane %v3579, 4
    %v3582 = vshll.u32 %v3251, 16
    %v3584 = vrot.slane %v3582, 5
    %v3585 = vsel %vm3273, %v3580, %v3584
    %v3587 = vshrl.u32 %v3201, 16
    %v3589 = vrot.slane %v3587, 4
    %v3590 = vshll.u32 %v3201, 16
    %v3592 = vrot.slane %v3590, 5
    %v3593 = vor.u32 %v3589, %v3592
    %v3594 = vrot.slane %v3593, 4
    %v3596 = vshll.u32 %v3202, 16
    %v3598 = vrot.slane %v3596, 5
    %v3599 = vsel %vm3273, %v3594, %v3598
    %v3600 = vshrl.u32 %v3202, 16
    %v3602 = vrot.slane %v3600, 4
    %v3603 = vor.u32 %v3602, %v3598
    %v3604 = vrot.slane %v3603, 4
    %v3606 = vshll.u32 %v3252, 16
    %v3608 = vrot.slane %v3606, 5
    %v3609 = vsel %vm3273, %v3604, %v3608
    %v3611 = vshrl.u32 %v3203, 16
    %v3613 = vrot.slane %v3611, 4
    %v3614 = vshll.u32 %v3203, 16
    %v3616 = vrot.slane %v3614, 5
    %v3617 = vor.u32 %v3613, %v3616
    %v3618 = vrot.slane %v3617, 4
    %v3620 = vshll.u32 %v3204, 16
    %v3622 = vrot.slane %v3620, 5
    %v3623 = vsel %vm3273, %v3618, %v3622
    %v3624 = vshrl.u32 %v3204, 16
    %v3626 = vrot.slane %v3624, 4
    %v3627 = vor.u32 %v3626, %v3622
    %v3628 = vrot.slane %v3627, 4
    %v3630 = vshll.u32 %v3253, 16
    %v3632 = vrot.slane %v3630, 5
    %v3633 = vsel %vm3273, %v3628, %v3632
    %v3635 = vshrl.u32 %v3205, 16
    %v3637 = vrot.slane %v3635, 4
    %v3638 = vshll.u32 %v3205, 16
    %v3640 = vrot.slane %v3638, 5
    %v3641 = vor.u32 %v3637, %v3640
    %v3642 = vrot.slane %v3641, 4
    %v3644 = vshll.u32 %v3206, 16
    %v3646 = vrot.slane %v3644, 5
    %v3647 = vsel %vm3273, %v3642, %v3646
    %v3648 = vshrl.u32 %v3206, 16
    %v3650 = vrot.slane %v3648, 4
    %v3651 = vor.u32 %v3650, %v3646
    %v3652 = vrot.slane %v3651, 4
    %v3654 = vshll.u32 %v3254, 16
    %v3656 = vrot.slane %v3654, 5
    %v3657 = vsel %vm3273, %v3652, %v3656
    %v3659 = vshrl.u32 %v3207, 16
    %v3661 = vrot.slane %v3659, 4
    %v3662 = vshll.u32 %v3207, 16
    %v3664 = vrot.slane %v3662, 5
    %v3665 = vor.u32 %v3661, %v3664
    %v3666 = vrot.slane %v3665, 4
    %v3668 = vshll.u32 %v3208, 16
    %v3670 = vrot.slane %v3668, 5
    %v3671 = vsel %vm3273, %v3666, %v3670
    %v3672 = vshrl.u32 %v3208, 16
    %v3674 = vrot.slane %v3672, 4
    %v3675 = vor.u32 %v3674, %v3670
    %v3676 = vrot.slane %v3675, 4
    %v3678 = vshll.u32 %v3255, 16
    %v3680 = vrot.slane %v3678, 5
    %v3681 = vsel %vm3273, %v3676, %v3680
    %v3683 = vshrl.u32 %v3209, 16
    %v3685 = vrot.slane %v3683, 4
    %v3686 = vshll.u32 %v3209, 16
    %v3688 = vrot.slane %v3686, 5
    %v3689 = vor.u32 %v3685, %v3688
    %v3690 = vrot.slane %v3689, 4
    %v3692 = vshll.u32 %v3210, 16
    %v3694 = vrot.slane %v3692, 5
    %v3695 = vsel %vm3273, %v3690, %v3694
    %v3696 = vshrl.u32 %v3210, 16
    %v3698 = vrot.slane %v3696, 4
    %v3699 = vor.u32 %v3698, %v3694
    %v3700 = vrot.slane %v3699, 4
    %v3702 = vshll.u32 %v3256, 16
    %v3704 = vrot.slane %v3702, 5
    %v3705 = vsel %vm3273, %v3700, %v3704
    %v3707 = vshrl.u32 %v3211, 16
    %v3709 = vrot.slane %v3707, 4
    %v3710 = vshll.u32 %v3211, 16
    %v3712 = vrot.slane %v3710, 5
    %v3713 = vor.u32 %v3709, %v3712
    %v3714 = vrot.slane %v3713, 4
    %v3716 = vshll.u32 %v3212, 16
    %v3718 = vrot.slane %v3716, 5
    %v3719 = vsel %vm3273, %v3714, %v3718
    %v3720 = vshrl.u32 %v3212, 16
    %v3722 = vrot.slane %v3720, 4
    %v3723 = vor.u32 %v3722, %v3718
    %v3724 = vrot.slane %v3723, 4
    %v3726 = vshll.u32 %v3257, 16
    %v3728 = vrot.slane %v3726, 5
    %v3729 = vsel %vm3273, %v3724, %v3728
    %v3731 = vshrl.u32 %v3213, 16
    %v3733 = vrot.slane %v3731, 4
    %v3734 = vshll.u32 %v3213, 16
    %v3736 = vrot.slane %v3734, 5
    %v3737 = vor.u32 %v3733, %v3736
    %v3738 = vrot.slane %v3737, 4
    %v3740 = vshll.u32 %v3214, 16
    %v3742 = vrot.slane %v3740, 5
    %v3743 = vsel %vm3273, %v3738, %v3742
    %v3744 = vshrl.u32 %v3214, 16
    %v3746 = vrot.slane %v3744, 4
    %v3747 = vor.u32 %v3746, %v3742
    %v3748 = vrot.slane %v3747, 4
    %v3750 = vshll.u32 %v3258, 16
    %v3752 = vrot.slane %v3750, 5
    %v3753 = vsel %vm3273, %v3748, %v3752
    %v3755 = vshrl.u32 %v3215, 16
    %v3757 = vrot.slane %v3755, 4
    %v3758 = vshll.u32 %v3215, 16
    %v3760 = vrot.slane %v3758, 5
    %v3761 = vor.u32 %v3757, %v3760
    %v3762 = vrot.slane %v3761, 4
    %v3764 = vshll.u32 %v3216, 16
    %v3766 = vrot.slane %v3764, 5
    %v3767 = vsel %vm3273, %v3762, %v3766
    %v3768 = vshrl.u32 %v3216, 16
    %v3770 = vrot.slane %v3768, 4
    %v3771 = vor.u32 %v3770, %v3766
    %v3772 = vrot.slane %v3771, 4
    %v3774 = vshll.u32 %v3259, 16
    %v3776 = vrot.slane %v3774, 5
    %v3777 = vsel %vm3273, %v3772, %v3776
    %v3779 = vshrl.u32 %v3217, 16
    %v3781 = vrot.slane %v3779, 4
    %v3782 = vshll.u32 %v3217, 16
    %v3784 = vrot.slane %v3782, 5
    %v3785 = vor.u32 %v3781, %v3784
    %v3786 = vrot.slane %v3785, 4
    %v3788 = vshll.u32 %v3218, 16
    %v3790 = vrot.slane %v3788, 5
    %v3791 = vsel %vm3273, %v3786, %v3790
    %v3792 = vshrl.u32 %v3218, 16
    %v3794 = vrot.slane %v3792, 4
    %v3795 = vor.u32 %v3794, %v3790
    %v3796 = vrot.slane %v3795, 4
    %v3798 = vshll.u32 %v3260, 16
    %v3800 = vrot.slane %v3798, 5
    %v3801 = vsel %vm3273, %v3796, %v3800
    %v3803 = vshrl.u32 %v3219, 16
    %v3805 = vrot.slane %v3803, 4
    %v3806 = vshll.u32 %v3219, 16
    %v3808 = vrot.slane %v3806, 5
    %v3809 = vor.u32 %v3805, %v3808
    %v3810 = vrot.slane %v3809, 4
    %v3812 = vshll.u32 %v3220, 16
    %v3814 = vrot.slane %v3812, 5
    %v3815 = vsel %vm3273, %v3810, %v3814
    %v3816 = vshrl.u32 %v3220, 16
    %v3818 = vrot.slane %v3816, 4
    %v3819 = vor.u32 %v3818, %v3814
    %v3820 = vrot.slane %v3819, 4
    %v3822 = vshll.u32 %v3261, 16
    %v3824 = vrot.slane %v3822, 5
    %v3825 = vsel %vm3273, %v3820, %v3824
    %v3827 = vshrl.u32 %v3221, 16
    %v3829 = vrot.slane %v3827, 4
    %v3830 = vshll.u32 %v3221, 16
    %v3832 = vrot.slane %v3830, 5
    %v3833 = vor.u32 %v3829, %v3832
    %v3834 = vrot.slane %v3833, 4
    %v3836 = vshll.u32 %v3222, 16
    %v3838 = vrot.slane %v3836, 5
    %v3839 = vsel %vm3273, %v3834, %v3838
    %v3840 = vshrl.u32 %v3222, 16
    %v3842 = vrot.slane %v3840, 4
    %v3843 = vor.u32 %v3842, %v3838
    %v3844 = vrot.slane %v3843, 4
    %v3846 = vshll.u32 %v3262, 16
    %v3848 = vrot.slane %v3846, 5
    %v3849 = vsel %vm3273, %v3844, %v3848
    %v3851 = vshrl.u32 %v3223, 16
    %v3853 = vrot.slane %v3851, 4
    %v3854 = vshll.u32 %v3223, 16
    %v3856 = vrot.slane %v3854, 5
    %v3857 = vor.u32 %v3853, %v3856
    %v3858 = vrot.slane %v3857, 4
    %v3860 = vshll.u32 %v3224, 16
    %v3862 = vrot.slane %v3860, 5
    %v3863 = vsel %vm3273, %v3858, %v3862
    %v3864 = vshrl.u32 %v3224, 16
    %v3866 = vrot.slane %v3864, 4
    %v3867 = vor.u32 %v3866, %v3862
    %v3868 = vrot.slane %v3867, 4
    %v3870 = vshll.u32 %v3263, 16
    %v3872 = vrot.slane %v3870, 5
    %v3873 = vsel %vm3273, %v3868, %v3872
    %v3875 = vshrl.u32 %v3225, 16
    %v3877 = vrot.slane %v3875, 4
    %v3878 = vshll.u32 %v3225, 16
    %v3880 = vrot.slane %v3878, 5
    %v3881 = vor.u32 %v3877, %v3880
    %v3882 = vrot.slane %v3881, 4
    %v3884 = vshll.u32 %v3226, 16
    %v3886 = vrot.slane %v3884, 5
    %v3887 = vsel %vm3273, %v3882, %v3886
    %v3888 = vshrl.u32 %v3226, 16
    %v3890 = vrot.slane %v3888, 4
    %v3891 = vor.u32 %v3890, %v3886
    %v3892 = vrot.slane %v3891, 4
    %v3894 = vshll.u32 %v3264, 16
    %v3896 = vrot.slane %v3894, 5
    %v3897 = vsel %vm3273, %v3892, %v3896
    %v3899 = vshrl.u32 %v3227, 16
    %v3901 = vrot.slane %v3899, 4
    %v3902 = vshll.u32 %v3227, 16
    %v3904 = vrot.slane %v3902, 5
    %v3905 = vor.u32 %v3901, %v3904
    %v3906 = vrot.slane %v3905, 4
    %v3908 = vshll.u32 %v3228, 16
    %v3910 = vrot.slane %v3908, 5
    %v3911 = vsel %vm3273, %v3906, %v3910
    %v3912 = vshrl.u32 %v3228, 16
    %v3914 = vrot.slane %v3912, 4
    %v3915 = vor.u32 %v3914, %v3910
    %v3916 = vrot.slane %v3915, 4
    %v3918 = vshll.u32 %v3265, 16
    %v3920 = vrot.slane %v3918, 5
    %v3921 = vsel %vm3273, %v3916, %v3920
    %v3923 = vshrl.u32 %v3229, 16
    %v3925 = vrot.slane %v3923, 4
    %v3926 = vshll.u32 %v3229, 16
    %v3928 = vrot.slane %v3926, 5
    %v3929 = vor.u32 %v3925, %v3928
    %v3930 = vrot.slane %v3929, 4
    %v3932 = vshll.u32 %v3230, 16
    %v3934 = vrot.slane %v3932, 5
    %v3935 = vsel %vm3273, %v3930, %v3934
    %v3936 = vshrl.u32 %v3230, 16
    %v3938 = vrot.slane %v3936, 4
    %v3939 = vor.u32 %v3938, %v3934
    %v3940 = vrot.slane %v3939, 4
    %v3942 = vshll.u32 %v3266, 16
    %v3944 = vrot.slane %v3942, 5
    %v3945 = vsel %vm3273, %v3940, %v3944
    %v3947 = vshrl.u32 %v3231, 16
    %v3949 = vrot.slane %v3947, 4
    %v3950 = vshll.u32 %v3231, 16
    %v3952 = vrot.slane %v3950, 5
    %v3953 = vor.u32 %v3949, %v3952
    %v3954 = vrot.slane %v3953, 4
    %v3956 = vshll.u32 %v3232, 16
    %v3958 = vrot.slane %v3956, 5
    %v3959 = vsel %vm3273, %v3954, %v3958
    %v3960 = vshrl.u32 %v3232, 16
    %v3962 = vrot.slane %v3960, 4
    %v3963 = vor.u32 %v3962, %v3958
    %v3964 = vrot.slane %v3963, 4
    %v3966 = vshll.u32 %v3267, 16
    %v3968 = vrot.slane %v3966, 5
    %v3969 = vsel %vm3273, %v3964, %v3968
    %v3971 = vshrl.u32 %v3233, 16
    %v3973 = vrot.slane %v3971, 4
    %v3974 = vshll.u32 %v3233, 16
    %v3976 = vrot.slane %v3974, 5
    %v3977 = vor.u32 %v3973, %v3976
    %v3978 = vrot.slane %v3977, 4
    %v3980 = vshll.u32 %v3234, 16
    %v3982 = vrot.slane %v3980, 5
    %v3983 = vsel %vm3273, %v3978, %v3982
    %v3984 = vshrl.u32 %v3234, 16
    %v3986 = vrot.slane %v3984, 4
    %v3987 = vor.u32 %v3986, %v3982
    %v3988 = vrot.slane %v3987, 4
    %v3990 = vshll.u32 %v3268, 16
    %v3992 = vrot.slane %v3990, 5
    %v3993 = vsel %vm3273, %v3988, %v3992
    %v3995 = vshrl.u32 %v3235, 16
    %v3997 = vrot.slane %v3995, 4
    %v3998 = vshll.u32 %v3235, 16
    %v4000 = vrot.slane %v3998, 5
    %v4001 = vor.u32 %v3997, %v4000
    %v4002 = vrot.slane %v4001, 4
    %v4004 = vshll.u32 %v3236, 16
    %v4006 = vrot.slane %v4004, 5
    %v4007 = vsel %vm3273, %v4002, %v4006
    %v4008 = vshrl.u32 %v3236, 16
    %v4010 = vrot.slane %v4008, 4
    %v4011 = vor.u32 %v4010, %v4006
    %v4012 = vrot.slane %v4011, 4
    %v4014 = vshll.u32 %v3269, 16
    %v4016 = vrot.slane %v4014, 5
    %v4017 = vsel %vm3273, %v4012, %v4016
    %v4019 = vshrl.u32 %v3237, 16
    %v4021 = vrot.slane %v4019, 4
    %v4022 = vshll.u32 %v3237, 16
    %v4024 = vrot.slane %v4022, 5
    %v4025 = vor.u32 %v4021, %v4024
    %v4026 = vrot.slane %v4025, 4
    %v4028 = vshll.u32 %v3238, 16
    %v4030 = vrot.slane %v4028, 5
    %v4031 = vsel %vm3273, %v4026, %v4030
    %v4032 = vshrl.u32 %v3238, 16
    %v4034 = vrot.slane %v4032, 4
    %v4035 = vor.u32 %v4034, %v4030
    %v4036 = vrot.slane %v4035, 4
    %v4038 = vshll.u32 %v3270, 16
    %v4040 = vrot.slane %v4038, 5
    %v4041 = vsel %vm3273, %v4036, %v4040
    %v4042 = vld [vmem:[#allocation2] sm:$0xe]
    %v4043 = vld [vmem:[#allocation2 + $0xc] sm:$0xe]
    %v4044 = vld [vmem:[#allocation2 + $0x18] sm:$0xe]
    %v4045 = vld [vmem:[#allocation2 + $0x24] sm:$0xe]
    %v4046 = vld [vmem:[#allocation2 + $0x30] sm:$0xe]
    %v4047 = vld [vmem:[#allocation2 + $0x3c] sm:$0xe]
    %v4048 = vld [vmem:[#allocation2 + $0x48] sm:$0xe]
    %v4049 = vld [vmem:[#allocation2 + $0x54] sm:$0xe]
    %v4050 = vld [vmem:[#allocation2 + $0x60] sm:$0xe]
    %v4051 = vld [vmem:[#allocation2 + $0x6c] sm:$0xe]
    %v4052 = vld [vmem:[#allocation2 + $0x78] sm:$0xe]
    %v4053 = vld [vmem:[#allocation2 + $0x84] sm:$0xe]
    %v4054 = vld [vmem:[#allocation2 + $0x90] sm:$0xe]
    %v4055 = vld [vmem:[#allocation2 + $0x9c] sm:$0xe]
    %v4056 = vld [vmem:[#allocation2 + $0xa8] sm:$0xe]
    %v4057 = vld [vmem:[#allocation2 + $0xb4] sm:$0xe]
    %v4058 = vld [vmem:[#allocation2 + $0xd8] sm:$0xe]
    %v4059 = vld [vmem:[#allocation2 + $0xe4] sm:$0xe]
    %v4060 = vld [vmem:[#allocation2 + $0xf0] sm:$0xe]
    %v4061 = vld [vmem:[#allocation2 + $0xfc] sm:$0xe]
    %v4062 = vld [vmem:[#allocation2 + $0x108] sm:$0xe]
    %v4063 = vld [vmem:[#allocation2 + $0x114] sm:$0xe]
    %v4064 = vld [vmem:[#allocation2 + $0x120] sm:$0xe]
    %v4065 = vld [vmem:[#allocation2 + $0x12c] sm:$0xe]
    %v4066 = vld [vmem:[#allocation2 + $0x138] sm:$0xe]
    %v4067 = vld [vmem:[#allocation2 + $0x144] sm:$0xe]
    %v4068 = vld [vmem:[#allocation2 + $0x150] sm:$0xe]
    %v4069 = vld [vmem:[#allocation2 + $0x15c] sm:$0xe]
    %v4070 = vld [vmem:[#allocation2 + $0x168] sm:$0xe]
    %v4071 = vld [vmem:[#allocation2 + $0x174] sm:$0xe]
    %v4072 = vld [vmem:[#allocation2 + $0x180] sm:$0xe]
    %v4073 = vld [vmem:[#allocation2 + $0x18c] sm:$0xe]
    %vm4170 = vcmask 1042432
    %vm4171 = vcmask 1046532
    %vm4172 = vmor %vm4170, %vm4171
    %v4173 = vrot.slane %v4042, 5
    %v4174 = vrot.slane %v4173, 4
    %v4175 = vrot.slane %v3176, 5
    %v4176 = vsel %vm4172, %v4174, %v4175
    %v4177 = vrot.slane %v4175, 4
    %v4178 = vrot.slane %v3239, 5
    %v4179 = vsel %vm4172, %v4177, %v4178
    %v4180 = vrot.slane %v4043, 5
    %v4181 = vrot.slane %v4180, 4
    %v4182 = vrot.slane %v3178, 5
    %v4183 = vsel %vm4172, %v4181, %v4182
    %v4184 = vrot.slane %v4182, 4
    %v4185 = vrot.slane %v3240, 5
    %v4186 = vsel %vm4172, %v4184, %v4185
    %v4187 = vrot.slane %v4044, 5
    %v4188 = vrot.slane %v4187, 4
    %v4189 = vrot.slane %v3180, 5
    %v4190 = vsel %vm4172, %v4188, %v4189
    %v4191 = vrot.slane %v4189, 4
    %v4192 = vrot.slane %v3241, 5
    %v4193 = vsel %vm4172, %v4191, %v4192
    %v4194 = vrot.slane %v4045, 5
    %v4195 = vrot.slane %v4194, 4
    %v4196 = vrot.slane %v3182, 5
    %v4197 = vsel %vm4172, %v4195, %v4196
    %v4198 = vrot.slane %v4196, 4
    %v4199 = vrot.slane %v3242, 5
    %v4200 = vsel %vm4172, %v4198, %v4199
    %v4201 = vrot.slane %v4046, 5
    %v4202 = vrot.slane %v4201, 4
    %v4203 = vrot.slane %v3184, 5
    %v4204 = vsel %vm4172, %v4202, %v4203
    %v4205 = vrot.slane %v4203, 4
    %v4206 = vrot.slane %v3243, 5
    %v4207 = vsel %vm4172, %v4205, %v4206
    %v4208 = vrot.slane %v4047, 5
    %v4209 = vrot.slane %v4208, 4
    %v4210 = vrot.slane %v3186, 5
    %v4211 = vsel %vm4172, %v4209, %v4210
    %v4212 = vrot.slane %v4210, 4
    %v4213 = vrot.slane %v3244, 5
    %v4214 = vsel %vm4172, %v4212, %v4213
    %v4215 = vrot.slane %v4048, 5
    %v4216 = vrot.slane %v4215, 4
    %v4217 = vrot.slane %v3188, 5
    %v4218 = vsel %vm4172, %v4216, %v4217
    %v4219 = vrot.slane %v4217, 4
    %v4220 = vrot.slane %v3245, 5
    %v4221 = vsel %vm4172, %v4219, %v4220
    %v4222 = vrot.slane %v4049, 5
    %v4223 = vrot.slane %v4222, 4
    %v4224 = vrot.slane %v3190, 5
    %v4225 = vsel %vm4172, %v4223, %v4224
    %v4226 = vrot.slane %v4224, 4
    %v4227 = vrot.slane %v3246, 5
    %v4228 = vsel %vm4172, %v4226, %v4227
    %v4229 = vrot.slane %v4050, 5
    %v4230 = vrot.slane %v4229, 4
    %v4231 = vrot.slane %v3192, 5
    %v4232 = vsel %vm4172, %v4230, %v4231
    %v4233 = vrot.slane %v4231, 4
    %v4234 = vrot.slane %v3247, 5
    %v4235 = vsel %vm4172, %v4233, %v4234
    %v4236 = vrot.slane %v4051, 5
    %v4237 = vrot.slane %v4236, 4
    %v4238 = vrot.slane %v3194, 5
    %v4239 = vsel %vm4172, %v4237, %v4238
    %v4240 = vrot.slane %v4238, 4
    %v4241 = vrot.slane %v3248, 5
    %v4242 = vsel %vm4172, %v4240, %v4241
    %v4243 = vrot.slane %v4052, 5
    %v4244 = vrot.slane %v4243, 4
    %v4245 = vrot.slane %v3196, 5
    %v4246 = vsel %vm4172, %v4244, %v4245
    %v4247 = vrot.slane %v4245, 4
    %v4248 = vrot.slane %v3249, 5
    %v4249 = vsel %vm4172, %v4247, %v4248
    %v4250 = vrot.slane %v4053, 5
    %v4251 = vrot.slane %v4250, 4
    %v4252 = vrot.slane %v3198, 5
    %v4253 = vsel %vm4172, %v4251, %v4252
    %v4254 = vrot.slane %v4252, 4
    %v4255 = vrot.slane %v3250, 5
    %v4256 = vsel %vm4172, %v4254, %v4255
    %v4257 = vrot.slane %v4054, 5
    %v4258 = vrot.slane %v4257, 4
    %v4259 = vrot.slane %v3200, 5
    %v4260 = vsel %vm4172, %v4258, %v4259
    %v4261 = vrot.slane %v4259, 4
    %v4262 = vrot.slane %v3251, 5
    %v4263 = vsel %vm4172, %v4261, %v4262
    %v4264 = vrot.slane %v4055, 5
    %v4265 = vrot.slane %v4264, 4
    %v4266 = vrot.slane %v3202, 5
    %v4267 = vsel %vm4172, %v4265, %v4266
    %v4268 = vrot.slane %v4266, 4
    %v4269 = vrot.slane %v3252, 5
    %v4270 = vsel %vm4172, %v4268, %v4269
    %v4271 = vrot.slane %v4056, 5
    %v4272 = vrot.slane %v4271, 4
    %v4273 = vrot.slane %v3204, 5
    %v4274 = vsel %vm4172, %v4272, %v4273
    %v4275 = vrot.slane %v4273, 4
    %v4276 = vrot.slane %v3253, 5
    %v4277 = vsel %vm4172, %v4275, %v4276
    %v4278 = vrot.slane %v4057, 5
    %v4279 = vrot.slane %v4278, 4
    %v4280 = vrot.slane %v3206, 5
    %v4281 = vsel %vm4172, %v4279, %v4280
    %v4282 = vrot.slane %v4280, 4
    %v4283 = vrot.slane %v3254, 5
    %v4284 = vsel %vm4172, %v4282, %v4283
    %v4285 = vrot.slane %v4058, 5
    %v4286 = vrot.slane %v4285, 4
    %v4287 = vrot.slane %v3208, 5
    %v4288 = vsel %vm4172, %v4286, %v4287
    %v4289 = vrot.slane %v4287, 4
    %v4290 = vrot.slane %v3255, 5
    %v4291 = vsel %vm4172, %v4289, %v4290
    %v4292 = vrot.slane %v4059, 5
    %v4293 = vrot.slane %v4292, 4
    %v4294 = vrot.slane %v3210, 5
    %v4295 = vsel %vm4172, %v4293, %v4294
    %v4296 = vrot.slane %v4294, 4
    %v4297 = vrot.slane %v3256, 5
    %v4298 = vsel %vm4172, %v4296, %v4297
    %v4299 = vrot.slane %v4060, 5
    %v4300 = vrot.slane %v4299, 4
    %v4301 = vrot.slane %v3212, 5
    %v4302 = vsel %vm4172, %v4300, %v4301
    %v4303 = vrot.slane %v4301, 4
    %v4304 = vrot.slane %v3257, 5
    %v4305 = vsel %vm4172, %v4303, %v4304
    %v4306 = vrot.slane %v4061, 5
    %v4307 = vrot.slane %v4306, 4
    %v4308 = vrot.slane %v3214, 5
    %v4309 = vsel %vm4172, %v4307, %v4308
    %v4310 = vrot.slane %v4308, 4
    %v4311 = vrot.slane %v3258, 5
    %v4312 = vsel %vm4172, %v4310, %v4311
    %v4313 = vrot.slane %v4062, 5
    %v4314 = vrot.slane %v4313, 4
    %v4315 = vrot.slane %v3216, 5
    %v4316 = vsel %vm4172, %v4314, %v4315
    %v4317 = vrot.slane %v4315, 4
    %v4318 = vrot.slane %v3259, 5
    %v4319 = vsel %vm4172, %v4317, %v4318
    %v4320 = vrot.slane %v4063, 5
    %v4321 = vrot.slane %v4320, 4
    %v4322 = vrot.slane %v3218, 5
    %v4323 = vsel %vm4172, %v4321, %v4322
    %v4324 = vrot.slane %v4322, 4
    %v4325 = vrot.slane %v3260, 5
    %v4326 = vsel %vm4172, %v4324, %v4325
    %v4327 = vrot.slane %v4064, 5
    %v4328 = vrot.slane %v4327, 4
    %v4329 = vrot.slane %v3220, 5
    %v4330 = vsel %vm4172, %v4328, %v4329
    %v4331 = vrot.slane %v4329, 4
    %v4332 = vrot.slane %v3261, 5
    %v4333 = vsel %vm4172, %v4331, %v4332
    %v4334 = vrot.slane %v4065, 5
    %v4335 = vrot.slane %v4334, 4
    %v4336 = vrot.slane %v3222, 5
    %v4337 = vsel %vm4172, %v4335, %v4336
    %v4338 = vrot.slane %v4336, 4
    %v4339 = vrot.slane %v3262, 5
    %v4340 = vsel %vm4172, %v4338, %v4339
    %v4341 = vrot.slane %v4066, 5
    %v4342 = vrot.slane %v4341, 4
    %v4343 = vrot.slane %v3224, 5
    %v4344 = vsel %vm4172, %v4342, %v4343
    %v4345 = vrot.slane %v4343, 4
    %v4346 = vrot.slane %v3263, 5
    %v4347 = vsel %vm4172, %v4345, %v4346
    %v4348 = vrot.slane %v4067, 5
    %v4349 = vrot.slane %v4348, 4
    %v4350 = vrot.slane %v3226, 5
    %v4351 = vsel %vm4172, %v4349, %v4350
    %v4352 = vrot.slane %v4350, 4
    %v4353 = vrot.slane %v3264, 5
    %v4354 = vsel %vm4172, %v4352, %v4353
    %v4355 = vrot.slane %v4068, 5
    %v4356 = vrot.slane %v4355, 4
    %v4357 = vrot.slane %v3228, 5
    %v4358 = vsel %vm4172, %v4356, %v4357
    %v4359 = vrot.slane %v4357, 4
    %v4360 = vrot.slane %v3265, 5
    %v4361 = vsel %vm4172, %v4359, %v4360
    %v4362 = vrot.slane %v4069, 5
    %v4363 = vrot.slane %v4362, 4
    %v4364 = vrot.slane %v3230, 5
    %v4365 = vsel %vm4172, %v4363, %v4364
    %v4366 = vrot.slane %v4364, 4
    %v4367 = vrot.slane %v3266, 5
    %v4368 = vsel %vm4172, %v4366, %v4367
    %v4369 = vrot.slane %v4070, 5
    %v4370 = vrot.slane %v4369, 4
    %v4371 = vrot.slane %v3232, 5
    %v4372 = vsel %vm4172, %v4370, %v4371
    %v4373 = vrot.slane %v4371, 4
    %v4374 = vrot.slane %v3267, 5
    %v4375 = vsel %vm4172, %v4373, %v4374
    %v4376 = vrot.slane %v4071, 5
    %v4377 = vrot.slane %v4376, 4
    %v4378 = vrot.slane %v3234, 5
    %v4379 = vsel %vm4172, %v4377, %v4378
    %v4380 = vrot.slane %v4378, 4
    %v4381 = vrot.slane %v3268, 5
    %v4382 = vsel %vm4172, %v4380, %v4381
    %v4383 = vrot.slane %v4072, 5
    %v4384 = vrot.slane %v4383, 4
    %v4385 = vrot.slane %v3236, 5
    %v4386 = vsel %vm4172, %v4384, %v4385
    %v4387 = vrot.slane %v4385, 4
    %v4388 = vrot.slane %v3269, 5
    %v4389 = vsel %vm4172, %v4387, %v4388
    %v4390 = vrot.slane %v4073, 5
    %v4391 = vrot.slane %v4390, 4
    %v4392 = vrot.slane %v3238, 5
    %v4393 = vsel %vm4172, %v4391, %v4392
    %v4394 = vrot.slane %v4392, 4
    %v4395 = vrot.slane %v3270, 5
    %v4396 = vsel %vm4172, %v4394, %v4395
    %v4397 = vld [vmem:[%s1949] sm:$0xf]
    %v4398 = vld [vmem:[%s1949 + $0x4] sm:$0xf]
    %v4399 = vld [vmem:[%s1949 + $0xc] sm:$0xf]
    %v4400 = vld [vmem:[%s1949 + $0x10] sm:$0xf]
    %v4401 = vld [vmem:[%s1949 + $0x18] sm:$0xf]
    %v4402 = vld [vmem:[%s1949 + $0x1c] sm:$0xf]
    %v4403 = vld [vmem:[%s1949 + $0x24] sm:$0xf]
    %v4404 = vld [vmem:[%s1949 + $0x28] sm:$0xf]
    %v4405 = vld [vmem:[%s1949 + $0x30] sm:$0xf]
    %v4406 = vld [vmem:[%s1949 + $0x34] sm:$0xf]
    %v4407 = vld [vmem:[%s1949 + $0x3c] sm:$0xf]
    %v4408 = vld [vmem:[%s1949 + $0x40] sm:$0xf]
    %v4409 = vld [vmem:[%s1949 + $0x48] sm:$0xf]
    %v4410 = vld [vmem:[%s1949 + $0x4c] sm:$0xf]
    %v4411 = vld [vmem:[%s1949 + $0x54] sm:$0xf]
    %v4412 = vld [vmem:[%s1949 + $0x58] sm:$0xf]
    %v4413 = vld [vmem:[%s1949 + $0x60] sm:$0xf]
    %v4414 = vld [vmem:[%s1949 + $0x64] sm:$0xf]
    %v4415 = vld [vmem:[%s1949 + $0x6c] sm:$0xf]
    %v4416 = vld [vmem:[%s1949 + $0x70] sm:$0xf]
    %v4417 = vld [vmem:[%s1949 + $0x78] sm:$0xf]
    %v4418 = vld [vmem:[%s1949 + $0x7c] sm:$0xf]
    %v4419 = vld [vmem:[%s1949 + $0x84] sm:$0xf]
    %v4420 = vld [vmem:[%s1949 + $0x88] sm:$0xf]
    %v4421 = vld [vmem:[%s1949 + $0x90] sm:$0xf]
    %v4422 = vld [vmem:[%s1949 + $0x94] sm:$0xf]
    %v4423 = vld [vmem:[%s1949 + $0x9c] sm:$0xf]
    %v4424 = vld [vmem:[%s1949 + $0xa0] sm:$0xf]
    %v4425 = vld [vmem:[%s1949 + $0xa8] sm:$0xf]
    %v4426 = vld [vmem:[%s1949 + $0xac] sm:$0xf]
    %v4427 = vld [vmem:[%s1949 + $0xb4] sm:$0xf]
    %v4428 = vld [vmem:[%s1949 + $0xb8] sm:$0xf]
    %v4429 = vld [vmem:[%s1949 + $0xd8] sm:$0xf]
    %v4430 = vld [vmem:[%s1949 + $0xdc] sm:$0xf]
    %v4431 = vld [vmem:[%s1949 + $0xe4] sm:$0xf]
    %v4432 = vld [vmem:[%s1949 + $0xe8] sm:$0xf]
    %v4433 = vld [vmem:[%s1949 + $0xf0] sm:$0xf]
    %v4434 = vld [vmem:[%s1949 + $0xf4] sm:$0xf]
    %v4435 = vld [vmem:[%s1949 + $0xfc] sm:$0xf]
    %v4436 = vld [vmem:[%s1949 + $0x100] sm:$0xf]
    %v4437 = vld [vmem:[%s1949 + $0x108] sm:$0xf]
    %v4438 = vld [vmem:[%s1949 + $0x10c] sm:$0xf]
    %v4439 = vld [vmem:[%s1949 + $0x114] sm:$0xf]
    %v4440 = vld [vmem:[%s1949 + $0x118] sm:$0xf]
    %v4441 = vld [vmem:[%s1949 + $0x120] sm:$0xf]
    %v4442 = vld [vmem:[%s1949 + $0x124] sm:$0xf]
    %v4443 = vld [vmem:[%s1949 + $0x12c] sm:$0xf]
    %v4444 = vld [vmem:[%s1949 + $0x130] sm:$0xf]
    %v4445 = vld [vmem:[%s1949 + $0x138] sm:$0xf]
    %v4446 = vld [vmem:[%s1949 + $0x13c] sm:$0xf]
    %v4447 = vld [vmem:[%s1949 + $0x144] sm:$0xf]
    %v4448 = vld [vmem:[%s1949 + $0x148] sm:$0xf]
    %v4449 = vld [vmem:[%s1949 + $0x150] sm:$0xf]
    %v4450 = vld [vmem:[%s1949 + $0x154] sm:$0xf]
    %v4451 = vld [vmem:[%s1949 + $0x15c] sm:$0xf]
    %v4452 = vld [vmem:[%s1949 + $0x160] sm:$0xf]
    %v4453 = vld [vmem:[%s1949 + $0x168] sm:$0xf]
    %v4454 = vld [vmem:[%s1949 + $0x16c] sm:$0xf]
    %v4455 = vld [vmem:[%s1949 + $0x174] sm:$0xf]
    %v4456 = vld [vmem:[%s1949 + $0x178] sm:$0xf]
    %v4457 = vld [vmem:[%s1949 + $0x180] sm:$0xf]
    %v4458 = vld [vmem:[%s1949 + $0x184] sm:$0xf]
    %v4459 = vld [vmem:[%s1949 + $0x18c] sm:$0xf]
    %v4460 = vld [vmem:[%s1949 + $0x190] sm:$0xf]
    %v4461 = vld [vmem:[%s1949 + $0x8] sm:$0x1]
    %v4462 = vld [vmem:[%s1949 + $0x14] sm:$0x1]
    %v4463 = vld [vmem:[%s1949 + $0x20] sm:$0x1]
    %v4464 = vld [vmem:[%s1949 + $0x2c] sm:$0x1]
    %v4465 = vld [vmem:[%s1949 + $0x38] sm:$0x1]
    %v4466 = vld [vmem:[%s1949 + $0x44] sm:$0x1]
    %v4467 = vld [vmem:[%s1949 + $0x50] sm:$0x1]
    %v4468 = vld [vmem:[%s1949 + $0x5c] sm:$0x1]
    %v4469 = vld [vmem:[%s1949 + $0x68] sm:$0x1]
    %v4470 = vld [vmem:[%s1949 + $0x74] sm:$0x1]
    %v4471 = vld [vmem:[%s1949 + $0x80] sm:$0x1]
    %v4472 = vld [vmem:[%s1949 + $0x8c] sm:$0x1]
    %v4473 = vld [vmem:[%s1949 + $0x98] sm:$0x1]
    %v4474 = vld [vmem:[%s1949 + $0xa4] sm:$0x1]
    %v4475 = vld [vmem:[%s1949 + $0xb0] sm:$0x1]
    %v4476 = vld [vmem:[%s1949 + $0xbc] sm:$0x1]
    %v4477 = vld [vmem:[%s1949 + $0xe0] sm:$0x1]
    %v4478 = vld [vmem:[%s1949 + $0xec] sm:$0x1]
    %v4479 = vld [vmem:[%s1949 + $0xf8] sm:$0x1]
    %v4480 = vld [vmem:[%s1949 + $0x104] sm:$0x1]
    %v4481 = vld [vmem:[%s1949 + $0x110] sm:$0x1]
    %v4482 = vld [vmem:[%s1949 + $0x11c] sm:$0x1]
    %v4483 = vld [vmem:[%s1949 + $0x128] sm:$0x1]
    %v4484 = vld [vmem:[%s1949 + $0x134] sm:$0x1]
    %v4485 = vld [vmem:[%s1949 + $0x140] sm:$0x1]
    %v4486 = vld [vmem:[%s1949 + $0x14c] sm:$0x1]
    %v4487 = vld [vmem:[%s1949 + $0x158] sm:$0x1]
    %v4488 = vld [vmem:[%s1949 + $0x164] sm:$0x1]
    %v4489 = vld [vmem:[%s1949 + $0x170] sm:$0x1]
    %v4490 = vld [vmem:[%s1949 + $0x17c] sm:$0x1]
    %v4491 = vld [vmem:[%s1949 + $0x188] sm:$0x1]
    %v4492 = vld [vmem:[%s1949 + $0x194] sm:$0x1]
    %v4494 = vshrl.u32 %v4397, 16
    %v4496 = vrot.slane %v4494, 4
    %v4497 = vshll.u32 %v4397, 16
    %v4499 = vrot.slane %v4497, 5
    %v4500 = vor.u32 %v4496, %v4499
    %v4501 = vrot.slane %v4500, 4
    %v4503 = vshll.u32 %v4398, 16
    %v4505 = vrot.slane %v4503, 5
    %v4506 = vsel %vm3273, %v4501, %v4505
    %v4507 = vshrl.u32 %v4398, 16
    %v4509 = vrot.slane %v4507, 4
    %v4510 = vor.u32 %v4509, %v4505
    %v4511 = vrot.slane %v4510, 4
    %v4513 = vshll.u32 %v4461, 16
    %v4515 = vrot.slane %v4513, 5
    %v4516 = vsel %vm3273, %v4511, %v4515
    %v4518 = vshrl.u32 %v4399, 16
    %v4520 = vrot.slane %v4518, 4
    %v4521 = vshll.u32 %v4399, 16
    %v4523 = vrot.slane %v4521, 5
    %v4524 = vor.u32 %v4520, %v4523
    %v4525 = vrot.slane %v4524, 4
    %v4527 = vshll.u32 %v4400, 16
    %v4529 = vrot.slane %v4527, 5
    %v4530 = vsel %vm3273, %v4525, %v4529
    %v4531 = vshrl.u32 %v4400, 16
    %v4533 = vrot.slane %v4531, 4
    %v4534 = vor.u32 %v4533, %v4529
    %v4535 = vrot.slane %v4534, 4
    %v4537 = vshll.u32 %v4462, 16
    %v4539 = vrot.slane %v4537, 5
    %v4540 = vsel %vm3273, %v4535, %v4539
    %v4542 = vshrl.u32 %v4401, 16
    %v4544 = vrot.slane %v4542, 4
    %v4545 = vshll.u32 %v4401, 16
    %v4547 = vrot.slane %v4545, 5
    %v4548 = vor.u32 %v4544, %v4547
    %v4549 = vrot.slane %v4548, 4
    %v4551 = vshll.u32 %v4402, 16
    %v4553 = vrot.slane %v4551, 5
    %v4554 = vsel %vm3273, %v4549, %v4553
    %v4555 = vshrl.u32 %v4402, 16
    %v4557 = vrot.slane %v4555, 4
    %v4558 = vor.u32 %v4557, %v4553
    %v4559 = vrot.slane %v4558, 4
    %v4561 = vshll.u32 %v4463, 16
    %v4563 = vrot.slane %v4561, 5
    %v4564 = vsel %vm3273, %v4559, %v4563
    %v4566 = vshrl.u32 %v4403, 16
    %v4568 = vrot.slane %v4566, 4
    %v4569 = vshll.u32 %v4403, 16
    %v4571 = vrot.slane %v4569, 5
    %v4572 = vor.u32 %v4568, %v4571
    %v4573 = vrot.slane %v4572, 4
    %v4575 = vshll.u32 %v4404, 16
    %v4577 = vrot.slane %v4575, 5
    %v4578 = vsel %vm3273, %v4573, %v4577
    %v4579 = vshrl.u32 %v4404, 16
    %v4581 = vrot.slane %v4579, 4
    %v4582 = vor.u32 %v4581, %v4577
    %v4583 = vrot.slane %v4582, 4
    %v4585 = vshll.u32 %v4464, 16
    %v4587 = vrot.slane %v4585, 5
    %v4588 = vsel %vm3273, %v4583, %v4587
    %v4590 = vshrl.u32 %v4405, 16
    %v4592 = vrot.slane %v4590, 4
    %v4593 = vshll.u32 %v4405, 16
    %v4595 = vrot.slane %v4593, 5
    %v4596 = vor.u32 %v4592, %v4595
    %v4597 = vrot.slane %v4596, 4
    %v4599 = vshll.u32 %v4406, 16
    %v4601 = vrot.slane %v4599, 5
    %v4602 = vsel %vm3273, %v4597, %v4601
    %v4603 = vshrl.u32 %v4406, 16
    %v4605 = vrot.slane %v4603, 4
    %v4606 = vor.u32 %v4605, %v4601
    %v4607 = vrot.slane %v4606, 4
    %v4609 = vshll.u32 %v4465, 16
    %v4611 = vrot.slane %v4609, 5
    %v4612 = vsel %vm3273, %v4607, %v4611
    %v4614 = vshrl.u32 %v4407, 16
    %v4616 = vrot.slane %v4614, 4
    %v4617 = vshll.u32 %v4407, 16
    %v4619 = vrot.slane %v4617, 5
    %v4620 = vor.u32 %v4616, %v4619
    %v4621 = vrot.slane %v4620, 4
    %v4623 = vshll.u32 %v4408, 16
    %v4625 = vrot.slane %v4623, 5
    %v4626 = vsel %vm3273, %v4621, %v4625
    %v4627 = vshrl.u32 %v4408, 16
    %v4629 = vrot.slane %v4627, 4
    %v4630 = vor.u32 %v4629, %v4625
    %v4631 = vrot.slane %v4630, 4
    %v4633 = vshll.u32 %v4466, 16
    %v4635 = vrot.slane %v4633, 5
    %v4636 = vsel %vm3273, %v4631, %v4635
    %v4638 = vshrl.u32 %v4409, 16
    %v4640 = vrot.slane %v4638, 4
    %v4641 = vshll.u32 %v4409, 16
    %v4643 = vrot.slane %v4641, 5
    %v4644 = vor.u32 %v4640, %v4643
    %v4645 = vrot.slane %v4644, 4
    %v4647 = vshll.u32 %v4410, 16
    %v4649 = vrot.slane %v4647, 5
    %v4650 = vsel %vm3273, %v4645, %v4649
    %v4651 = vshrl.u32 %v4410, 16
    %v4653 = vrot.slane %v4651, 4
    %v4654 = vor.u32 %v4653, %v4649
    %v4655 = vrot.slane %v4654, 4
    %v4657 = vshll.u32 %v4467, 16
    %v4659 = vrot.slane %v4657, 5
    %v4660 = vsel %vm3273, %v4655, %v4659
    %v4662 = vshrl.u32 %v4411, 16
    %v4664 = vrot.slane %v4662, 4
    %v4665 = vshll.u32 %v4411, 16
    %v4667 = vrot.slane %v4665, 5
    %v4668 = vor.u32 %v4664, %v4667
    %v4669 = vrot.slane %v4668, 4
    %v4671 = vshll.u32 %v4412, 16
    %v4673 = vrot.slane %v4671, 5
    %v4674 = vsel %vm3273, %v4669, %v4673
    %v4675 = vshrl.u32 %v4412, 16
    %v4677 = vrot.slane %v4675, 4
    %v4678 = vor.u32 %v4677, %v4673
    %v4679 = vrot.slane %v4678, 4
    %v4681 = vshll.u32 %v4468, 16
    %v4683 = vrot.slane %v4681, 5
    %v4684 = vsel %vm3273, %v4679, %v4683
    %v4686 = vshrl.u32 %v4413, 16
    %v4688 = vrot.slane %v4686, 4
    %v4689 = vshll.u32 %v4413, 16
    %v4691 = vrot.slane %v4689, 5
    %v4692 = vor.u32 %v4688, %v4691
    %v4693 = vrot.slane %v4692, 4
    %v4695 = vshll.u32 %v4414, 16
    %v4697 = vrot.slane %v4695, 5
    %v4698 = vsel %vm3273, %v4693, %v4697
    %v4699 = vshrl.u32 %v4414, 16
    %v4701 = vrot.slane %v4699, 4
    %v4702 = vor.u32 %v4701, %v4697
    %v4703 = vrot.slane %v4702, 4
    %v4705 = vshll.u32 %v4469, 16
    %v4707 = vrot.slane %v4705, 5
    %v4708 = vsel %vm3273, %v4703, %v4707
    %v4710 = vshrl.u32 %v4415, 16
    %v4712 = vrot.slane %v4710, 4
    %v4713 = vshll.u32 %v4415, 16
    %v4715 = vrot.slane %v4713, 5
    %v4716 = vor.u32 %v4712, %v4715
    %v4717 = vrot.slane %v4716, 4
    %v4719 = vshll.u32 %v4416, 16
    %v4721 = vrot.slane %v4719, 5
    %v4722 = vsel %vm3273, %v4717, %v4721
    %v4723 = vshrl.u32 %v4416, 16
    %v4725 = vrot.slane %v4723, 4
    %v4726 = vor.u32 %v4725, %v4721
    %v4727 = vrot.slane %v4726, 4
    %v4729 = vshll.u32 %v4470, 16
    %v4731 = vrot.slane %v4729, 5
    %v4732 = vsel %vm3273, %v4727, %v4731
    %v4734 = vshrl.u32 %v4417, 16
    %v4736 = vrot.slane %v4734, 4
    %v4737 = vshll.u32 %v4417, 16
    %v4739 = vrot.slane %v4737, 5
    %v4740 = vor.u32 %v4736, %v4739
    %v4741 = vrot.slane %v4740, 4
    %v4743 = vshll.u32 %v4418, 16
    %v4745 = vrot.slane %v4743, 5
    %v4746 = vsel %vm3273, %v4741, %v4745
    %v4747 = vshrl.u32 %v4418, 16
    %v4749 = vrot.slane %v4747, 4
    %v4750 = vor.u32 %v4749, %v4745
    %v4751 = vrot.slane %v4750, 4
    %v4753 = vshll.u32 %v4471, 16
    %v4755 = vrot.slane %v4753, 5
    %v4756 = vsel %vm3273, %v4751, %v4755
    %v4758 = vshrl.u32 %v4419, 16
    %v4760 = vrot.slane %v4758, 4
    %v4761 = vshll.u32 %v4419, 16
    %v4763 = vrot.slane %v4761, 5
    %v4764 = vor.u32 %v4760, %v4763
    %v4765 = vrot.slane %v4764, 4
    %v4767 = vshll.u32 %v4420, 16
    %v4769 = vrot.slane %v4767, 5
    %v4770 = vsel %vm3273, %v4765, %v4769
    %v4771 = vshrl.u32 %v4420, 16
    %v4773 = vrot.slane %v4771, 4
    %v4774 = vor.u32 %v4773, %v4769
    %v4775 = vrot.slane %v4774, 4
    %v4777 = vshll.u32 %v4472, 16
    %v4779 = vrot.slane %v4777, 5
    %v4780 = vsel %vm3273, %v4775, %v4779
    %v4782 = vshrl.u32 %v4421, 16
    %v4784 = vrot.slane %v4782, 4
    %v4785 = vshll.u32 %v4421, 16
    %v4787 = vrot.slane %v4785, 5
    %v4788 = vor.u32 %v4784, %v4787
    %v4789 = vrot.slane %v4788, 4
    %v4791 = vshll.u32 %v4422, 16
    %v4793 = vrot.slane %v4791, 5
    %v4794 = vsel %vm3273, %v4789, %v4793
    %v4795 = vshrl.u32 %v4422, 16
    %v4797 = vrot.slane %v4795, 4
    %v4798 = vor.u32 %v4797, %v4793
    %v4799 = vrot.slane %v4798, 4
    %v4801 = vshll.u32 %v4473, 16
    %v4803 = vrot.slane %v4801, 5
    %v4804 = vsel %vm3273, %v4799, %v4803
    %v4806 = vshrl.u32 %v4423, 16
    %v4808 = vrot.slane %v4806, 4
    %v4809 = vshll.u32 %v4423, 16
    %v4811 = vrot.slane %v4809, 5
    %v4812 = vor.u32 %v4808, %v4811
    %v4813 = vrot.slane %v4812, 4
    %v4815 = vshll.u32 %v4424, 16
    %v4817 = vrot.slane %v4815, 5
    %v4818 = vsel %vm3273, %v4813, %v4817
    %v4819 = vshrl.u32 %v4424, 16
    %v4821 = vrot.slane %v4819, 4
    %v4822 = vor.u32 %v4821, %v4817
    %v4823 = vrot.slane %v4822, 4
    %v4825 = vshll.u32 %v4474, 16
    %v4827 = vrot.slane %v4825, 5
    %v4828 = vsel %vm3273, %v4823, %v4827
    %v4830 = vshrl.u32 %v4425, 16
    %v4832 = vrot.slane %v4830, 4
    %v4833 = vshll.u32 %v4425, 16
    %v4835 = vrot.slane %v4833, 5
    %v4836 = vor.u32 %v4832, %v4835
    %v4837 = vrot.slane %v4836, 4
    %v4839 = vshll.u32 %v4426, 16
    %v4841 = vrot.slane %v4839, 5
    %v4842 = vsel %vm3273, %v4837, %v4841
    %v4843 = vshrl.u32 %v4426, 16
    %v4845 = vrot.slane %v4843, 4
    %v4846 = vor.u32 %v4845, %v4841
    %v4847 = vrot.slane %v4846, 4
    %v4849 = vshll.u32 %v4475, 16
    %v4851 = vrot.slane %v4849, 5
    %v4852 = vsel %vm3273, %v4847, %v4851
    %v4854 = vshrl.u32 %v4427, 16
    %v4856 = vrot.slane %v4854, 4
    %v4857 = vshll.u32 %v4427, 16
    %v4859 = vrot.slane %v4857, 5
    %v4860 = vor.u32 %v4856, %v4859
    %v4861 = vrot.slane %v4860, 4
    %v4863 = vshll.u32 %v4428, 16
    %v4865 = vrot.slane %v4863, 5
    %v4866 = vsel %vm3273, %v4861, %v4865
    %v4867 = vshrl.u32 %v4428, 16
    %v4869 = vrot.slane %v4867, 4
    %v4870 = vor.u32 %v4869, %v4865
    %v4871 = vrot.slane %v4870, 4
    %v4873 = vshll.u32 %v4476, 16
    %v4875 = vrot.slane %v4873, 5
    %v4876 = vsel %vm3273, %v4871, %v4875
    %v4878 = vshrl.u32 %v4429, 16
    %v4880 = vrot.slane %v4878, 4
    %v4881 = vshll.u32 %v4429, 16
    %v4883 = vrot.slane %v4881, 5
    %v4884 = vor.u32 %v4880, %v4883
    %v4885 = vrot.slane %v4884, 4
    %v4887 = vshll.u32 %v4430, 16
    %v4889 = vrot.slane %v4887, 5
    %v4890 = vsel %vm3273, %v4885, %v4889
    %v4891 = vshrl.u32 %v4430, 16
    %v4893 = vrot.slane %v4891, 4
    %v4894 = vor.u32 %v4893, %v4889
    %v4895 = vrot.slane %v4894, 4
    %v4897 = vshll.u32 %v4477, 16
    %v4899 = vrot.slane %v4897, 5
    %v4900 = vsel %vm3273, %v4895, %v4899
    %v4902 = vshrl.u32 %v4431, 16
    %v4904 = vrot.slane %v4902, 4
    %v4905 = vshll.u32 %v4431, 16
    %v4907 = vrot.slane %v4905, 5
    %v4908 = vor.u32 %v4904, %v4907
    %v4909 = vrot.slane %v4908, 4
    %v4911 = vshll.u32 %v4432, 16
    %v4913 = vrot.slane %v4911, 5
    %v4914 = vsel %vm3273, %v4909, %v4913
    %v4915 = vshrl.u32 %v4432, 16
    %v4917 = vrot.slane %v4915, 4
    %v4918 = vor.u32 %v4917, %v4913
    %v4919 = vrot.slane %v4918, 4
    %v4921 = vshll.u32 %v4478, 16
    %v4923 = vrot.slane %v4921, 5
    %v4924 = vsel %vm3273, %v4919, %v4923
    %v4926 = vshrl.u32 %v4433, 16
    %v4928 = vrot.slane %v4926, 4
    %v4929 = vshll.u32 %v4433, 16
    %v4931 = vrot.slane %v4929, 5
    %v4932 = vor.u32 %v4928, %v4931
    %v4933 = vrot.slane %v4932, 4
    %v4935 = vshll.u32 %v4434, 16
    %v4937 = vrot.slane %v4935, 5
    %v4938 = vsel %vm3273, %v4933, %v4937
    %v4939 = vshrl.u32 %v4434, 16
    %v4941 = vrot.slane %v4939, 4
    %v4942 = vor.u32 %v4941, %v4937
    %v4943 = vrot.slane %v4942, 4
    %v4945 = vshll.u32 %v4479, 16
    %v4947 = vrot.slane %v4945, 5
    %v4948 = vsel %vm3273, %v4943, %v4947
    %v4950 = vshrl.u32 %v4435, 16
    %v4952 = vrot.slane %v4950, 4
    %v4953 = vshll.u32 %v4435, 16
    %v4955 = vrot.slane %v4953, 5
    %v4956 = vor.u32 %v4952, %v4955
    %v4957 = vrot.slane %v4956, 4
    %v4959 = vshll.u32 %v4436, 16
    %v4961 = vrot.slane %v4959, 5
    %v4962 = vsel %vm3273, %v4957, %v4961
    %v4963 = vshrl.u32 %v4436, 16
    %v4965 = vrot.slane %v4963, 4
    %v4966 = vor.u32 %v4965, %v4961
    %v4967 = vrot.slane %v4966, 4
    %v4969 = vshll.u32 %v4480, 16
    %v4971 = vrot.slane %v4969, 5
    %v4972 = vsel %vm3273, %v4967, %v4971
    %v4974 = vshrl.u32 %v4437, 16
    %v4976 = vrot.slane %v4974, 4
    %v4977 = vshll.u32 %v4437, 16
    %v4979 = vrot.slane %v4977, 5
    %v4980 = vor.u32 %v4976, %v4979
    %v4981 = vrot.slane %v4980, 4
    %v4983 = vshll.u32 %v4438, 16
    %v4985 = vrot.slane %v4983, 5
    %v4986 = vsel %vm3273, %v4981, %v4985
    %v4987 = vshrl.u32 %v4438, 16
    %v4989 = vrot.slane %v4987, 4
    %v4990 = vor.u32 %v4989, %v4985
    %v4991 = vrot.slane %v4990, 4
    %v4993 = vshll.u32 %v4481, 16
    %v4995 = vrot.slane %v4993, 5
    %v4996 = vsel %vm3273, %v4991, %v4995
    %v4998 = vshrl.u32 %v4439, 16
    %v5000 = vrot.slane %v4998, 4
    %v5001 = vshll.u32 %v4439, 16
    %v5003 = vrot.slane %v5001, 5
    %v5004 = vor.u32 %v5000, %v5003
    %v5005 = vrot.slane %v5004, 4
    %v5007 = vshll.u32 %v4440, 16
    %v5009 = vrot.slane %v5007, 5
    %v5010 = vsel %vm3273, %v5005, %v5009
    %v5011 = vshrl.u32 %v4440, 16
    %v5013 = vrot.slane %v5011, 4
    %v5014 = vor.u32 %v5013, %v5009
    %v5015 = vrot.slane %v5014, 4
    %v5017 = vshll.u32 %v4482, 16
    %v5019 = vrot.slane %v5017, 5
    %v5020 = vsel %vm3273, %v5015, %v5019
    %v5022 = vshrl.u32 %v4441, 16
    %v5024 = vrot.slane %v5022, 4
    %v5025 = vshll.u32 %v4441, 16
    %v5027 = vrot.slane %v5025, 5
    %v5028 = vor.u32 %v5024, %v5027
    %v5029 = vrot.slane %v5028, 4
    %v5031 = vshll.u32 %v4442, 16
    %v5033 = vrot.slane %v5031, 5
    %v5034 = vsel %vm3273, %v5029, %v5033
    %v5035 = vshrl.u32 %v4442, 16
    %v5037 = vrot.slane %v5035, 4
    %v5038 = vor.u32 %v5037, %v5033
    %v5039 = vrot.slane %v5038, 4
    %v5041 = vshll.u32 %v4483, 16
    %v5043 = vrot.slane %v5041, 5
    %v5044 = vsel %vm3273, %v5039, %v5043
    %v5046 = vshrl.u32 %v4443, 16
    %v5048 = vrot.slane %v5046, 4
    %v5049 = vshll.u32 %v4443, 16
    %v5051 = vrot.slane %v5049, 5
    %v5052 = vor.u32 %v5048, %v5051
    %v5053 = vrot.slane %v5052, 4
    %v5055 = vshll.u32 %v4444, 16
    %v5057 = vrot.slane %v5055, 5
    %v5058 = vsel %vm3273, %v5053, %v5057
    %v5059 = vshrl.u32 %v4444, 16
    %v5061 = vrot.slane %v5059, 4
    %v5062 = vor.u32 %v5061, %v5057
    %v5063 = vrot.slane %v5062, 4
    %v5065 = vshll.u32 %v4484, 16
    %v5067 = vrot.slane %v5065, 5
    %v5068 = vsel %vm3273, %v5063, %v5067
    %v5070 = vshrl.u32 %v4445, 16
    %v5072 = vrot.slane %v5070, 4
    %v5073 = vshll.u32 %v4445, 16
    %v5075 = vrot.slane %v5073, 5
    %v5076 = vor.u32 %v5072, %v5075
    %v5077 = vrot.slane %v5076, 4
    %v5079 = vshll.u32 %v4446, 16
    %v5081 = vrot.slane %v5079, 5
    %v5082 = vsel %vm3273, %v5077, %v5081
    %v5083 = vshrl.u32 %v4446, 16
    %v5085 = vrot.slane %v5083, 4
    %v5086 = vor.u32 %v5085, %v5081
    %v5087 = vrot.slane %v5086, 4
    %v5089 = vshll.u32 %v4485, 16
    %v5091 = vrot.slane %v5089, 5
    %v5092 = vsel %vm3273, %v5087, %v5091
    %v5094 = vshrl.u32 %v4447, 16
    %v5096 = vrot.slane %v5094, 4
    %v5097 = vshll.u32 %v4447, 16
    %v5099 = vrot.slane %v5097, 5
    %v5100 = vor.u32 %v5096, %v5099
    %v5101 = vrot.slane %v5100, 4
    %v5103 = vshll.u32 %v4448, 16
    %v5105 = vrot.slane %v5103, 5
    %v5106 = vsel %vm3273, %v5101, %v5105
    %v5107 = vshrl.u32 %v4448, 16
    %v5109 = vrot.slane %v5107, 4
    %v5110 = vor.u32 %v5109, %v5105
    %v5111 = vrot.slane %v5110, 4
    %v5113 = vshll.u32 %v4486, 16
    %v5115 = vrot.slane %v5113, 5
    %v5116 = vsel %vm3273, %v5111, %v5115
    %v5118 = vshrl.u32 %v4449, 16
    %v5120 = vrot.slane %v5118, 4
    %v5121 = vshll.u32 %v4449, 16
    %v5123 = vrot.slane %v5121, 5
    %v5124 = vor.u32 %v5120, %v5123
    %v5125 = vrot.slane %v5124, 4
    %v5127 = vshll.u32 %v4450, 16
    %v5129 = vrot.slane %v5127, 5
    %v5130 = vsel %vm3273, %v5125, %v5129
    %v5131 = vshrl.u32 %v4450, 16
    %v5133 = vrot.slane %v5131, 4
    %v5134 = vor.u32 %v5133, %v5129
    %v5135 = vrot.slane %v5134, 4
    %v5137 = vshll.u32 %v4487, 16
    %v5139 = vrot.slane %v5137, 5
    %v5140 = vsel %vm3273, %v5135, %v5139
    %v5142 = vshrl.u32 %v4451, 16
    %v5144 = vrot.slane %v5142, 4
    %v5145 = vshll.u32 %v4451, 16
    %v5147 = vrot.slane %v5145, 5
    %v5148 = vor.u32 %v5144, %v5147
    %v5149 = vrot.slane %v5148, 4
    %v5151 = vshll.u32 %v4452, 16
    %v5153 = vrot.slane %v5151, 5
    %v5154 = vsel %vm3273, %v5149, %v5153
    %v5155 = vshrl.u32 %v4452, 16
    %v5157 = vrot.slane %v5155, 4
    %v5158 = vor.u32 %v5157, %v5153
    %v5159 = vrot.slane %v5158, 4
    %v5161 = vshll.u32 %v4488, 16
    %v5163 = vrot.slane %v5161, 5
    %v5164 = vsel %vm3273, %v5159, %v5163
    %v5166 = vshrl.u32 %v4453, 16
    %v5168 = vrot.slane %v5166, 4
    %v5169 = vshll.u32 %v4453, 16
    %v5171 = vrot.slane %v5169, 5
    %v5172 = vor.u32 %v5168, %v5171
    %v5173 = vrot.slane %v5172, 4
    %v5175 = vshll.u32 %v4454, 16
    %v5177 = vrot.slane %v5175, 5
    %v5178 = vsel %vm3273, %v5173, %v5177
    %v5179 = vshrl.u32 %v4454, 16
    %v5181 = vrot.slane %v5179, 4
    %v5182 = vor.u32 %v5181, %v5177
    %v5183 = vrot.slane %v5182, 4
    %v5185 = vshll.u32 %v4489, 16
    %v5187 = vrot.slane %v5185, 5
    %v5188 = vsel %vm3273, %v5183, %v5187
    %v5190 = vshrl.u32 %v4455, 16
    %v5192 = vrot.slane %v5190, 4
    %v5193 = vshll.u32 %v4455, 16
    %v5195 = vrot.slane %v5193, 5
    %v5196 = vor.u32 %v5192, %v5195
    %v5197 = vrot.slane %v5196, 4
    %v5199 = vshll.u32 %v4456, 16
    %v5201 = vrot.slane %v5199, 5
    %v5202 = vsel %vm3273, %v5197, %v5201
    %v5203 = vshrl.u32 %v4456, 16
    %v5205 = vrot.slane %v5203, 4
    %v5206 = vor.u32 %v5205, %v5201
    %v5207 = vrot.slane %v5206, 4
    %v5209 = vshll.u32 %v4490, 16
    %v5211 = vrot.slane %v5209, 5
    %v5212 = vsel %vm3273, %v5207, %v5211
    %v5214 = vshrl.u32 %v4457, 16
    %v5216 = vrot.slane %v5214, 4
    %v5217 = vshll.u32 %v4457, 16
    %v5219 = vrot.slane %v5217, 5
    %v5220 = vor.u32 %v5216, %v5219
    %v5221 = vrot.slane %v5220, 4
    %v5223 = vshll.u32 %v4458, 16
    %v5225 = vrot.slane %v5223, 5
    %v5226 = vsel %vm3273, %v5221, %v5225
    %v5227 = vshrl.u32 %v4458, 16
    %v5229 = vrot.slane %v5227, 4
    %v5230 = vor.u32 %v5229, %v5225
    %v5231 = vrot.slane %v5230, 4
    %v5233 = vshll.u32 %v4491, 16
    %v5235 = vrot.slane %v5233, 5
    %v5236 = vsel %vm3273, %v5231, %v5235
    %v5238 = vshrl.u32 %v4459, 16
    %v5240 = vrot.slane %v5238, 4
    %v5241 = vshll.u32 %v4459, 16
    %v5243 = vrot.slane %v5241, 5
    %v5244 = vor.u32 %v5240, %v5243
    %v5245 = vrot.slane %v5244, 4
    %v5247 = vshll.u32 %v4460, 16
    %v5249 = vrot.slane %v5247, 5
    %v5250 = vsel %vm3273, %v5245, %v5249
    %v5251 = vshrl.u32 %v4460, 16
    %v5253 = vrot.slane %v5251, 4
    %v5254 = vor.u32 %v5253, %v5249
    %v5255 = vrot.slane %v5254, 4
    %v5257 = vshll.u32 %v4492, 16
    %v5259 = vrot.slane %v5257, 5
    %v5260 = vsel %vm3273, %v5255, %v5259
    %v5261 = vld [vmem:[%s1949] sm:$0xe]
    %v5262 = vld [vmem:[%s1949 + $0xc] sm:$0xe]
    %v5263 = vld [vmem:[%s1949 + $0x18] sm:$0xe]
    %v5264 = vld [vmem:[%s1949 + $0x24] sm:$0xe]
    %v5265 = vld [vmem:[%s1949 + $0x30] sm:$0xe]
    %v5266 = vld [vmem:[%s1949 + $0x3c] sm:$0xe]
    %v5267 = vld [vmem:[%s1949 + $0x48] sm:$0xe]
    %v5268 = vld [vmem:[%s1949 + $0x54] sm:$0xe]
    %v5269 = vld [vmem:[%s1949 + $0x60] sm:$0xe]
    %v5270 = vld [vmem:[%s1949 + $0x6c] sm:$0xe]
    %v5271 = vld [vmem:[%s1949 + $0x78] sm:$0xe]
    %v5272 = vld [vmem:[%s1949 + $0x84] sm:$0xe]
    %v5273 = vld [vmem:[%s1949 + $0x90] sm:$0xe]
    %v5274 = vld [vmem:[%s1949 + $0x9c] sm:$0xe]
    %v5275 = vld [vmem:[%s1949 + $0xa8] sm:$0xe]
    %v5276 = vld [vmem:[%s1949 + $0xb4] sm:$0xe]
    %v5277 = vld [vmem:[%s1949 + $0xd8] sm:$0xe]
    %v5278 = vld [vmem:[%s1949 + $0xe4] sm:$0xe]
    %v5279 = vld [vmem:[%s1949 + $0xf0] sm:$0xe]
    %v5280 = vld [vmem:[%s1949 + $0xfc] sm:$0xe]
    %v5281 = vld [vmem:[%s1949 + $0x108] sm:$0xe]
    %v5282 = vld [vmem:[%s1949 + $0x114] sm:$0xe]
    %v5283 = vld [vmem:[%s1949 + $0x120] sm:$0xe]
    %v5284 = vld [vmem:[%s1949 + $0x12c] sm:$0xe]
    %v5285 = vld [vmem:[%s1949 + $0x138] sm:$0xe]
    %v5286 = vld [vmem:[%s1949 + $0x144] sm:$0xe]
    %v5287 = vld [vmem:[%s1949 + $0x150] sm:$0xe]
    %v5288 = vld [vmem:[%s1949 + $0x15c] sm:$0xe]
    %v5289 = vld [vmem:[%s1949 + $0x168] sm:$0xe]
    %v5290 = vld [vmem:[%s1949 + $0x174] sm:$0xe]
    %v5291 = vld [vmem:[%s1949 + $0x180] sm:$0xe]
    %v5292 = vld [vmem:[%s1949 + $0x18c] sm:$0xe]
    %v5389 = vrot.slane %v5261, 5
    %v5390 = vrot.slane %v5389, 4
    %v5391 = vrot.slane %v4398, 5
    %v5392 = vsel %vm4172, %v5390, %v5391
    %v5393 = vrot.slane %v5391, 4
    %v5394 = vrot.slane %v4461, 5
    %v5395 = vsel %vm4172, %v5393, %v5394
    %v5396 = vrot.slane %v5262, 5
    %v5397 = vrot.slane %v5396, 4
    %v5398 = vrot.slane %v4400, 5
    %v5399 = vsel %vm4172, %v5397, %v5398
    %v5400 = vrot.slane %v5398, 4
    %v5401 = vrot.slane %v4462, 5
    %v5402 = vsel %vm4172, %v5400, %v5401
    %v5403 = vrot.slane %v5263, 5
    %v5404 = vrot.slane %v5403, 4
    %v5405 = vrot.slane %v4402, 5
    %v5406 = vsel %vm4172, %v5404, %v5405
    %v5407 = vrot.slane %v5405, 4
    %v5408 = vrot.slane %v4463, 5
    %v5409 = vsel %vm4172, %v5407, %v5408
    %v5410 = vrot.slane %v5264, 5
    %v5411 = vrot.slane %v5410, 4
    %v5412 = vrot.slane %v4404, 5
    %v5413 = vsel %vm4172, %v5411, %v5412
    %v5414 = vrot.slane %v5412, 4
    %v5415 = vrot.slane %v4464, 5
    %v5416 = vsel %vm4172, %v5414, %v5415
    %v5417 = vrot.slane %v5265, 5
    %v5418 = vrot.slane %v5417, 4
    %v5419 = vrot.slane %v4406, 5
    %v5420 = vsel %vm4172, %v5418, %v5419
    %v5421 = vrot.slane %v5419, 4
    %v5422 = vrot.slane %v4465, 5
    %v5423 = vsel %vm4172, %v5421, %v5422
    %v5424 = vrot.slane %v5266, 5
    %v5425 = vrot.slane %v5424, 4
    %v5426 = vrot.slane %v4408, 5
    %v5427 = vsel %vm4172, %v5425, %v5426
    %v5428 = vrot.slane %v5426, 4
    %v5429 = vrot.slane %v4466, 5
    %v5430 = vsel %vm4172, %v5428, %v5429
    %v5431 = vrot.slane %v5267, 5
    %v5432 = vrot.slane %v5431, 4
    %v5433 = vrot.slane %v4410, 5
    %v5434 = vsel %vm4172, %v5432, %v5433
    %v5435 = vrot.slane %v5433, 4
    %v5436 = vrot.slane %v4467, 5
    %v5437 = vsel %vm4172, %v5435, %v5436
    %v5438 = vrot.slane %v5268, 5
    %v5439 = vrot.slane %v5438, 4
    %v5440 = vrot.slane %v4412, 5
    %v5441 = vsel %vm4172, %v5439, %v5440
    %v5442 = vrot.slane %v5440, 4
    %v5443 = vrot.slane %v4468, 5
    %v5444 = vsel %vm4172, %v5442, %v5443
    %v5445 = vrot.slane %v5269, 5
    %v5446 = vrot.slane %v5445, 4
    %v5447 = vrot.slane %v4414, 5
    %v5448 = vsel %vm4172, %v5446, %v5447
    %v5449 = vrot.slane %v5447, 4
    %v5450 = vrot.slane %v4469, 5
    %v5451 = vsel %vm4172, %v5449, %v5450
    %v5452 = vrot.slane %v5270, 5
    %v5453 = vrot.slane %v5452, 4
    %v5454 = vrot.slane %v4416, 5
    %v5455 = vsel %vm4172, %v5453, %v5454
    %v5456 = vrot.slane %v5454, 4
    %v5457 = vrot.slane %v4470, 5
    %v5458 = vsel %vm4172, %v5456, %v5457
    %v5459 = vrot.slane %v5271, 5
    %v5460 = vrot.slane %v5459, 4
    %v5461 = vrot.slane %v4418, 5
    %v5462 = vsel %vm4172, %v5460, %v5461
    %v5463 = vrot.slane %v5461, 4
    %v5464 = vrot.slane %v4471, 5
    %v5465 = vsel %vm4172, %v5463, %v5464
    %v5466 = vrot.slane %v5272, 5
    %v5467 = vrot.slane %v5466, 4
    %v5468 = vrot.slane %v4420, 5
    %v5469 = vsel %vm4172, %v5467, %v5468
    %v5470 = vrot.slane %v5468, 4
    %v5471 = vrot.slane %v4472, 5
    %v5472 = vsel %vm4172, %v5470, %v5471
    %v5473 = vrot.slane %v5273, 5
    %v5474 = vrot.slane %v5473, 4
    %v5475 = vrot.slane %v4422, 5
    %v5476 = vsel %vm4172, %v5474, %v5475
    %v5477 = vrot.slane %v5475, 4
    %v5478 = vrot.slane %v4473, 5
    %v5479 = vsel %vm4172, %v5477, %v5478
    %v5480 = vrot.slane %v5274, 5
    %v5481 = vrot.slane %v5480, 4
    %v5482 = vrot.slane %v4424, 5
    %v5483 = vsel %vm4172, %v5481, %v5482
    %v5484 = vrot.slane %v5482, 4
    %v5485 = vrot.slane %v4474, 5
    %v5486 = vsel %vm4172, %v5484, %v5485
    %v5487 = vrot.slane %v5275, 5
    %v5488 = vrot.slane %v5487, 4
    %v5489 = vrot.slane %v4426, 5
    %v5490 = vsel %vm4172, %v5488, %v5489
    %v5491 = vrot.slane %v5489, 4
    %v5492 = vrot.slane %v4475, 5
    %v5493 = vsel %vm4172, %v5491, %v5492
    %v5494 = vrot.slane %v5276, 5
    %v5495 = vrot.slane %v5494, 4
    %v5496 = vrot.slane %v4428, 5
    %v5497 = vsel %vm4172, %v5495, %v5496
    %v5498 = vrot.slane %v5496, 4
    %v5499 = vrot.slane %v4476, 5
    %v5500 = vsel %vm4172, %v5498, %v5499
    %v5501 = vrot.slane %v5277, 5
    %v5502 = vrot.slane %v5501, 4
    %v5503 = vrot.slane %v4430, 5
    %v5504 = vsel %vm4172, %v5502, %v5503
    %v5505 = vrot.slane %v5503, 4
    %v5506 = vrot.slane %v4477, 5
    %v5507 = vsel %vm4172, %v5505, %v5506
    %v5508 = vrot.slane %v5278, 5
    %v5509 = vrot.slane %v5508, 4
    %v5510 = vrot.slane %v4432, 5
    %v5511 = vsel %vm4172, %v5509, %v5510
    %v5512 = vrot.slane %v5510, 4
    %v5513 = vrot.slane %v4478, 5
    %v5514 = vsel %vm4172, %v5512, %v5513
    %v5515 = vrot.slane %v5279, 5
    %v5516 = vrot.slane %v5515, 4
    %v5517 = vrot.slane %v4434, 5
    %v5518 = vsel %vm4172, %v5516, %v5517
    %v5519 = vrot.slane %v5517, 4
    %v5520 = vrot.slane %v4479, 5
    %v5521 = vsel %vm4172, %v5519, %v5520
    %v5522 = vrot.slane %v5280, 5
    %v5523 = vrot.slane %v5522, 4
    %v5524 = vrot.slane %v4436, 5
    %v5525 = vsel %vm4172, %v5523, %v5524
    %v5526 = vrot.slane %v5524, 4
    %v5527 = vrot.slane %v4480, 5
    %v5528 = vsel %vm4172, %v5526, %v5527
    %v5529 = vrot.slane %v5281, 5
    %v5530 = vrot.slane %v5529, 4
    %v5531 = vrot.slane %v4438, 5
    %v5532 = vsel %vm4172, %v5530, %v5531
    %v5533 = vrot.slane %v5531, 4
    %v5534 = vrot.slane %v4481, 5
    %v5535 = vsel %vm4172, %v5533, %v5534
    %v5536 = vrot.slane %v5282, 5
    %v5537 = vrot.slane %v5536, 4
    %v5538 = vrot.slane %v4440, 5
    %v5539 = vsel %vm4172, %v5537, %v5538
    %v5540 = vrot.slane %v5538, 4
    %v5541 = vrot.slane %v4482, 5
    %v5542 = vsel %vm4172, %v5540, %v5541
    %v5543 = vrot.slane %v5283, 5
    %v5544 = vrot.slane %v5543, 4
    %v5545 = vrot.slane %v4442, 5
    %v5546 = vsel %vm4172, %v5544, %v5545
    %v5547 = vrot.slane %v5545, 4
    %v5548 = vrot.slane %v4483, 5
    %v5549 = vsel %vm4172, %v5547, %v5548
    %v5550 = vrot.slane %v5284, 5
    %v5551 = vrot.slane %v5550, 4
    %v5552 = vrot.slane %v4444, 5
    %v5553 = vsel %vm4172, %v5551, %v5552
    %v5554 = vrot.slane %v5552, 4
    %v5555 = vrot.slane %v4484, 5
    %v5556 = vsel %vm4172, %v5554, %v5555
    %v5557 = vrot.slane %v5285, 5
    %v5558 = vrot.slane %v5557, 4
    %v5559 = vrot.slane %v4446, 5
    %v5560 = vsel %vm4172, %v5558, %v5559
    %v5561 = vrot.slane %v5559, 4
    %v5562 = vrot.slane %v4485, 5
    %v5563 = vsel %vm4172, %v5561, %v5562
    %v5564 = vrot.slane %v5286, 5
    %v5565 = vrot.slane %v5564, 4
    %v5566 = vrot.slane %v4448, 5
    %v5567 = vsel %vm4172, %v5565, %v5566
    %v5568 = vrot.slane %v5566, 4
    %v5569 = vrot.slane %v4486, 5
    %v5570 = vsel %vm4172, %v5568, %v5569
    %v5571 = vrot.slane %v5287, 5
    %v5572 = vrot.slane %v5571, 4
    %v5573 = vrot.slane %v4450, 5
    %v5574 = vsel %vm4172, %v5572, %v5573
    %v5575 = vrot.slane %v5573, 4
    %v5576 = vrot.slane %v4487, 5
    %v5577 = vsel %vm4172, %v5575, %v5576
    %v5578 = vrot.slane %v5288, 5
    %v5579 = vrot.slane %v5578, 4
    %v5580 = vrot.slane %v4452, 5
    %v5581 = vsel %vm4172, %v5579, %v5580
    %v5582 = vrot.slane %v5580, 4
    %v5583 = vrot.slane %v4488, 5
    %v5584 = vsel %vm4172, %v5582, %v5583
    %v5585 = vrot.slane %v5289, 5
    %v5586 = vrot.slane %v5585, 4
    %v5587 = vrot.slane %v4454, 5
    %v5588 = vsel %vm4172, %v5586, %v5587
    %v5589 = vrot.slane %v5587, 4
    %v5590 = vrot.slane %v4489, 5
    %v5591 = vsel %vm4172, %v5589, %v5590
    %v5592 = vrot.slane %v5290, 5
    %v5593 = vrot.slane %v5592, 4
    %v5594 = vrot.slane %v4456, 5
    %v5595 = vsel %vm4172, %v5593, %v5594
    %v5596 = vrot.slane %v5594, 4
    %v5597 = vrot.slane %v4490, 5
    %v5598 = vsel %vm4172, %v5596, %v5597
    %v5599 = vrot.slane %v5291, 5
    %v5600 = vrot.slane %v5599, 4
    %v5601 = vrot.slane %v4458, 5
    %v5602 = vsel %vm4172, %v5600, %v5601
    %v5603 = vrot.slane %v5601, 4
    %v5604 = vrot.slane %v4491, 5
    %v5605 = vsel %vm4172, %v5603, %v5604
    %v5606 = vrot.slane %v5292, 5
    %v5607 = vrot.slane %v5606, 4
    %v5608 = vrot.slane %v4460, 5
    %v5609 = vsel %vm4172, %v5607, %v5608
    %v5610 = vrot.slane %v5608, 4
    %v5611 = vrot.slane %v4492, 5
    %v5612 = vsel %vm4172, %v5610, %v5611
    %s5613 = scalar_lea.vmem [#allocation2], 24
    %v5614 = vld [vmem:[%s5613] sm:$0xf]
    %v5615 = vld [vmem:[%s5613 + $0x4] sm:$0xf]
    %v5616 = vld [vmem:[%s5613 + $0xc] sm:$0xf]
    %v5617 = vld [vmem:[%s5613 + $0x10] sm:$0xf]
    %v5618 = vld [vmem:[%s5613 + $0x18] sm:$0xf]
    %v5619 = vld [vmem:[%s5613 + $0x1c] sm:$0xf]
    %v5620 = vld [vmem:[%s5613 + $0x24] sm:$0xf]
    %v5621 = vld [vmem:[%s5613 + $0x28] sm:$0xf]
    %v5622 = vld [vmem:[%s5613 + $0x30] sm:$0xf]
    %v5623 = vld [vmem:[%s5613 + $0x34] sm:$0xf]
    %v5624 = vld [vmem:[%s5613 + $0x3c] sm:$0xf]
    %v5625 = vld [vmem:[%s5613 + $0x40] sm:$0xf]
    %v5626 = vld [vmem:[%s5613 + $0x48] sm:$0xf]
    %v5627 = vld [vmem:[%s5613 + $0x4c] sm:$0xf]
    %v5628 = vld [vmem:[%s5613 + $0x54] sm:$0xf]
    %v5629 = vld [vmem:[%s5613 + $0x58] sm:$0xf]
    %v5630 = vld [vmem:[%s5613 + $0x60] sm:$0xf]
    %v5631 = vld [vmem:[%s5613 + $0x64] sm:$0xf]
    %v5632 = vld [vmem:[%s5613 + $0x6c] sm:$0xf]
    %v5633 = vld [vmem:[%s5613 + $0x70] sm:$0xf]
    %v5634 = vld [vmem:[%s5613 + $0x78] sm:$0xf]
    %v5635 = vld [vmem:[%s5613 + $0x7c] sm:$0xf]
    %v5636 = vld [vmem:[%s5613 + $0x84] sm:$0xf]
    %v5637 = vld [vmem:[%s5613 + $0x88] sm:$0xf]
    %v5638 = vld [vmem:[%s5613 + $0x90] sm:$0xf]
    %v5639 = vld [vmem:[%s5613 + $0x94] sm:$0xf]
    %v5640 = vld [vmem:[%s5613 + $0x9c] sm:$0xf]
    %v5641 = vld [vmem:[%s5613 + $0xa0] sm:$0xf]
    %v5642 = vld [vmem:[%s5613 + $0xa8] sm:$0xf]
    %v5643 = vld [vmem:[%s5613 + $0xac] sm:$0xf]
    %v5644 = vld [vmem:[%s5613 + $0xb4] sm:$0xf]
    %v5645 = vld [vmem:[%s5613 + $0xb8] sm:$0xf]
    %v5646 = vld [vmem:[%s5613 + $0xd8] sm:$0xf]
    %v5647 = vld [vmem:[%s5613 + $0xdc] sm:$0xf]
    %v5648 = vld [vmem:[%s5613 + $0xe4] sm:$0xf]
    %v5649 = vld [vmem:[%s5613 + $0xe8] sm:$0xf]
    %v5650 = vld [vmem:[%s5613 + $0xf0] sm:$0xf]
    %v5651 = vld [vmem:[%s5613 + $0xf4] sm:$0xf]
    %v5652 = vld [vmem:[%s5613 + $0xfc] sm:$0xf]
    %v5653 = vld [vmem:[%s5613 + $0x100] sm:$0xf]
    %v5654 = vld [vmem:[%s5613 + $0x108] sm:$0xf]
    %v5655 = vld [vmem:[%s5613 + $0x10c] sm:$0xf]
    %v5656 = vld [vmem:[%s5613 + $0x114] sm:$0xf]
    %v5657 = vld [vmem:[%s5613 + $0x118] sm:$0xf]
    %v5658 = vld [vmem:[%s5613 + $0x120] sm:$0xf]
    %v5659 = vld [vmem:[%s5613 + $0x124] sm:$0xf]
    %v5660 = vld [vmem:[%s5613 + $0x12c] sm:$0xf]
    %v5661 = vld [vmem:[%s5613 + $0x130] sm:$0xf]
    %v5662 = vld [vmem:[%s5613 + $0x138] sm:$0xf]
    %v5663 = vld [vmem:[%s5613 + $0x13c] sm:$0xf]
    %v5664 = vld [vmem:[%s5613 + $0x144] sm:$0xf]
    %v5665 = vld [vmem:[%s5613 + $0x148] sm:$0xf]
    %v5666 = vld [vmem:[%s5613 + $0x150] sm:$0xf]
    %v5667 = vld [vmem:[%s5613 + $0x154] sm:$0xf]
    %v5668 = vld [vmem:[%s5613 + $0x15c] sm:$0xf]
    %v5669 = vld [vmem:[%s5613 + $0x160] sm:$0xf]
    %v5670 = vld [vmem:[%s5613 + $0x168] sm:$0xf]
    %v5671 = vld [vmem:[%s5613 + $0x16c] sm:$0xf]
    %v5672 = vld [vmem:[%s5613 + $0x174] sm:$0xf]
    %v5673 = vld [vmem:[%s5613 + $0x178] sm:$0xf]
    %v5674 = vld [vmem:[%s5613 + $0x180] sm:$0xf]
    %v5675 = vld [vmem:[%s5613 + $0x184] sm:$0xf]
    %v5676 = vld [vmem:[%s5613 + $0x18c] sm:$0xf]
    %v5677 = vld [vmem:[%s5613 + $0x190] sm:$0xf]
    %v5678 = vld [vmem:[%s5613 + $0x8] sm:$0x1]
    %v5679 = vld [vmem:[%s5613 + $0x14] sm:$0x1]
    %v5680 = vld [vmem:[%s5613 + $0x20] sm:$0x1]
    %v5681 = vld [vmem:[%s5613 + $0x2c] sm:$0x1]
    %v5682 = vld [vmem:[%s5613 + $0x38] sm:$0x1]
    %v5683 = vld [vmem:[%s5613 + $0x44] sm:$0x1]
    %v5684 = vld [vmem:[%s5613 + $0x50] sm:$0x1]
    %v5685 = vld [vmem:[%s5613 + $0x5c] sm:$0x1]
    %v5686 = vld [vmem:[%s5613 + $0x68] sm:$0x1]
    %v5687 = vld [vmem:[%s5613 + $0x74] sm:$0x1]
    %v5688 = vld [vmem:[%s5613 + $0x80] sm:$0x1]
    %v5689 = vld [vmem:[%s5613 + $0x8c] sm:$0x1]
    %v5690 = vld [vmem:[%s5613 + $0x98] sm:$0x1]
    %v5691 = vld [vmem:[%s5613 + $0xa4] sm:$0x1]
    %v5692 = vld [vmem:[%s5613 + $0xb0] sm:$0x1]
    %v5693 = vld [vmem:[%s5613 + $0xbc] sm:$0x1]
    %v5694 = vld [vmem:[%s5613 + $0xe0] sm:$0x1]
    %v5695 = vld [vmem:[%s5613 + $0xec] sm:$0x1]
    %v5696 = vld [vmem:[%s5613 + $0xf8] sm:$0x1]
    %v5697 = vld [vmem:[%s5613 + $0x104] sm:$0x1]
    %v5698 = vld [vmem:[%s5613 + $0x110] sm:$0x1]
    %v5699 = vld [vmem:[%s5613 + $0x11c] sm:$0x1]
    %v5700 = vld [vmem:[%s5613 + $0x128] sm:$0x1]
    %v5701 = vld [vmem:[%s5613 + $0x134] sm:$0x1]
    %v5702 = vld [vmem:[%s5613 + $0x140] sm:$0x1]
    %v5703 = vld [vmem:[%s5613 + $0x14c] sm:$0x1]
    %v5704 = vld [vmem:[%s5613 + $0x158] sm:$0x1]
    %v5705 = vld [vmem:[%s5613 + $0x164] sm:$0x1]
    %v5706 = vld [vmem:[%s5613 + $0x170] sm:$0x1]
    %v5707 = vld [vmem:[%s5613 + $0x17c] sm:$0x1]
    %v5708 = vld [vmem:[%s5613 + $0x188] sm:$0x1]
    %v5709 = vld [vmem:[%s5613 + $0x194] sm:$0x1]
    %v5711 = vshrl.u32 %v5614, 16
    %v5713 = vrot.slane %v5711, 4
    %v5714 = vshll.u32 %v5614, 16
    %v5716 = vrot.slane %v5714, 5
    %v5717 = vor.u32 %v5713, %v5716
    %v5718 = vrot.slane %v5717, 4
    %v5720 = vshll.u32 %v5615, 16
    %v5722 = vrot.slane %v5720, 5
    %v5723 = vsel %vm3273, %v5718, %v5722
    %v5724 = vshrl.u32 %v5615, 16
    %v5726 = vrot.slane %v5724, 4
    %v5727 = vor.u32 %v5726, %v5722
    %v5728 = vrot.slane %v5727, 4
    %v5730 = vshll.u32 %v5678, 16
    %v5732 = vrot.slane %v5730, 5
    %v5733 = vsel %vm3273, %v5728, %v5732
    %v5735 = vshrl.u32 %v5616, 16
    %v5737 = vrot.slane %v5735, 4
    %v5738 = vshll.u32 %v5616, 16
    %v5740 = vrot.slane %v5738, 5
    %v5741 = vor.u32 %v5737, %v5740
    %v5742 = vrot.slane %v5741, 4
    %v5744 = vshll.u32 %v5617, 16
    %v5746 = vrot.slane %v5744, 5
    %v5747 = vsel %vm3273, %v5742, %v5746
    %v5748 = vshrl.u32 %v5617, 16
    %v5750 = vrot.slane %v5748, 4
    %v5751 = vor.u32 %v5750, %v5746
    %v5752 = vrot.slane %v5751, 4
    %v5754 = vshll.u32 %v5679, 16
    %v5756 = vrot.slane %v5754, 5
    %v5757 = vsel %vm3273, %v5752, %v5756
    %v5759 = vshrl.u32 %v5618, 16
    %v5761 = vrot.slane %v5759, 4
    %v5762 = vshll.u32 %v5618, 16
    %v5764 = vrot.slane %v5762, 5
    %v5765 = vor.u32 %v5761, %v5764
    %v5766 = vrot.slane %v5765, 4
    %v5768 = vshll.u32 %v5619, 16
    %v5770 = vrot.slane %v5768, 5
    %v5771 = vsel %vm3273, %v5766, %v5770
    %v5772 = vshrl.u32 %v5619, 16
    %v5774 = vrot.slane %v5772, 4
    %v5775 = vor.u32 %v5774, %v5770
    %v5776 = vrot.slane %v5775, 4
    %v5778 = vshll.u32 %v5680, 16
    %v5780 = vrot.slane %v5778, 5
    %v5781 = vsel %vm3273, %v5776, %v5780
    %v5783 = vshrl.u32 %v5620, 16
    %v5785 = vrot.slane %v5783, 4
    %v5786 = vshll.u32 %v5620, 16
    %v5788 = vrot.slane %v5786, 5
    %v5789 = vor.u32 %v5785, %v5788
    %v5790 = vrot.slane %v5789, 4
    %v5792 = vshll.u32 %v5621, 16
    %v5794 = vrot.slane %v5792, 5
    %v5795 = vsel %vm3273, %v5790, %v5794
    %v5796 = vshrl.u32 %v5621, 16
    %v5798 = vrot.slane %v5796, 4
    %v5799 = vor.u32 %v5798, %v5794
    %v5800 = vrot.slane %v5799, 4
    %v5802 = vshll.u32 %v5681, 16
    %v5804 = vrot.slane %v5802, 5
    %v5805 = vsel %vm3273, %v5800, %v5804
    %v5807 = vshrl.u32 %v5622, 16
    %v5809 = vrot.slane %v5807, 4
    %v5810 = vshll.u32 %v5622, 16
    %v5812 = vrot.slane %v5810, 5
    %v5813 = vor.u32 %v5809, %v5812
    %v5814 = vrot.slane %v5813, 4
    %v5816 = vshll.u32 %v5623, 16
    %v5818 = vrot.slane %v5816, 5
    %v5819 = vsel %vm3273, %v5814, %v5818
    %v5820 = vshrl.u32 %v5623, 16
    %v5822 = vrot.slane %v5820, 4
    %v5823 = vor.u32 %v5822, %v5818
    %v5824 = vrot.slane %v5823, 4
    %v5826 = vshll.u32 %v5682, 16
    %v5828 = vrot.slane %v5826, 5
    %v5829 = vsel %vm3273, %v5824, %v5828
    %v5831 = vshrl.u32 %v5624, 16
    %v5833 = vrot.slane %v5831, 4
    %v5834 = vshll.u32 %v5624, 16
    %v5836 = vrot.slane %v5834, 5
    %v5837 = vor.u32 %v5833, %v5836
    %v5838 = vrot.slane %v5837, 4
    %v5840 = vshll.u32 %v5625, 16
    %v5842 = vrot.slane %v5840, 5
    %v5843 = vsel %vm3273, %v5838, %v5842
    %v5844 = vshrl.u32 %v5625, 16
    %v5846 = vrot.slane %v5844, 4
    %v5847 = vor.u32 %v5846, %v5842
    %v5848 = vrot.slane %v5847, 4
    %v5850 = vshll.u32 %v5683, 16
    %v5852 = vrot.slane %v5850, 5
    %v5853 = vsel %vm3273, %v5848, %v5852
    %v5855 = vshrl.u32 %v5626, 16
    %v5857 = vrot.slane %v5855, 4
    %v5858 = vshll.u32 %v5626, 16
    %v5860 = vrot.slane %v5858, 5
    %v5861 = vor.u32 %v5857, %v5860
    %v5862 = vrot.slane %v5861, 4
    %v5864 = vshll.u32 %v5627, 16
    %v5866 = vrot.slane %v5864, 5
    %v5867 = vsel %vm3273, %v5862, %v5866
    %v5868 = vshrl.u32 %v5627, 16
    %v5870 = vrot.slane %v5868, 4
    %v5871 = vor.u32 %v5870, %v5866
    %v5872 = vrot.slane %v5871, 4
    %v5874 = vshll.u32 %v5684, 16
    %v5876 = vrot.slane %v5874, 5
    %v5877 = vsel %vm3273, %v5872, %v5876
    %v5879 = vshrl.u32 %v5628, 16
    %v5881 = vrot.slane %v5879, 4
    %v5882 = vshll.u32 %v5628, 16
    %v5884 = vrot.slane %v5882, 5
    %v5885 = vor.u32 %v5881, %v5884
    %v5886 = vrot.slane %v5885, 4
    %v5888 = vshll.u32 %v5629, 16
    %v5890 = vrot.slane %v5888, 5
    %v5891 = vsel %vm3273, %v5886, %v5890
    %v5892 = vshrl.u32 %v5629, 16
    %v5894 = vrot.slane %v5892, 4
    %v5895 = vor.u32 %v5894, %v5890
    %v5896 = vrot.slane %v5895, 4
    %v5898 = vshll.u32 %v5685, 16
    %v5900 = vrot.slane %v5898, 5
    %v5901 = vsel %vm3273, %v5896, %v5900
    %v5903 = vshrl.u32 %v5630, 16
    %v5905 = vrot.slane %v5903, 4
    %v5906 = vshll.u32 %v5630, 16
    %v5908 = vrot.slane %v5906, 5
    %v5909 = vor.u32 %v5905, %v5908
    %v5910 = vrot.slane %v5909, 4
    %v5912 = vshll.u32 %v5631, 16
    %v5914 = vrot.slane %v5912, 5
    %v5915 = vsel %vm3273, %v5910, %v5914
    %v5916 = vshrl.u32 %v5631, 16
    %v5918 = vrot.slane %v5916, 4
    %v5919 = vor.u32 %v5918, %v5914
    %v5920 = vrot.slane %v5919, 4
    %v5922 = vshll.u32 %v5686, 16
    %v5924 = vrot.slane %v5922, 5
    %v5925 = vsel %vm3273, %v5920, %v5924
    %v5927 = vshrl.u32 %v5632, 16
    %v5929 = vrot.slane %v5927, 4
    %v5930 = vshll.u32 %v5632, 16
    %v5932 = vrot.slane %v5930, 5
    %v5933 = vor.u32 %v5929, %v5932
    %v5934 = vrot.slane %v5933, 4
    %v5936 = vshll.u32 %v5633, 16
    %v5938 = vrot.slane %v5936, 5
    %v5939 = vsel %vm3273, %v5934, %v5938
    %v5940 = vshrl.u32 %v5633, 16
    %v5942 = vrot.slane %v5940, 4
    %v5943 = vor.u32 %v5942, %v5938
    %v5944 = vrot.slane %v5943, 4
    %v5946 = vshll.u32 %v5687, 16
    %v5948 = vrot.slane %v5946, 5
    %v5949 = vsel %vm3273, %v5944, %v5948
    %v5951 = vshrl.u32 %v5634, 16
    %v5953 = vrot.slane %v5951, 4
    %v5954 = vshll.u32 %v5634, 16
    %v5956 = vrot.slane %v5954, 5
    %v5957 = vor.u32 %v5953, %v5956
    %v5958 = vrot.slane %v5957, 4
    %v5960 = vshll.u32 %v5635, 16
    %v5962 = vrot.slane %v5960, 5
    %v5963 = vsel %vm3273, %v5958, %v5962
    %v5964 = vshrl.u32 %v5635, 16
    %v5966 = vrot.slane %v5964, 4
    %v5967 = vor.u32 %v5966, %v5962
    %v5968 = vrot.slane %v5967, 4
    %v5970 = vshll.u32 %v5688, 16
    %v5972 = vrot.slane %v5970, 5
    %v5973 = vsel %vm3273, %v5968, %v5972
    %v5975 = vshrl.u32 %v5636, 16
    %v5977 = vrot.slane %v5975, 4
    %v5978 = vshll.u32 %v5636, 16
    %v5980 = vrot.slane %v5978, 5
    %v5981 = vor.u32 %v5977, %v5980
    %v5982 = vrot.slane %v5981, 4
    %v5984 = vshll.u32 %v5637, 16
    %v5986 = vrot.slane %v5984, 5
    %v5987 = vsel %vm3273, %v5982, %v5986
    %v5988 = vshrl.u32 %v5637, 16
    %v5990 = vrot.slane %v5988, 4
    %v5991 = vor.u32 %v5990, %v5986
    %v5992 = vrot.slane %v5991, 4
    %v5994 = vshll.u32 %v5689, 16
    %v5996 = vrot.slane %v5994, 5
    %v5997 = vsel %vm3273, %v5992, %v5996
    %v5999 = vshrl.u32 %v5638, 16
    %v6001 = vrot.slane %v5999, 4
    %v6002 = vshll.u32 %v5638, 16
    %v6004 = vrot.slane %v6002, 5
    %v6005 = vor.u32 %v6001, %v6004
    %v6006 = vrot.slane %v6005, 4
    %v6008 = vshll.u32 %v5639, 16
    %v6010 = vrot.slane %v6008, 5
    %v6011 = vsel %vm3273, %v6006, %v6010
    %v6012 = vshrl.u32 %v5639, 16
    %v6014 = vrot.slane %v6012, 4
    %v6015 = vor.u32 %v6014, %v6010
    %v6016 = vrot.slane %v6015, 4
    %v6018 = vshll.u32 %v5690, 16
    %v6020 = vrot.slane %v6018, 5
    %v6021 = vsel %vm3273, %v6016, %v6020
    %v6023 = vshrl.u32 %v5640, 16
    %v6025 = vrot.slane %v6023, 4
    %v6026 = vshll.u32 %v5640, 16
    %v6028 = vrot.slane %v6026, 5
    %v6029 = vor.u32 %v6025, %v6028
    %v6030 = vrot.slane %v6029, 4
    %v6032 = vshll.u32 %v5641, 16
    %v6034 = vrot.slane %v6032, 5
    %v6035 = vsel %vm3273, %v6030, %v6034
    %v6036 = vshrl.u32 %v5641, 16
    %v6038 = vrot.slane %v6036, 4
    %v6039 = vor.u32 %v6038, %v6034
    %v6040 = vrot.slane %v6039, 4
    %v6042 = vshll.u32 %v5691, 16
    %v6044 = vrot.slane %v6042, 5
    %v6045 = vsel %vm3273, %v6040, %v6044
    %v6047 = vshrl.u32 %v5642, 16
    %v6049 = vrot.slane %v6047, 4
    %v6050 = vshll.u32 %v5642, 16
    %v6052 = vrot.slane %v6050, 5
    %v6053 = vor.u32 %v6049, %v6052
    %v6054 = vrot.slane %v6053, 4
    %v6056 = vshll.u32 %v5643, 16
    %v6058 = vrot.slane %v6056, 5
    %v6059 = vsel %vm3273, %v6054, %v6058
    %v6060 = vshrl.u32 %v5643, 16
    %v6062 = vrot.slane %v6060, 4
    %v6063 = vor.u32 %v6062, %v6058
    %v6064 = vrot.slane %v6063, 4
    %v6066 = vshll.u32 %v5692, 16
    %v6068 = vrot.slane %v6066, 5
    %v6069 = vsel %vm3273, %v6064, %v6068
    %v6071 = vshrl.u32 %v5644, 16
    %v6073 = vrot.slane %v6071, 4
    %v6074 = vshll.u32 %v5644, 16
    %v6076 = vrot.slane %v6074, 5
    %v6077 = vor.u32 %v6073, %v6076
    %v6078 = vrot.slane %v6077, 4
    %v6080 = vshll.u32 %v5645, 16
    %v6082 = vrot.slane %v6080, 5
    %v6083 = vsel %vm3273, %v6078, %v6082
    %v6084 = vshrl.u32 %v5645, 16
    %v6086 = vrot.slane %v6084, 4
    %v6087 = vor.u32 %v6086, %v6082
    %v6088 = vrot.slane %v6087, 4
    %v6090 = vshll.u32 %v5693, 16
    %v6092 = vrot.slane %v6090, 5
    %v6093 = vsel %vm3273, %v6088, %v6092
    %v6095 = vshrl.u32 %v5646, 16
    %v6097 = vrot.slane %v6095, 4
    %v6098 = vshll.u32 %v5646, 16
    %v6100 = vrot.slane %v6098, 5
    %v6101 = vor.u32 %v6097, %v6100
    %v6102 = vrot.slane %v6101, 4
    %v6104 = vshll.u32 %v5647, 16
    %v6106 = vrot.slane %v6104, 5
    %v6107 = vsel %vm3273, %v6102, %v6106
    %v6108 = vshrl.u32 %v5647, 16
    %v6110 = vrot.slane %v6108, 4
    %v6111 = vor.u32 %v6110, %v6106
    %v6112 = vrot.slane %v6111, 4
    %v6114 = vshll.u32 %v5694, 16
    %v6116 = vrot.slane %v6114, 5
    %v6117 = vsel %vm3273, %v6112, %v6116
    %v6119 = vshrl.u32 %v5648, 16
    %v6121 = vrot.slane %v6119, 4
    %v6122 = vshll.u32 %v5648, 16
    %v6124 = vrot.slane %v6122, 5
    %v6125 = vor.u32 %v6121, %v6124
    %v6126 = vrot.slane %v6125, 4
    %v6128 = vshll.u32 %v5649, 16
    %v6130 = vrot.slane %v6128, 5
    %v6131 = vsel %vm3273, %v6126, %v6130
    %v6132 = vshrl.u32 %v5649, 16
    %v6134 = vrot.slane %v6132, 4
    %v6135 = vor.u32 %v6134, %v6130
    %v6136 = vrot.slane %v6135, 4
    %v6138 = vshll.u32 %v5695, 16
    %v6140 = vrot.slane %v6138, 5
    %v6141 = vsel %vm3273, %v6136, %v6140
    %v6143 = vshrl.u32 %v5650, 16
    %v6145 = vrot.slane %v6143, 4
    %v6146 = vshll.u32 %v5650, 16
    %v6148 = vrot.slane %v6146, 5
    %v6149 = vor.u32 %v6145, %v6148
    %v6150 = vrot.slane %v6149, 4
    %v6152 = vshll.u32 %v5651, 16
    %v6154 = vrot.slane %v6152, 5
    %v6155 = vsel %vm3273, %v6150, %v6154
    %v6156 = vshrl.u32 %v5651, 16
    %v6158 = vrot.slane %v6156, 4
    %v6159 = vor.u32 %v6158, %v6154
    %v6160 = vrot.slane %v6159, 4
    %v6162 = vshll.u32 %v5696, 16
    %v6164 = vrot.slane %v6162, 5
    %v6165 = vsel %vm3273, %v6160, %v6164
    %v6167 = vshrl.u32 %v5652, 16
    %v6169 = vrot.slane %v6167, 4
    %v6170 = vshll.u32 %v5652, 16
    %v6172 = vrot.slane %v6170, 5
    %v6173 = vor.u32 %v6169, %v6172
    %v6174 = vrot.slane %v6173, 4
    %v6176 = vshll.u32 %v5653, 16
    %v6178 = vrot.slane %v6176, 5
    %v6179 = vsel %vm3273, %v6174, %v6178
    %v6180 = vshrl.u32 %v5653, 16
    %v6182 = vrot.slane %v6180, 4
    %v6183 = vor.u32 %v6182, %v6178
    %v6184 = vrot.slane %v6183, 4
    %v6186 = vshll.u32 %v5697, 16
    %v6188 = vrot.slane %v6186, 5
    %v6189 = vsel %vm3273, %v6184, %v6188
    %v6191 = vshrl.u32 %v5654, 16
    %v6193 = vrot.slane %v6191, 4
    %v6194 = vshll.u32 %v5654, 16
    %v6196 = vrot.slane %v6194, 5
    %v6197 = vor.u32 %v6193, %v6196
    %v6198 = vrot.slane %v6197, 4
    %v6200 = vshll.u32 %v5655, 16
    %v6202 = vrot.slane %v6200, 5
    %v6203 = vsel %vm3273, %v6198, %v6202
    %v6204 = vshrl.u32 %v5655, 16
    %v6206 = vrot.slane %v6204, 4
    %v6207 = vor.u32 %v6206, %v6202
    %v6208 = vrot.slane %v6207, 4
    %v6210 = vshll.u32 %v5698, 16
    %v6212 = vrot.slane %v6210, 5
    %v6213 = vsel %vm3273, %v6208, %v6212
    %v6215 = vshrl.u32 %v5656, 16
    %v6217 = vrot.slane %v6215, 4
    %v6218 = vshll.u32 %v5656, 16
    %v6220 = vrot.slane %v6218, 5
    %v6221 = vor.u32 %v6217, %v6220
    %v6222 = vrot.slane %v6221, 4
    %v6224 = vshll.u32 %v5657, 16
    %v6226 = vrot.slane %v6224, 5
    %v6227 = vsel %vm3273, %v6222, %v6226
    %v6228 = vshrl.u32 %v5657, 16
    %v6230 = vrot.slane %v6228, 4
    %v6231 = vor.u32 %v6230, %v6226
    %v6232 = vrot.slane %v6231, 4
    %v6234 = vshll.u32 %v5699, 16
    %v6236 = vrot.slane %v6234, 5
    %v6237 = vsel %vm3273, %v6232, %v6236
    %v6239 = vshrl.u32 %v5658, 16
    %v6241 = vrot.slane %v6239, 4
    %v6242 = vshll.u32 %v5658, 16
    %v6244 = vrot.slane %v6242, 5
    %v6245 = vor.u32 %v6241, %v6244
    %v6246 = vrot.slane %v6245, 4
    %v6248 = vshll.u32 %v5659, 16
    %v6250 = vrot.slane %v6248, 5
    %v6251 = vsel %vm3273, %v6246, %v6250
    %v6252 = vshrl.u32 %v5659, 16
    %v6254 = vrot.slane %v6252, 4
    %v6255 = vor.u32 %v6254, %v6250
    %v6256 = vrot.slane %v6255, 4
    %v6258 = vshll.u32 %v5700, 16
    %v6260 = vrot.slane %v6258, 5
    %v6261 = vsel %vm3273, %v6256, %v6260
    %v6263 = vshrl.u32 %v5660, 16
    %v6265 = vrot.slane %v6263, 4
    %v6266 = vshll.u32 %v5660, 16
    %v6268 = vrot.slane %v6266, 5
    %v6269 = vor.u32 %v6265, %v6268
    %v6270 = vrot.slane %v6269, 4
    %v6272 = vshll.u32 %v5661, 16
    %v6274 = vrot.slane %v6272, 5
    %v6275 = vsel %vm3273, %v6270, %v6274
    %v6276 = vshrl.u32 %v5661, 16
    %v6278 = vrot.slane %v6276, 4
    %v6279 = vor.u32 %v6278, %v6274
    %v6280 = vrot.slane %v6279, 4
    %v6282 = vshll.u32 %v5701, 16
    %v6284 = vrot.slane %v6282, 5
    %v6285 = vsel %vm3273, %v6280, %v6284
    %v6287 = vshrl.u32 %v5662, 16
    %v6289 = vrot.slane %v6287, 4
    %v6290 = vshll.u32 %v5662, 16
    %v6292 = vrot.slane %v6290, 5
    %v6293 = vor.u32 %v6289, %v6292
    %v6294 = vrot.slane %v6293, 4
    %v6296 = vshll.u32 %v5663, 16
    %v6298 = vrot.slane %v6296, 5
    %v6299 = vsel %vm3273, %v6294, %v6298
    %v6300 = vshrl.u32 %v5663, 16
    %v6302 = vrot.slane %v6300, 4
    %v6303 = vor.u32 %v6302, %v6298
    %v6304 = vrot.slane %v6303, 4
    %v6306 = vshll.u32 %v5702, 16
    %v6308 = vrot.slane %v6306, 5
    %v6309 = vsel %vm3273, %v6304, %v6308
    %v6311 = vshrl.u32 %v5664, 16
    %v6313 = vrot.slane %v6311, 4
    %v6314 = vshll.u32 %v5664, 16
    %v6316 = vrot.slane %v6314, 5
    %v6317 = vor.u32 %v6313, %v6316
    %v6318 = vrot.slane %v6317, 4
    %v6320 = vshll.u32 %v5665, 16
    %v6322 = vrot.slane %v6320, 5
    %v6323 = vsel %vm3273, %v6318, %v6322
    %v6324 = vshrl.u32 %v5665, 16
    %v6326 = vrot.slane %v6324, 4
    %v6327 = vor.u32 %v6326, %v6322
    %v6328 = vrot.slane %v6327, 4
    %v6330 = vshll.u32 %v5703, 16
    %v6332 = vrot.slane %v6330, 5
    %v6333 = vsel %vm3273, %v6328, %v6332
    %v6335 = vshrl.u32 %v5666, 16
    %v6337 = vrot.slane %v6335, 4
    %v6338 = vshll.u32 %v5666, 16
    %v6340 = vrot.slane %v6338, 5
    %v6341 = vor.u32 %v6337, %v6340
    %v6342 = vrot.slane %v6341, 4
    %v6344 = vshll.u32 %v5667, 16
    %v6346 = vrot.slane %v6344, 5
    %v6347 = vsel %vm3273, %v6342, %v6346
    %v6348 = vshrl.u32 %v5667, 16
    %v6350 = vrot.slane %v6348, 4
    %v6351 = vor.u32 %v6350, %v6346
    %v6352 = vrot.slane %v6351, 4
    %v6354 = vshll.u32 %v5704, 16
    %v6356 = vrot.slane %v6354, 5
    %v6357 = vsel %vm3273, %v6352, %v6356
    %v6359 = vshrl.u32 %v5668, 16
    %v6361 = vrot.slane %v6359, 4
    %v6362 = vshll.u32 %v5668, 16
    %v6364 = vrot.slane %v6362, 5
    %v6365 = vor.u32 %v6361, %v6364
    %v6366 = vrot.slane %v6365, 4
    %v6368 = vshll.u32 %v5669, 16
    %v6370 = vrot.slane %v6368, 5
    %v6371 = vsel %vm3273, %v6366, %v6370
    %v6372 = vshrl.u32 %v5669, 16
    %v6374 = vrot.slane %v6372, 4
    %v6375 = vor.u32 %v6374, %v6370
    %v6376 = vrot.slane %v6375, 4
    %v6378 = vshll.u32 %v5705, 16
    %v6380 = vrot.slane %v6378, 5
    %v6381 = vsel %vm3273, %v6376, %v6380
    %v6383 = vshrl.u32 %v5670, 16
    %v6385 = vrot.slane %v6383, 4
    %v6386 = vshll.u32 %v5670, 16
    %v6388 = vrot.slane %v6386, 5
    %v6389 = vor.u32 %v6385, %v6388
    %v6390 = vrot.slane %v6389, 4
    %v6392 = vshll.u32 %v5671, 16
    %v6394 = vrot.slane %v6392, 5
    %v6395 = vsel %vm3273, %v6390, %v6394
    %v6396 = vshrl.u32 %v5671, 16
    %v6398 = vrot.slane %v6396, 4
    %v6399 = vor.u32 %v6398, %v6394
    %v6400 = vrot.slane %v6399, 4
    %v6402 = vshll.u32 %v5706, 16
    %v6404 = vrot.slane %v6402, 5
    %v6405 = vsel %vm3273, %v6400, %v6404
    %v6407 = vshrl.u32 %v5672, 16
    %v6409 = vrot.slane %v6407, 4
    %v6410 = vshll.u32 %v5672, 16
    %v6412 = vrot.slane %v6410, 5
    %v6413 = vor.u32 %v6409, %v6412
    %v6414 = vrot.slane %v6413, 4
    %v6416 = vshll.u32 %v5673, 16
    %v6418 = vrot.slane %v6416, 5
    %v6419 = vsel %vm3273, %v6414, %v6418
    %v6420 = vshrl.u32 %v5673, 16
    %v6422 = vrot.slane %v6420, 4
    %v6423 = vor.u32 %v6422, %v6418
    %v6424 = vrot.slane %v6423, 4
    %v6426 = vshll.u32 %v5707, 16
    %v6428 = vrot.slane %v6426, 5
    %v6429 = vsel %vm3273, %v6424, %v6428
    %v6431 = vshrl.u32 %v5674, 16
    %v6433 = vrot.slane %v6431, 4
    %v6434 = vshll.u32 %v5674, 16
    %v6436 = vrot.slane %v6434, 5
    %v6437 = vor.u32 %v6433, %v6436
    %v6438 = vrot.slane %v6437, 4
    %v6440 = vshll.u32 %v5675, 16
    %v6442 = vrot.slane %v6440, 5
    %v6443 = vsel %vm3273, %v6438, %v6442
    %v6444 = vshrl.u32 %v5675, 16
    %v6446 = vrot.slane %v6444, 4
    %v6447 = vor.u32 %v6446, %v6442
    %v6448 = vrot.slane %v6447, 4
    %v6450 = vshll.u32 %v5708, 16
    %v6452 = vrot.slane %v6450, 5
    %v6453 = vsel %vm3273, %v6448, %v6452
    %v6455 = vshrl.u32 %v5676, 16
    %v6457 = vrot.slane %v6455, 4
    %v6458 = vshll.u32 %v5676, 16
    %v6460 = vrot.slane %v6458, 5
    %v6461 = vor.u32 %v6457, %v6460
    %v6462 = vrot.slane %v6461, 4
    %v6464 = vshll.u32 %v5677, 16
    %v6466 = vrot.slane %v6464, 5
    %v6467 = vsel %vm3273, %v6462, %v6466
    %v6468 = vshrl.u32 %v5677, 16
    %v6470 = vrot.slane %v6468, 4
    %v6471 = vor.u32 %v6470, %v6466
    %v6472 = vrot.slane %v6471, 4
    %v6474 = vshll.u32 %v5709, 16
    %v6476 = vrot.slane %v6474, 5
    %v6477 = vsel %vm3273, %v6472, %v6476
    %v6478 = vld [vmem:[%s5613] sm:$0xe]
    %v6479 = vld [vmem:[%s5613 + $0xc] sm:$0xe]
    %v6480 = vld [vmem:[%s5613 + $0x18] sm:$0xe]
    %v6481 = vld [vmem:[%s5613 + $0x24] sm:$0xe]
    %v6482 = vld [vmem:[%s5613 + $0x30] sm:$0xe]
    %v6483 = vld [vmem:[%s5613 + $0x3c] sm:$0xe]
    %v6484 = vld [vmem:[%s5613 + $0x48] sm:$0xe]
    %v6485 = vld [vmem:[%s5613 + $0x54] sm:$0xe]
    %v6486 = vld [vmem:[%s5613 + $0x60] sm:$0xe]
    %v6487 = vld [vmem:[%s5613 + $0x6c] sm:$0xe]
    %v6488 = vld [vmem:[%s5613 + $0x78] sm:$0xe]
    %v6489 = vld [vmem:[%s5613 + $0x84] sm:$0xe]
    %v6490 = vld [vmem:[%s5613 + $0x90] sm:$0xe]
    %v6491 = vld [vmem:[%s5613 + $0x9c] sm:$0xe]
    %v6492 = vld [vmem:[%s5613 + $0xa8] sm:$0xe]
    %v6493 = vld [vmem:[%s5613 + $0xb4] sm:$0xe]
    %v6494 = vld [vmem:[%s5613 + $0xd8] sm:$0xe]
    %v6495 = vld [vmem:[%s5613 + $0xe4] sm:$0xe]
    %v6496 = vld [vmem:[%s5613 + $0xf0] sm:$0xe]
    %v6497 = vld [vmem:[%s5613 + $0xfc] sm:$0xe]
    %v6498 = vld [vmem:[%s5613 + $0x108] sm:$0xe]
    %v6499 = vld [vmem:[%s5613 + $0x114] sm:$0xe]
    %v6500 = vld [vmem:[%s5613 + $0x120] sm:$0xe]
    %v6501 = vld [vmem:[%s5613 + $0x12c] sm:$0xe]
    %v6502 = vld [vmem:[%s5613 + $0x138] sm:$0xe]
    %v6503 = vld [vmem:[%s5613 + $0x144] sm:$0xe]
    %v6504 = vld [vmem:[%s5613 + $0x150] sm:$0xe]
    %v6505 = vld [vmem:[%s5613 + $0x15c] sm:$0xe]
    %v6506 = vld [vmem:[%s5613 + $0x168] sm:$0xe]
    %v6507 = vld [vmem:[%s5613 + $0x174] sm:$0xe]
    %v6508 = vld [vmem:[%s5613 + $0x180] sm:$0xe]
    %v6509 = vld [vmem:[%s5613 + $0x18c] sm:$0xe]
    %v6606 = vrot.slane %v6478, 5
    %v6607 = vrot.slane %v6606, 4
    %v6608 = vrot.slane %v5615, 5
    %v6609 = vsel %vm4172, %v6607, %v6608
    %v6610 = vrot.slane %v6608, 4
    %v6611 = vrot.slane %v5678, 5
    %v6612 = vsel %vm4172, %v6610, %v6611
    %v6613 = vrot.slane %v6479, 5
    %v6614 = vrot.slane %v6613, 4
    %v6615 = vrot.slane %v5617, 5
    %v6616 = vsel %vm4172, %v6614, %v6615
    %v6617 = vrot.slane %v6615, 4
    %v6618 = vrot.slane %v5679, 5
    %v6619 = vsel %vm4172, %v6617, %v6618
    %v6620 = vrot.slane %v6480, 5
    %v6621 = vrot.slane %v6620, 4
    %v6622 = vrot.slane %v5619, 5
    %v6623 = vsel %vm4172, %v6621, %v6622
    %v6624 = vrot.slane %v6622, 4
    %v6625 = vrot.slane %v5680, 5
    %v6626 = vsel %vm4172, %v6624, %v6625
    %v6627 = vrot.slane %v6481, 5
    %v6628 = vrot.slane %v6627, 4
    %v6629 = vrot.slane %v5621, 5
    %v6630 = vsel %vm4172, %v6628, %v6629
    %v6631 = vrot.slane %v6629, 4
    %v6632 = vrot.slane %v5681, 5
    %v6633 = vsel %vm4172, %v6631, %v6632
    %v6634 = vrot.slane %v6482, 5
    %v6635 = vrot.slane %v6634, 4
    %v6636 = vrot.slane %v5623, 5
    %v6637 = vsel %vm4172, %v6635, %v6636
    %v6638 = vrot.slane %v6636, 4
    %v6639 = vrot.slane %v5682, 5
    %v6640 = vsel %vm4172, %v6638, %v6639
    %v6641 = vrot.slane %v6483, 5
    %v6642 = vrot.slane %v6641, 4
    %v6643 = vrot.slane %v5625, 5
    %v6644 = vsel %vm4172, %v6642, %v6643
    %v6645 = vrot.slane %v6643, 4
    %v6646 = vrot.slane %v5683, 5
    %v6647 = vsel %vm4172, %v6645, %v6646
    %v6648 = vrot.slane %v6484, 5
    %v6649 = vrot.slane %v6648, 4
    %v6650 = vrot.slane %v5627, 5
    %v6651 = vsel %vm4172, %v6649, %v6650
    %v6652 = vrot.slane %v6650, 4
    %v6653 = vrot.slane %v5684, 5
    %v6654 = vsel %vm4172, %v6652, %v6653
    %v6655 = vrot.slane %v6485, 5
    %v6656 = vrot.slane %v6655, 4
    %v6657 = vrot.slane %v5629, 5
    %v6658 = vsel %vm4172, %v6656, %v6657
    %v6659 = vrot.slane %v6657, 4
    %v6660 = vrot.slane %v5685, 5
    %v6661 = vsel %vm4172, %v6659, %v6660
    %v6662 = vrot.slane %v6486, 5
    %v6663 = vrot.slane %v6662, 4
    %v6664 = vrot.slane %v5631, 5
    %v6665 = vsel %vm4172, %v6663, %v6664
    %v6666 = vrot.slane %v6664, 4
    %v6667 = vrot.slane %v5686, 5
    %v6668 = vsel %vm4172, %v6666, %v6667
    %v6669 = vrot.slane %v6487, 5
    %v6670 = vrot.slane %v6669, 4
    %v6671 = vrot.slane %v5633, 5
    %v6672 = vsel %vm4172, %v6670, %v6671
    %v6673 = vrot.slane %v6671, 4
    %v6674 = vrot.slane %v5687, 5
    %v6675 = vsel %vm4172, %v6673, %v6674
    %v6676 = vrot.slane %v6488, 5
    %v6677 = vrot.slane %v6676, 4
    %v6678 = vrot.slane %v5635, 5
    %v6679 = vsel %vm4172, %v6677, %v6678
    %v6680 = vrot.slane %v6678, 4
    %v6681 = vrot.slane %v5688, 5
    %v6682 = vsel %vm4172, %v6680, %v6681
    %v6683 = vrot.slane %v6489, 5
    %v6684 = vrot.slane %v6683, 4
    %v6685 = vrot.slane %v5637, 5
    %v6686 = vsel %vm4172, %v6684, %v6685
    %v6687 = vrot.slane %v6685, 4
    %v6688 = vrot.slane %v5689, 5
    %v6689 = vsel %vm4172, %v6687, %v6688
    %v6690 = vrot.slane %v6490, 5
    %v6691 = vrot.slane %v6690, 4
    %v6692 = vrot.slane %v5639, 5
    %v6693 = vsel %vm4172, %v6691, %v6692
    %v6694 = vrot.slane %v6692, 4
    %v6695 = vrot.slane %v5690, 5
    %v6696 = vsel %vm4172, %v6694, %v6695
    %v6697 = vrot.slane %v6491, 5
    %v6698 = vrot.slane %v6697, 4
    %v6699 = vrot.slane %v5641, 5
    %v6700 = vsel %vm4172, %v6698, %v6699
    %v6701 = vrot.slane %v6699, 4
    %v6702 = vrot.slane %v5691, 5
    %v6703 = vsel %vm4172, %v6701, %v6702
    %v6704 = vrot.slane %v6492, 5
    %v6705 = vrot.slane %v6704, 4
    %v6706 = vrot.slane %v5643, 5
    %v6707 = vsel %vm4172, %v6705, %v6706
    %v6708 = vrot.slane %v6706, 4
    %v6709 = vrot.slane %v5692, 5
    %v6710 = vsel %vm4172, %v6708, %v6709
    %v6711 = vrot.slane %v6493, 5
    %v6712 = vrot.slane %v6711, 4
    %v6713 = vrot.slane %v5645, 5
    %v6714 = vsel %vm4172, %v6712, %v6713
    %v6715 = vrot.slane %v6713, 4
    %v6716 = vrot.slane %v5693, 5
    %v6717 = vsel %vm4172, %v6715, %v6716
    %v6718 = vrot.slane %v6494, 5
    %v6719 = vrot.slane %v6718, 4
    %v6720 = vrot.slane %v5647, 5
    %v6721 = vsel %vm4172, %v6719, %v6720
    %v6722 = vrot.slane %v6720, 4
    %v6723 = vrot.slane %v5694, 5
    %v6724 = vsel %vm4172, %v6722, %v6723
    %v6725 = vrot.slane %v6495, 5
    %v6726 = vrot.slane %v6725, 4
    %v6727 = vrot.slane %v5649, 5
    %v6728 = vsel %vm4172, %v6726, %v6727
    %v6729 = vrot.slane %v6727, 4
    %v6730 = vrot.slane %v5695, 5
    %v6731 = vsel %vm4172, %v6729, %v6730
    %v6732 = vrot.slane %v6496, 5
    %v6733 = vrot.slane %v6732, 4
    %v6734 = vrot.slane %v5651, 5
    %v6735 = vsel %vm4172, %v6733, %v6734
    %v6736 = vrot.slane %v6734, 4
    %v6737 = vrot.slane %v5696, 5
    %v6738 = vsel %vm4172, %v6736, %v6737
    %v6739 = vrot.slane %v6497, 5
    %v6740 = vrot.slane %v6739, 4
    %v6741 = vrot.slane %v5653, 5
    %v6742 = vsel %vm4172, %v6740, %v6741
    %v6743 = vrot.slane %v6741, 4
    %v6744 = vrot.slane %v5697, 5
    %v6745 = vsel %vm4172, %v6743, %v6744
    %v6746 = vrot.slane %v6498, 5
    %v6747 = vrot.slane %v6746, 4
    %v6748 = vrot.slane %v5655, 5
    %v6749 = vsel %vm4172, %v6747, %v6748
    %v6750 = vrot.slane %v6748, 4
    %v6751 = vrot.slane %v5698, 5
    %v6752 = vsel %vm4172, %v6750, %v6751
    %v6753 = vrot.slane %v6499, 5
    %v6754 = vrot.slane %v6753, 4
    %v6755 = vrot.slane %v5657, 5
    %v6756 = vsel %vm4172, %v6754, %v6755
    %v6757 = vrot.slane %v6755, 4
    %v6758 = vrot.slane %v5699, 5
    %v6759 = vsel %vm4172, %v6757, %v6758
    %v6760 = vrot.slane %v6500, 5
    %v6761 = vrot.slane %v6760, 4
    %v6762 = vrot.slane %v5659, 5
    %v6763 = vsel %vm4172, %v6761, %v6762
    %v6764 = vrot.slane %v6762, 4
    %v6765 = vrot.slane %v5700, 5
    %v6766 = vsel %vm4172, %v6764, %v6765
    %v6767 = vrot.slane %v6501, 5
    %v6768 = vrot.slane %v6767, 4
    %v6769 = vrot.slane %v5661, 5
    %v6770 = vsel %vm4172, %v6768, %v6769
    %v6771 = vrot.slane %v6769, 4
    %v6772 = vrot.slane %v5701, 5
    %v6773 = vsel %vm4172, %v6771, %v6772
    %v6774 = vrot.slane %v6502, 5
    %v6775 = vrot.slane %v6774, 4
    %v6776 = vrot.slane %v5663, 5
    %v6777 = vsel %vm4172, %v6775, %v6776
    %v6778 = vrot.slane %v6776, 4
    %v6779 = vrot.slane %v5702, 5
    %v6780 = vsel %vm4172, %v6778, %v6779
    %v6781 = vrot.slane %v6503, 5
    %v6782 = vrot.slane %v6781, 4
    %v6783 = vrot.slane %v5665, 5
    %v6784 = vsel %vm4172, %v6782, %v6783
    %v6785 = vrot.slane %v6783, 4
    %v6786 = vrot.slane %v5703, 5
    %v6787 = vsel %vm4172, %v6785, %v6786
    %v6788 = vrot.slane %v6504, 5
    %v6789 = vrot.slane %v6788, 4
    %v6790 = vrot.slane %v5667, 5
    %v6791 = vsel %vm4172, %v6789, %v6790
    %v6792 = vrot.slane %v6790, 4
    %v6793 = vrot.slane %v5704, 5
    %v6794 = vsel %vm4172, %v6792, %v6793
    %v6795 = vrot.slane %v6505, 5
    %v6796 = vrot.slane %v6795, 4
    %v6797 = vrot.slane %v5669, 5
    %v6798 = vsel %vm4172, %v6796, %v6797
    %v6799 = vrot.slane %v6797, 4
    %v6800 = vrot.slane %v5705, 5
    %v6801 = vsel %vm4172, %v6799, %v6800
    %v6802 = vrot.slane %v6506, 5
    %v6803 = vrot.slane %v6802, 4
    %v6804 = vrot.slane %v5671, 5
    %v6805 = vsel %vm4172, %v6803, %v6804
    %v6806 = vrot.slane %v6804, 4
    %v6807 = vrot.slane %v5706, 5
    %v6808 = vsel %vm4172, %v6806, %v6807
    %v6809 = vrot.slane %v6507, 5
    %v6810 = vrot.slane %v6809, 4
    %v6811 = vrot.slane %v5673, 5
    %v6812 = vsel %vm4172, %v6810, %v6811
    %v6813 = vrot.slane %v6811, 4
    %v6814 = vrot.slane %v5707, 5
    %v6815 = vsel %vm4172, %v6813, %v6814
    %v6816 = vrot.slane %v6508, 5
    %v6817 = vrot.slane %v6816, 4
    %v6818 = vrot.slane %v5675, 5
    %v6819 = vsel %vm4172, %v6817, %v6818
    %v6820 = vrot.slane %v6818, 4
    %v6821 = vrot.slane %v5708, 5
    %v6822 = vsel %vm4172, %v6820, %v6821
    %v6823 = vrot.slane %v6509, 5
    %v6824 = vrot.slane %v6823, 4
    %v6825 = vrot.slane %v5677, 5
    %v6826 = vsel %vm4172, %v6824, %v6825
    %v6827 = vrot.slane %v6825, 4
    %v6828 = vrot.slane %v5709, 5
    %v6829 = vsel %vm4172, %v6827, %v6828
    %v6862 = vunpack.c.l.b16 %v3175
    %v6863 = vunpack.c.l.b16 %v3176
    %v6864 = vunpack.c.l.b16 %v3177
    %v6865 = vunpack.c.l.b16 %v3178
    %v6866 = vunpack.c.l.b16 %v3179
    %v6867 = vunpack.c.l.b16 %v3180
    %v6868 = vunpack.c.l.b16 %v3181
    %v6869 = vunpack.c.l.b16 %v3182
    %v6870 = vunpack.c.l.b16 %v3183
    %v6871 = vunpack.c.l.b16 %v3184
    %v6872 = vunpack.c.l.b16 %v3185
    %v6873 = vunpack.c.l.b16 %v3186
    %v6874 = vunpack.c.l.b16 %v3187
    %v6875 = vunpack.c.l.b16 %v3188
    %v6876 = vunpack.c.l.b16 %v3189
    %v6877 = vunpack.c.l.b16 %v3190
    %v6878 = vunpack.c.l.b16 %v3191
    %v6879 = vunpack.c.l.b16 %v3192
    %v6880 = vunpack.c.l.b16 %v3193
    %v6881 = vunpack.c.l.b16 %v3194
    %v6882 = vunpack.c.l.b16 %v3195
    %v6883 = vunpack.c.l.b16 %v3196
    %v6884 = vunpack.c.l.b16 %v3197
    %v6885 = vunpack.c.l.b16 %v3198
    %v6886 = vunpack.c.l.b16 %v3199
    %v6887 = vunpack.c.l.b16 %v3200
    %v6888 = vunpack.c.l.b16 %v3201
    %v6889 = vunpack.c.l.b16 %v3202
    %v6890 = vunpack.c.l.b16 %v3203
    %v6891 = vunpack.c.l.b16 %v3204
    %v6892 = vunpack.c.l.b16 %v3205
    %v6893 = vunpack.c.l.b16 %v3206
    %v6894 = vunpack.c.l.b16 %v3207
    %v6895 = vunpack.c.l.b16 %v3208
    %v6896 = vunpack.c.l.b16 %v3209
    %v6897 = vunpack.c.l.b16 %v3210
    %v6898 = vunpack.c.l.b16 %v3211
    %v6899 = vunpack.c.l.b16 %v3212
    %v6900 = vunpack.c.l.b16 %v3213
    %v6901 = vunpack.c.l.b16 %v3214
    %v6902 = vunpack.c.l.b16 %v3215
    %v6903 = vunpack.c.l.b16 %v3216
    %v6904 = vunpack.c.l.b16 %v3217
    %v6905 = vunpack.c.l.b16 %v3218
    %v6906 = vunpack.c.l.b16 %v3219
    %v6907 = vunpack.c.l.b16 %v3220
    %v6908 = vunpack.c.l.b16 %v3221
    %v6909 = vunpack.c.l.b16 %v3222
    %v6910 = vunpack.c.l.b16 %v3223
    %v6911 = vunpack.c.l.b16 %v3224
    %v6912 = vunpack.c.l.b16 %v3225
    %v6913 = vunpack.c.l.b16 %v3226
    %v6914 = vunpack.c.l.b16 %v3227
    %v6915 = vunpack.c.l.b16 %v3228
    %v6916 = vunpack.c.l.b16 %v3229
    %v6917 = vunpack.c.l.b16 %v3230
    %v6918 = vunpack.c.l.b16 %v3231
    %v6919 = vunpack.c.l.b16 %v3232
    %v6920 = vunpack.c.l.b16 %v3233
    %v6921 = vunpack.c.l.b16 %v3234
    %v6922 = vunpack.c.l.b16 %v3235
    %v6923 = vunpack.c.l.b16 %v3236
    %v6924 = vunpack.c.l.b16 %v3237
    %v6925 = vunpack.c.l.b16 %v3238
    %v6926 = vpack.c.b16 %v6863, %v6862
    %v6927 = vpack.c.b16 %v6865, %v6864
    %v6928 = vpack.c.b16 %v6867, %v6866
    %v6929 = vpack.c.b16 %v6869, %v6868
    %v6930 = vpack.c.b16 %v6871, %v6870
    %v6931 = vpack.c.b16 %v6873, %v6872
    %v6932 = vpack.c.b16 %v6875, %v6874
    %v6933 = vpack.c.b16 %v6877, %v6876
    %v6934 = vpack.c.b16 %v6879, %v6878
    %v6935 = vpack.c.b16 %v6881, %v6880
    %v6936 = vpack.c.b16 %v6883, %v6882
    %v6937 = vpack.c.b16 %v6885, %v6884
    %v6938 = vpack.c.b16 %v6887, %v6886
    %v6939 = vpack.c.b16 %v6889, %v6888
    %v6940 = vpack.c.b16 %v6891, %v6890
    %v6941 = vpack.c.b16 %v6893, %v6892
    %v6942 = vpack.c.b16 %v6895, %v6894
    %v6943 = vpack.c.b16 %v6897, %v6896
    %v6944 = vpack.c.b16 %v6899, %v6898
    %v6945 = vpack.c.b16 %v6901, %v6900
    %v6946 = vpack.c.b16 %v6903, %v6902
    %v6947 = vpack.c.b16 %v6905, %v6904
    %v6948 = vpack.c.b16 %v6907, %v6906
    %v6949 = vpack.c.b16 %v6909, %v6908
    %v6950 = vpack.c.b16 %v6911, %v6910
    %v6951 = vpack.c.b16 %v6913, %v6912
    %v6952 = vpack.c.b16 %v6915, %v6914
    %v6953 = vpack.c.b16 %v6917, %v6916
    %v6954 = vpack.c.b16 %v6919, %v6918
    %v6955 = vpack.c.b16 %v6921, %v6920
    %v6956 = vpack.c.b16 %v6923, %v6922
    %v6957 = vpack.c.b16 %v6925, %v6924
    %v6958 = vunpack.c.l.b16 %v3287
    %v6959 = vunpack.c.l.b16 %v3297
    %v6960 = vunpack.c.l.b16 %v3311
    %v6961 = vunpack.c.l.b16 %v3321
    %v6962 = vunpack.c.l.b16 %v3335
    %v6963 = vunpack.c.l.b16 %v3345
    %v6964 = vunpack.c.l.b16 %v3359
    %v6965 = vunpack.c.l.b16 %v3369
    %v6966 = vunpack.c.l.b16 %v3383
    %v6967 = vunpack.c.l.b16 %v3393
    %v6968 = vunpack.c.l.b16 %v3407
    %v6969 = vunpack.c.l.b16 %v3417
    %v6970 = vunpack.c.l.b16 %v3431
    %v6971 = vunpack.c.l.b16 %v3441
    %v6972 = vunpack.c.l.b16 %v3455
    %v6973 = vunpack.c.l.b16 %v3465
    %v6974 = vunpack.c.l.b16 %v3479
    %v6975 = vunpack.c.l.b16 %v3489
    %v6976 = vunpack.c.l.b16 %v3503
    %v6977 = vunpack.c.l.b16 %v3513
    %v6978 = vunpack.c.l.b16 %v3527
    %v6979 = vunpack.c.l.b16 %v3537
    %v6980 = vunpack.c.l.b16 %v3551
    %v6981 = vunpack.c.l.b16 %v3561
    %v6982 = vunpack.c.l.b16 %v3575
    %v6983 = vunpack.c.l.b16 %v3585
    %v6984 = vunpack.c.l.b16 %v3599
    %v6985 = vunpack.c.l.b16 %v3609
    %v6986 = vunpack.c.l.b16 %v3623
    %v6987 = vunpack.c.l.b16 %v3633
    %v6988 = vunpack.c.l.b16 %v3647
    %v6989 = vunpack.c.l.b16 %v3657
    %v6990 = vunpack.c.l.b16 %v3671
    %v6991 = vunpack.c.l.b16 %v3681
    %v6992 = vunpack.c.l.b16 %v3695
    %v6993 = vunpack.c.l.b16 %v3705
    %v6994 = vunpack.c.l.b16 %v3719
    %v6995 = vunpack.c.l.b16 %v3729
    %v6996 = vunpack.c.l.b16 %v3743
    %v6997 = vunpack.c.l.b16 %v3753
    %v6998 = vunpack.c.l.b16 %v3767
    %v6999 = vunpack.c.l.b16 %v3777
    %v7000 = vunpack.c.l.b16 %v3791
    %v7001 = vunpack.c.l.b16 %v3801
    %v7002 = vunpack.c.l.b16 %v3815
    %v7003 = vunpack.c.l.b16 %v3825
    %v7004 = vunpack.c.l.b16 %v3839
    %v7005 = vunpack.c.l.b16 %v3849
    %v7006 = vunpack.c.l.b16 %v3863
    %v7007 = vunpack.c.l.b16 %v3873
    %v7008 = vunpack.c.l.b16 %v3887
    %v7009 = vunpack.c.l.b16 %v3897
    %v7010 = vunpack.c.l.b16 %v3911
    %v7011 = vunpack.c.l.b16 %v3921
    %v7012 = vunpack.c.l.b16 %v3935
    %v7013 = vunpack.c.l.b16 %v3945
    %v7014 = vunpack.c.l.b16 %v3959
    %v7015 = vunpack.c.l.b16 %v3969
    %v7016 = vunpack.c.l.b16 %v3983
    %v7017 = vunpack.c.l.b16 %v3993
    %v7018 = vunpack.c.l.b16 %v4007
    %v7019 = vunpack.c.l.b16 %v4017
    %v7020 = vunpack.c.l.b16 %v4031
    %v7021 = vunpack.c.l.b16 %v4041
    %v7022 = vpack.c.b16 %v6959, %v6958
    %v7023 = vpack.c.b16 %v6961, %v6960
    %v7024 = vpack.c.b16 %v6963, %v6962
    %v7025 = vpack.c.b16 %v6965, %v6964
    %v7026 = vpack.c.b16 %v6967, %v6966
    %v7027 = vpack.c.b16 %v6969, %v6968
    %v7028 = vpack.c.b16 %v6971, %v6970
    %v7029 = vpack.c.b16 %v6973, %v6972
    %v7030 = vpack.c.b16 %v6975, %v6974
    %v7031 = vpack.c.b16 %v6977, %v6976
    %v7032 = vpack.c.b16 %v6979, %v6978
    %v7033 = vpack.c.b16 %v6981, %v6980
    %v7034 = vpack.c.b16 %v6983, %v6982
    %v7035 = vpack.c.b16 %v6985, %v6984
    %v7036 = vpack.c.b16 %v6987, %v6986
    %v7037 = vpack.c.b16 %v6989, %v6988
    %v7038 = vpack.c.b16 %v6991, %v6990
    %v7039 = vpack.c.b16 %v6993, %v6992
    %v7040 = vpack.c.b16 %v6995, %v6994
    %v7041 = vpack.c.b16 %v6997, %v6996
    %v7042 = vpack.c.b16 %v6999, %v6998
    %v7043 = vpack.c.b16 %v7001, %v7000
    %v7044 = vpack.c.b16 %v7003, %v7002
    %v7045 = vpack.c.b16 %v7005, %v7004
    %v7046 = vpack.c.b16 %v7007, %v7006
    %v7047 = vpack.c.b16 %v7009, %v7008
    %v7048 = vpack.c.b16 %v7011, %v7010
    %v7049 = vpack.c.b16 %v7013, %v7012
    %v7050 = vpack.c.b16 %v7015, %v7014
    %v7051 = vpack.c.b16 %v7017, %v7016
    %v7052 = vpack.c.b16 %v7019, %v7018
    %v7053 = vpack.c.b16 %v7021, %v7020
    %7054 = vrot.lane.b32.xlu0 %v7022, 64
    %v7055 = vpop.permute.xlu0 %7054
    %7056 = vrot.lane.b32.xlu0 %v7023, 64
    %v7057 = vpop.permute.xlu0 %7056
    %7058 = vrot.lane.b32.xlu0 %v7024, 64
    %v7059 = vpop.permute.xlu0 %7058
    %7060 = vrot.lane.b32.xlu0 %v7025, 64
    %v7061 = vpop.permute.xlu0 %7060
    %7062 = vrot.lane.b32.xlu0 %v7026, 64
    %v7063 = vpop.permute.xlu0 %7062
    %7064 = vrot.lane.b32.xlu0 %v7027, 64
    %v7065 = vpop.permute.xlu0 %7064
    %7066 = vrot.lane.b32.xlu0 %v7028, 64
    %v7067 = vpop.permute.xlu0 %7066
    %7068 = vrot.lane.b32.xlu0 %v7029, 64
    %v7069 = vpop.permute.xlu0 %7068
    %7070 = vrot.lane.b32.xlu0 %v7030, 64
    %v7071 = vpop.permute.xlu0 %7070
    %7072 = vrot.lane.b32.xlu0 %v7031, 64
    %v7073 = vpop.permute.xlu0 %7072
    %7074 = vrot.lane.b32.xlu0 %v7032, 64
    %v7075 = vpop.permute.xlu0 %7074
    %7076 = vrot.lane.b32.xlu0 %v7033, 64
    %v7077 = vpop.permute.xlu0 %7076
    %7078 = vrot.lane.b32.xlu0 %v7034, 64
    %v7079 = vpop.permute.xlu0 %7078
    %7080 = vrot.lane.b32.xlu0 %v7035, 64
    %v7081 = vpop.permute.xlu0 %7080
    %7082 = vrot.lane.b32.xlu0 %v7036, 64
    %v7083 = vpop.permute.xlu0 %7082
    %7084 = vrot.lane.b32.xlu0 %v7037, 64
    %v7085 = vpop.permute.xlu0 %7084
    %7086 = vrot.lane.b32.xlu0 %v7038, 64
    %v7087 = vpop.permute.xlu0 %7086
    %7088 = vrot.lane.b32.xlu0 %v7039, 64
    %v7089 = vpop.permute.xlu0 %7088
    %7090 = vrot.lane.b32.xlu0 %v7040, 64
    %v7091 = vpop.permute.xlu0 %7090
    %7092 = vrot.lane.b32.xlu0 %v7041, 64
    %v7093 = vpop.permute.xlu0 %7092
    %7094 = vrot.lane.b32.xlu0 %v7042, 64
    %v7095 = vpop.permute.xlu0 %7094
    %7096 = vrot.lane.b32.xlu0 %v7043, 64
    %v7097 = vpop.permute.xlu0 %7096
    %7098 = vrot.lane.b32.xlu0 %v7044, 64
    %v7099 = vpop.permute.xlu0 %7098
    %7100 = vrot.lane.b32.xlu0 %v7045, 64
    %v7101 = vpop.permute.xlu0 %7100
    %7102 = vrot.lane.b32.xlu0 %v7046, 64
    %v7103 = vpop.permute.xlu0 %7102
    %7104 = vrot.lane.b32.xlu0 %v7047, 64
    %v7105 = vpop.permute.xlu0 %7104
    %7106 = vrot.lane.b32.xlu0 %v7048, 64
    %v7107 = vpop.permute.xlu0 %7106
    %7108 = vrot.lane.b32.xlu0 %v7049, 64
    %v7109 = vpop.permute.xlu0 %7108
    %7110 = vrot.lane.b32.xlu0 %v7050, 64
    %v7111 = vpop.permute.xlu0 %7110
    %7112 = vrot.lane.b32.xlu0 %v7051, 64
    %v7113 = vpop.permute.xlu0 %7112
    %7114 = vrot.lane.b32.xlu0 %v7052, 64
    %v7115 = vpop.permute.xlu0 %7114
    %7116 = vrot.lane.b32.xlu0 %v7053, 64
    %v7117 = vpop.permute.xlu0 %7116
    %v7118 = vunpack.c.l.b16 %v4176
    %v7119 = vunpack.c.l.b16 %v4179
    %v7120 = vunpack.c.l.b16 %v4183
    %v7121 = vunpack.c.l.b16 %v4186
    %v7122 = vunpack.c.l.b16 %v4190
    %v7123 = vunpack.c.l.b16 %v4193
    %v7124 = vunpack.c.l.b16 %v4197
    %v7125 = vunpack.c.l.b16 %v4200
    %v7126 = vunpack.c.l.b16 %v4204
    %v7127 = vunpack.c.l.b16 %v4207
    %v7128 = vunpack.c.l.b16 %v4211
    %v7129 = vunpack.c.l.b16 %v4214
    %v7130 = vunpack.c.l.b16 %v4218
    %v7131 = vunpack.c.l.b16 %v4221
    %v7132 = vunpack.c.l.b16 %v4225
    %v7133 = vunpack.c.l.b16 %v4228
    %v7134 = vunpack.c.l.b16 %v4232
    %v7135 = vunpack.c.l.b16 %v4235
    %v7136 = vunpack.c.l.b16 %v4239
    %v7137 = vunpack.c.l.b16 %v4242
    %v7138 = vunpack.c.l.b16 %v4246
    %v7139 = vunpack.c.l.b16 %v4249
    %v7140 = vunpack.c.l.b16 %v4253
    %v7141 = vunpack.c.l.b16 %v4256
    %v7142 = vunpack.c.l.b16 %v4260
    %v7143 = vunpack.c.l.b16 %v4263
    %v7144 = vunpack.c.l.b16 %v4267
    %v7145 = vunpack.c.l.b16 %v4270
    %v7146 = vunpack.c.l.b16 %v4274
    %v7147 = vunpack.c.l.b16 %v4277
    %v7148 = vunpack.c.l.b16 %v4281
    %v7149 = vunpack.c.l.b16 %v4284
    %v7150 = vunpack.c.l.b16 %v4288
    %v7151 = vunpack.c.l.b16 %v4291
    %v7152 = vunpack.c.l.b16 %v4295
    %v7153 = vunpack.c.l.b16 %v4298
    %v7154 = vunpack.c.l.b16 %v4302
    %v7155 = vunpack.c.l.b16 %v4305
    %v7156 = vunpack.c.l.b16 %v4309
    %v7157 = vunpack.c.l.b16 %v4312
    %v7158 = vunpack.c.l.b16 %v4316
    %v7159 = vunpack.c.l.b16 %v4319
    %v7160 = vunpack.c.l.b16 %v4323
    %v7161 = vunpack.c.l.b16 %v4326
    %v7162 = vunpack.c.l.b16 %v4330
    %v7163 = vunpack.c.l.b16 %v4333
    %v7164 = vunpack.c.l.b16 %v4337
    %v7165 = vunpack.c.l.b16 %v4340
    %v7166 = vunpack.c.l.b16 %v4344
    %v7167 = vunpack.c.l.b16 %v4347
    %v7168 = vunpack.c.l.b16 %v4351
    %v7169 = vunpack.c.l.b16 %v4354
    %v7170 = vunpack.c.l.b16 %v4358
    %v7171 = vunpack.c.l.b16 %v4361
    %v7172 = vunpack.c.l.b16 %v4365
    %v7173 = vunpack.c.l.b16 %v4368
    %v7174 = vunpack.c.l.b16 %v4372
    %v7175 = vunpack.c.l.b16 %v4375
    %v7176 = vunpack.c.l.b16 %v4379
    %v7177 = vunpack.c.l.b16 %v4382
    %v7178 = vunpack.c.l.b16 %v4386
    %v7179 = vunpack.c.l.b16 %v4389
    %v7180 = vunpack.c.l.b16 %v4393
    %v7181 = vunpack.c.l.b16 %v4396
    %v7182 = vpack.c.b16 %v7119, %v7118
    %v7183 = vpack.c.b16 %v7121, %v7120
    %v7184 = vpack.c.b16 %v7123, %v7122
    %v7185 = vpack.c.b16 %v7125, %v7124
    %v7186 = vpack.c.b16 %v7127, %v7126
    %v7187 = vpack.c.b16 %v7129, %v7128
    %v7188 = vpack.c.b16 %v7131, %v7130
    %v7189 = vpack.c.b16 %v7133, %v7132
    %v7190 = vpack.c.b16 %v7135, %v7134
    %v7191 = vpack.c.b16 %v7137, %v7136
    %v7192 = vpack.c.b16 %v7139, %v7138
    %v7193 = vpack.c.b16 %v7141, %v7140
    %v7194 = vpack.c.b16 %v7143, %v7142
    %v7195 = vpack.c.b16 %v7145, %v7144
    %v7196 = vpack.c.b16 %v7147, %v7146
    %v7197 = vpack.c.b16 %v7149, %v7148
    %v7198 = vpack.c.b16 %v7151, %v7150
    %v7199 = vpack.c.b16 %v7153, %v7152
    %v7200 = vpack.c.b16 %v7155, %v7154
    %v7201 = vpack.c.b16 %v7157, %v7156
    %v7202 = vpack.c.b16 %v7159, %v7158
    %v7203 = vpack.c.b16 %v7161, %v7160
    %v7204 = vpack.c.b16 %v7163, %v7162
    %v7205 = vpack.c.b16 %v7165, %v7164
    %v7206 = vpack.c.b16 %v7167, %v7166
    %v7207 = vpack.c.b16 %v7169, %v7168
    %v7208 = vpack.c.b16 %v7171, %v7170
    %v7209 = vpack.c.b16 %v7173, %v7172
    %v7210 = vpack.c.b16 %v7175, %v7174
    %v7211 = vpack.c.b16 %v7177, %v7176
    %v7212 = vpack.c.b16 %v7179, %v7178
    %v7213 = vpack.c.b16 %v7181, %v7180
    %v7246 = vunpack.c.l.b16 %v4397
    %v7247 = vunpack.c.l.b16 %v4398
    %v7248 = vunpack.c.l.b16 %v4399
    %v7249 = vunpack.c.l.b16 %v4400
    %v7250 = vunpack.c.l.b16 %v4401
    %v7251 = vunpack.c.l.b16 %v4402
    %v7252 = vunpack.c.l.b16 %v4403
    %v7253 = vunpack.c.l.b16 %v4404
    %v7254 = vunpack.c.l.b16 %v4405
    %v7255 = vunpack.c.l.b16 %v4406
    %v7256 = vunpack.c.l.b16 %v4407
    %v7257 = vunpack.c.l.b16 %v4408
    %v7258 = vunpack.c.l.b16 %v4409
    %v7259 = vunpack.c.l.b16 %v4410
    %v7260 = vunpack.c.l.b16 %v4411
    %v7261 = vunpack.c.l.b16 %v4412
    %v7262 = vunpack.c.l.b16 %v4413
    %v7263 = vunpack.c.l.b16 %v4414
    %v7264 = vunpack.c.l.b16 %v4415
    %v7265 = vunpack.c.l.b16 %v4416
    %v7266 = vunpack.c.l.b16 %v4417
    %v7267 = vunpack.c.l.b16 %v4418
    %v7268 = vunpack.c.l.b16 %v4419
    %v7269 = vunpack.c.l.b16 %v4420
    %v7270 = vunpack.c.l.b16 %v4421
    %v7271 = vunpack.c.l.b16 %v4422
    %v7272 = vunpack.c.l.b16 %v4423
    %v7273 = vunpack.c.l.b16 %v4424
    %v7274 = vunpack.c.l.b16 %v4425
    %v7275 = vunpack.c.l.b16 %v4426
    %v7276 = vunpack.c.l.b16 %v4427
    %v7277 = vunpack.c.l.b16 %v4428
    %v7278 = vunpack.c.l.b16 %v4429
    %v7279 = vunpack.c.l.b16 %v4430
    %v7280 = vunpack.c.l.b16 %v4431
    %v7281 = vunpack.c.l.b16 %v4432
    %v7282 = vunpack.c.l.b16 %v4433
    %v7283 = vunpack.c.l.b16 %v4434
    %v7284 = vunpack.c.l.b16 %v4435
    %v7285 = vunpack.c.l.b16 %v4436
    %v7286 = vunpack.c.l.b16 %v4437
    %v7287 = vunpack.c.l.b16 %v4438
    %v7288 = vunpack.c.l.b16 %v4439
    %v7289 = vunpack.c.l.b16 %v4440
    %v7290 = vunpack.c.l.b16 %v4441
    %v7291 = vunpack.c.l.b16 %v4442
    %v7292 = vunpack.c.l.b16 %v4443
    %v7293 = vunpack.c.l.b16 %v4444
    %v7294 = vunpack.c.l.b16 %v4445
    %v7295 = vunpack.c.l.b16 %v4446
    %v7296 = vunpack.c.l.b16 %v4447
    %v7297 = vunpack.c.l.b16 %v4448
    %v7298 = vunpack.c.l.b16 %v4449
    %v7299 = vunpack.c.l.b16 %v4450
    %v7300 = vunpack.c.l.b16 %v4451
    %v7301 = vunpack.c.l.b16 %v4452
    %v7302 = vunpack.c.l.b16 %v4453
    %v7303 = vunpack.c.l.b16 %v4454
    %v7304 = vunpack.c.l.b16 %v4455
    %v7305 = vunpack.c.l.b16 %v4456
    %v7306 = vunpack.c.l.b16 %v4457
    %v7307 = vunpack.c.l.b16 %v4458
    %v7308 = vunpack.c.l.b16 %v4459
    %v7309 = vunpack.c.l.b16 %v4460
    %v7310 = vpack.c.b16 %v7247, %v7246
    %v7311 = vpack.c.b16 %v7249, %v7248
    %v7312 = vpack.c.b16 %v7251, %v7250
    %v7313 = vpack.c.b16 %v7253, %v7252
    %v7314 = vpack.c.b16 %v7255, %v7254
    %v7315 = vpack.c.b16 %v7257, %v7256
    %v7316 = vpack.c.b16 %v7259, %v7258
    %v7317 = vpack.c.b16 %v7261, %v7260
    %v7318 = vpack.c.b16 %v7263, %v7262
    %v7319 = vpack.c.b16 %v7265, %v7264
    %v7320 = vpack.c.b16 %v7267, %v7266
    %v7321 = vpack.c.b16 %v7269, %v7268
    %v7322 = vpack.c.b16 %v7271, %v7270
    %v7323 = vpack.c.b16 %v7273, %v7272
    %v7324 = vpack.c.b16 %v7275, %v7274
    %v7325 = vpack.c.b16 %v7277, %v7276
    %v7326 = vpack.c.b16 %v7279, %v7278
    %v7327 = vpack.c.b16 %v7281, %v7280
    %v7328 = vpack.c.b16 %v7283, %v7282
    %v7329 = vpack.c.b16 %v7285, %v7284
    %v7330 = vpack.c.b16 %v7287, %v7286
    %v7331 = vpack.c.b16 %v7289, %v7288
    %v7332 = vpack.c.b16 %v7291, %v7290
    %v7333 = vpack.c.b16 %v7293, %v7292
    %v7334 = vpack.c.b16 %v7295, %v7294
    %v7335 = vpack.c.b16 %v7297, %v7296
    %v7336 = vpack.c.b16 %v7299, %v7298
    %v7337 = vpack.c.b16 %v7301, %v7300
    %v7338 = vpack.c.b16 %v7303, %v7302
    %v7339 = vpack.c.b16 %v7305, %v7304
    %v7340 = vpack.c.b16 %v7307, %v7306
    %v7341 = vpack.c.b16 %v7309, %v7308
    %7342 = vrot.lane.b32.xlu0 %v7310, 64
    %v7343 = vpop.permute.xlu0 %7342
    %7344 = vrot.lane.b32.xlu0 %v7311, 64
    %v7345 = vpop.permute.xlu0 %7344
    %7346 = vrot.lane.b32.xlu0 %v7312, 64
    %v7347 = vpop.permute.xlu0 %7346
    %7348 = vrot.lane.b32.xlu0 %v7313, 64
    %v7349 = vpop.permute.xlu0 %7348
    %7350 = vrot.lane.b32.xlu0 %v7314, 64
    %v7351 = vpop.permute.xlu0 %7350
    %7352 = vrot.lane.b32.xlu0 %v7315, 64
    %v7353 = vpop.permute.xlu0 %7352
    %7354 = vrot.lane.b32.xlu0 %v7316, 64
    %v7355 = vpop.permute.xlu0 %7354
    %7356 = vrot.lane.b32.xlu0 %v7317, 64
    %v7357 = vpop.permute.xlu0 %7356
    %7358 = vrot.lane.b32.xlu0 %v7318, 64
    %v7359 = vpop.permute.xlu0 %7358
    %7360 = vrot.lane.b32.xlu0 %v7319, 64
    %v7361 = vpop.permute.xlu0 %7360
    %7362 = vrot.lane.b32.xlu0 %v7320, 64
    %v7363 = vpop.permute.xlu0 %7362
    %7364 = vrot.lane.b32.xlu0 %v7321, 64
    %v7365 = vpop.permute.xlu0 %7364
    %7366 = vrot.lane.b32.xlu0 %v7322, 64
    %v7367 = vpop.permute.xlu0 %7366
    %7368 = vrot.lane.b32.xlu0 %v7323, 64
    %v7369 = vpop.permute.xlu0 %7368
    %7370 = vrot.lane.b32.xlu0 %v7324, 64
    %v7371 = vpop.permute.xlu0 %7370
    %7372 = vrot.lane.b32.xlu0 %v7325, 64
    %v7373 = vpop.permute.xlu0 %7372
    %7374 = vrot.lane.b32.xlu0 %v7326, 64
    %v7375 = vpop.permute.xlu0 %7374
    %7376 = vrot.lane.b32.xlu0 %v7327, 64
    %v7377 = vpop.permute.xlu0 %7376
    %7378 = vrot.lane.b32.xlu0 %v7328, 64
    %v7379 = vpop.permute.xlu0 %7378
    %7380 = vrot.lane.b32.xlu0 %v7329, 64
    %v7381 = vpop.permute.xlu0 %7380
    %7382 = vrot.lane.b32.xlu0 %v7330, 64
    %v7383 = vpop.permute.xlu0 %7382
    %7384 = vrot.lane.b32.xlu0 %v7331, 64
    %v7385 = vpop.permute.xlu0 %7384
    %7386 = vrot.lane.b32.xlu0 %v7332, 64
    %v7387 = vpop.permute.xlu0 %7386
    %7388 = vrot.lane.b32.xlu0 %v7333, 64
    %v7389 = vpop.permute.xlu0 %7388
    %7390 = vrot.lane.b32.xlu0 %v7334, 64
    %v7391 = vpop.permute.xlu0 %7390
    %7392 = vrot.lane.b32.xlu0 %v7335, 64
    %v7393 = vpop.permute.xlu0 %7392
    %7394 = vrot.lane.b32.xlu0 %v7336, 64
    %v7395 = vpop.permute.xlu0 %7394
    %7396 = vrot.lane.b32.xlu0 %v7337, 64
    %v7397 = vpop.permute.xlu0 %7396
    %7398 = vrot.lane.b32.xlu0 %v7338, 64
    %v7399 = vpop.permute.xlu0 %7398
    %7400 = vrot.lane.b32.xlu0 %v7339, 64
    %v7401 = vpop.permute.xlu0 %7400
    %7402 = vrot.lane.b32.xlu0 %v7340, 64
    %v7403 = vpop.permute.xlu0 %7402
    %7404 = vrot.lane.b32.xlu0 %v7341, 64
    %v7405 = vpop.permute.xlu0 %7404
    %v7406 = vunpack.c.l.b16 %v4506
    %v7407 = vunpack.c.l.b16 %v4516
    %v7408 = vunpack.c.l.b16 %v4530
    %v7409 = vunpack.c.l.b16 %v4540
    %v7410 = vunpack.c.l.b16 %v4554
    %v7411 = vunpack.c.l.b16 %v4564
    %v7412 = vunpack.c.l.b16 %v4578
    %v7413 = vunpack.c.l.b16 %v4588
    %v7414 = vunpack.c.l.b16 %v4602
    %v7415 = vunpack.c.l.b16 %v4612
    %v7416 = vunpack.c.l.b16 %v4626
    %v7417 = vunpack.c.l.b16 %v4636
    %v7418 = vunpack.c.l.b16 %v4650
    %v7419 = vunpack.c.l.b16 %v4660
    %v7420 = vunpack.c.l.b16 %v4674
    %v7421 = vunpack.c.l.b16 %v4684
    %v7422 = vunpack.c.l.b16 %v4698
    %v7423 = vunpack.c.l.b16 %v4708
    %v7424 = vunpack.c.l.b16 %v4722
    %v7425 = vunpack.c.l.b16 %v4732
    %v7426 = vunpack.c.l.b16 %v4746
    %v7427 = vunpack.c.l.b16 %v4756
    %v7428 = vunpack.c.l.b16 %v4770
    %v7429 = vunpack.c.l.b16 %v4780
    %v7430 = vunpack.c.l.b16 %v4794
    %v7431 = vunpack.c.l.b16 %v4804
    %v7432 = vunpack.c.l.b16 %v4818
    %v7433 = vunpack.c.l.b16 %v4828
    %v7434 = vunpack.c.l.b16 %v4842
    %v7435 = vunpack.c.l.b16 %v4852
    %v7436 = vunpack.c.l.b16 %v4866
    %v7437 = vunpack.c.l.b16 %v4876
    %v7438 = vunpack.c.l.b16 %v4890
    %v7439 = vunpack.c.l.b16 %v4900
    %v7440 = vunpack.c.l.b16 %v4914
    %v7441 = vunpack.c.l.b16 %v4924
    %v7442 = vunpack.c.l.b16 %v4938
    %v7443 = vunpack.c.l.b16 %v4948
    %v7444 = vunpack.c.l.b16 %v4962
    %v7445 = vunpack.c.l.b16 %v4972
    %v7446 = vunpack.c.l.b16 %v4986
    %v7447 = vunpack.c.l.b16 %v4996
    %v7448 = vunpack.c.l.b16 %v5010
    %v7449 = vunpack.c.l.b16 %v5020
    %v7450 = vunpack.c.l.b16 %v5034
    %v7451 = vunpack.c.l.b16 %v5044
    %v7452 = vunpack.c.l.b16 %v5058
    %v7453 = vunpack.c.l.b16 %v5068
    %v7454 = vunpack.c.l.b16 %v5082
    %v7455 = vunpack.c.l.b16 %v5092
    %v7456 = vunpack.c.l.b16 %v5106
    %v7457 = vunpack.c.l.b16 %v5116
    %v7458 = vunpack.c.l.b16 %v5130
    %v7459 = vunpack.c.l.b16 %v5140
    %v7460 = vunpack.c.l.b16 %v5154
    %v7461 = vunpack.c.l.b16 %v5164
    %v7462 = vunpack.c.l.b16 %v5178
    %v7463 = vunpack.c.l.b16 %v5188
    %v7464 = vunpack.c.l.b16 %v5202
    %v7465 = vunpack.c.l.b16 %v5212
    %v7466 = vunpack.c.l.b16 %v5226
    %v7467 = vunpack.c.l.b16 %v5236
    %v7468 = vunpack.c.l.b16 %v5250
    %v7469 = vunpack.c.l.b16 %v5260
    %v7470 = vpack.c.b16 %v7407, %v7406
    %v7471 = vpack.c.b16 %v7409, %v7408
    %v7472 = vpack.c.b16 %v7411, %v7410
    %v7473 = vpack.c.b16 %v7413, %v7412
    %v7474 = vpack.c.b16 %v7415, %v7414
    %v7475 = vpack.c.b16 %v7417, %v7416
    %v7476 = vpack.c.b16 %v7419, %v7418
    %v7477 = vpack.c.b16 %v7421, %v7420
    %v7478 = vpack.c.b16 %v7423, %v7422
    %v7479 = vpack.c.b16 %v7425, %v7424
    %v7480 = vpack.c.b16 %v7427, %v7426
    %v7481 = vpack.c.b16 %v7429, %v7428
    %v7482 = vpack.c.b16 %v7431, %v7430
    %v7483 = vpack.c.b16 %v7433, %v7432
    %v7484 = vpack.c.b16 %v7435, %v7434
    %v7485 = vpack.c.b16 %v7437, %v7436
    %v7486 = vpack.c.b16 %v7439, %v7438
    %v7487 = vpack.c.b16 %v7441, %v7440
    %v7488 = vpack.c.b16 %v7443, %v7442
    %v7489 = vpack.c.b16 %v7445, %v7444
    %v7490 = vpack.c.b16 %v7447, %v7446
    %v7491 = vpack.c.b16 %v7449, %v7448
    %v7492 = vpack.c.b16 %v7451, %v7450
    %v7493 = vpack.c.b16 %v7453, %v7452
    %v7494 = vpack.c.b16 %v7455, %v7454
    %v7495 = vpack.c.b16 %v7457, %v7456
    %v7496 = vpack.c.b16 %v7459, %v7458
    %v7497 = vpack.c.b16 %v7461, %v7460
    %v7498 = vpack.c.b16 %v7463, %v7462
    %v7499 = vpack.c.b16 %v7465, %v7464
    %v7500 = vpack.c.b16 %v7467, %v7466
    %v7501 = vpack.c.b16 %v7469, %v7468
    %v7502 = vunpack.c.l.b16 %v5392
    %v7503 = vunpack.c.l.b16 %v5395
    %v7504 = vunpack.c.l.b16 %v5399
    %v7505 = vunpack.c.l.b16 %v5402
    %v7506 = vunpack.c.l.b16 %v5406
    %v7507 = vunpack.c.l.b16 %v5409
    %v7508 = vunpack.c.l.b16 %v5413
    %v7509 = vunpack.c.l.b16 %v5416
    %v7510 = vunpack.c.l.b16 %v5420
    %v7511 = vunpack.c.l.b16 %v5423
    %v7512 = vunpack.c.l.b16 %v5427
    %v7513 = vunpack.c.l.b16 %v5430
    %v7514 = vunpack.c.l.b16 %v5434
    %v7515 = vunpack.c.l.b16 %v5437
    %v7516 = vunpack.c.l.b16 %v5441
    %v7517 = vunpack.c.l.b16 %v5444
    %v7518 = vunpack.c.l.b16 %v5448
    %v7519 = vunpack.c.l.b16 %v5451
    %v7520 = vunpack.c.l.b16 %v5455
    %v7521 = vunpack.c.l.b16 %v5458
    %v7522 = vunpack.c.l.b16 %v5462
    %v7523 = vunpack.c.l.b16 %v5465
    %v7524 = vunpack.c.l.b16 %v5469
    %v7525 = vunpack.c.l.b16 %v5472
    %v7526 = vunpack.c.l.b16 %v5476
    %v7527 = vunpack.c.l.b16 %v5479
    %v7528 = vunpack.c.l.b16 %v5483
    %v7529 = vunpack.c.l.b16 %v5486
    %v7530 = vunpack.c.l.b16 %v5490
    %v7531 = vunpack.c.l.b16 %v5493
    %v7532 = vunpack.c.l.b16 %v5497
    %v7533 = vunpack.c.l.b16 %v5500
    %v7534 = vunpack.c.l.b16 %v5504
    %v7535 = vunpack.c.l.b16 %v5507
    %v7536 = vunpack.c.l.b16 %v5511
    %v7537 = vunpack.c.l.b16 %v5514
    %v7538 = vunpack.c.l.b16 %v5518
    %v7539 = vunpack.c.l.b16 %v5521
    %v7540 = vunpack.c.l.b16 %v5525
    %v7541 = vunpack.c.l.b16 %v5528
    %v7542 = vunpack.c.l.b16 %v5532
    %v7543 = vunpack.c.l.b16 %v5535
    %v7544 = vunpack.c.l.b16 %v5539
    %v7545 = vunpack.c.l.b16 %v5542
    %v7546 = vunpack.c.l.b16 %v5546
    %v7547 = vunpack.c.l.b16 %v5549
    %v7548 = vunpack.c.l.b16 %v5553
    %v7549 = vunpack.c.l.b16 %v5556
    %v7550 = vunpack.c.l.b16 %v5560
    %v7551 = vunpack.c.l.b16 %v5563
    %v7552 = vunpack.c.l.b16 %v5567
    %v7553 = vunpack.c.l.b16 %v5570
    %v7554 = vunpack.c.l.b16 %v5574
    %v7555 = vunpack.c.l.b16 %v5577
    %v7556 = vunpack.c.l.b16 %v5581
    %v7557 = vunpack.c.l.b16 %v5584
    %v7558 = vunpack.c.l.b16 %v5588
    %v7559 = vunpack.c.l.b16 %v5591
    %v7560 = vunpack.c.l.b16 %v5595
    %v7561 = vunpack.c.l.b16 %v5598
    %v7562 = vunpack.c.l.b16 %v5602
    %v7563 = vunpack.c.l.b16 %v5605
    %v7564 = vunpack.c.l.b16 %v5609
    %v7565 = vunpack.c.l.b16 %v5612
    %v7566 = vpack.c.b16 %v7503, %v7502
    %v7567 = vpack.c.b16 %v7505, %v7504
    %v7568 = vpack.c.b16 %v7507, %v7506
    %v7569 = vpack.c.b16 %v7509, %v7508
    %v7570 = vpack.c.b16 %v7511, %v7510
    %v7571 = vpack.c.b16 %v7513, %v7512
    %v7572 = vpack.c.b16 %v7515, %v7514
    %v7573 = vpack.c.b16 %v7517, %v7516
    %v7574 = vpack.c.b16 %v7519, %v7518
    %v7575 = vpack.c.b16 %v7521, %v7520
    %v7576 = vpack.c.b16 %v7523, %v7522
    %v7577 = vpack.c.b16 %v7525, %v7524
    %v7578 = vpack.c.b16 %v7527, %v7526
    %v7579 = vpack.c.b16 %v7529, %v7528
    %v7580 = vpack.c.b16 %v7531, %v7530
    %v7581 = vpack.c.b16 %v7533, %v7532
    %v7582 = vpack.c.b16 %v7535, %v7534
    %v7583 = vpack.c.b16 %v7537, %v7536
    %v7584 = vpack.c.b16 %v7539, %v7538
    %v7585 = vpack.c.b16 %v7541, %v7540
    %v7586 = vpack.c.b16 %v7543, %v7542
    %v7587 = vpack.c.b16 %v7545, %v7544
    %v7588 = vpack.c.b16 %v7547, %v7546
    %v7589 = vpack.c.b16 %v7549, %v7548
    %v7590 = vpack.c.b16 %v7551, %v7550
    %v7591 = vpack.c.b16 %v7553, %v7552
    %v7592 = vpack.c.b16 %v7555, %v7554
    %v7593 = vpack.c.b16 %v7557, %v7556
    %v7594 = vpack.c.b16 %v7559, %v7558
    %v7595 = vpack.c.b16 %v7561, %v7560
    %v7596 = vpack.c.b16 %v7563, %v7562
    %v7597 = vpack.c.b16 %v7565, %v7564
    %7598 = vrot.lane.b32.xlu0 %v7566, 64
    %v7599 = vpop.permute.xlu0 %7598
    %7600 = vrot.lane.b32.xlu0 %v7567, 64
    %v7601 = vpop.permute.xlu0 %7600
    %7602 = vrot.lane.b32.xlu0 %v7568, 64
    %v7603 = vpop.permute.xlu0 %7602
    %7604 = vrot.lane.b32.xlu0 %v7569, 64
    %v7605 = vpop.permute.xlu0 %7604
    %7606 = vrot.lane.b32.xlu0 %v7570, 64
    %v7607 = vpop.permute.xlu0 %7606
    %7608 = vrot.lane.b32.xlu0 %v7571, 64
    %v7609 = vpop.permute.xlu0 %7608
    %7610 = vrot.lane.b32.xlu0 %v7572, 64
    %v7611 = vpop.permute.xlu0 %7610
    %7612 = vrot.lane.b32.xlu0 %v7573, 64
    %v7613 = vpop.permute.xlu0 %7612
    %7614 = vrot.lane.b32.xlu0 %v7574, 64
    %v7615 = vpop.permute.xlu0 %7614
    %7616 = vrot.lane.b32.xlu0 %v7575, 64
    %v7617 = vpop.permute.xlu0 %7616
    %7618 = vrot.lane.b32.xlu0 %v7576, 64
    %v7619 = vpop.permute.xlu0 %7618
    %7620 = vrot.lane.b32.xlu0 %v7577, 64
    %v7621 = vpop.permute.xlu0 %7620
    %7622 = vrot.lane.b32.xlu0 %v7578, 64
    %v7623 = vpop.permute.xlu0 %7622
    %7624 = vrot.lane.b32.xlu0 %v7579, 64
    %v7625 = vpop.permute.xlu0 %7624
    %7626 = vrot.lane.b32.xlu0 %v7580, 64
    %v7627 = vpop.permute.xlu0 %7626
    %7628 = vrot.lane.b32.xlu0 %v7581, 64
    %v7629 = vpop.permute.xlu0 %7628
    %7630 = vrot.lane.b32.xlu0 %v7582, 64
    %v7631 = vpop.permute.xlu0 %7630
    %7632 = vrot.lane.b32.xlu0 %v7583, 64
    %v7633 = vpop.permute.xlu0 %7632
    %7634 = vrot.lane.b32.xlu0 %v7584, 64
    %v7635 = vpop.permute.xlu0 %7634
    %7636 = vrot.lane.b32.xlu0 %v7585, 64
    %v7637 = vpop.permute.xlu0 %7636
    %7638 = vrot.lane.b32.xlu0 %v7586, 64
    %v7639 = vpop.permute.xlu0 %7638
    %7640 = vrot.lane.b32.xlu0 %v7587, 64
    %v7641 = vpop.permute.xlu0 %7640
    %7642 = vrot.lane.b32.xlu0 %v7588, 64
    %v7643 = vpop.permute.xlu0 %7642
    %7644 = vrot.lane.b32.xlu0 %v7589, 64
    %v7645 = vpop.permute.xlu0 %7644
    %7646 = vrot.lane.b32.xlu0 %v7590, 64
    %v7647 = vpop.permute.xlu0 %7646
    %7648 = vrot.lane.b32.xlu0 %v7591, 64
    %v7649 = vpop.permute.xlu0 %7648
    %7650 = vrot.lane.b32.xlu0 %v7592, 64
    %v7651 = vpop.permute.xlu0 %7650
    %7652 = vrot.lane.b32.xlu0 %v7593, 64
    %v7653 = vpop.permute.xlu0 %7652
    %7654 = vrot.lane.b32.xlu0 %v7594, 64
    %v7655 = vpop.permute.xlu0 %7654
    %7656 = vrot.lane.b32.xlu0 %v7595, 64
    %v7657 = vpop.permute.xlu0 %7656
    %7658 = vrot.lane.b32.xlu0 %v7596, 64
    %v7659 = vpop.permute.xlu0 %7658
    %7660 = vrot.lane.b32.xlu0 %v7597, 64
    %v7661 = vpop.permute.xlu0 %7660
    %v7694 = vunpack.c.l.b16 %v5614
    %v7695 = vunpack.c.l.b16 %v5615
    %v7696 = vunpack.c.l.b16 %v5616
    %v7697 = vunpack.c.l.b16 %v5617
    %v7698 = vunpack.c.l.b16 %v5618
    %v7699 = vunpack.c.l.b16 %v5619
    %v7700 = vunpack.c.l.b16 %v5620
    %v7701 = vunpack.c.l.b16 %v5621
    %v7702 = vunpack.c.l.b16 %v5622
    %v7703 = vunpack.c.l.b16 %v5623
    %v7704 = vunpack.c.l.b16 %v5624
    %v7705 = vunpack.c.l.b16 %v5625
    %v7706 = vunpack.c.l.b16 %v5626
    %v7707 = vunpack.c.l.b16 %v5627
    %v7708 = vunpack.c.l.b16 %v5628
    %v7709 = vunpack.c.l.b16 %v5629
    %v7710 = vunpack.c.l.b16 %v5630
    %v7711 = vunpack.c.l.b16 %v5631
    %v7712 = vunpack.c.l.b16 %v5632
    %v7713 = vunpack.c.l.b16 %v5633
    %v7714 = vunpack.c.l.b16 %v5634
    %v7715 = vunpack.c.l.b16 %v5635
    %v7716 = vunpack.c.l.b16 %v5636
    %v7717 = vunpack.c.l.b16 %v5637
    %v7718 = vunpack.c.l.b16 %v5638
    %v7719 = vunpack.c.l.b16 %v5639
    %v7720 = vunpack.c.l.b16 %v5640
    %v7721 = vunpack.c.l.b16 %v5641
    %v7722 = vunpack.c.l.b16 %v5642
    %v7723 = vunpack.c.l.b16 %v5643
    %v7724 = vunpack.c.l.b16 %v5644
    %v7725 = vunpack.c.l.b16 %v5645
    %v7726 = vunpack.c.l.b16 %v5646
    %v7727 = vunpack.c.l.b16 %v5647
    %v7728 = vunpack.c.l.b16 %v5648
    %v7729 = vunpack.c.l.b16 %v5649
    %v7730 = vunpack.c.l.b16 %v5650
    %v7731 = vunpack.c.l.b16 %v5651
    %v7732 = vunpack.c.l.b16 %v5652
    %v7733 = vunpack.c.l.b16 %v5653
    %v7734 = vunpack.c.l.b16 %v5654
    %v7735 = vunpack.c.l.b16 %v5655
    %v7736 = vunpack.c.l.b16 %v5656
    %v7737 = vunpack.c.l.b16 %v5657
    %v7738 = vunpack.c.l.b16 %v5658
    %v7739 = vunpack.c.l.b16 %v5659
    %v7740 = vunpack.c.l.b16 %v5660
    %v7741 = vunpack.c.l.b16 %v5661
    %v7742 = vunpack.c.l.b16 %v5662
    %v7743 = vunpack.c.l.b16 %v5663
    %v7744 = vunpack.c.l.b16 %v5664
    %v7745 = vunpack.c.l.b16 %v5665
    %v7746 = vunpack.c.l.b16 %v5666
    %v7747 = vunpack.c.l.b16 %v5667
    %v7748 = vunpack.c.l.b16 %v5668
    %v7749 = vunpack.c.l.b16 %v5669
    %v7750 = vunpack.c.l.b16 %v5670
    %v7751 = vunpack.c.l.b16 %v5671
    %v7752 = vunpack.c.l.b16 %v5672
    %v7753 = vunpack.c.l.b16 %v5673
    %v7754 = vunpack.c.l.b16 %v5674
    %v7755 = vunpack.c.l.b16 %v5675
    %v7756 = vunpack.c.l.b16 %v5676
    %v7757 = vunpack.c.l.b16 %v5677
    %v7758 = vpack.c.b16 %v7695, %v7694
    %v7759 = vpack.c.b16 %v7697, %v7696
    %v7760 = vpack.c.b16 %v7699, %v7698
    %v7761 = vpack.c.b16 %v7701, %v7700
    %v7762 = vpack.c.b16 %v7703, %v7702
    %v7763 = vpack.c.b16 %v7705, %v7704
    %v7764 = vpack.c.b16 %v7707, %v7706
    %v7765 = vpack.c.b16 %v7709, %v7708
    %v7766 = vpack.c.b16 %v7711, %v7710
    %v7767 = vpack.c.b16 %v7713, %v7712
    %v7768 = vpack.c.b16 %v7715, %v7714
    %v7769 = vpack.c.b16 %v7717, %v7716
    %v7770 = vpack.c.b16 %v7719, %v7718
    %v7771 = vpack.c.b16 %v7721, %v7720
    %v7772 = vpack.c.b16 %v7723, %v7722
    %v7773 = vpack.c.b16 %v7725, %v7724
    %v7774 = vpack.c.b16 %v7727, %v7726
    %v7775 = vpack.c.b16 %v7729, %v7728
    %v7776 = vpack.c.b16 %v7731, %v7730
    %v7777 = vpack.c.b16 %v7733, %v7732
    %v7778 = vpack.c.b16 %v7735, %v7734
    %v7779 = vpack.c.b16 %v7737, %v7736
    %v7780 = vpack.c.b16 %v7739, %v7738
    %v7781 = vpack.c.b16 %v7741, %v7740
    %v7782 = vpack.c.b16 %v7743, %v7742
    %v7783 = vpack.c.b16 %v7745, %v7744
    %v7784 = vpack.c.b16 %v7747, %v7746
    %v7785 = vpack.c.b16 %v7749, %v7748
    %v7786 = vpack.c.b16 %v7751, %v7750
    %v7787 = vpack.c.b16 %v7753, %v7752
    %v7788 = vpack.c.b16 %v7755, %v7754
    %v7789 = vpack.c.b16 %v7757, %v7756
    %v7790 = vunpack.c.l.b16 %v5723
    %v7791 = vunpack.c.l.b16 %v5733
    %v7792 = vunpack.c.l.b16 %v5747
    %v7793 = vunpack.c.l.b16 %v5757
    %v7794 = vunpack.c.l.b16 %v5771
    %v7795 = vunpack.c.l.b16 %v5781
    %v7796 = vunpack.c.l.b16 %v5795
    %v7797 = vunpack.c.l.b16 %v5805
    %v7798 = vunpack.c.l.b16 %v5819
    %v7799 = vunpack.c.l.b16 %v5829
    %v7800 = vunpack.c.l.b16 %v5843
    %v7801 = vunpack.c.l.b16 %v5853
    %v7802 = vunpack.c.l.b16 %v5867
    %v7803 = vunpack.c.l.b16 %v5877
    %v7804 = vunpack.c.l.b16 %v5891
    %v7805 = vunpack.c.l.b16 %v5901
    %v7806 = vunpack.c.l.b16 %v5915
    %v7807 = vunpack.c.l.b16 %v5925
    %v7808 = vunpack.c.l.b16 %v5939
    %v7809 = vunpack.c.l.b16 %v5949
    %v7810 = vunpack.c.l.b16 %v5963
    %v7811 = vunpack.c.l.b16 %v5973
    %v7812 = vunpack.c.l.b16 %v5987
    %v7813 = vunpack.c.l.b16 %v5997
    %v7814 = vunpack.c.l.b16 %v6011
    %v7815 = vunpack.c.l.b16 %v6021
    %v7816 = vunpack.c.l.b16 %v6035
    %v7817 = vunpack.c.l.b16 %v6045
    %v7818 = vunpack.c.l.b16 %v6059
    %v7819 = vunpack.c.l.b16 %v6069
    %v7820 = vunpack.c.l.b16 %v6083
    %v7821 = vunpack.c.l.b16 %v6093
    %v7822 = vunpack.c.l.b16 %v6107
    %v7823 = vunpack.c.l.b16 %v6117
    %v7824 = vunpack.c.l.b16 %v6131
    %v7825 = vunpack.c.l.b16 %v6141
    %v7826 = vunpack.c.l.b16 %v6155
    %v7827 = vunpack.c.l.b16 %v6165
    %v7828 = vunpack.c.l.b16 %v6179
    %v7829 = vunpack.c.l.b16 %v6189
    %v7830 = vunpack.c.l.b16 %v6203
    %v7831 = vunpack.c.l.b16 %v6213
    %v7832 = vunpack.c.l.b16 %v6227
    %v7833 = vunpack.c.l.b16 %v6237
    %v7834 = vunpack.c.l.b16 %v6251
    %v7835 = vunpack.c.l.b16 %v6261
    %v7836 = vunpack.c.l.b16 %v6275
    %v7837 = vunpack.c.l.b16 %v6285
    %v7838 = vunpack.c.l.b16 %v6299
    %v7839 = vunpack.c.l.b16 %v6309
    %v7840 = vunpack.c.l.b16 %v6323
    %v7841 = vunpack.c.l.b16 %v6333
    %v7842 = vunpack.c.l.b16 %v6347
    %v7843 = vunpack.c.l.b16 %v6357
    %v7844 = vunpack.c.l.b16 %v6371
    %v7845 = vunpack.c.l.b16 %v6381
    %v7846 = vunpack.c.l.b16 %v6395
    %v7847 = vunpack.c.l.b16 %v6405
    %v7848 = vunpack.c.l.b16 %v6419
    %v7849 = vunpack.c.l.b16 %v6429
    %v7850 = vunpack.c.l.b16 %v6443
    %v7851 = vunpack.c.l.b16 %v6453
    %v7852 = vunpack.c.l.b16 %v6467
    %v7853 = vunpack.c.l.b16 %v6477
    %v7854 = vpack.c.b16 %v7791, %v7790
    %v7855 = vpack.c.b16 %v7793, %v7792
    %v7856 = vpack.c.b16 %v7795, %v7794
    %v7857 = vpack.c.b16 %v7797, %v7796
    %v7858 = vpack.c.b16 %v7799, %v7798
    %v7859 = vpack.c.b16 %v7801, %v7800
    %v7860 = vpack.c.b16 %v7803, %v7802
    %v7861 = vpack.c.b16 %v7805, %v7804
    %v7862 = vpack.c.b16 %v7807, %v7806
    %v7863 = vpack.c.b16 %v7809, %v7808
    %v7864 = vpack.c.b16 %v7811, %v7810
    %v7865 = vpack.c.b16 %v7813, %v7812
    %v7866 = vpack.c.b16 %v7815, %v7814
    %v7867 = vpack.c.b16 %v7817, %v7816
    %v7868 = vpack.c.b16 %v7819, %v7818
    %v7869 = vpack.c.b16 %v7821, %v7820
    %v7870 = vpack.c.b16 %v7823, %v7822
    %v7871 = vpack.c.b16 %v7825, %v7824
    %v7872 = vpack.c.b16 %v7827, %v7826
    %v7873 = vpack.c.b16 %v7829, %v7828
    %v7874 = vpack.c.b16 %v7831, %v7830
    %v7875 = vpack.c.b16 %v7833, %v7832
    %v7876 = vpack.c.b16 %v7835, %v7834
    %v7877 = vpack.c.b16 %v7837, %v7836
    %v7878 = vpack.c.b16 %v7839, %v7838
    %v7879 = vpack.c.b16 %v7841, %v7840
    %v7880 = vpack.c.b16 %v7843, %v7842
    %v7881 = vpack.c.b16 %v7845, %v7844
    %v7882 = vpack.c.b16 %v7847, %v7846
    %v7883 = vpack.c.b16 %v7849, %v7848
    %v7884 = vpack.c.b16 %v7851, %v7850
    %v7885 = vpack.c.b16 %v7853, %v7852
    %7886 = vrot.lane.b32.xlu0 %v7854, 64
    %v7887 = vpop.permute.xlu0 %7886
    %7888 = vrot.lane.b32.xlu0 %v7855, 64
    %v7889 = vpop.permute.xlu0 %7888
    %7890 = vrot.lane.b32.xlu0 %v7856, 64
    %v7891 = vpop.permute.xlu0 %7890
    %7892 = vrot.lane.b32.xlu0 %v7857, 64
    %v7893 = vpop.permute.xlu0 %7892
    %7894 = vrot.lane.b32.xlu0 %v7858, 64
    %v7895 = vpop.permute.xlu0 %7894
    %7896 = vrot.lane.b32.xlu0 %v7859, 64
    %v7897 = vpop.permute.xlu0 %7896
    %7898 = vrot.lane.b32.xlu0 %v7860, 64
    %v7899 = vpop.permute.xlu0 %7898
    %7900 = vrot.lane.b32.xlu0 %v7861, 64
    %v7901 = vpop.permute.xlu0 %7900
    %7902 = vrot.lane.b32.xlu0 %v7862, 64
    %v7903 = vpop.permute.xlu0 %7902
    %7904 = vrot.lane.b32.xlu0 %v7863, 64
    %v7905 = vpop.permute.xlu0 %7904
    %7906 = vrot.lane.b32.xlu0 %v7864, 64
    %v7907 = vpop.permute.xlu0 %7906
    %7908 = vrot.lane.b32.xlu0 %v7865, 64
    %v7909 = vpop.permute.xlu0 %7908
    %7910 = vrot.lane.b32.xlu0 %v7866, 64
    %v7911 = vpop.permute.xlu0 %7910
    %7912 = vrot.lane.b32.xlu0 %v7867, 64
    %v7913 = vpop.permute.xlu0 %7912
    %7914 = vrot.lane.b32.xlu0 %v7868, 64
    %v7915 = vpop.permute.xlu0 %7914
    %7916 = vrot.lane.b32.xlu0 %v7869, 64
    %v7917 = vpop.permute.xlu0 %7916
    %7918 = vrot.lane.b32.xlu0 %v7870, 64
    %v7919 = vpop.permute.xlu0 %7918
    %7920 = vrot.lane.b32.xlu0 %v7871, 64
    %v7921 = vpop.permute.xlu0 %7920
    %7922 = vrot.lane.b32.xlu0 %v7872, 64
    %v7923 = vpop.permute.xlu0 %7922
    %7924 = vrot.lane.b32.xlu0 %v7873, 64
    %v7925 = vpop.permute.xlu0 %7924
    %7926 = vrot.lane.b32.xlu0 %v7874, 64
    %v7927 = vpop.permute.xlu0 %7926
    %7928 = vrot.lane.b32.xlu0 %v7875, 64
    %v7929 = vpop.permute.xlu0 %7928
    %7930 = vrot.lane.b32.xlu0 %v7876, 64
    %v7931 = vpop.permute.xlu0 %7930
    %7932 = vrot.lane.b32.xlu0 %v7877, 64
    %v7933 = vpop.permute.xlu0 %7932
    %7934 = vrot.lane.b32.xlu0 %v7878, 64
    %v7935 = vpop.permute.xlu0 %7934
    %7936 = vrot.lane.b32.xlu0 %v7879, 64
    %v7937 = vpop.permute.xlu0 %7936
    %7938 = vrot.lane.b32.xlu0 %v7880, 64
    %v7939 = vpop.permute.xlu0 %7938
    %7940 = vrot.lane.b32.xlu0 %v7881, 64
    %v7941 = vpop.permute.xlu0 %7940
    %7942 = vrot.lane.b32.xlu0 %v7882, 64
    %v7943 = vpop.permute.xlu0 %7942
    %7944 = vrot.lane.b32.xlu0 %v7883, 64
    %v7945 = vpop.permute.xlu0 %7944
    %7946 = vrot.lane.b32.xlu0 %v7884, 64
    %v7947 = vpop.permute.xlu0 %7946
    %7948 = vrot.lane.b32.xlu0 %v7885, 64
    %v7949 = vpop.permute.xlu0 %7948
    %v7950 = vunpack.c.l.b16 %v6609
    %v7951 = vunpack.c.l.b16 %v6612
    %v7952 = vunpack.c.l.b16 %v6616
    %v7953 = vunpack.c.l.b16 %v6619
    %v7954 = vunpack.c.l.b16 %v6623
    %v7955 = vunpack.c.l.b16 %v6626
    %v7956 = vunpack.c.l.b16 %v6630
    %v7957 = vunpack.c.l.b16 %v6633
    %v7958 = vunpack.c.l.b16 %v6637
    %v7959 = vunpack.c.l.b16 %v6640
    %v7960 = vunpack.c.l.b16 %v6644
    %v7961 = vunpack.c.l.b16 %v6647
    %v7962 = vunpack.c.l.b16 %v6651
    %v7963 = vunpack.c.l.b16 %v6654
    %v7964 = vunpack.c.l.b16 %v6658
    %v7965 = vunpack.c.l.b16 %v6661
    %v7966 = vunpack.c.l.b16 %v6665
    %v7967 = vunpack.c.l.b16 %v6668
    %v7968 = vunpack.c.l.b16 %v6672
    %v7969 = vunpack.c.l.b16 %v6675
    %v7970 = vunpack.c.l.b16 %v6679
    %v7971 = vunpack.c.l.b16 %v6682
    %v7972 = vunpack.c.l.b16 %v6686
    %v7973 = vunpack.c.l.b16 %v6689
    %v7974 = vunpack.c.l.b16 %v6693
    %v7975 = vunpack.c.l.b16 %v6696
    %v7976 = vunpack.c.l.b16 %v6700
    %v7977 = vunpack.c.l.b16 %v6703
    %v7978 = vunpack.c.l.b16 %v6707
    %v7979 = vunpack.c.l.b16 %v6710
    %v7980 = vunpack.c.l.b16 %v6714
    %v7981 = vunpack.c.l.b16 %v6717
    %v7982 = vunpack.c.l.b16 %v6721
    %v7983 = vunpack.c.l.b16 %v6724
    %v7984 = vunpack.c.l.b16 %v6728
    %v7985 = vunpack.c.l.b16 %v6731
    %v7986 = vunpack.c.l.b16 %v6735
    %v7987 = vunpack.c.l.b16 %v6738
    %v7988 = vunpack.c.l.b16 %v6742
    %v7989 = vunpack.c.l.b16 %v6745
    %v7990 = vunpack.c.l.b16 %v6749
    %v7991 = vunpack.c.l.b16 %v6752
    %v7992 = vunpack.c.l.b16 %v6756
    %v7993 = vunpack.c.l.b16 %v6759
    %v7994 = vunpack.c.l.b16 %v6763
    %v7995 = vunpack.c.l.b16 %v6766
    %v7996 = vunpack.c.l.b16 %v6770
    %v7997 = vunpack.c.l.b16 %v6773
    %v7998 = vunpack.c.l.b16 %v6777
    %v7999 = vunpack.c.l.b16 %v6780
    %v8000 = vunpack.c.l.b16 %v6784
    %v8001 = vunpack.c.l.b16 %v6787
    %v8002 = vunpack.c.l.b16 %v6791
    %v8003 = vunpack.c.l.b16 %v6794
    %v8004 = vunpack.c.l.b16 %v6798
    %v8005 = vunpack.c.l.b16 %v6801
    %v8006 = vunpack.c.l.b16 %v6805
    %v8007 = vunpack.c.l.b16 %v6808
    %v8008 = vunpack.c.l.b16 %v6812
    %v8009 = vunpack.c.l.b16 %v6815
    %v8010 = vunpack.c.l.b16 %v6819
    %v8011 = vunpack.c.l.b16 %v6822
    %v8012 = vunpack.c.l.b16 %v6826
    %v8013 = vunpack.c.l.b16 %v6829
    %v8014 = vpack.c.b16 %v7951, %v7950
    %v8015 = vpack.c.b16 %v7953, %v7952
    %v8016 = vpack.c.b16 %v7955, %v7954
    %v8017 = vpack.c.b16 %v7957, %v7956
    %v8018 = vpack.c.b16 %v7959, %v7958
    %v8019 = vpack.c.b16 %v7961, %v7960
    %v8020 = vpack.c.b16 %v7963, %v7962
    %v8021 = vpack.c.b16 %v7965, %v7964
    %v8022 = vpack.c.b16 %v7967, %v7966
    %v8023 = vpack.c.b16 %v7969, %v7968
    %v8024 = vpack.c.b16 %v7971, %v7970
    %v8025 = vpack.c.b16 %v7973, %v7972
    %v8026 = vpack.c.b16 %v7975, %v7974
    %v8027 = vpack.c.b16 %v7977, %v7976
    %v8028 = vpack.c.b16 %v7979, %v7978
    %v8029 = vpack.c.b16 %v7981, %v7980
    %v8030 = vpack.c.b16 %v7983, %v7982
    %v8031 = vpack.c.b16 %v7985, %v7984
    %v8032 = vpack.c.b16 %v7987, %v7986
    %v8033 = vpack.c.b16 %v7989, %v7988
    %v8034 = vpack.c.b16 %v7991, %v7990
    %v8035 = vpack.c.b16 %v7993, %v7992
    %v8036 = vpack.c.b16 %v7995, %v7994
    %v8037 = vpack.c.b16 %v7997, %v7996
    %v8038 = vpack.c.b16 %v7999, %v7998
    %v8039 = vpack.c.b16 %v8001, %v8000
    %v8040 = vpack.c.b16 %v8003, %v8002
    %v8041 = vpack.c.b16 %v8005, %v8004
    %v8042 = vpack.c.b16 %v8007, %v8006
    %v8043 = vpack.c.b16 %v8009, %v8008
    %v8044 = vpack.c.b16 %v8011, %v8010
    %v8045 = vpack.c.b16 %v8013, %v8012
    %v8048 = vsel %vm112, %v6926, %v7055
    %v8052 = vsel %vm112, %v6927, %v7057
    %v8056 = vsel %vm112, %v6928, %v7059
    %v8060 = vsel %vm112, %v6929, %v7061
    %v8064 = vsel %vm112, %v6930, %v7063
    %v8068 = vsel %vm112, %v6931, %v7065
    %v8072 = vsel %vm112, %v6932, %v7067
    %v8076 = vsel %vm112, %v6933, %v7069
    %v8080 = vsel %vm112, %v6934, %v7071
    %v8084 = vsel %vm112, %v6935, %v7073
    %v8088 = vsel %vm112, %v6936, %v7075
    %v8092 = vsel %vm112, %v6937, %v7077
    %v8096 = vsel %vm112, %v6938, %v7079
    %v8100 = vsel %vm112, %v6939, %v7081
    %v8104 = vsel %vm112, %v6940, %v7083
    %v8108 = vsel %vm112, %v6941, %v7085
    %v8112 = vsel %vm112, %v6942, %v7087
    %v8116 = vsel %vm112, %v6943, %v7089
    %v8120 = vsel %vm112, %v6944, %v7091
    %v8124 = vsel %vm112, %v6945, %v7093
    %v8128 = vsel %vm112, %v6946, %v7095
    %v8132 = vsel %vm112, %v6947, %v7097
    %v8136 = vsel %vm112, %v6948, %v7099
    %v8140 = vsel %vm112, %v6949, %v7101
    %v8144 = vsel %vm112, %v6950, %v7103
    %v8148 = vsel %vm112, %v6951, %v7105
    %v8152 = vsel %vm112, %v6952, %v7107
    %v8156 = vsel %vm112, %v6953, %v7109
    %v8160 = vsel %vm112, %v6954, %v7111
    %v8164 = vsel %vm112, %v6955, %v7113
    %v8168 = vsel %vm112, %v6956, %v7115
    %v8172 = vsel %vm112, %v6957, %v7117
    %v8176 = vsel %vm112, %v7182, %v7343
    %v8180 = vsel %vm112, %v7183, %v7345
    %v8184 = vsel %vm112, %v7184, %v7347
    %v8188 = vsel %vm112, %v7185, %v7349
    %v8192 = vsel %vm112, %v7186, %v7351
    %v8196 = vsel %vm112, %v7187, %v7353
    %v8200 = vsel %vm112, %v7188, %v7355
    %v8204 = vsel %vm112, %v7189, %v7357
    %v8208 = vsel %vm112, %v7190, %v7359
    %v8212 = vsel %vm112, %v7191, %v7361
    %v8216 = vsel %vm112, %v7192, %v7363
    %v8220 = vsel %vm112, %v7193, %v7365
    %v8224 = vsel %vm112, %v7194, %v7367
    %v8228 = vsel %vm112, %v7195, %v7369
    %v8232 = vsel %vm112, %v7196, %v7371
    %v8236 = vsel %vm112, %v7197, %v7373
    %v8240 = vsel %vm112, %v7198, %v7375
    %v8244 = vsel %vm112, %v7199, %v7377
    %v8248 = vsel %vm112, %v7200, %v7379
    %v8252 = vsel %vm112, %v7201, %v7381
    %v8256 = vsel %vm112, %v7202, %v7383
    %v8260 = vsel %vm112, %v7203, %v7385
    %v8264 = vsel %vm112, %v7204, %v7387
    %v8268 = vsel %vm112, %v7205, %v7389
    %v8272 = vsel %vm112, %v7206, %v7391
    %v8276 = vsel %vm112, %v7207, %v7393
    %v8280 = vsel %vm112, %v7208, %v7395
    %v8284 = vsel %vm112, %v7209, %v7397
    %v8288 = vsel %vm112, %v7210, %v7399
    %v8292 = vsel %vm112, %v7211, %v7401
    %v8296 = vsel %vm112, %v7212, %v7403
    %v8300 = vsel %vm112, %v7213, %v7405
    %v8304 = vsel %vm112, %v7470, %v7599
    %v8308 = vsel %vm112, %v7471, %v7601
    %v8312 = vsel %vm112, %v7472, %v7603
    %v8316 = vsel %vm112, %v7473, %v7605
    %v8320 = vsel %vm112, %v7474, %v7607
    %v8324 = vsel %vm112, %v7475, %v7609
    %v8328 = vsel %vm112, %v7476, %v7611
    %v8332 = vsel %vm112, %v7477, %v7613
    %v8336 = vsel %vm112, %v7478, %v7615
    %v8340 = vsel %vm112, %v7479, %v7617
    %v8344 = vsel %vm112, %v7480, %v7619
    %v8348 = vsel %vm112, %v7481, %v7621
    %v8352 = vsel %vm112, %v7482, %v7623
    %v8356 = vsel %vm112, %v7483, %v7625
    %v8360 = vsel %vm112, %v7484, %v7627
    %v8364 = vsel %vm112, %v7485, %v7629
    %v8368 = vsel %vm112, %v7486, %v7631
    %v8372 = vsel %vm112, %v7487, %v7633
    %v8376 = vsel %vm112, %v7488, %v7635
    %v8380 = vsel %vm112, %v7489, %v7637
    %v8384 = vsel %vm112, %v7490, %v7639
    %v8388 = vsel %vm112, %v7491, %v7641
    %v8392 = vsel %vm112, %v7492, %v7643
    %v8396 = vsel %vm112, %v7493, %v7645
    %v8400 = vsel %vm112, %v7494, %v7647
    %v8404 = vsel %vm112, %v7495, %v7649
    %v8408 = vsel %vm112, %v7496, %v7651
    %v8412 = vsel %vm112, %v7497, %v7653
    %v8416 = vsel %vm112, %v7498, %v7655
    %v8420 = vsel %vm112, %v7499, %v7657
    %v8424 = vsel %vm112, %v7500, %v7659
    %v8428 = vsel %vm112, %v7501, %v7661
    %v8432 = vsel %vm112, %v7758, %v7887
    %v8436 = vsel %vm112, %v7759, %v7889
    %v8440 = vsel %vm112, %v7760, %v7891
    %v8444 = vsel %vm112, %v7761, %v7893
    %v8448 = vsel %vm112, %v7762, %v7895
    %v8452 = vsel %vm112, %v7763, %v7897
    %v8456 = vsel %vm112, %v7764, %v7899
    %v8460 = vsel %vm112, %v7765, %v7901
    %v8464 = vsel %vm112, %v7766, %v7903
    %v8468 = vsel %vm112, %v7767, %v7905
    %v8472 = vsel %vm112, %v7768, %v7907
    %v8476 = vsel %vm112, %v7769, %v7909
    %v8480 = vsel %vm112, %v7770, %v7911
    %v8484 = vsel %vm112, %v7771, %v7913
    %v8488 = vsel %vm112, %v7772, %v7915
    %v8492 = vsel %vm112, %v7773, %v7917
    %v8496 = vsel %vm112, %v7774, %v7919
    %v8500 = vsel %vm112, %v7775, %v7921
    %v8504 = vsel %vm112, %v7776, %v7923
    %v8508 = vsel %vm112, %v7777, %v7925
    %v8512 = vsel %vm112, %v7778, %v7927
    %v8516 = vsel %vm112, %v7779, %v7929
    %v8520 = vsel %vm112, %v7780, %v7931
    %v8524 = vsel %vm112, %v7781, %v7933
    %v8528 = vsel %vm112, %v7782, %v7935
    %v8532 = vsel %vm112, %v7783, %v7937
    %v8536 = vsel %vm112, %v7784, %v7939
    %v8540 = vsel %vm112, %v7785, %v7941
    %v8544 = vsel %vm112, %v7786, %v7943
    %v8548 = vsel %vm112, %v7787, %v7945
    %v8552 = vsel %vm112, %v7788, %v7947
    %v8556 = vsel %vm112, %v7789, %v7949
    %v8558 = vld [vmem:[%s7] sm:$0xf]
    %v8559 = vld [vmem:[%s7 + $0x4] sm:$0xf]
    %v8560 = vld [vmem:[%s7 + $0x8] sm:$0xf]
    %v8561 = vld [vmem:[%s7 + $0xc] sm:$0xf]
    %v8562 = vld [vmem:[%s7 + $0x10] sm:$0xf]
    %v8563 = vld [vmem:[%s7 + $0x14] sm:$0xf]
    %v8564 = vld [vmem:[%s7 + $0x18] sm:$0xf]
    %v8565 = vld [vmem:[%s7 + $0x1c] sm:$0xf]
    %v8566 = vld [vmem:[%s7 + $0x20] sm:$0xf]
    %v8567 = vld [vmem:[%s7 + $0x24] sm:$0xf]
    %v8568 = vld [vmem:[%s7 + $0x28] sm:$0xf]
    %v8569 = vld [vmem:[%s7 + $0x2c] sm:$0xf]
    %v8570 = vld [vmem:[%s7 + $0x30] sm:$0xf]
    %v8571 = vld [vmem:[%s7 + $0x34] sm:$0xf]
    %v8572 = vld [vmem:[%s7 + $0x38] sm:$0xf]
    %v8573 = vld [vmem:[%s7 + $0x3c] sm:$0xf]
    %v8574 = vld [vmem:[%s7 + $0x40] sm:$0xf]
    %v8575 = vld [vmem:[%s7 + $0x44] sm:$0xf]
    %v8576 = vld [vmem:[%s7 + $0x48] sm:$0xf]
    %v8577 = vld [vmem:[%s7 + $0x4c] sm:$0xf]
    %v8578 = vld [vmem:[%s7 + $0x50] sm:$0xf]
    %v8579 = vld [vmem:[%s7 + $0x54] sm:$0xf]
    %v8580 = vld [vmem:[%s7 + $0x58] sm:$0xf]
    %v8581 = vld [vmem:[%s7 + $0x5c] sm:$0xf]
    %v8582 = vld [vmem:[%s7 + $0x60] sm:$0xf]
    %v8583 = vld [vmem:[%s7 + $0x64] sm:$0xf]
    %v8584 = vld [vmem:[%s7 + $0x68] sm:$0xf]
    %v8585 = vld [vmem:[%s7 + $0x6c] sm:$0xf]
    %v8586 = vld [vmem:[%s7 + $0x70] sm:$0xf]
    %v8587 = vld [vmem:[%s7 + $0x74] sm:$0xf]
    %v8588 = vld [vmem:[%s7 + $0x78] sm:$0xf]
    %v8589 = vld [vmem:[%s7 + $0x7c] sm:$0xf]
    %v8590 = vld [vmem:[%s7 + $0x80] sm:$0xf]
    %v8591 = vld [vmem:[%s7 + $0x84] sm:$0xf]
    %v8592 = vld [vmem:[%s7 + $0x88] sm:$0xf]
    %v8593 = vld [vmem:[%s7 + $0x8c] sm:$0xf]
    %v8594 = vld [vmem:[%s7 + $0x90] sm:$0xf]
    %v8595 = vld [vmem:[%s7 + $0x94] sm:$0xf]
    %v8596 = vld [vmem:[%s7 + $0x98] sm:$0xf]
    %v8597 = vld [vmem:[%s7 + $0x9c] sm:$0xf]
    %v8598 = vld [vmem:[%s7 + $0xa0] sm:$0xf]
    %v8599 = vld [vmem:[%s7 + $0xa4] sm:$0xf]
    %v8600 = vld [vmem:[%s7 + $0xa8] sm:$0xf]
    %v8601 = vld [vmem:[%s7 + $0xac] sm:$0xf]
    %v8602 = vld [vmem:[%s7 + $0xb0] sm:$0xf]
    %v8603 = vld [vmem:[%s7 + $0xb4] sm:$0xf]
    %v8604 = vld [vmem:[%s7 + $0xb8] sm:$0xf]
    %v8605 = vld [vmem:[%s7 + $0xbc] sm:$0xf]
    %v8606 = vld [vmem:[%s7 + $0xc0] sm:$0xf]
    %v8607 = vld [vmem:[%s7 + $0xc4] sm:$0xf]
    %v8608 = vld [vmem:[%s7 + $0xc8] sm:$0xf]
    %v8609 = vld [vmem:[%s7 + $0xcc] sm:$0xf]
    %v8610 = vld [vmem:[%s7 + $0xd0] sm:$0xf]
    %v8611 = vld [vmem:[%s7 + $0xd4] sm:$0xf]
    %v8612 = vld [vmem:[%s7 + $0xd8] sm:$0xf]
    %v8613 = vld [vmem:[%s7 + $0xdc] sm:$0xf]
    %v8614 = vld [vmem:[%s7 + $0xe0] sm:$0xf]
    %v8615 = vld [vmem:[%s7 + $0xe4] sm:$0xf]
    %v8616 = vld [vmem:[%s7 + $0xe8] sm:$0xf]
    %v8617 = vld [vmem:[%s7 + $0xec] sm:$0xf]
    %v8618 = vld [vmem:[%s7 + $0xf0] sm:$0xf]
    %v8619 = vld [vmem:[%s7 + $0xf4] sm:$0xf]
    %v8620 = vld [vmem:[%s7 + $0xf8] sm:$0xf]
    %v8621 = vld [vmem:[%s7 + $0xfc] sm:$0xf]
    %v8622 = vld [vmem:[%s7 + $0x100] sm:$0xf]
    %v8623 = vld [vmem:[%s7 + $0x104] sm:$0xf]
    %v8624 = vld [vmem:[%s7 + $0x108] sm:$0xf]
    %v8625 = vld [vmem:[%s7 + $0x10c] sm:$0xf]
    %v8626 = vld [vmem:[%s7 + $0x110] sm:$0xf]
    %v8627 = vld [vmem:[%s7 + $0x114] sm:$0xf]
    %v8628 = vld [vmem:[%s7 + $0x118] sm:$0xf]
    %v8629 = vld [vmem:[%s7 + $0x11c] sm:$0xf]
    %v8630 = vld [vmem:[%s8] sm:$0x1]
    %v8632 = vlaneseq
    %v8633 = vshrl.u32 %v8632, 7
    %v8634 = vsub.s32 0, %v8633
    %v8635 = vrot.slane %v8630, %v8634
    %v8709 = vunpack.c.l.b16 %v8558
    %v8710 = vunpack.c.l.b16 %v8559
    %v8711 = vunpack.c.l.b16 %v8560
    %v8712 = vunpack.c.l.b16 %v8561
    %v8713 = vunpack.c.l.b16 %v8562
    %v8714 = vunpack.c.l.b16 %v8563
    %v8715 = vunpack.c.l.b16 %v8564
    %v8716 = vunpack.c.l.b16 %v8565
    %v8717 = vunpack.c.l.b16 %v8566
    %v8718 = vunpack.c.l.b16 %v8567
    %v8719 = vunpack.c.l.b16 %v8568
    %v8720 = vunpack.c.l.b16 %v8569
    %v8721 = vunpack.c.l.b16 %v8570
    %v8722 = vunpack.c.l.b16 %v8571
    %v8723 = vunpack.c.l.b16 %v8572
    %v8724 = vunpack.c.l.b16 %v8573
    %v8725 = vunpack.c.l.b16 %v8574
    %v8726 = vunpack.c.l.b16 %v8575
    %v8727 = vunpack.c.l.b16 %v8576
    %v8728 = vunpack.c.l.b16 %v8577
    %v8729 = vunpack.c.l.b16 %v8578
    %v8730 = vunpack.c.l.b16 %v8579
    %v8731 = vunpack.c.l.b16 %v8580
    %v8732 = vunpack.c.l.b16 %v8581
    %v8733 = vunpack.c.l.b16 %v8582
    %v8734 = vunpack.c.l.b16 %v8583
    %v8735 = vunpack.c.l.b16 %v8584
    %v8736 = vunpack.c.l.b16 %v8585
    %v8737 = vunpack.c.l.b16 %v8586
    %v8738 = vunpack.c.l.b16 %v8587
    %v8739 = vunpack.c.l.b16 %v8588
    %v8740 = vunpack.c.l.b16 %v8589
    %v8741 = vunpack.c.l.b16 %v8590
    %v8742 = vunpack.c.l.b16 %v8591
    %v8743 = vunpack.c.l.b16 %v8592
    %v8744 = vunpack.c.l.b16 %v8593
    %v8745 = vunpack.c.l.b16 %v8594
    %v8746 = vunpack.c.l.b16 %v8595
    %v8747 = vunpack.c.l.b16 %v8596
    %v8748 = vunpack.c.l.b16 %v8597
    %v8749 = vunpack.c.l.b16 %v8598
    %v8750 = vunpack.c.l.b16 %v8599
    %v8751 = vunpack.c.l.b16 %v8600
    %v8752 = vunpack.c.l.b16 %v8601
    %v8753 = vunpack.c.l.b16 %v8602
    %v8754 = vunpack.c.l.b16 %v8603
    %v8755 = vunpack.c.l.b16 %v8604
    %v8756 = vunpack.c.l.b16 %v8605
    %v8757 = vunpack.c.l.b16 %v8606
    %v8758 = vunpack.c.l.b16 %v8607
    %v8759 = vunpack.c.l.b16 %v8608
    %v8760 = vunpack.c.l.b16 %v8609
    %v8761 = vunpack.c.l.b16 %v8610
    %v8762 = vunpack.c.l.b16 %v8611
    %v8763 = vunpack.c.l.b16 %v8612
    %v8764 = vunpack.c.l.b16 %v8613
    %v8765 = vunpack.c.l.b16 %v8614
    %v8766 = vunpack.c.l.b16 %v8615
    %v8767 = vunpack.c.l.b16 %v8616
    %v8768 = vunpack.c.l.b16 %v8617
    %v8769 = vunpack.c.l.b16 %v8618
    %v8770 = vunpack.c.l.b16 %v8619
    %v8771 = vunpack.c.l.b16 %v8620
    %v8772 = vunpack.c.l.b16 %v8621
    %v8773 = vunpack.c.l.b16 %v8622
    %v8774 = vunpack.c.l.b16 %v8623
    %v8775 = vunpack.c.l.b16 %v8624
    %v8776 = vunpack.c.l.b16 %v8625
    %v8777 = vunpack.c.l.b16 %v8626
    %v8778 = vunpack.c.l.b16 %v8627
    %v8779 = vunpack.c.l.b16 %v8628
    %v8780 = vunpack.c.l.b16 %v8629
    %v8781 = vpack.c.b16 %v8710, %v8709
    %v8782 = vpack.c.b16 %v8712, %v8711
    %v8783 = vpack.c.b16 %v8714, %v8713
    %v8784 = vpack.c.b16 %v8716, %v8715
    %v8785 = vpack.c.b16 %v8718, %v8717
    %v8786 = vpack.c.b16 %v8720, %v8719
    %v8787 = vpack.c.b16 %v8722, %v8721
    %v8788 = vpack.c.b16 %v8724, %v8723
    %v8789 = vpack.c.b16 %v8726, %v8725
    %v8790 = vpack.c.b16 %v8728, %v8727
    %v8791 = vpack.c.b16 %v8730, %v8729
    %v8792 = vpack.c.b16 %v8732, %v8731
    %v8793 = vpack.c.b16 %v8734, %v8733
    %v8794 = vpack.c.b16 %v8736, %v8735
    %v8795 = vpack.c.b16 %v8738, %v8737
    %v8796 = vpack.c.b16 %v8740, %v8739
    %v8797 = vpack.c.b16 %v8742, %v8741
    %v8798 = vpack.c.b16 %v8744, %v8743
    %v8799 = vpack.c.b16 %v8746, %v8745
    %v8800 = vpack.c.b16 %v8748, %v8747
    %v8801 = vpack.c.b16 %v8750, %v8749
    %v8802 = vpack.c.b16 %v8752, %v8751
    %v8803 = vpack.c.b16 %v8754, %v8753
    %v8804 = vpack.c.b16 %v8756, %v8755
    %v8805 = vpack.c.b16 %v8758, %v8757
    %v8806 = vpack.c.b16 %v8760, %v8759
    %v8807 = vpack.c.b16 %v8762, %v8761
    %v8808 = vpack.c.b16 %v8764, %v8763
    %v8809 = vpack.c.b16 %v8766, %v8765
    %v8810 = vpack.c.b16 %v8768, %v8767
    %v8811 = vpack.c.b16 %v8770, %v8769
    %v8812 = vpack.c.b16 %v8772, %v8771
    %v8813 = vpack.c.b16 %v8774, %v8773
    %v8814 = vpack.c.b16 %v8776, %v8775
    %v8815 = vpack.c.b16 %v8778, %v8777
    %v8816 = vpack.c.b16 %v8780, %v8779
    %v8854 = vsel %vm112, %v8014, 0
    %v8857 = vsel %vm112, %v8015, 0
    %v8860 = vsel %vm112, %v8016, 0
    %v8863 = vsel %vm112, %v8017, 0
    %v8866 = vsel %vm112, %v8018, 0
    %v8869 = vsel %vm112, %v8019, 0
    %v8872 = vsel %vm112, %v8020, 0
    %v8875 = vsel %vm112, %v8021, 0
    %v8878 = vsel %vm112, %v8022, 0
    %v8881 = vsel %vm112, %v8023, 0
    %v8884 = vsel %vm112, %v8024, 0
    %v8887 = vsel %vm112, %v8025, 0
    %v8890 = vsel %vm112, %v8026, 0
    %v8893 = vsel %vm112, %v8027, 0
    %v8896 = vsel %vm112, %v8028, 0
    %v8899 = vsel %vm112, %v8029, 0
    %v8902 = vsel %vm112, %v8030, 0
    %v8905 = vsel %vm112, %v8031, 0
    %v8908 = vsel %vm112, %v8032, 0
    %v8911 = vsel %vm112, %v8033, 0
    %v8914 = vsel %vm112, %v8034, 0
    %v8917 = vsel %vm112, %v8035, 0
    %v8920 = vsel %vm112, %v8036, 0
    %v8923 = vsel %vm112, %v8037, 0
    %v8926 = vsel %vm112, %v8038, 0
    %v8929 = vsel %vm112, %v8039, 0
    %v8932 = vsel %vm112, %v8040, 0
    %v8935 = vsel %vm112, %v8041, 0
    %v8938 = vsel %vm112, %v8042, 0
    %v8941 = vsel %vm112, %v8043, 0
    %v8944 = vsel %vm112, %v8044, 0
    %v8947 = vsel %vm112, %v8045, 0
    %8949 = vmatprep.subr.bf16.mxu0 0
    %8950 = vmatpush1.bf16.msra.mxu0 %v8788
    %8951 = vmatprep.subr.bf16.mxu0 0
    %8952 = vmatpush1.bf16.msra.mxu0 %v8787
    %8953 = vmatprep.subr.bf16.mxu0 0
    %8954 = vmatpush1.bf16.msra.mxu0 %v8786
    %8955 = vmatprep.subr.bf16.mxu0 0
    %8956 = vmatpush1.bf16.msra.mxu0 %v8785
    %8957 = vmatprep.subr.bf16.mxu0 0
    %8958 = vmatpush1.bf16.msra.mxu0 %v8784
    %8959 = vmatprep.subr.bf16.mxu0 0
    %8960 = vmatpush1.bf16.msra.mxu0 %v8783
    %8961 = vmatprep.subr.bf16.mxu0 0
    %8962 = vmatpush1.bf16.msra.mxu0 %v8782
    %8963 = vmatprep.subr.bf16.mxu0 0
    %8964 = vmatpush1.bf16.msra.mxu0 %v8781
    %8965 = vmatprep.subr.bf16.mxu0 0
    %8966 = vmatpush2.bf16.msra.mxu0 %v8796
    %8967 = vmatprep.subr.bf16.mxu0 0
    %8968 = vmatpush2.bf16.msra.mxu0 %v8795
    %8969 = vmatprep.subr.bf16.mxu0 0
    %8970 = vmatpush2.bf16.msra.mxu0 %v8794
    %8971 = vmatprep.subr.bf16.mxu0 0
    %8972 = vmatpush2.bf16.msra.mxu0 %v8793
    %8973 = vmatprep.subr.bf16.mxu0 0
    %8974 = vmatpush2.bf16.msra.mxu0 %v8792
    %8975 = vmatprep.subr.bf16.mxu0 0
    %8976 = vmatpush2.bf16.msra.mxu0 %v8791
    %8977 = vmatprep.subr.bf16.mxu0 0
    %8978 = vmatpush2.bf16.msra.mxu0 %v8790
    %8979 = vmatprep.subr.bf16.mxu0 0
    %8980 = vmatpush2.bf16.msra.mxu0 %v8789
    %8981 = vmatprep.mubr.bf16.mxu0 %v8176
    %8982 = vmatmul.mubr.bf16.gmra.mxu0 %v8048
    %v8983 = vpop.f32.mrf.mxu0
    %v8984 = vadd.f32 %v8635, %v8983
    %v8985 = vpop.f32.mrf.mxu0
    %v8986 = vpop.f32.mrf.mxu0
    %v8987 = vadd.f32 %v8635, %v8986
    %v8988 = vpop.f32.mrf.mxu0
    %8989 = vmatprep.mubr.bf16.mxu0 %v8180
    %8990 = vmatmul.mubr.bf16.gmra.mxu0 %v8052
    %v8991 = vpop.f32.mrf.mxu0
    %v8992 = vadd.f32 %v8635, %v8991
    %v8993 = vpop.f32.mrf.mxu0
    %v8994 = vpop.f32.mrf.mxu0
    %v8995 = vadd.f32 %v8635, %v8994
    %v8996 = vpop.f32.mrf.mxu0
    %8997 = vmatprep.mubr.bf16.mxu0 %v8184
    %8998 = vmatmul.mubr.bf16.gmra.mxu0 %v8056
    %v8999 = vpop.f32.mrf.mxu0
    %v9000 = vadd.f32 %v8635, %v8999
    %v9001 = vpop.f32.mrf.mxu0
    %v9002 = vpop.f32.mrf.mxu0
    %v9003 = vadd.f32 %v8635, %v9002
    %v9004 = vpop.f32.mrf.mxu0
    %9005 = vmatprep.mubr.bf16.mxu0 %v8188
    %9006 = vmatmul.mubr.bf16.gmra.mxu0 %v8060
    %v9007 = vpop.f32.mrf.mxu0
    %v9008 = vadd.f32 %v8635, %v9007
    %v9009 = vpop.f32.mrf.mxu0
    %v9010 = vpop.f32.mrf.mxu0
    %v9011 = vadd.f32 %v8635, %v9010
    %v9012 = vpop.f32.mrf.mxu0
    %9013 = vmatprep.mubr.bf16.mxu0 %v8192
    %9014 = vmatmul.mubr.bf16.gmra.mxu0 %v8064
    %v9015 = vpop.f32.mrf.mxu0
    %v9016 = vadd.f32 %v8635, %v9015
    %v9017 = vpop.f32.mrf.mxu0
    %v9018 = vpop.f32.mrf.mxu0
    %v9019 = vadd.f32 %v8635, %v9018
    %v9020 = vpop.f32.mrf.mxu0
    %9021 = vmatprep.mubr.bf16.mxu0 %v8196
    %9022 = vmatmul.mubr.bf16.gmra.mxu0 %v8068
    %v9023 = vpop.f32.mrf.mxu0
    %v9024 = vadd.f32 %v8635, %v9023
    %v9025 = vpop.f32.mrf.mxu0
    %v9026 = vpop.f32.mrf.mxu0
    %v9027 = vadd.f32 %v8635, %v9026
    %v9028 = vpop.f32.mrf.mxu0
    %9029 = vmatprep.mubr.bf16.mxu0 %v8200
    %9030 = vmatmul.mubr.bf16.gmra.mxu0 %v8072
    %v9031 = vpop.f32.mrf.mxu0
    %v9032 = vadd.f32 %v8635, %v9031
    %v9033 = vpop.f32.mrf.mxu0
    %v9034 = vpop.f32.mrf.mxu0
    %v9035 = vadd.f32 %v8635, %v9034
    %v9036 = vpop.f32.mrf.mxu0
    %9037 = vmatprep.mubr.bf16.mxu0 %v8204
    %9038 = vmatmul.mubr.bf16.gmra.mxu0 %v8076
    %v9039 = vpop.f32.mrf.mxu0
    %v9040 = vadd.f32 %v8635, %v9039
    %v9041 = vpop.f32.mrf.mxu0
    %v9042 = vpop.f32.mrf.mxu0
    %v9043 = vadd.f32 %v8635, %v9042
    %v9044 = vpop.f32.mrf.mxu0
    %9045 = vmatprep.mubr.bf16.mxu0 %v8208
    %9046 = vmatmul.mubr.bf16.gmra.mxu0 %v8080
    %v9047 = vpop.f32.mrf.mxu0
    %v9048 = vadd.f32 %v8635, %v9047
    %v9049 = vpop.f32.mrf.mxu0
    %v9050 = vpop.f32.mrf.mxu0
    %v9051 = vadd.f32 %v8635, %v9050
    %v9052 = vpop.f32.mrf.mxu0
    %9053 = vmatprep.mubr.bf16.mxu0 %v8212
    %9054 = vmatmul.mubr.bf16.gmra.mxu0 %v8084
    %v9055 = vpop.f32.mrf.mxu0
    %v9056 = vadd.f32 %v8635, %v9055
    %v9057 = vpop.f32.mrf.mxu0
    %v9058 = vpop.f32.mrf.mxu0
    %v9059 = vadd.f32 %v8635, %v9058
    %v9060 = vpop.f32.mrf.mxu0
    %9061 = vmatprep.mubr.bf16.mxu0 %v8216
    %9062 = vmatmul.mubr.bf16.gmra.mxu0 %v8088
    %v9063 = vpop.f32.mrf.mxu0
    %v9064 = vadd.f32 %v8635, %v9063
    %v9065 = vpop.f32.mrf.mxu0
    %v9066 = vpop.f32.mrf.mxu0
    %v9067 = vadd.f32 %v8635, %v9066
    %v9068 = vpop.f32.mrf.mxu0
    %9069 = vmatprep.mubr.bf16.mxu0 %v8220
    %9070 = vmatmul.mubr.bf16.gmra.mxu0 %v8092
    %v9071 = vpop.f32.mrf.mxu0
    %v9072 = vadd.f32 %v8635, %v9071
    %v9073 = vpop.f32.mrf.mxu0
    %v9074 = vpop.f32.mrf.mxu0
    %v9075 = vadd.f32 %v8635, %v9074
    %v9076 = vpop.f32.mrf.mxu0
    %9077 = vmatprep.mubr.bf16.mxu0 %v8224
    %9078 = vmatmul.mubr.bf16.gmra.mxu0 %v8096
    %v9079 = vpop.f32.mrf.mxu0
    %v9080 = vadd.f32 %v8635, %v9079
    %v9081 = vpop.f32.mrf.mxu0
    %v9082 = vpop.f32.mrf.mxu0
    %v9083 = vadd.f32 %v8635, %v9082
    %v9084 = vpop.f32.mrf.mxu0
    %9085 = vmatprep.mubr.bf16.mxu0 %v8228
    %9086 = vmatmul.mubr.bf16.gmra.mxu0 %v8100
    %v9087 = vpop.f32.mrf.mxu0
    %v9088 = vadd.f32 %v8635, %v9087
    %v9089 = vpop.f32.mrf.mxu0
    %v9090 = vpop.f32.mrf.mxu0
    %v9091 = vadd.f32 %v8635, %v9090
    %v9092 = vpop.f32.mrf.mxu0
    %9093 = vmatprep.mubr.bf16.mxu0 %v8232
    %9094 = vmatmul.mubr.bf16.gmra.mxu0 %v8104
    %v9095 = vpop.f32.mrf.mxu0
    %v9096 = vadd.f32 %v8635, %v9095
    %v9097 = vpop.f32.mrf.mxu0
    %v9098 = vpop.f32.mrf.mxu0
    %v9099 = vadd.f32 %v8635, %v9098
    %v9100 = vpop.f32.mrf.mxu0
    %9101 = vmatprep.mubr.bf16.mxu0 %v8236
    %9102 = vmatmul.mubr.bf16.gmra.mxu0 %v8108
    %v9103 = vpop.f32.mrf.mxu0
    %v9104 = vadd.f32 %v8635, %v9103
    %v9105 = vpop.f32.mrf.mxu0
    %v9106 = vpop.f32.mrf.mxu0
    %v9107 = vadd.f32 %v8635, %v9106
    %v9108 = vpop.f32.mrf.mxu0
    %9109 = vmatprep.mubr.bf16.mxu0 %v8240
    %9110 = vmatmul.mubr.bf16.gmra.mxu0 %v8112
    %v9111 = vpop.f32.mrf.mxu0
    %v9112 = vadd.f32 %v8635, %v9111
    %v9113 = vpop.f32.mrf.mxu0
    %v9114 = vpop.f32.mrf.mxu0
    %v9115 = vadd.f32 %v8635, %v9114
    %v9116 = vpop.f32.mrf.mxu0
    %9117 = vmatprep.mubr.bf16.mxu0 %v8244
    %9118 = vmatmul.mubr.bf16.gmra.mxu0 %v8116
    %v9119 = vpop.f32.mrf.mxu0
    %v9120 = vadd.f32 %v8635, %v9119
    %v9121 = vpop.f32.mrf.mxu0
    %v9122 = vpop.f32.mrf.mxu0
    %v9123 = vadd.f32 %v8635, %v9122
    %v9124 = vpop.f32.mrf.mxu0
    %9125 = vmatprep.mubr.bf16.mxu0 %v8248
    %9126 = vmatmul.mubr.bf16.gmra.mxu0 %v8120
    %v9127 = vpop.f32.mrf.mxu0
    %v9128 = vadd.f32 %v8635, %v9127
    %v9129 = vpop.f32.mrf.mxu0
    %v9130 = vpop.f32.mrf.mxu0
    %v9131 = vadd.f32 %v8635, %v9130
    %v9132 = vpop.f32.mrf.mxu0
    %9133 = vmatprep.mubr.bf16.mxu0 %v8252
    %9134 = vmatmul.mubr.bf16.gmra.mxu0 %v8124
    %v9135 = vpop.f32.mrf.mxu0
    %v9136 = vadd.f32 %v8635, %v9135
    %v9137 = vpop.f32.mrf.mxu0
    %v9138 = vpop.f32.mrf.mxu0
    %v9139 = vadd.f32 %v8635, %v9138
    %v9140 = vpop.f32.mrf.mxu0
    %9141 = vmatprep.mubr.bf16.mxu0 %v8256
    %9142 = vmatmul.mubr.bf16.gmra.mxu0 %v8128
    %v9143 = vpop.f32.mrf.mxu0
    %v9144 = vadd.f32 %v8635, %v9143
    %v9145 = vpop.f32.mrf.mxu0
    %v9146 = vpop.f32.mrf.mxu0
    %v9147 = vadd.f32 %v8635, %v9146
    %v9148 = vpop.f32.mrf.mxu0
    %9149 = vmatprep.mubr.bf16.mxu0 %v8260
    %9150 = vmatmul.mubr.bf16.gmra.mxu0 %v8132
    %v9151 = vpop.f32.mrf.mxu0
    %v9152 = vadd.f32 %v8635, %v9151
    %v9153 = vpop.f32.mrf.mxu0
    %v9154 = vpop.f32.mrf.mxu0
    %v9155 = vadd.f32 %v8635, %v9154
    %v9156 = vpop.f32.mrf.mxu0
    %9157 = vmatprep.mubr.bf16.mxu0 %v8264
    %9158 = vmatmul.mubr.bf16.gmra.mxu0 %v8136
    %v9159 = vpop.f32.mrf.mxu0
    %v9160 = vadd.f32 %v8635, %v9159
    %v9161 = vpop.f32.mrf.mxu0
    %v9162 = vpop.f32.mrf.mxu0
    %v9163 = vadd.f32 %v8635, %v9162
    %v9164 = vpop.f32.mrf.mxu0
    %9165 = vmatprep.mubr.bf16.mxu0 %v8268
    %9166 = vmatmul.mubr.bf16.gmra.mxu0 %v8140
    %v9167 = vpop.f32.mrf.mxu0
    %v9168 = vadd.f32 %v8635, %v9167
    %v9169 = vpop.f32.mrf.mxu0
    %v9170 = vpop.f32.mrf.mxu0
    %v9171 = vadd.f32 %v8635, %v9170
    %v9172 = vpop.f32.mrf.mxu0
    %9173 = vmatprep.mubr.bf16.mxu0 %v8272
    %9174 = vmatmul.mubr.bf16.gmra.mxu0 %v8144
    %v9175 = vpop.f32.mrf.mxu0
    %v9176 = vadd.f32 %v8635, %v9175
    %v9177 = vpop.f32.mrf.mxu0
    %v9178 = vpop.f32.mrf.mxu0
    %v9179 = vadd.f32 %v8635, %v9178
    %v9180 = vpop.f32.mrf.mxu0
    %9181 = vmatprep.mubr.bf16.mxu0 %v8276
    %9182 = vmatmul.mubr.bf16.gmra.mxu0 %v8148
    %v9183 = vpop.f32.mrf.mxu0
    %v9184 = vadd.f32 %v8635, %v9183
    %v9185 = vpop.f32.mrf.mxu0
    %v9186 = vpop.f32.mrf.mxu0
    %v9187 = vadd.f32 %v8635, %v9186
    %v9188 = vpop.f32.mrf.mxu0
    %9189 = vmatprep.mubr.bf16.mxu0 %v8280
    %9190 = vmatmul.mubr.bf16.gmra.mxu0 %v8152
    %v9191 = vpop.f32.mrf.mxu0
    %v9192 = vadd.f32 %v8635, %v9191
    %v9193 = vpop.f32.mrf.mxu0
    %v9194 = vpop.f32.mrf.mxu0
    %v9195 = vadd.f32 %v8635, %v9194
    %v9196 = vpop.f32.mrf.mxu0
    %9197 = vmatprep.mubr.bf16.mxu0 %v8284
    %9198 = vmatmul.mubr.bf16.gmra.mxu0 %v8156
    %v9199 = vpop.f32.mrf.mxu0
    %v9200 = vadd.f32 %v8635, %v9199
    %v9201 = vpop.f32.mrf.mxu0
    %v9202 = vpop.f32.mrf.mxu0
    %v9203 = vadd.f32 %v8635, %v9202
    %v9204 = vpop.f32.mrf.mxu0
    %9205 = vmatprep.mubr.bf16.mxu0 %v8288
    %9206 = vmatmul.mubr.bf16.gmra.mxu0 %v8160
    %v9207 = vpop.f32.mrf.mxu0
    %v9208 = vadd.f32 %v8635, %v9207
    %v9209 = vpop.f32.mrf.mxu0
    %v9210 = vpop.f32.mrf.mxu0
    %v9211 = vadd.f32 %v8635, %v9210
    %v9212 = vpop.f32.mrf.mxu0
    %9213 = vmatprep.mubr.bf16.mxu0 %v8292
    %9214 = vmatmul.mubr.bf16.gmra.mxu0 %v8164
    %v9215 = vpop.f32.mrf.mxu0
    %v9216 = vadd.f32 %v8635, %v9215
    %v9217 = vpop.f32.mrf.mxu0
    %v9218 = vpop.f32.mrf.mxu0
    %v9219 = vadd.f32 %v8635, %v9218
    %v9220 = vpop.f32.mrf.mxu0
    %9221 = vmatprep.mubr.bf16.mxu0 %v8296
    %9222 = vmatmul.mubr.bf16.gmra.mxu0 %v8168
    %v9223 = vpop.f32.mrf.mxu0
    %v9224 = vadd.f32 %v8635, %v9223
    %v9225 = vpop.f32.mrf.mxu0
    %v9226 = vpop.f32.mrf.mxu0
    %v9227 = vadd.f32 %v8635, %v9226
    %v9228 = vpop.f32.mrf.mxu0
    %9229 = vmatprep.mubr.bf16.mxu0 %v8300
    %9230 = vmatmul.mubr.bf16.gmra.mxu0 %v8172
    %v9231 = vpop.f32.mrf.mxu0
    %v9232 = vadd.f32 %v8635, %v9231
    %v9233 = vpop.f32.mrf.mxu0
    %v9234 = vpop.f32.mrf.mxu0
    %v9235 = vadd.f32 %v8635, %v9234
    %v9236 = vpop.f32.mrf.mxu0
    %9237 = vdwg.mxu0
    %9238 = vmatprep.subr.bf16.mxu0 0
    %9239 = vmatpush1.bf16.msra.mxu0 %v8804
    %9240 = vmatprep.subr.bf16.mxu0 0
    %9241 = vmatpush1.bf16.msra.mxu0 %v8803
    %9242 = vmatprep.subr.bf16.mxu0 0
    %9243 = vmatpush1.bf16.msra.mxu0 %v8802
    %9244 = vmatprep.subr.bf16.mxu0 0
    %9245 = vmatpush1.bf16.msra.mxu0 %v8801
    %9246 = vmatprep.subr.bf16.mxu0 0
    %9247 = vmatpush1.bf16.msra.mxu0 %v8800
    %9248 = vmatprep.subr.bf16.mxu0 0
    %9249 = vmatpush1.bf16.msra.mxu0 %v8799
    %9250 = vmatprep.subr.bf16.mxu0 0
    %9251 = vmatpush1.bf16.msra.mxu0 %v8798
    %9252 = vmatprep.subr.bf16.mxu0 0
    %9253 = vmatpush1.bf16.msra.mxu0 %v8797
    %9254 = vmatprep.subr.bf16.mxu0 0
    %9255 = vmatpush2.bf16.msra.mxu0 %v8812
    %9256 = vmatprep.subr.bf16.mxu0 0
    %9257 = vmatpush2.bf16.msra.mxu0 %v8811
    %9258 = vmatprep.subr.bf16.mxu0 0
    %9259 = vmatpush2.bf16.msra.mxu0 %v8810
    %9260 = vmatprep.subr.bf16.mxu0 0
    %9261 = vmatpush2.bf16.msra.mxu0 %v8809
    %9262 = vmatprep.subr.bf16.mxu0 0
    %9263 = vmatpush2.bf16.msra.mxu0 %v8808
    %9264 = vmatprep.subr.bf16.mxu0 0
    %9265 = vmatpush2.bf16.msra.mxu0 %v8807
    %9266 = vmatprep.subr.bf16.mxu0 0
    %9267 = vmatpush2.bf16.msra.mxu0 %v8806
    %9268 = vmatprep.subr.bf16.mxu0 0
    %9269 = vmatpush2.bf16.msra.mxu0 %v8805
    %9270 = vmatprep.mubr.bf16.mxu0 %v8432
    %9271 = vmatmul.mubr.bf16.gmra.mxu0 %v8304
    %v9272 = vpop.f32.mrf.mxu0
    %v9273 = vadd.f32 %v8984, %v9272
    %v9274 = vpop.f32.mrf.mxu0
    %v9275 = vpop.f32.mrf.mxu0
    %v9276 = vadd.f32 %v8987, %v9275
    %v9277 = vpop.f32.mrf.mxu0
    %9278 = vmatprep.mubr.bf16.mxu0 %v8436
    %9279 = vmatmul.mubr.bf16.gmra.mxu0 %v8308
    %v9280 = vpop.f32.mrf.mxu0
    %v9281 = vadd.f32 %v8992, %v9280
    %v9282 = vpop.f32.mrf.mxu0
    %v9283 = vpop.f32.mrf.mxu0
    %v9284 = vadd.f32 %v8995, %v9283
    %v9285 = vpop.f32.mrf.mxu0
    %9286 = vmatprep.mubr.bf16.mxu0 %v8440
    %9287 = vmatmul.mubr.bf16.gmra.mxu0 %v8312
    %v9288 = vpop.f32.mrf.mxu0
    %v9289 = vadd.f32 %v9000, %v9288
    %v9290 = vpop.f32.mrf.mxu0
    %v9291 = vpop.f32.mrf.mxu0
    %v9292 = vadd.f32 %v9003, %v9291
    %v9293 = vpop.f32.mrf.mxu0
    %9294 = vmatprep.mubr.bf16.mxu0 %v8444
    %9295 = vmatmul.mubr.bf16.gmra.mxu0 %v8316
    %v9296 = vpop.f32.mrf.mxu0
    %v9297 = vadd.f32 %v9008, %v9296
    %v9298 = vpop.f32.mrf.mxu0
    %v9299 = vpop.f32.mrf.mxu0
    %v9300 = vadd.f32 %v9011, %v9299
    %v9301 = vpop.f32.mrf.mxu0
    %9302 = vmatprep.mubr.bf16.mxu0 %v8448
    %9303 = vmatmul.mubr.bf16.gmra.mxu0 %v8320
    %v9304 = vpop.f32.mrf.mxu0
    %v9305 = vadd.f32 %v9016, %v9304
    %v9306 = vpop.f32.mrf.mxu0
    %v9307 = vpop.f32.mrf.mxu0
    %v9308 = vadd.f32 %v9019, %v9307
    %v9309 = vpop.f32.mrf.mxu0
    %9310 = vmatprep.mubr.bf16.mxu0 %v8452
    %9311 = vmatmul.mubr.bf16.gmra.mxu0 %v8324
    %v9312 = vpop.f32.mrf.mxu0
    %v9313 = vadd.f32 %v9024, %v9312
    %v9314 = vpop.f32.mrf.mxu0
    %v9315 = vpop.f32.mrf.mxu0
    %v9316 = vadd.f32 %v9027, %v9315
    %v9317 = vpop.f32.mrf.mxu0
    %9318 = vmatprep.mubr.bf16.mxu0 %v8456
    %9319 = vmatmul.mubr.bf16.gmra.mxu0 %v8328
    %v9320 = vpop.f32.mrf.mxu0
    %v9321 = vadd.f32 %v9032, %v9320
    %v9322 = vpop.f32.mrf.mxu0
    %v9323 = vpop.f32.mrf.mxu0
    %v9324 = vadd.f32 %v9035, %v9323
    %v9325 = vpop.f32.mrf.mxu0
    %9326 = vmatprep.mubr.bf16.mxu0 %v8460
    %9327 = vmatmul.mubr.bf16.gmra.mxu0 %v8332
    %v9328 = vpop.f32.mrf.mxu0
    %v9329 = vadd.f32 %v9040, %v9328
    %v9330 = vpop.f32.mrf.mxu0
    %v9331 = vpop.f32.mrf.mxu0
    %v9332 = vadd.f32 %v9043, %v9331
    %v9333 = vpop.f32.mrf.mxu0
    %9334 = vmatprep.mubr.bf16.mxu0 %v8464
    %9335 = vmatmul.mubr.bf16.gmra.mxu0 %v8336
    %v9336 = vpop.f32.mrf.mxu0
    %v9337 = vadd.f32 %v9048, %v9336
    %v9338 = vpop.f32.mrf.mxu0
    %v9339 = vpop.f32.mrf.mxu0
    %v9340 = vadd.f32 %v9051, %v9339
    %v9341 = vpop.f32.mrf.mxu0
    %9342 = vmatprep.mubr.bf16.mxu0 %v8468
    %9343 = vmatmul.mubr.bf16.gmra.mxu0 %v8340
    %v9344 = vpop.f32.mrf.mxu0
    %v9345 = vadd.f32 %v9056, %v9344
    %v9346 = vpop.f32.mrf.mxu0
    %v9347 = vpop.f32.mrf.mxu0
    %v9348 = vadd.f32 %v9059, %v9347
    %v9349 = vpop.f32.mrf.mxu0
    %9350 = vmatprep.mubr.bf16.mxu0 %v8472
    %9351 = vmatmul.mubr.bf16.gmra.mxu0 %v8344
    %v9352 = vpop.f32.mrf.mxu0
    %v9353 = vadd.f32 %v9064, %v9352
    %v9354 = vpop.f32.mrf.mxu0
    %v9355 = vpop.f32.mrf.mxu0
    %v9356 = vadd.f32 %v9067, %v9355
    %v9357 = vpop.f32.mrf.mxu0
    %9358 = vmatprep.mubr.bf16.mxu0 %v8476
    %9359 = vmatmul.mubr.bf16.gmra.mxu0 %v8348
    %v9360 = vpop.f32.mrf.mxu0
    %v9361 = vadd.f32 %v9072, %v9360
    %v9362 = vpop.f32.mrf.mxu0
    %v9363 = vpop.f32.mrf.mxu0
    %v9364 = vadd.f32 %v9075, %v9363
    %v9365 = vpop.f32.mrf.mxu0
    %9366 = vmatprep.mubr.bf16.mxu0 %v8480
    %9367 = vmatmul.mubr.bf16.gmra.mxu0 %v8352
    %v9368 = vpop.f32.mrf.mxu0
    %v9369 = vadd.f32 %v9080, %v9368
    %v9370 = vpop.f32.mrf.mxu0
    %v9371 = vpop.f32.mrf.mxu0
    %v9372 = vadd.f32 %v9083, %v9371
    %v9373 = vpop.f32.mrf.mxu0
    %9374 = vmatprep.mubr.bf16.mxu0 %v8484
    %9375 = vmatmul.mubr.bf16.gmra.mxu0 %v8356
    %v9376 = vpop.f32.mrf.mxu0
    %v9377 = vadd.f32 %v9088, %v9376
    %v9378 = vpop.f32.mrf.mxu0
    %v9379 = vpop.f32.mrf.mxu0
    %v9380 = vadd.f32 %v9091, %v9379
    %v9381 = vpop.f32.mrf.mxu0
    %9382 = vmatprep.mubr.bf16.mxu0 %v8488
    %9383 = vmatmul.mubr.bf16.gmra.mxu0 %v8360
    %v9384 = vpop.f32.mrf.mxu0
    %v9385 = vadd.f32 %v9096, %v9384
    %v9386 = vpop.f32.mrf.mxu0
    %v9387 = vpop.f32.mrf.mxu0
    %v9388 = vadd.f32 %v9099, %v9387
    %v9389 = vpop.f32.mrf.mxu0
    %9390 = vmatprep.mubr.bf16.mxu0 %v8492
    %9391 = vmatmul.mubr.bf16.gmra.mxu0 %v8364
    %v9392 = vpop.f32.mrf.mxu0
    %v9393 = vadd.f32 %v9104, %v9392
    %v9394 = vpop.f32.mrf.mxu0
    %v9395 = vpop.f32.mrf.mxu0
    %v9396 = vadd.f32 %v9107, %v9395
    %v9397 = vpop.f32.mrf.mxu0
    %9398 = vmatprep.mubr.bf16.mxu0 %v8496
    %9399 = vmatmul.mubr.bf16.gmra.mxu0 %v8368
    %v9400 = vpop.f32.mrf.mxu0
    %v9401 = vadd.f32 %v9112, %v9400
    %v9402 = vpop.f32.mrf.mxu0
    %v9403 = vpop.f32.mrf.mxu0
    %v9404 = vadd.f32 %v9115, %v9403
    %v9405 = vpop.f32.mrf.mxu0
    %9406 = vmatprep.mubr.bf16.mxu0 %v8500
    %9407 = vmatmul.mubr.bf16.gmra.mxu0 %v8372
    %v9408 = vpop.f32.mrf.mxu0
    %v9409 = vadd.f32 %v9120, %v9408
    %v9410 = vpop.f32.mrf.mxu0
    %v9411 = vpop.f32.mrf.mxu0
    %v9412 = vadd.f32 %v9123, %v9411
    %v9413 = vpop.f32.mrf.mxu0
    %9414 = vmatprep.mubr.bf16.mxu0 %v8504
    %9415 = vmatmul.mubr.bf16.gmra.mxu0 %v8376
    %v9416 = vpop.f32.mrf.mxu0
    %v9417 = vadd.f32 %v9128, %v9416
    %v9418 = vpop.f32.mrf.mxu0
    %v9419 = vpop.f32.mrf.mxu0
    %v9420 = vadd.f32 %v9131, %v9419
    %v9421 = vpop.f32.mrf.mxu0
    %9422 = vmatprep.mubr.bf16.mxu0 %v8508
    %9423 = vmatmul.mubr.bf16.gmra.mxu0 %v8380
    %v9424 = vpop.f32.mrf.mxu0
    %v9425 = vadd.f32 %v9136, %v9424
    %v9426 = vpop.f32.mrf.mxu0
    %v9427 = vpop.f32.mrf.mxu0
    %v9428 = vadd.f32 %v9139, %v9427
    %v9429 = vpop.f32.mrf.mxu0
    %9430 = vmatprep.mubr.bf16.mxu0 %v8512
    %9431 = vmatmul.mubr.bf16.gmra.mxu0 %v8384
    %v9432 = vpop.f32.mrf.mxu0
    %v9433 = vadd.f32 %v9144, %v9432
    %v9434 = vpop.f32.mrf.mxu0
    %v9435 = vpop.f32.mrf.mxu0
    %v9436 = vadd.f32 %v9147, %v9435
    %v9437 = vpop.f32.mrf.mxu0
    %9438 = vmatprep.mubr.bf16.mxu0 %v8516
    %9439 = vmatmul.mubr.bf16.gmra.mxu0 %v8388
    %v9440 = vpop.f32.mrf.mxu0
    %v9441 = vadd.f32 %v9152, %v9440
    %v9442 = vpop.f32.mrf.mxu0
    %v9443 = vpop.f32.mrf.mxu0
    %v9444 = vadd.f32 %v9155, %v9443
    %v9445 = vpop.f32.mrf.mxu0
    %9446 = vmatprep.mubr.bf16.mxu0 %v8520
    %9447 = vmatmul.mubr.bf16.gmra.mxu0 %v8392
    %v9448 = vpop.f32.mrf.mxu0
    %v9449 = vadd.f32 %v9160, %v9448
    %v9450 = vpop.f32.mrf.mxu0
    %v9451 = vpop.f32.mrf.mxu0
    %v9452 = vadd.f32 %v9163, %v9451
    %v9453 = vpop.f32.mrf.mxu0
    %9454 = vmatprep.mubr.bf16.mxu0 %v8524
    %9455 = vmatmul.mubr.bf16.gmra.mxu0 %v8396
    %v9456 = vpop.f32.mrf.mxu0
    %v9457 = vadd.f32 %v9168, %v9456
    %v9458 = vpop.f32.mrf.mxu0
    %v9459 = vpop.f32.mrf.mxu0
    %v9460 = vadd.f32 %v9171, %v9459
    %v9461 = vpop.f32.mrf.mxu0
    %9462 = vmatprep.mubr.bf16.mxu0 %v8528
    %9463 = vmatmul.mubr.bf16.gmra.mxu0 %v8400
    %v9464 = vpop.f32.mrf.mxu0
    %v9465 = vadd.f32 %v9176, %v9464
    %v9466 = vpop.f32.mrf.mxu0
    %v9467 = vpop.f32.mrf.mxu0
    %v9468 = vadd.f32 %v9179, %v9467
    %v9469 = vpop.f32.mrf.mxu0
    %9470 = vmatprep.mubr.bf16.mxu0 %v8532
    %9471 = vmatmul.mubr.bf16.gmra.mxu0 %v8404
    %v9472 = vpop.f32.mrf.mxu0
    %v9473 = vadd.f32 %v9184, %v9472
    %v9474 = vpop.f32.mrf.mxu0
    %v9475 = vpop.f32.mrf.mxu0
    %v9476 = vadd.f32 %v9187, %v9475
    %v9477 = vpop.f32.mrf.mxu0
    %9478 = vmatprep.mubr.bf16.mxu0 %v8536
    %9479 = vmatmul.mubr.bf16.gmra.mxu0 %v8408
    %v9480 = vpop.f32.mrf.mxu0
    %v9481 = vadd.f32 %v9192, %v9480
    %v9482 = vpop.f32.mrf.mxu0
    %v9483 = vpop.f32.mrf.mxu0
    %v9484 = vadd.f32 %v9195, %v9483
    %v9485 = vpop.f32.mrf.mxu0
    %9486 = vmatprep.mubr.bf16.mxu0 %v8540
    %9487 = vmatmul.mubr.bf16.gmra.mxu0 %v8412
    %v9488 = vpop.f32.mrf.mxu0
    %v9489 = vadd.f32 %v9200, %v9488
    %v9490 = vpop.f32.mrf.mxu0
    %v9491 = vpop.f32.mrf.mxu0
    %v9492 = vadd.f32 %v9203, %v9491
    %v9493 = vpop.f32.mrf.mxu0
    %9494 = vmatprep.mubr.bf16.mxu0 %v8544
    %9495 = vmatmul.mubr.bf16.gmra.mxu0 %v8416
    %v9496 = vpop.f32.mrf.mxu0
    %v9497 = vadd.f32 %v9208, %v9496
    %v9498 = vpop.f32.mrf.mxu0
    %v9499 = vpop.f32.mrf.mxu0
    %v9500 = vadd.f32 %v9211, %v9499
    %v9501 = vpop.f32.mrf.mxu0
    %9502 = vmatprep.mubr.bf16.mxu0 %v8548
    %9503 = vmatmul.mubr.bf16.gmra.mxu0 %v8420
    %v9504 = vpop.f32.mrf.mxu0
    %v9505 = vadd.f32 %v9216, %v9504
    %v9506 = vpop.f32.mrf.mxu0
    %v9507 = vpop.f32.mrf.mxu0
    %v9508 = vadd.f32 %v9219, %v9507
    %v9509 = vpop.f32.mrf.mxu0
    %9510 = vmatprep.mubr.bf16.mxu0 %v8552
    %9511 = vmatmul.mubr.bf16.gmra.mxu0 %v8424
    %v9512 = vpop.f32.mrf.mxu0
    %v9513 = vadd.f32 %v9224, %v9512
    %v9514 = vpop.f32.mrf.mxu0
    %v9515 = vpop.f32.mrf.mxu0
    %v9516 = vadd.f32 %v9227, %v9515
    %v9517 = vpop.f32.mrf.mxu0
    %9518 = vmatprep.mubr.bf16.mxu0 %v8556
    %9519 = vmatmul.mubr.bf16.gmra.mxu0 %v8428
    %v9520 = vpop.f32.mrf.mxu0
    %v9521 = vadd.f32 %v9232, %v9520
    %v9522 = vpop.f32.mrf.mxu0
    %v9523 = vpop.f32.mrf.mxu0
    %v9524 = vadd.f32 %v9235, %v9523
    %v9525 = vpop.f32.mrf.mxu0
    %9526 = vdwg.mxu0
    %9527 = vmatprep.subr.bf16.mxu0 0
    %9528 = vmatpush1.bf16.msra.mxu0 0
    %9529 = vmatprep.subr.bf16.mxu0 0
    %9530 = vmatpush1.bf16.msra.mxu0 0
    %9531 = vmatprep.subr.bf16.mxu0 0
    %9532 = vmatpush1.bf16.msra.mxu0 0
    %9533 = vmatprep.subr.bf16.mxu0 0
    %9534 = vmatpush1.bf16.msra.mxu0 0
    %9535 = vmatprep.subr.bf16.mxu0 0
    %9536 = vmatpush1.bf16.msra.mxu0 %v8816
    %9537 = vmatprep.subr.bf16.mxu0 0
    %9538 = vmatpush1.bf16.msra.mxu0 %v8815
    %9539 = vmatprep.subr.bf16.mxu0 0
    %9540 = vmatpush1.bf16.msra.mxu0 %v8814
    %9541 = vmatprep.subr.bf16.mxu0 0
    %9542 = vmatpush1.bf16.msra.mxu0 %v8813
    %9543 = vmatprep.subr.bf16.mxu0 0
    %9544 = vmatpush2.bf16.msra.mxu0 0
    %9545 = vmatprep.subr.bf16.mxu0 0
    %9546 = vmatpush2.bf16.msra.mxu0 0
    %9547 = vmatprep.subr.bf16.mxu0 0
    %9548 = vmatpush2.bf16.msra.mxu0 0
    %9549 = vmatprep.subr.bf16.mxu0 0
    %9550 = vmatpush2.bf16.msra.mxu0 0
    %9551 = vmatprep.subr.bf16.mxu0 0
    %9552 = vmatpush2.bf16.msra.mxu0 0
    %9553 = vmatprep.subr.bf16.mxu0 0
    %9554 = vmatpush2.bf16.msra.mxu0 0
    %9555 = vmatprep.subr.bf16.mxu0 0
    %9556 = vmatpush2.bf16.msra.mxu0 0
    %9557 = vmatprep.subr.bf16.mxu0 0
    %9558 = vmatpush2.bf16.msra.mxu0 0
    %9559 = vmatprep.mubr.bf16.mxu0 0
    %9560 = vmatmul.mubr.bf16.gmra.mxu0 %v8854
    %v9561 = vpop.f32.mrf.mxu0
    %v9562 = vadd.f32 %v9273, %v9561
    %v9563 = vpop.f32.mrf.mxu0
    %v9564 = vpop.f32.mrf.mxu0
    %v9565 = vadd.f32 %v9276, %v9564
    %v9566 = vpop.f32.mrf.mxu0
    %9567 = vmatprep.mubr.bf16.mxu0 0
    %9568 = vmatmul.mubr.bf16.gmra.mxu0 %v8857
    %v9569 = vpop.f32.mrf.mxu0
    %v9570 = vadd.f32 %v9281, %v9569
    %v9571 = vpop.f32.mrf.mxu0
    %v9572 = vpop.f32.mrf.mxu0
    %v9573 = vadd.f32 %v9284, %v9572
    %v9574 = vpop.f32.mrf.mxu0
    %9575 = vmatprep.mubr.bf16.mxu0 0
    %9576 = vmatmul.mubr.bf16.gmra.mxu0 %v8860
    %v9577 = vpop.f32.mrf.mxu0
    %v9578 = vadd.f32 %v9289, %v9577
    %v9579 = vpop.f32.mrf.mxu0
    %v9580 = vpop.f32.mrf.mxu0
    %v9581 = vadd.f32 %v9292, %v9580
    %v9582 = vpop.f32.mrf.mxu0
    %9583 = vmatprep.mubr.bf16.mxu0 0
    %9584 = vmatmul.mubr.bf16.gmra.mxu0 %v8863
    %v9585 = vpop.f32.mrf.mxu0
    %v9586 = vadd.f32 %v9297, %v9585
    %v9587 = vpop.f32.mrf.mxu0
    %v9588 = vpop.f32.mrf.mxu0
    %v9589 = vadd.f32 %v9300, %v9588
    %v9590 = vpop.f32.mrf.mxu0
    %9591 = vmatprep.mubr.bf16.mxu0 0
    %9592 = vmatmul.mubr.bf16.gmra.mxu0 %v8866
    %v9593 = vpop.f32.mrf.mxu0
    %v9594 = vadd.f32 %v9305, %v9593
    %v9595 = vpop.f32.mrf.mxu0
    %v9596 = vpop.f32.mrf.mxu0
    %v9597 = vadd.f32 %v9308, %v9596
    %v9598 = vpop.f32.mrf.mxu0
    %9599 = vmatprep.mubr.bf16.mxu0 0
    %9600 = vmatmul.mubr.bf16.gmra.mxu0 %v8869
    %v9601 = vpop.f32.mrf.mxu0
    %v9602 = vadd.f32 %v9313, %v9601
    %v9603 = vpop.f32.mrf.mxu0
    %v9604 = vpop.f32.mrf.mxu0
    %v9605 = vadd.f32 %v9316, %v9604
    %v9606 = vpop.f32.mrf.mxu0
    %9607 = vmatprep.mubr.bf16.mxu0 0
    %9608 = vmatmul.mubr.bf16.gmra.mxu0 %v8872
    %v9609 = vpop.f32.mrf.mxu0
    %v9610 = vadd.f32 %v9321, %v9609
    %v9611 = vpop.f32.mrf.mxu0
    %v9612 = vpop.f32.mrf.mxu0
    %v9613 = vadd.f32 %v9324, %v9612
    %v9614 = vpop.f32.mrf.mxu0
    %9615 = vmatprep.mubr.bf16.mxu0 0
    %9616 = vmatmul.mubr.bf16.gmra.mxu0 %v8875
    %v9617 = vpop.f32.mrf.mxu0
    %v9618 = vadd.f32 %v9329, %v9617
    %v9619 = vpop.f32.mrf.mxu0
    %v9620 = vpop.f32.mrf.mxu0
    %v9621 = vadd.f32 %v9332, %v9620
    %v9622 = vpop.f32.mrf.mxu0
    %9623 = vmatprep.mubr.bf16.mxu0 0
    %9624 = vmatmul.mubr.bf16.gmra.mxu0 %v8878
    %v9625 = vpop.f32.mrf.mxu0
    %v9626 = vadd.f32 %v9337, %v9625
    %v9627 = vpop.f32.mrf.mxu0
    %v9628 = vpop.f32.mrf.mxu0
    %v9629 = vadd.f32 %v9340, %v9628
    %v9630 = vpop.f32.mrf.mxu0
    %9631 = vmatprep.mubr.bf16.mxu0 0
    %9632 = vmatmul.mubr.bf16.gmra.mxu0 %v8881
    %v9633 = vpop.f32.mrf.mxu0
    %v9634 = vadd.f32 %v9345, %v9633
    %v9635 = vpop.f32.mrf.mxu0
    %v9636 = vpop.f32.mrf.mxu0
    %v9637 = vadd.f32 %v9348, %v9636
    %v9638 = vpop.f32.mrf.mxu0
    %9639 = vmatprep.mubr.bf16.mxu0 0
    %9640 = vmatmul.mubr.bf16.gmra.mxu0 %v8884
    %v9641 = vpop.f32.mrf.mxu0
    %v9642 = vadd.f32 %v9353, %v9641
    %v9643 = vpop.f32.mrf.mxu0
    %v9644 = vpop.f32.mrf.mxu0
    %v9645 = vadd.f32 %v9356, %v9644
    %v9646 = vpop.f32.mrf.mxu0
    %9647 = vmatprep.mubr.bf16.mxu0 0
    %9648 = vmatmul.mubr.bf16.gmra.mxu0 %v8887
    %v9649 = vpop.f32.mrf.mxu0
    %v9650 = vadd.f32 %v9361, %v9649
    %v9651 = vpop.f32.mrf.mxu0
    %v9652 = vpop.f32.mrf.mxu0
    %v9653 = vadd.f32 %v9364, %v9652
    %v9654 = vpop.f32.mrf.mxu0
    %9655 = vmatprep.mubr.bf16.mxu0 0
    %9656 = vmatmul.mubr.bf16.gmra.mxu0 %v8890
    %v9657 = vpop.f32.mrf.mxu0
    %v9658 = vadd.f32 %v9369, %v9657
    %v9659 = vpop.f32.mrf.mxu0
    %v9660 = vpop.f32.mrf.mxu0
    %v9661 = vadd.f32 %v9372, %v9660
    %v9662 = vpop.f32.mrf.mxu0
    %9663 = vmatprep.mubr.bf16.mxu0 0
    %9664 = vmatmul.mubr.bf16.gmra.mxu0 %v8893
    %v9665 = vpop.f32.mrf.mxu0
    %v9666 = vadd.f32 %v9377, %v9665
    %v9667 = vpop.f32.mrf.mxu0
    %v9668 = vpop.f32.mrf.mxu0
    %v9669 = vadd.f32 %v9380, %v9668
    %v9670 = vpop.f32.mrf.mxu0
    %9671 = vmatprep.mubr.bf16.mxu0 0
    %9672 = vmatmul.mubr.bf16.gmra.mxu0 %v8896
    %v9673 = vpop.f32.mrf.mxu0
    %v9674 = vadd.f32 %v9385, %v9673
    %v9675 = vpop.f32.mrf.mxu0
    %v9676 = vpop.f32.mrf.mxu0
    %v9677 = vadd.f32 %v9388, %v9676
    %v9678 = vpop.f32.mrf.mxu0
    %9679 = vmatprep.mubr.bf16.mxu0 0
    %9680 = vmatmul.mubr.bf16.gmra.mxu0 %v8899
    %v9681 = vpop.f32.mrf.mxu0
    %v9682 = vadd.f32 %v9393, %v9681
    %v9683 = vpop.f32.mrf.mxu0
    %v9684 = vpop.f32.mrf.mxu0
    %v9685 = vadd.f32 %v9396, %v9684
    %v9686 = vpop.f32.mrf.mxu0
    %9687 = vmatprep.mubr.bf16.mxu0 0
    %9688 = vmatmul.mubr.bf16.gmra.mxu0 %v8902
    %v9689 = vpop.f32.mrf.mxu0
    %v9690 = vadd.f32 %v9401, %v9689
    %v9691 = vpop.f32.mrf.mxu0
    %v9692 = vpop.f32.mrf.mxu0
    %v9693 = vadd.f32 %v9404, %v9692
    %v9694 = vpop.f32.mrf.mxu0
    %9695 = vmatprep.mubr.bf16.mxu0 0
    %9696 = vmatmul.mubr.bf16.gmra.mxu0 %v8905
    %v9697 = vpop.f32.mrf.mxu0
    %v9698 = vadd.f32 %v9409, %v9697
    %v9699 = vpop.f32.mrf.mxu0
    %v9700 = vpop.f32.mrf.mxu0
    %v9701 = vadd.f32 %v9412, %v9700
    %v9702 = vpop.f32.mrf.mxu0
    %9703 = vmatprep.mubr.bf16.mxu0 0
    %9704 = vmatmul.mubr.bf16.gmra.mxu0 %v8908
    %v9705 = vpop.f32.mrf.mxu0
    %v9706 = vadd.f32 %v9417, %v9705
    %v9707 = vpop.f32.mrf.mxu0
    %v9708 = vpop.f32.mrf.mxu0
    %v9709 = vadd.f32 %v9420, %v9708
    %v9710 = vpop.f32.mrf.mxu0
    %9711 = vmatprep.mubr.bf16.mxu0 0
    %9712 = vmatmul.mubr.bf16.gmra.mxu0 %v8911
    %v9713 = vpop.f32.mrf.mxu0
    %v9714 = vadd.f32 %v9425, %v9713
    %v9715 = vpop.f32.mrf.mxu0
    %v9716 = vpop.f32.mrf.mxu0
    %v9717 = vadd.f32 %v9428, %v9716
    %v9718 = vpop.f32.mrf.mxu0
    %9719 = vmatprep.mubr.bf16.mxu0 0
    %9720 = vmatmul.mubr.bf16.gmra.mxu0 %v8914
    %v9721 = vpop.f32.mrf.mxu0
    %v9722 = vadd.f32 %v9433, %v9721
    %v9723 = vpop.f32.mrf.mxu0
    %v9724 = vpop.f32.mrf.mxu0
    %v9725 = vadd.f32 %v9436, %v9724
    %v9726 = vpop.f32.mrf.mxu0
    %9727 = vmatprep.mubr.bf16.mxu0 0
    %9728 = vmatmul.mubr.bf16.gmra.mxu0 %v8917
    %v9729 = vpop.f32.mrf.mxu0
    %v9730 = vadd.f32 %v9441, %v9729
    %v9731 = vpop.f32.mrf.mxu0
    %v9732 = vpop.f32.mrf.mxu0
    %v9733 = vadd.f32 %v9444, %v9732
    %v9734 = vpop.f32.mrf.mxu0
    %9735 = vmatprep.mubr.bf16.mxu0 0
    %9736 = vmatmul.mubr.bf16.gmra.mxu0 %v8920
    %v9737 = vpop.f32.mrf.mxu0
    %v9738 = vadd.f32 %v9449, %v9737
    %v9739 = vpop.f32.mrf.mxu0
    %v9740 = vpop.f32.mrf.mxu0
    %v9741 = vadd.f32 %v9452, %v9740
    %v9742 = vpop.f32.mrf.mxu0
    %9743 = vmatprep.mubr.bf16.mxu0 0
    %9744 = vmatmul.mubr.bf16.gmra.mxu0 %v8923
    %v9745 = vpop.f32.mrf.mxu0
    %v9746 = vadd.f32 %v9457, %v9745
    %v9747 = vpop.f32.mrf.mxu0
    %v9748 = vpop.f32.mrf.mxu0
    %v9749 = vadd.f32 %v9460, %v9748
    %v9750 = vpop.f32.mrf.mxu0
    %9751 = vmatprep.mubr.bf16.mxu0 0
    %9752 = vmatmul.mubr.bf16.gmra.mxu0 %v8926
    %v9753 = vpop.f32.mrf.mxu0
    %v9754 = vadd.f32 %v9465, %v9753
    %v9755 = vpop.f32.mrf.mxu0
    %v9756 = vpop.f32.mrf.mxu0
    %v9757 = vadd.f32 %v9468, %v9756
    %v9758 = vpop.f32.mrf.mxu0
    %9759 = vmatprep.mubr.bf16.mxu0 0
    %9760 = vmatmul.mubr.bf16.gmra.mxu0 %v8929
    %v9761 = vpop.f32.mrf.mxu0
    %v9762 = vadd.f32 %v9473, %v9761
    %v9763 = vpop.f32.mrf.mxu0
    %v9764 = vpop.f32.mrf.mxu0
    %v9765 = vadd.f32 %v9476, %v9764
    %v9766 = vpop.f32.mrf.mxu0
    %9767 = vmatprep.mubr.bf16.mxu0 0
    %9768 = vmatmul.mubr.bf16.gmra.mxu0 %v8932
    %v9769 = vpop.f32.mrf.mxu0
    %v9770 = vadd.f32 %v9481, %v9769
    %v9771 = vpop.f32.mrf.mxu0
    %v9772 = vpop.f32.mrf.mxu0
    %v9773 = vadd.f32 %v9484, %v9772
    %v9774 = vpop.f32.mrf.mxu0
    %9775 = vmatprep.mubr.bf16.mxu0 0
    %9776 = vmatmul.mubr.bf16.gmra.mxu0 %v8935
    %v9777 = vpop.f32.mrf.mxu0
    %v9778 = vadd.f32 %v9489, %v9777
    %v9779 = vpop.f32.mrf.mxu0
    %v9780 = vpop.f32.mrf.mxu0
    %v9781 = vadd.f32 %v9492, %v9780
    %v9782 = vpop.f32.mrf.mxu0
    %9783 = vmatprep.mubr.bf16.mxu0 0
    %9784 = vmatmul.mubr.bf16.gmra.mxu0 %v8938
    %v9785 = vpop.f32.mrf.mxu0
    %v9786 = vadd.f32 %v9497, %v9785
    %v9787 = vpop.f32.mrf.mxu0
    %v9788 = vpop.f32.mrf.mxu0
    %v9789 = vadd.f32 %v9500, %v9788
    %v9790 = vpop.f32.mrf.mxu0
    %9791 = vmatprep.mubr.bf16.mxu0 0
    %9792 = vmatmul.mubr.bf16.gmra.mxu0 %v8941
    %v9793 = vpop.f32.mrf.mxu0
    %v9794 = vadd.f32 %v9505, %v9793
    %v9795 = vpop.f32.mrf.mxu0
    %v9796 = vpop.f32.mrf.mxu0
    %v9797 = vadd.f32 %v9508, %v9796
    %v9798 = vpop.f32.mrf.mxu0
    %9799 = vmatprep.mubr.bf16.mxu0 0
    %9800 = vmatmul.mubr.bf16.gmra.mxu0 %v8944
    %v9801 = vpop.f32.mrf.mxu0
    %v9802 = vadd.f32 %v9513, %v9801
    %v9803 = vpop.f32.mrf.mxu0
    %v9804 = vpop.f32.mrf.mxu0
    %v9805 = vadd.f32 %v9516, %v9804
    %v9806 = vpop.f32.mrf.mxu0
    %9807 = vmatprep.mubr.bf16.mxu0 0
    %9808 = vmatmul.mubr.bf16.gmra.mxu0 %v8947
    %v9809 = vpop.f32.mrf.mxu0
    %v9810 = vadd.f32 %v9521, %v9809
    %v9811 = vpop.f32.mrf.mxu0
    %v9812 = vpop.f32.mrf.mxu0
    %v9813 = vadd.f32 %v9524, %v9812
    %v9814 = vpop.f32.mrf.mxu0
    %9815 = vdwg.mxu0
    %v9816 = vld [vmem:[%s9] sm:$0x1]
    %v9817 = vld [vmem:[%s10] sm:$0x1]
    %v9818 = vsel %vm112, %v9562, 0.0
    %v9819 = vsel %vm112, %v9565, 0.0
    %v9820 = vadd.f32 %v9818, %v9819
    %v9821 = vsel %vm112, %v9570, 0.0
    %v9822 = vadd.f32 %v9820, %v9821
    %v9823 = vsel %vm112, %v9573, 0.0
    %v9824 = vadd.f32 %v9822, %v9823
    %v9825 = vsel %vm112, %v9578, 0.0
    %v9826 = vadd.f32 %v9824, %v9825
    %v9827 = vsel %vm112, %v9581, 0.0
    %v9828 = vadd.f32 %v9826, %v9827
    %v9829 = vsel %vm112, %v9586, 0.0
    %v9830 = vadd.f32 %v9828, %v9829
    %v9831 = vsel %vm112, %v9589, 0.0
    %v9832 = vadd.f32 %v9830, %v9831
    %v9833 = vsel %vm112, %v9594, 0.0
    %v9834 = vadd.f32 %v9832, %v9833
    %v9835 = vsel %vm112, %v9597, 0.0
    %v9836 = vadd.f32 %v9834, %v9835
    %v9837 = vsel %vm112, %v9602, 0.0
    %v9838 = vadd.f32 %v9836, %v9837
    %v9839 = vsel %vm112, %v9605, 0.0
    %v9840 = vadd.f32 %v9838, %v9839
    %v9841 = vsel %vm112, %v9610, 0.0
    %v9842 = vadd.f32 %v9840, %v9841
    %v9843 = vsel %vm112, %v9613, 0.0
    %v9844 = vadd.f32 %v9842, %v9843
    %v9845 = vsel %vm112, %v9618, 0.0
    %v9846 = vadd.f32 %v9844, %v9845
    %v9847 = vsel %vm112, %v9621, 0.0
    %v9848 = vadd.f32 %v9846, %v9847
    %v9849 = vsel %vm112, %v9626, 0.0
    %v9850 = vadd.f32 %v9848, %v9849
    %v9851 = vsel %vm112, %v9629, 0.0
    %v9852 = vadd.f32 %v9850, %v9851
    %v9853 = vsel %vm112, %v9634, 0.0
    %v9854 = vadd.f32 %v9852, %v9853
    %v9855 = vsel %vm112, %v9637, 0.0
    %v9856 = vadd.f32 %v9854, %v9855
    %v9857 = vsel %vm112, %v9642, 0.0
    %v9858 = vadd.f32 %v9856, %v9857
    %v9859 = vsel %vm112, %v9645, 0.0
    %v9860 = vadd.f32 %v9858, %v9859
    %v9861 = vsel %vm112, %v9650, 0.0
    %v9862 = vadd.f32 %v9860, %v9861
    %v9863 = vsel %vm112, %v9653, 0.0
    %v9864 = vadd.f32 %v9862, %v9863
    %v9865 = vsel %vm112, %v9658, 0.0
    %v9866 = vadd.f32 %v9864, %v9865
    %v9867 = vsel %vm112, %v9661, 0.0
    %v9868 = vadd.f32 %v9866, %v9867
    %v9869 = vsel %vm112, %v9666, 0.0
    %v9870 = vadd.f32 %v9868, %v9869
    %v9871 = vsel %vm112, %v9669, 0.0
    %v9872 = vadd.f32 %v9870, %v9871
    %v9873 = vsel %vm112, %v9674, 0.0
    %v9874 = vadd.f32 %v9872, %v9873
    %v9875 = vsel %vm112, %v9677, 0.0
    %v9876 = vadd.f32 %v9874, %v9875
    %v9877 = vsel %vm112, %v9682, 0.0
    %v9878 = vadd.f32 %v9876, %v9877
    %v9879 = vsel %vm112, %v9685, 0.0
    %v9880 = vadd.f32 %v9878, %v9879
    %v9881 = vsel %vm112, %v9690, 0.0
    %v9882 = vadd.f32 %v9880, %v9881
    %v9883 = vsel %vm112, %v9693, 0.0
    %v9884 = vadd.f32 %v9882, %v9883
    %v9885 = vsel %vm112, %v9698, 0.0
    %v9886 = vadd.f32 %v9884, %v9885
    %v9887 = vsel %vm112, %v9701, 0.0
    %v9888 = vadd.f32 %v9886, %v9887
    %v9889 = vsel %vm112, %v9706, 0.0
    %v9890 = vadd.f32 %v9888, %v9889
    %v9891 = vsel %vm112, %v9709, 0.0
    %v9892 = vadd.f32 %v9890, %v9891
    %v9893 = vsel %vm112, %v9714, 0.0
    %v9894 = vadd.f32 %v9892, %v9893
    %v9895 = vsel %vm112, %v9717, 0.0
    %v9896 = vadd.f32 %v9894, %v9895
    %v9897 = vsel %vm112, %v9722, 0.0
    %v9898 = vadd.f32 %v9896, %v9897
    %v9899 = vsel %vm112, %v9725, 0.0
    %v9900 = vadd.f32 %v9898, %v9899
    %v9901 = vsel %vm112, %v9730, 0.0
    %v9902 = vadd.f32 %v9900, %v9901
    %v9903 = vsel %vm112, %v9733, 0.0
    %v9904 = vadd.f32 %v9902, %v9903
    %v9905 = vsel %vm112, %v9738, 0.0
    %v9906 = vadd.f32 %v9904, %v9905
    %v9907 = vsel %vm112, %v9741, 0.0
    %v9908 = vadd.f32 %v9906, %v9907
    %v9909 = vsel %vm112, %v9746, 0.0
    %v9910 = vadd.f32 %v9908, %v9909
    %v9911 = vsel %vm112, %v9749, 0.0
    %v9912 = vadd.f32 %v9910, %v9911
    %v9913 = vsel %vm112, %v9754, 0.0
    %v9914 = vadd.f32 %v9912, %v9913
    %v9915 = vsel %vm112, %v9757, 0.0
    %v9916 = vadd.f32 %v9914, %v9915
    %v9917 = vsel %vm112, %v9762, 0.0
    %v9918 = vadd.f32 %v9916, %v9917
    %v9919 = vsel %vm112, %v9765, 0.0
    %v9920 = vadd.f32 %v9918, %v9919
    %v9921 = vsel %vm112, %v9770, 0.0
    %v9922 = vadd.f32 %v9920, %v9921
    %v9923 = vsel %vm112, %v9773, 0.0
    %v9924 = vadd.f32 %v9922, %v9923
    %v9925 = vsel %vm112, %v9778, 0.0
    %v9926 = vadd.f32 %v9924, %v9925
    %v9927 = vsel %vm112, %v9781, 0.0
    %v9928 = vadd.f32 %v9926, %v9927
    %v9929 = vsel %vm112, %v9786, 0.0
    %v9930 = vadd.f32 %v9928, %v9929
    %v9931 = vsel %vm112, %v9789, 0.0
    %v9932 = vadd.f32 %v9930, %v9931
    %v9933 = vsel %vm112, %v9794, 0.0
    %v9934 = vadd.f32 %v9932, %v9933
    %v9935 = vsel %vm112, %v9797, 0.0
    %v9936 = vadd.f32 %v9934, %v9935
    %v9937 = vsel %vm112, %v9802, 0.0
    %v9938 = vadd.f32 %v9936, %v9937
    %v9939 = vsel %vm112, %v9805, 0.0
    %v9940 = vadd.f32 %v9938, %v9939
    %v9941 = vsel %vm112, %v9810, 0.0
    %v9942 = vadd.f32 %v9940, %v9941
    %v9943 = vsel %vm112, %v9813, 0.0
    %v9944 = vadd.f32 %v9942, %v9943
    %v9945 = vrot.slane %v9944, 4
    %v9946 = vadd.f32 %v9944, %v9945
    %v9947 = vrot.slane %v9946, 2
    %v9948 = vadd.f32 %v9946, %v9947
    %v9949 = vrot.slane %v9948, 1
    %v9950 = vadd.f32 %v9948, %v9949
    %v9951 = vmul.f32 %v9950, 0.001953125
    %v9952 = vsub.f32 %v9562, %v9951
    %v9953 = vsub.f32 %v9565, %v9951
    %v9954 = vsub.f32 %v9570, %v9951
    %v9955 = vsub.f32 %v9573, %v9951
    %v9956 = vsub.f32 %v9578, %v9951
    %v9957 = vsub.f32 %v9581, %v9951
    %v9958 = vsub.f32 %v9586, %v9951
    %v9959 = vsub.f32 %v9589, %v9951
    %v9960 = vsub.f32 %v9594, %v9951
    %v9961 = vsub.f32 %v9597, %v9951
    %v9962 = vsub.f32 %v9602, %v9951
    %v9963 = vsub.f32 %v9605, %v9951
    %v9964 = vsub.f32 %v9610, %v9951
    %v9965 = vsub.f32 %v9613, %v9951
    %v9966 = vsub.f32 %v9618, %v9951
    %v9967 = vsub.f32 %v9621, %v9951
    %v9968 = vsub.f32 %v9626, %v9951
    %v9969 = vsub.f32 %v9629, %v9951
    %v9970 = vsub.f32 %v9634, %v9951
    %v9971 = vsub.f32 %v9637, %v9951
    %v9972 = vsub.f32 %v9642, %v9951
    %v9973 = vsub.f32 %v9645, %v9951
    %v9974 = vsub.f32 %v9650, %v9951
    %v9975 = vsub.f32 %v9653, %v9951
    %v9976 = vsub.f32 %v9658, %v9951
    %v9977 = vsub.f32 %v9661, %v9951
    %v9978 = vsub.f32 %v9666, %v9951
    %v9979 = vsub.f32 %v9669, %v9951
    %v9980 = vsub.f32 %v9674, %v9951
    %v9981 = vsub.f32 %v9677, %v9951
    %v9982 = vsub.f32 %v9682, %v9951
    %v9983 = vsub.f32 %v9685, %v9951
    %v9984 = vsub.f32 %v9690, %v9951
    %v9985 = vsub.f32 %v9693, %v9951
    %v9986 = vsub.f32 %v9698, %v9951
    %v9987 = vsub.f32 %v9701, %v9951
    %v9988 = vsub.f32 %v9706, %v9951
    %v9989 = vsub.f32 %v9709, %v9951
    %v9990 = vsub.f32 %v9714, %v9951
    %v9991 = vsub.f32 %v9717, %v9951
    %v9992 = vsub.f32 %v9722, %v9951
    %v9993 = vsub.f32 %v9725, %v9951
    %v9994 = vsub.f32 %v9730, %v9951
    %v9995 = vsub.f32 %v9733, %v9951
    %v9996 = vsub.f32 %v9738, %v9951
    %v9997 = vsub.f32 %v9741, %v9951
    %v9998 = vsub.f32 %v9746, %v9951
    %v9999 = vsub.f32 %v9749, %v9951
    %v10000 = vsub.f32 %v9754, %v9951
    %v10001 = vsub.f32 %v9757, %v9951
    %v10002 = vsub.f32 %v9762, %v9951
    %v10003 = vsub.f32 %v9765, %v9951
    %v10004 = vsub.f32 %v9770, %v9951
    %v10005 = vsub.f32 %v9773, %v9951
    %v10006 = vsub.f32 %v9778, %v9951
    %v10007 = vsub.f32 %v9781, %v9951
    %v10008 = vsub.f32 %v9786, %v9951
    %v10009 = vsub.f32 %v9789, %v9951
    %v10010 = vsub.f32 %v9794, %v9951
    %v10011 = vsub.f32 %v9797, %v9951
    %v10012 = vsub.f32 %v9802, %v9951
    %v10013 = vsub.f32 %v9805, %v9951
    %v10014 = vsub.f32 %v9810, %v9951
    %v10015 = vsub.f32 %v9813, %v9951
    %v10016 = vmul.f32 %v9952, %v9952
    %v10017 = vmul.f32 %v9953, %v9953
    %v10018 = vmul.f32 %v9954, %v9954
    %v10019 = vmul.f32 %v9955, %v9955
    %v10020 = vmul.f32 %v9956, %v9956
    %v10021 = vmul.f32 %v9957, %v9957
    %v10022 = vmul.f32 %v9958, %v9958
    %v10023 = vmul.f32 %v9959, %v9959
    %v10024 = vmul.f32 %v9960, %v9960
    %v10025 = vmul.f32 %v9961, %v9961
    %v10026 = vmul.f32 %v9962, %v9962
    %v10027 = vmul.f32 %v9963, %v9963
    %v10028 = vmul.f32 %v9964, %v9964
    %v10029 = vmul.f32 %v9965, %v9965
    %v10030 = vmul.f32 %v9966, %v9966
    %v10031 = vmul.f32 %v9967, %v9967
    %v10032 = vmul.f32 %v9968, %v9968
    %v10033 = vmul.f32 %v9969, %v9969
    %v10034 = vmul.f32 %v9970, %v9970
    %v10035 = vmul.f32 %v9971, %v9971
    %v10036 = vmul.f32 %v9972, %v9972
    %v10037 = vmul.f32 %v9973, %v9973
    %v10038 = vmul.f32 %v9974, %v9974
    %v10039 = vmul.f32 %v9975, %v9975
    %v10040 = vmul.f32 %v9976, %v9976
    %v10041 = vmul.f32 %v9977, %v9977
    %v10042 = vmul.f32 %v9978, %v9978
    %v10043 = vmul.f32 %v9979, %v9979
    %v10044 = vmul.f32 %v9980, %v9980
    %v10045 = vmul.f32 %v9981, %v9981
    %v10046 = vmul.f32 %v9982, %v9982
    %v10047 = vmul.f32 %v9983, %v9983
    %v10048 = vmul.f32 %v9984, %v9984
    %v10049 = vmul.f32 %v9985, %v9985
    %v10050 = vmul.f32 %v9986, %v9986
    %v10051 = vmul.f32 %v9987, %v9987
    %v10052 = vmul.f32 %v9988, %v9988
    %v10053 = vmul.f32 %v9989, %v9989
    %v10054 = vmul.f32 %v9990, %v9990
    %v10055 = vmul.f32 %v9991, %v9991
    %v10056 = vmul.f32 %v9992, %v9992
    %v10057 = vmul.f32 %v9993, %v9993
    %v10058 = vmul.f32 %v9994, %v9994
    %v10059 = vmul.f32 %v9995, %v9995
    %v10060 = vmul.f32 %v9996, %v9996
    %v10061 = vmul.f32 %v9997, %v9997
    %v10062 = vmul.f32 %v9998, %v9998
    %v10063 = vmul.f32 %v9999, %v9999
    %v10064 = vmul.f32 %v10000, %v10000
    %v10065 = vmul.f32 %v10001, %v10001
    %v10066 = vmul.f32 %v10002, %v10002
    %v10067 = vmul.f32 %v10003, %v10003
    %v10068 = vmul.f32 %v10004, %v10004
    %v10069 = vmul.f32 %v10005, %v10005
    %v10070 = vmul.f32 %v10006, %v10006
    %v10071 = vmul.f32 %v10007, %v10007
    %v10072 = vmul.f32 %v10008, %v10008
    %v10073 = vmul.f32 %v10009, %v10009
    %v10074 = vmul.f32 %v10010, %v10010
    %v10075 = vmul.f32 %v10011, %v10011
    %v10076 = vmul.f32 %v10012, %v10012
    %v10077 = vmul.f32 %v10013, %v10013
    %v10078 = vmul.f32 %v10014, %v10014
    %v10079 = vmul.f32 %v10015, %v10015
    %v10080 = vsel %vm112, %v10016, 0.0
    %v10081 = vsel %vm112, %v10017, 0.0
    %v10082 = vadd.f32 %v10080, %v10081
    %v10083 = vsel %vm112, %v10018, 0.0
    %v10084 = vadd.f32 %v10082, %v10083
    %v10085 = vsel %vm112, %v10019, 0.0
    %v10086 = vadd.f32 %v10084, %v10085
    %v10087 = vsel %vm112, %v10020, 0.0
    %v10088 = vadd.f32 %v10086, %v10087
    %v10089 = vsel %vm112, %v10021, 0.0
    %v10090 = vadd.f32 %v10088, %v10089
    %v10091 = vsel %vm112, %v10022, 0.0
    %v10092 = vadd.f32 %v10090, %v10091
    %v10093 = vsel %vm112, %v10023, 0.0
    %v10094 = vadd.f32 %v10092, %v10093
    %v10095 = vsel %vm112, %v10024, 0.0
    %v10096 = vadd.f32 %v10094, %v10095
    %v10097 = vsel %vm112, %v10025, 0.0
    %v10098 = vadd.f32 %v10096, %v10097
    %v10099 = vsel %vm112, %v10026, 0.0
    %v10100 = vadd.f32 %v10098, %v10099
    %v10101 = vsel %vm112, %v10027, 0.0
    %v10102 = vadd.f32 %v10100, %v10101
    %v10103 = vsel %vm112, %v10028, 0.0
    %v10104 = vadd.f32 %v10102, %v10103
    %v10105 = vsel %vm112, %v10029, 0.0
    %v10106 = vadd.f32 %v10104, %v10105
    %v10107 = vsel %vm112, %v10030, 0.0
    %v10108 = vadd.f32 %v10106, %v10107
    %v10109 = vsel %vm112, %v10031, 0.0
    %v10110 = vadd.f32 %v10108, %v10109
    %v10111 = vsel %vm112, %v10032, 0.0
    %v10112 = vadd.f32 %v10110, %v10111
    %v10113 = vsel %vm112, %v10033, 0.0
    %v10114 = vadd.f32 %v10112, %v10113
    %v10115 = vsel %vm112, %v10034, 0.0
    %v10116 = vadd.f32 %v10114, %v10115
    %v10117 = vsel %vm112, %v10035, 0.0
    %v10118 = vadd.f32 %v10116, %v10117
    %v10119 = vsel %vm112, %v10036, 0.0
    %v10120 = vadd.f32 %v10118, %v10119
    %v10121 = vsel %vm112, %v10037, 0.0
    %v10122 = vadd.f32 %v10120, %v10121
    %v10123 = vsel %vm112, %v10038, 0.0
    %v10124 = vadd.f32 %v10122, %v10123
    %v10125 = vsel %vm112, %v10039, 0.0
    %v10126 = vadd.f32 %v10124, %v10125
    %v10127 = vsel %vm112, %v10040, 0.0
    %v10128 = vadd.f32 %v10126, %v10127
    %v10129 = vsel %vm112, %v10041, 0.0
    %v10130 = vadd.f32 %v10128, %v10129
    %v10131 = vsel %vm112, %v10042, 0.0
    %v10132 = vadd.f32 %v10130, %v10131
    %v10133 = vsel %vm112, %v10043, 0.0
    %v10134 = vadd.f32 %v10132, %v10133
    %v10135 = vsel %vm112, %v10044, 0.0
    %v10136 = vadd.f32 %v10134, %v10135
    %v10137 = vsel %vm112, %v10045, 0.0
    %v10138 = vadd.f32 %v10136, %v10137
    %v10139 = vsel %vm112, %v10046, 0.0
    %v10140 = vadd.f32 %v10138, %v10139
    %v10141 = vsel %vm112, %v10047, 0.0
    %v10142 = vadd.f32 %v10140, %v10141
    %v10143 = vsel %vm112, %v10048, 0.0
    %v10144 = vadd.f32 %v10142, %v10143
    %v10145 = vsel %vm112, %v10049, 0.0
    %v10146 = vadd.f32 %v10144, %v10145
    %v10147 = vsel %vm112, %v10050, 0.0
    %v10148 = vadd.f32 %v10146, %v10147
    %v10149 = vsel %vm112, %v10051, 0.0
    %v10150 = vadd.f32 %v10148, %v10149
    %v10151 = vsel %vm112, %v10052, 0.0
    %v10152 = vadd.f32 %v10150, %v10151
    %v10153 = vsel %vm112, %v10053, 0.0
    %v10154 = vadd.f32 %v10152, %v10153
    %v10155 = vsel %vm112, %v10054, 0.0
    %v10156 = vadd.f32 %v10154, %v10155
    %v10157 = vsel %vm112, %v10055, 0.0
    %v10158 = vadd.f32 %v10156, %v10157
    %v10159 = vsel %vm112, %v10056, 0.0
    %v10160 = vadd.f32 %v10158, %v10159
    %v10161 = vsel %vm112, %v10057, 0.0
    %v10162 = vadd.f32 %v10160, %v10161
    %v10163 = vsel %vm112, %v10058, 0.0
    %v10164 = vadd.f32 %v10162, %v10163
    %v10165 = vsel %vm112, %v10059, 0.0
    %v10166 = vadd.f32 %v10164, %v10165
    %v10167 = vsel %vm112, %v10060, 0.0
    %v10168 = vadd.f32 %v10166, %v10167
    %v10169 = vsel %vm112, %v10061, 0.0
    %v10170 = vadd.f32 %v10168, %v10169
    %v10171 = vsel %vm112, %v10062, 0.0
    %v10172 = vadd.f32 %v10170, %v10171
    %v10173 = vsel %vm112, %v10063, 0.0
    %v10174 = vadd.f32 %v10172, %v10173
    %v10175 = vsel %vm112, %v10064, 0.0
    %v10176 = vadd.f32 %v10174, %v10175
    %v10177 = vsel %vm112, %v10065, 0.0
    %v10178 = vadd.f32 %v10176, %v10177
    %v10179 = vsel %vm112, %v10066, 0.0
    %v10180 = vadd.f32 %v10178, %v10179
    %v10181 = vsel %vm112, %v10067, 0.0
    %v10182 = vadd.f32 %v10180, %v10181
    %v10183 = vsel %vm112, %v10068, 0.0
    %v10184 = vadd.f32 %v10182, %v10183
    %v10185 = vsel %vm112, %v10069, 0.0
    %v10186 = vadd.f32 %v10184, %v10185
    %v10187 = vsel %vm112, %v10070, 0.0
    %v10188 = vadd.f32 %v10186, %v10187
    %v10189 = vsel %vm112, %v10071, 0.0
    %v10190 = vadd.f32 %v10188, %v10189
    %v10191 = vsel %vm112, %v10072, 0.0
    %v10192 = vadd.f32 %v10190, %v10191
    %v10193 = vsel %vm112, %v10073, 0.0
    %v10194 = vadd.f32 %v10192, %v10193
    %v10195 = vsel %vm112, %v10074, 0.0
    %v10196 = vadd.f32 %v10194, %v10195
    %v10197 = vsel %vm112, %v10075, 0.0
    %v10198 = vadd.f32 %v10196, %v10197
    %v10199 = vsel %vm112, %v10076, 0.0
    %v10200 = vadd.f32 %v10198, %v10199
    %v10201 = vsel %vm112, %v10077, 0.0
    %v10202 = vadd.f32 %v10200, %v10201
    %v10203 = vsel %vm112, %v10078, 0.0
    %v10204 = vadd.f32 %v10202, %v10203
    %v10205 = vsel %vm112, %v10079, 0.0
    %v10206 = vadd.f32 %v10204, %v10205
    %v10207 = vrot.slane %v10206, 4
    %v10208 = vadd.f32 %v10206, %v10207
    %v10209 = vrot.slane %v10208, 2
    %v10210 = vadd.f32 %v10208, %v10209
    %v10211 = vrot.slane %v10210, 1
    %v10212 = vadd.f32 %v10210, %v10211
    %v10213 = vmul.f32 %v10212, 0.001953125
    %v10214 = vadd.f32 %v10213, 1e-05
    %v10215 = vrsqrt.pop %v10214
    %v10216 = vmul.f32 %v9952, %v10215
    %v10217 = vmul.f32 %v9953, %v10215
    %v10218 = vmul.f32 %v9954, %v10215
    %v10219 = vmul.f32 %v9955, %v10215
    %v10220 = vmul.f32 %v9956, %v10215
    %v10221 = vmul.f32 %v9957, %v10215
    %v10222 = vmul.f32 %v9958, %v10215
    %v10223 = vmul.f32 %v9959, %v10215
    %v10224 = vmul.f32 %v9960, %v10215
    %v10225 = vmul.f32 %v9961, %v10215
    %v10226 = vmul.f32 %v9962, %v10215
    %v10227 = vmul.f32 %v9963, %v10215
    %v10228 = vmul.f32 %v9964, %v10215
    %v10229 = vmul.f32 %v9965, %v10215
    %v10230 = vmul.f32 %v9966, %v10215
    %v10231 = vmul.f32 %v9967, %v10215
    %v10232 = vmul.f32 %v9968, %v10215
    %v10233 = vmul.f32 %v9969, %v10215
    %v10234 = vmul.f32 %v9970, %v10215
    %v10235 = vmul.f32 %v9971, %v10215
    %v10236 = vmul.f32 %v9972, %v10215
    %v10237 = vmul.f32 %v9973, %v10215
    %v10238 = vmul.f32 %v9974, %v10215
    %v10239 = vmul.f32 %v9975, %v10215
    %v10240 = vmul.f32 %v9976, %v10215
    %v10241 = vmul.f32 %v9977, %v10215
    %v10242 = vmul.f32 %v9978, %v10215
    %v10243 = vmul.f32 %v9979, %v10215
    %v10244 = vmul.f32 %v9980, %v10215
    %v10245 = vmul.f32 %v9981, %v10215
    %v10246 = vmul.f32 %v9982, %v10215
    %v10247 = vmul.f32 %v9983, %v10215
    %v10248 = vmul.f32 %v9984, %v10215
    %v10249 = vmul.f32 %v9985, %v10215
    %v10250 = vmul.f32 %v9986, %v10215
    %v10251 = vmul.f32 %v9987, %v10215
    %v10252 = vmul.f32 %v9988, %v10215
    %v10253 = vmul.f32 %v9989, %v10215
    %v10254 = vmul.f32 %v9990, %v10215
    %v10255 = vmul.f32 %v9991, %v10215
    %v10256 = vmul.f32 %v9992, %v10215
    %v10257 = vmul.f32 %v9993, %v10215
    %v10258 = vmul.f32 %v9994, %v10215
    %v10259 = vmul.f32 %v9995, %v10215
    %v10260 = vmul.f32 %v9996, %v10215
    %v10261 = vmul.f32 %v9997, %v10215
    %v10262 = vmul.f32 %v9998, %v10215
    %v10263 = vmul.f32 %v9999, %v10215
    %v10264 = vmul.f32 %v10000, %v10215
    %v10265 = vmul.f32 %v10001, %v10215
    %v10266 = vmul.f32 %v10002, %v10215
    %v10267 = vmul.f32 %v10003, %v10215
    %v10268 = vmul.f32 %v10004, %v10215
    %v10269 = vmul.f32 %v10005, %v10215
    %v10270 = vmul.f32 %v10006, %v10215
    %v10271 = vmul.f32 %v10007, %v10215
    %v10272 = vmul.f32 %v10008, %v10215
    %v10273 = vmul.f32 %v10009, %v10215
    %v10274 = vmul.f32 %v10010, %v10215
    %v10275 = vmul.f32 %v10011, %v10215
    %v10276 = vmul.f32 %v10012, %v10215
    %v10277 = vmul.f32 %v10013, %v10215
    %v10278 = vmul.f32 %v10014, %v10215
    %v10279 = vmul.f32 %v10015, %v10215
    %v10281 = vlaneseq
    %v10282 = vshrl.u32 %v10281, 7
    %v10283 = vsub.s32 0, %v10282
    %v10284 = vrot.slane %v9816, %v10283
    %v10286 = vmul.f32 %v10216, %v10284
    %v10287 = vmul.f32 %v10217, %v10284
    %v10288 = vmul.f32 %v10218, %v10284
    %v10289 = vmul.f32 %v10219, %v10284
    %v10290 = vmul.f32 %v10220, %v10284
    %v10291 = vmul.f32 %v10221, %v10284
    %v10292 = vmul.f32 %v10222, %v10284
    %v10293 = vmul.f32 %v10223, %v10284
    %v10294 = vmul.f32 %v10224, %v10284
    %v10295 = vmul.f32 %v10225, %v10284
    %v10296 = vmul.f32 %v10226, %v10284
    %v10297 = vmul.f32 %v10227, %v10284
    %v10298 = vmul.f32 %v10228, %v10284
    %v10299 = vmul.f32 %v10229, %v10284
    %v10300 = vmul.f32 %v10230, %v10284
    %v10301 = vmul.f32 %v10231, %v10284
    %v10302 = vmul.f32 %v10232, %v10284
    %v10303 = vmul.f32 %v10233, %v10284
    %v10304 = vmul.f32 %v10234, %v10284
    %v10305 = vmul.f32 %v10235, %v10284
    %v10306 = vmul.f32 %v10236, %v10284
    %v10307 = vmul.f32 %v10237, %v10284
    %v10308 = vmul.f32 %v10238, %v10284
    %v10309 = vmul.f32 %v10239, %v10284
    %v10310 = vmul.f32 %v10240, %v10284
    %v10311 = vmul.f32 %v10241, %v10284
    %v10312 = vmul.f32 %v10242, %v10284
    %v10313 = vmul.f32 %v10243, %v10284
    %v10314 = vmul.f32 %v10244, %v10284
    %v10315 = vmul.f32 %v10245, %v10284
    %v10316 = vmul.f32 %v10246, %v10284
    %v10317 = vmul.f32 %v10247, %v10284
    %v10318 = vmul.f32 %v10248, %v10284
    %v10319 = vmul.f32 %v10249, %v10284
    %v10320 = vmul.f32 %v10250, %v10284
    %v10321 = vmul.f32 %v10251, %v10284
    %v10322 = vmul.f32 %v10252, %v10284
    %v10323 = vmul.f32 %v10253, %v10284
    %v10324 = vmul.f32 %v10254, %v10284
    %v10325 = vmul.f32 %v10255, %v10284
    %v10326 = vmul.f32 %v10256, %v10284
    %v10327 = vmul.f32 %v10257, %v10284
    %v10328 = vmul.f32 %v10258, %v10284
    %v10329 = vmul.f32 %v10259, %v10284
    %v10330 = vmul.f32 %v10260, %v10284
    %v10331 = vmul.f32 %v10261, %v10284
    %v10332 = vmul.f32 %v10262, %v10284
    %v10333 = vmul.f32 %v10263, %v10284
    %v10334 = vmul.f32 %v10264, %v10284
    %v10335 = vmul.f32 %v10265, %v10284
    %v10336 = vmul.f32 %v10266, %v10284
    %v10337 = vmul.f32 %v10267, %v10284
    %v10338 = vmul.f32 %v10268, %v10284
    %v10339 = vmul.f32 %v10269, %v10284
    %v10340 = vmul.f32 %v10270, %v10284
    %v10341 = vmul.f32 %v10271, %v10284
    %v10342 = vmul.f32 %v10272, %v10284
    %v10343 = vmul.f32 %v10273, %v10284
    %v10344 = vmul.f32 %v10274, %v10284
    %v10345 = vmul.f32 %v10275, %v10284
    %v10346 = vmul.f32 %v10276, %v10284
    %v10347 = vmul.f32 %v10277, %v10284
    %v10348 = vmul.f32 %v10278, %v10284
    %v10349 = vmul.f32 %v10279, %v10284
    %v10351 = vlaneseq
    %v10352 = vshrl.u32 %v10351, 7
    %v10353 = vsub.s32 0, %v10352
    %v10354 = vrot.slane %v9817, %v10353
    %v10356 = vadd.f32 %v10286, %v10354
    %v10357 = vadd.f32 %v10287, %v10354
    %v10358 = vadd.f32 %v10288, %v10354
    %v10359 = vadd.f32 %v10289, %v10354
    %v10360 = vadd.f32 %v10290, %v10354
    %v10361 = vadd.f32 %v10291, %v10354
    %v10362 = vadd.f32 %v10292, %v10354
    %v10363 = vadd.f32 %v10293, %v10354
    %v10364 = vadd.f32 %v10294, %v10354
    %v10365 = vadd.f32 %v10295, %v10354
    %v10366 = vadd.f32 %v10296, %v10354
    %v10367 = vadd.f32 %v10297, %v10354
    %v10368 = vadd.f32 %v10298, %v10354
    %v10369 = vadd.f32 %v10299, %v10354
    %v10370 = vadd.f32 %v10300, %v10354
    %v10371 = vadd.f32 %v10301, %v10354
    %v10372 = vadd.f32 %v10302, %v10354
    %v10373 = vadd.f32 %v10303, %v10354
    %v10374 = vadd.f32 %v10304, %v10354
    %v10375 = vadd.f32 %v10305, %v10354
    %v10376 = vadd.f32 %v10306, %v10354
    %v10377 = vadd.f32 %v10307, %v10354
    %v10378 = vadd.f32 %v10308, %v10354
    %v10379 = vadd.f32 %v10309, %v10354
    %v10380 = vadd.f32 %v10310, %v10354
    %v10381 = vadd.f32 %v10311, %v10354
    %v10382 = vadd.f32 %v10312, %v10354
    %v10383 = vadd.f32 %v10313, %v10354
    %v10384 = vadd.f32 %v10314, %v10354
    %v10385 = vadd.f32 %v10315, %v10354
    %v10386 = vadd.f32 %v10316, %v10354
    %v10387 = vadd.f32 %v10317, %v10354
    %v10388 = vadd.f32 %v10318, %v10354
    %v10389 = vadd.f32 %v10319, %v10354
    %v10390 = vadd.f32 %v10320, %v10354
    %v10391 = vadd.f32 %v10321, %v10354
    %v10392 = vadd.f32 %v10322, %v10354
    %v10393 = vadd.f32 %v10323, %v10354
    %v10394 = vadd.f32 %v10324, %v10354
    %v10395 = vadd.f32 %v10325, %v10354
    %v10396 = vadd.f32 %v10326, %v10354
    %v10397 = vadd.f32 %v10327, %v10354
    %v10398 = vadd.f32 %v10328, %v10354
    %v10399 = vadd.f32 %v10329, %v10354
    %v10400 = vadd.f32 %v10330, %v10354
    %v10401 = vadd.f32 %v10331, %v10354
    %v10402 = vadd.f32 %v10332, %v10354
    %v10403 = vadd.f32 %v10333, %v10354
    %v10404 = vadd.f32 %v10334, %v10354
    %v10405 = vadd.f32 %v10335, %v10354
    %v10406 = vadd.f32 %v10336, %v10354
    %v10407 = vadd.f32 %v10337, %v10354
    %v10408 = vadd.f32 %v10338, %v10354
    %v10409 = vadd.f32 %v10339, %v10354
    %v10410 = vadd.f32 %v10340, %v10354
    %v10411 = vadd.f32 %v10341, %v10354
    %v10412 = vadd.f32 %v10342, %v10354
    %v10413 = vadd.f32 %v10343, %v10354
    %v10414 = vadd.f32 %v10344, %v10354
    %v10415 = vadd.f32 %v10345, %v10354
    %v10416 = vadd.f32 %v10346, %v10354
    %v10417 = vadd.f32 %v10347, %v10354
    %v10418 = vadd.f32 %v10348, %v10354
    %v10419 = vadd.f32 %v10349, %v10354
    %v10420 = vmax.f32 %v10356, 0.0
    %v10421 = vmax.f32 %v10357, 0.0
    %v10422 = vmax.f32 %v10358, 0.0
    %v10423 = vmax.f32 %v10359, 0.0
    %v10424 = vmax.f32 %v10360, 0.0
    %v10425 = vmax.f32 %v10361, 0.0
    %v10426 = vmax.f32 %v10362, 0.0
    %v10427 = vmax.f32 %v10363, 0.0
    %v10428 = vmax.f32 %v10364, 0.0
    %v10429 = vmax.f32 %v10365, 0.0
    %v10430 = vmax.f32 %v10366, 0.0
    %v10431 = vmax.f32 %v10367, 0.0
    %v10432 = vmax.f32 %v10368, 0.0
    %v10433 = vmax.f32 %v10369, 0.0
    %v10434 = vmax.f32 %v10370, 0.0
    %v10435 = vmax.f32 %v10371, 0.0
    %v10436 = vmax.f32 %v10372, 0.0
    %v10437 = vmax.f32 %v10373, 0.0
    %v10438 = vmax.f32 %v10374, 0.0
    %v10439 = vmax.f32 %v10375, 0.0
    %v10440 = vmax.f32 %v10376, 0.0
    %v10441 = vmax.f32 %v10377, 0.0
    %v10442 = vmax.f32 %v10378, 0.0
    %v10443 = vmax.f32 %v10379, 0.0
    %v10444 = vmax.f32 %v10380, 0.0
    %v10445 = vmax.f32 %v10381, 0.0
    %v10446 = vmax.f32 %v10382, 0.0
    %v10447 = vmax.f32 %v10383, 0.0
    %v10448 = vmax.f32 %v10384, 0.0
    %v10449 = vmax.f32 %v10385, 0.0
    %v10450 = vmax.f32 %v10386, 0.0
    %v10451 = vmax.f32 %v10387, 0.0
    %v10452 = vmax.f32 %v10388, 0.0
    %v10453 = vmax.f32 %v10389, 0.0
    %v10454 = vmax.f32 %v10390, 0.0
    %v10455 = vmax.f32 %v10391, 0.0
    %v10456 = vmax.f32 %v10392, 0.0
    %v10457 = vmax.f32 %v10393, 0.0
    %v10458 = vmax.f32 %v10394, 0.0
    %v10459 = vmax.f32 %v10395, 0.0
    %v10460 = vmax.f32 %v10396, 0.0
    %v10461 = vmax.f32 %v10397, 0.0
    %v10462 = vmax.f32 %v10398, 0.0
    %v10463 = vmax.f32 %v10399, 0.0
    %v10464 = vmax.f32 %v10400, 0.0
    %v10465 = vmax.f32 %v10401, 0.0
    %v10466 = vmax.f32 %v10402, 0.0
    %v10467 = vmax.f32 %v10403, 0.0
    %v10468 = vmax.f32 %v10404, 0.0
    %v10469 = vmax.f32 %v10405, 0.0
    %v10470 = vmax.f32 %v10406, 0.0
    %v10471 = vmax.f32 %v10407, 0.0
    %v10472 = vmax.f32 %v10408, 0.0
    %v10473 = vmax.f32 %v10409, 0.0
    %v10474 = vmax.f32 %v10410, 0.0
    %v10475 = vmax.f32 %v10411, 0.0
    %v10476 = vmax.f32 %v10412, 0.0
    %v10477 = vmax.f32 %v10413, 0.0
    %v10478 = vmax.f32 %v10414, 0.0
    %v10479 = vmax.f32 %v10415, 0.0
    %v10480 = vmax.f32 %v10416, 0.0
    %v10481 = vmax.f32 %v10417, 0.0
    %v10482 = vmax.f32 %v10418, 0.0
    %v10483 = vmax.f32 %v10419, 0.0
    %v10484 = vpack.c.bf16 %v10421, %v10420
    %v10485 = vpack.c.bf16 %v10423, %v10422
    %v10486 = vpack.c.bf16 %v10425, %v10424
    %v10487 = vpack.c.bf16 %v10427, %v10426
    %v10488 = vpack.c.bf16 %v10429, %v10428
    %v10489 = vpack.c.bf16 %v10431, %v10430
    %v10490 = vpack.c.bf16 %v10433, %v10432
    %v10491 = vpack.c.bf16 %v10435, %v10434
    %v10492 = vpack.c.bf16 %v10437, %v10436
    %v10493 = vpack.c.bf16 %v10439, %v10438
    %v10494 = vpack.c.bf16 %v10441, %v10440
    %v10495 = vpack.c.bf16 %v10443, %v10442
    %v10496 = vpack.c.bf16 %v10445, %v10444
    %v10497 = vpack.c.bf16 %v10447, %v10446
    %v10498 = vpack.c.bf16 %v10449, %v10448
    %v10499 = vpack.c.bf16 %v10451, %v10450
    %v10500 = vpack.c.bf16 %v10453, %v10452
    %v10501 = vpack.c.bf16 %v10455, %v10454
    %v10502 = vpack.c.bf16 %v10457, %v10456
    %v10503 = vpack.c.bf16 %v10459, %v10458
    %v10504 = vpack.c.bf16 %v10461, %v10460
    %v10505 = vpack.c.bf16 %v10463, %v10462
    %v10506 = vpack.c.bf16 %v10465, %v10464
    %v10507 = vpack.c.bf16 %v10467, %v10466
    %v10508 = vpack.c.bf16 %v10469, %v10468
    %v10509 = vpack.c.bf16 %v10471, %v10470
    %v10510 = vpack.c.bf16 %v10473, %v10472
    %v10511 = vpack.c.bf16 %v10475, %v10474
    %v10512 = vpack.c.bf16 %v10477, %v10476
    %v10513 = vpack.c.bf16 %v10479, %v10478
    %v10514 = vpack.c.bf16 %v10481, %v10480
    %v10515 = vpack.c.bf16 %v10483, %v10482
    %v10516 = vpack.c.bf16 %v47, %v46
    %v10517 = vpack.c.bf16 %v49, %v48
    %v10518 = vpack.c.bf16 %v51, %v50
    %v10519 = vpack.c.bf16 %v53, %v52
    %v10520 = vpack.c.bf16 %v55, %v54
    %v10521 = vpack.c.bf16 %v57, %v56
    %v10522 = vpack.c.bf16 %v59, %v58
    %v10523 = vpack.c.bf16 %v61, %v60
    %v10524 = vpack.c.bf16 %v63, %v62
    %v10525 = vpack.c.bf16 %v65, %v64
    %v10526 = vpack.c.bf16 %v67, %v66
    %v10527 = vpack.c.bf16 %v69, %v68
    %v10528 = vpack.c.bf16 %v71, %v70
    %v10529 = vpack.c.bf16 %v73, %v72
    %v10530 = vpack.c.bf16 %v75, %v74
    %v10531 = vpack.c.bf16 %v77, %v76
    %v10532 = vpack.c.bf16 %v79, %v78
    %v10533 = vpack.c.bf16 %v81, %v80
    %v10534 = vpack.c.bf16 %v83, %v82
    %v10535 = vpack.c.bf16 %v85, %v84
    %v10536 = vpack.c.bf16 %v87, %v86
    %v10537 = vpack.c.bf16 %v89, %v88
    %v10538 = vpack.c.bf16 %v91, %v90
    %v10539 = vpack.c.bf16 %v93, %v92
    %v10540 = vpack.c.bf16 %v95, %v94
    %v10541 = vpack.c.bf16 %v97, %v96
    %v10542 = vpack.c.bf16 %v99, %v98
    %v10543 = vpack.c.bf16 %v101, %v100
    %v10544 = vpack.c.bf16 %v103, %v102
    %v10545 = vpack.c.bf16 %v105, %v104
    %v10546 = vpack.c.bf16 %v107, %v106
    %v10547 = vpack.c.bf16 %v109, %v108
    %10580 = vrot.lane.b32.xlu0 %v10516, 64
    %v10581 = vpop.permute.xlu0 %10580
    %10582 = vrot.lane.b32.xlu0 %v10517, 64
    %v10583 = vpop.permute.xlu0 %10582
    %10584 = vrot.lane.b32.xlu0 %v10518, 64
    %v10585 = vpop.permute.xlu0 %10584
    %10586 = vrot.lane.b32.xlu0 %v10519, 64
    %v10587 = vpop.permute.xlu0 %10586
    %10588 = vrot.lane.b32.xlu0 %v10520, 64
    %v10589 = vpop.permute.xlu0 %10588
    %10590 = vrot.lane.b32.xlu0 %v10521, 64
    %v10591 = vpop.permute.xlu0 %10590
    %10592 = vrot.lane.b32.xlu0 %v10522, 64
    %v10593 = vpop.permute.xlu0 %10592
    %10594 = vrot.lane.b32.xlu0 %v10523, 64
    %v10595 = vpop.permute.xlu0 %10594
    %10596 = vrot.lane.b32.xlu0 %v10524, 64
    %v10597 = vpop.permute.xlu0 %10596
    %10598 = vrot.lane.b32.xlu0 %v10525, 64
    %v10599 = vpop.permute.xlu0 %10598
    %10600 = vrot.lane.b32.xlu0 %v10526, 64
    %v10601 = vpop.permute.xlu0 %10600
    %10602 = vrot.lane.b32.xlu0 %v10527, 64
    %v10603 = vpop.permute.xlu0 %10602
    %10604 = vrot.lane.b32.xlu0 %v10528, 64
    %v10605 = vpop.permute.xlu0 %10604
    %10606 = vrot.lane.b32.xlu0 %v10529, 64
    %v10607 = vpop.permute.xlu0 %10606
    %10608 = vrot.lane.b32.xlu0 %v10530, 64
    %v10609 = vpop.permute.xlu0 %10608
    %10610 = vrot.lane.b32.xlu0 %v10531, 64
    %v10611 = vpop.permute.xlu0 %10610
    %10612 = vrot.lane.b32.xlu0 %v10532, 64
    %v10613 = vpop.permute.xlu0 %10612
    %10614 = vrot.lane.b32.xlu0 %v10533, 64
    %v10615 = vpop.permute.xlu0 %10614
    %10616 = vrot.lane.b32.xlu0 %v10534, 64
    %v10617 = vpop.permute.xlu0 %10616
    %10618 = vrot.lane.b32.xlu0 %v10535, 64
    %v10619 = vpop.permute.xlu0 %10618
    %10620 = vrot.lane.b32.xlu0 %v10536, 64
    %v10621 = vpop.permute.xlu0 %10620
    %10622 = vrot.lane.b32.xlu0 %v10537, 64
    %v10623 = vpop.permute.xlu0 %10622
    %10624 = vrot.lane.b32.xlu0 %v10538, 64
    %v10625 = vpop.permute.xlu0 %10624
    %10626 = vrot.lane.b32.xlu0 %v10539, 64
    %v10627 = vpop.permute.xlu0 %10626
    %10628 = vrot.lane.b32.xlu0 %v10540, 64
    %v10629 = vpop.permute.xlu0 %10628
    %10630 = vrot.lane.b32.xlu0 %v10541, 64
    %v10631 = vpop.permute.xlu0 %10630
    %10632 = vrot.lane.b32.xlu0 %v10542, 64
    %v10633 = vpop.permute.xlu0 %10632
    %10634 = vrot.lane.b32.xlu0 %v10543, 64
    %v10635 = vpop.permute.xlu0 %10634
    %10636 = vrot.lane.b32.xlu0 %v10544, 64
    %v10637 = vpop.permute.xlu0 %10636
    %10638 = vrot.lane.b32.xlu0 %v10545, 64
    %v10639 = vpop.permute.xlu0 %10638
    %10640 = vrot.lane.b32.xlu0 %v10546, 64
    %v10641 = vpop.permute.xlu0 %10640
    %10642 = vrot.lane.b32.xlu0 %v10547, 64
    %v10643 = vpop.permute.xlu0 %10642
    %v10646 = vsel %vm112, %v10484, %v10581
    %v10650 = vsel %vm112, %v10485, %v10583
    %v10654 = vsel %vm112, %v10486, %v10585
    %v10658 = vsel %vm112, %v10487, %v10587
    %v10662 = vsel %vm112, %v10488, %v10589
    %v10666 = vsel %vm112, %v10489, %v10591
    %v10670 = vsel %vm112, %v10490, %v10593
    %v10674 = vsel %vm112, %v10491, %v10595
    %v10678 = vsel %vm112, %v10492, %v10597
    %v10682 = vsel %vm112, %v10493, %v10599
    %v10686 = vsel %vm112, %v10494, %v10601
    %v10690 = vsel %vm112, %v10495, %v10603
    %v10694 = vsel %vm112, %v10496, %v10605
    %v10698 = vsel %vm112, %v10497, %v10607
    %v10702 = vsel %vm112, %v10498, %v10609
    %v10706 = vsel %vm112, %v10499, %v10611
    %v10710 = vsel %vm112, %v10500, %v10613
    %v10714 = vsel %vm112, %v10501, %v10615
    %v10718 = vsel %vm112, %v10502, %v10617
    %v10722 = vsel %vm112, %v10503, %v10619
    %v10726 = vsel %vm112, %v10504, %v10621
    %v10730 = vsel %vm112, %v10505, %v10623
    %v10734 = vsel %vm112, %v10506, %v10625
    %v10738 = vsel %vm112, %v10507, %v10627
    %v10742 = vsel %vm112, %v10508, %v10629
    %v10746 = vsel %vm112, %v10509, %v10631
    %v10750 = vsel %vm112, %v10510, %v10633
    %v10754 = vsel %vm112, %v10511, %v10635
    %v10758 = vsel %vm112, %v10512, %v10637
    %v10762 = vsel %vm112, %v10513, %v10639
    %v10766 = vsel %vm112, %v10514, %v10641
    %v10770 = vsel %vm112, %v10515, %v10643
    %v10772 = vld [vmem:[%s11] sm:$0xf]
    %v10773 = vld [vmem:[%s11 + $0x4] sm:$0xf]
    %v10774 = vld [vmem:[%s11 + $0x8] sm:$0xf]
    %v10775 = vld [vmem:[%s11 + $0xc] sm:$0xf]
    %v10776 = vld [vmem:[%s11 + $0x10] sm:$0xf]
    %v10777 = vld [vmem:[%s11 + $0x14] sm:$0xf]
    %v10778 = vld [vmem:[%s11 + $0x18] sm:$0xf]
    %v10779 = vld [vmem:[%s11 + $0x1c] sm:$0xf]
    %v10780 = vld [vmem:[%s11 + $0x20] sm:$0xf]
    %v10781 = vld [vmem:[%s11 + $0x24] sm:$0xf]
    %v10782 = vld [vmem:[%s11 + $0x28] sm:$0xf]
    %v10783 = vld [vmem:[%s11 + $0x2c] sm:$0xf]
    %v10784 = vld [vmem:[%s11 + $0x30] sm:$0xf]
    %v10785 = vld [vmem:[%s11 + $0x34] sm:$0xf]
    %v10786 = vld [vmem:[%s11 + $0x38] sm:$0xf]
    %v10787 = vld [vmem:[%s11 + $0x3c] sm:$0xf]
    %v10788 = vld [vmem:[%s12] sm:$0x1]
    %v10790 = vlaneseq
    %v10791 = vshrl.u32 %v10790, 7
    %v10792 = vsub.s32 0, %v10791
    %v10793 = vrot.slane %v10788, %v10792
    %v10811 = vunpack.c.l.b16 %v10772
    %v10812 = vunpack.c.l.b16 %v10773
    %v10813 = vunpack.c.l.b16 %v10774
    %v10814 = vunpack.c.l.b16 %v10775
    %v10815 = vunpack.c.l.b16 %v10776
    %v10816 = vunpack.c.l.b16 %v10777
    %v10817 = vunpack.c.l.b16 %v10778
    %v10818 = vunpack.c.l.b16 %v10779
    %v10819 = vunpack.c.l.b16 %v10780
    %v10820 = vunpack.c.l.b16 %v10781
    %v10821 = vunpack.c.l.b16 %v10782
    %v10822 = vunpack.c.l.b16 %v10783
    %v10823 = vunpack.c.l.b16 %v10784
    %v10824 = vunpack.c.l.b16 %v10785
    %v10825 = vunpack.c.l.b16 %v10786
    %v10826 = vunpack.c.l.b16 %v10787
    %v10827 = vpack.c.b16 %v10812, %v10811
    %v10828 = vpack.c.b16 %v10814, %v10813
    %v10829 = vpack.c.b16 %v10816, %v10815
    %v10830 = vpack.c.b16 %v10818, %v10817
    %v10831 = vpack.c.b16 %v10820, %v10819
    %v10832 = vpack.c.b16 %v10822, %v10821
    %v10833 = vpack.c.b16 %v10824, %v10823
    %v10834 = vpack.c.b16 %v10826, %v10825
    %10843 = vmatprep.subr.bf16.mxu0 0
    %10844 = vmatpush1.bf16.msra.mxu0 %v10834
    %10845 = vmatprep.subr.bf16.mxu0 0
    %10846 = vmatpush1.bf16.msra.mxu0 %v10833
    %10847 = vmatprep.subr.bf16.mxu0 0
    %10848 = vmatpush1.bf16.msra.mxu0 %v10832
    %10849 = vmatprep.subr.bf16.mxu0 0
    %10850 = vmatpush1.bf16.msra.mxu0 %v10831
    %10851 = vmatprep.subr.bf16.mxu0 0
    %10852 = vmatpush1.bf16.msra.mxu0 %v10830
    %10853 = vmatprep.subr.bf16.mxu0 0
    %10854 = vmatpush1.bf16.msra.mxu0 %v10829
    %10855 = vmatprep.subr.bf16.mxu0 0
    %10856 = vmatpush1.bf16.msra.mxu0 %v10828
    %10857 = vmatprep.subr.bf16.mxu0 0
    %10858 = vmatpush1.bf16.msra.mxu0 %v10827
    %10859 = vmatprep.subr.bf16.mxu0 0
    %10860 = vmatpush2.bf16.msra.mxu0 0
    %10861 = vmatprep.subr.bf16.mxu0 0
    %10862 = vmatpush2.bf16.msra.mxu0 0
    %10863 = vmatprep.subr.bf16.mxu0 0
    %10864 = vmatpush2.bf16.msra.mxu0 0
    %10865 = vmatprep.subr.bf16.mxu0 0
    %10866 = vmatpush2.bf16.msra.mxu0 0
    %10867 = vmatprep.subr.bf16.mxu0 0
    %10868 = vmatpush2.bf16.msra.mxu0 0
    %10869 = vmatprep.subr.bf16.mxu0 0
    %10870 = vmatpush2.bf16.msra.mxu0 0
    %10871 = vmatprep.subr.bf16.mxu0 0
    %10872 = vmatpush2.bf16.msra.mxu0 0
    %10873 = vmatprep.subr.bf16.mxu0 0
    %10874 = vmatpush2.bf16.msra.mxu0 0
    %10875 = vmatprep.mubr.bf16.mxu0 0
    %10876 = vmatmul.mubr.bf16.gmra.mxu0 %v10646
    %v10877 = vpop.f32.mrf.mxu0
    %v10878 = vadd.f32 %v10793, %v10877
    %v10879 = vpop.f32.mrf.mxu0
    %v10880 = vpop.f32.mrf.mxu0
    %v10881 = vadd.f32 %v10793, %v10880
    %v10882 = vpop.f32.mrf.mxu0
    %10883 = vmatprep.mubr.bf16.mxu0 0
    %10884 = vmatmul.mubr.bf16.gmra.mxu0 %v10650
    %v10885 = vpop.f32.mrf.mxu0
    %v10886 = vadd.f32 %v10793, %v10885
    %v10887 = vpop.f32.mrf.mxu0
    %v10888 = vpop.f32.mrf.mxu0
    %v10889 = vadd.f32 %v10793, %v10888
    %v10890 = vpop.f32.mrf.mxu0
    %10891 = vmatprep.mubr.bf16.mxu0 0
    %10892 = vmatmul.mubr.bf16.gmra.mxu0 %v10654
    %v10893 = vpop.f32.mrf.mxu0
    %v10894 = vadd.f32 %v10793, %v10893
    %v10895 = vpop.f32.mrf.mxu0
    %v10896 = vpop.f32.mrf.mxu0
    %v10897 = vadd.f32 %v10793, %v10896
    %v10898 = vpop.f32.mrf.mxu0
    %10899 = vmatprep.mubr.bf16.mxu0 0
    %10900 = vmatmul.mubr.bf16.gmra.mxu0 %v10658
    %v10901 = vpop.f32.mrf.mxu0
    %v10902 = vadd.f32 %v10793, %v10901
    %v10903 = vpop.f32.mrf.mxu0
    %v10904 = vpop.f32.mrf.mxu0
    %v10905 = vadd.f32 %v10793, %v10904
    %v10906 = vpop.f32.mrf.mxu0
    %10907 = vmatprep.mubr.bf16.mxu0 0
    %10908 = vmatmul.mubr.bf16.gmra.mxu0 %v10662
    %v10909 = vpop.f32.mrf.mxu0
    %v10910 = vadd.f32 %v10793, %v10909
    %v10911 = vpop.f32.mrf.mxu0
    %v10912 = vpop.f32.mrf.mxu0
    %v10913 = vadd.f32 %v10793, %v10912
    %v10914 = vpop.f32.mrf.mxu0
    %10915 = vmatprep.mubr.bf16.mxu0 0
    %10916 = vmatmul.mubr.bf16.gmra.mxu0 %v10666
    %v10917 = vpop.f32.mrf.mxu0
    %v10918 = vadd.f32 %v10793, %v10917
    %v10919 = vpop.f32.mrf.mxu0
    %v10920 = vpop.f32.mrf.mxu0
    %v10921 = vadd.f32 %v10793, %v10920
    %v10922 = vpop.f32.mrf.mxu0
    %10923 = vmatprep.mubr.bf16.mxu0 0
    %10924 = vmatmul.mubr.bf16.gmra.mxu0 %v10670
    %v10925 = vpop.f32.mrf.mxu0
    %v10926 = vadd.f32 %v10793, %v10925
    %v10927 = vpop.f32.mrf.mxu0
    %v10928 = vpop.f32.mrf.mxu0
    %v10929 = vadd.f32 %v10793, %v10928
    %v10930 = vpop.f32.mrf.mxu0
    %10931 = vmatprep.mubr.bf16.mxu0 0
    %10932 = vmatmul.mubr.bf16.gmra.mxu0 %v10674
    %v10933 = vpop.f32.mrf.mxu0
    %v10934 = vadd.f32 %v10793, %v10933
    %v10935 = vpop.f32.mrf.mxu0
    %v10936 = vpop.f32.mrf.mxu0
    %v10937 = vadd.f32 %v10793, %v10936
    %v10938 = vpop.f32.mrf.mxu0
    %10939 = vmatprep.mubr.bf16.mxu0 0
    %10940 = vmatmul.mubr.bf16.gmra.mxu0 %v10678
    %v10941 = vpop.f32.mrf.mxu0
    %v10942 = vadd.f32 %v10793, %v10941
    %v10943 = vpop.f32.mrf.mxu0
    %v10944 = vpop.f32.mrf.mxu0
    %v10945 = vadd.f32 %v10793, %v10944
    %v10946 = vpop.f32.mrf.mxu0
    %10947 = vmatprep.mubr.bf16.mxu0 0
    %10948 = vmatmul.mubr.bf16.gmra.mxu0 %v10682
    %v10949 = vpop.f32.mrf.mxu0
    %v10950 = vadd.f32 %v10793, %v10949
    %v10951 = vpop.f32.mrf.mxu0
    %v10952 = vpop.f32.mrf.mxu0
    %v10953 = vadd.f32 %v10793, %v10952
    %v10954 = vpop.f32.mrf.mxu0
    %10955 = vmatprep.mubr.bf16.mxu0 0
    %10956 = vmatmul.mubr.bf16.gmra.mxu0 %v10686
    %v10957 = vpop.f32.mrf.mxu0
    %v10958 = vadd.f32 %v10793, %v10957
    %v10959 = vpop.f32.mrf.mxu0
    %v10960 = vpop.f32.mrf.mxu0
    %v10961 = vadd.f32 %v10793, %v10960
    %v10962 = vpop.f32.mrf.mxu0
    %10963 = vmatprep.mubr.bf16.mxu0 0
    %10964 = vmatmul.mubr.bf16.gmra.mxu0 %v10690
    %v10965 = vpop.f32.mrf.mxu0
    %v10966 = vadd.f32 %v10793, %v10965
    %v10967 = vpop.f32.mrf.mxu0
    %v10968 = vpop.f32.mrf.mxu0
    %v10969 = vadd.f32 %v10793, %v10968
    %v10970 = vpop.f32.mrf.mxu0
    %10971 = vmatprep.mubr.bf16.mxu0 0
    %10972 = vmatmul.mubr.bf16.gmra.mxu0 %v10694
    %v10973 = vpop.f32.mrf.mxu0
    %v10974 = vadd.f32 %v10793, %v10973
    %v10975 = vpop.f32.mrf.mxu0
    %v10976 = vpop.f32.mrf.mxu0
    %v10977 = vadd.f32 %v10793, %v10976
    %v10978 = vpop.f32.mrf.mxu0
    %10979 = vmatprep.mubr.bf16.mxu0 0
    %10980 = vmatmul.mubr.bf16.gmra.mxu0 %v10698
    %v10981 = vpop.f32.mrf.mxu0
    %v10982 = vadd.f32 %v10793, %v10981
    %v10983 = vpop.f32.mrf.mxu0
    %v10984 = vpop.f32.mrf.mxu0
    %v10985 = vadd.f32 %v10793, %v10984
    %v10986 = vpop.f32.mrf.mxu0
    %10987 = vmatprep.mubr.bf16.mxu0 0
    %10988 = vmatmul.mubr.bf16.gmra.mxu0 %v10702
    %v10989 = vpop.f32.mrf.mxu0
    %v10990 = vadd.f32 %v10793, %v10989
    %v10991 = vpop.f32.mrf.mxu0
    %v10992 = vpop.f32.mrf.mxu0
    %v10993 = vadd.f32 %v10793, %v10992
    %v10994 = vpop.f32.mrf.mxu0
    %10995 = vmatprep.mubr.bf16.mxu0 0
    %10996 = vmatmul.mubr.bf16.gmra.mxu0 %v10706
    %v10997 = vpop.f32.mrf.mxu0
    %v10998 = vadd.f32 %v10793, %v10997
    %v10999 = vpop.f32.mrf.mxu0
    %v11000 = vpop.f32.mrf.mxu0
    %v11001 = vadd.f32 %v10793, %v11000
    %v11002 = vpop.f32.mrf.mxu0
    %11003 = vmatprep.mubr.bf16.mxu0 0
    %11004 = vmatmul.mubr.bf16.gmra.mxu0 %v10710
    %v11005 = vpop.f32.mrf.mxu0
    %v11006 = vadd.f32 %v10793, %v11005
    %v11007 = vpop.f32.mrf.mxu0
    %v11008 = vpop.f32.mrf.mxu0
    %v11009 = vadd.f32 %v10793, %v11008
    %v11010 = vpop.f32.mrf.mxu0
    %11011 = vmatprep.mubr.bf16.mxu0 0
    %11012 = vmatmul.mubr.bf16.gmra.mxu0 %v10714
    %v11013 = vpop.f32.mrf.mxu0
    %v11014 = vadd.f32 %v10793, %v11013
    %v11015 = vpop.f32.mrf.mxu0
    %v11016 = vpop.f32.mrf.mxu0
    %v11017 = vadd.f32 %v10793, %v11016
    %v11018 = vpop.f32.mrf.mxu0
    %11019 = vmatprep.mubr.bf16.mxu0 0
    %11020 = vmatmul.mubr.bf16.gmra.mxu0 %v10718
    %v11021 = vpop.f32.mrf.mxu0
    %v11022 = vadd.f32 %v10793, %v11021
    %v11023 = vpop.f32.mrf.mxu0
    %v11024 = vpop.f32.mrf.mxu0
    %v11025 = vadd.f32 %v10793, %v11024
    %v11026 = vpop.f32.mrf.mxu0
    %11027 = vmatprep.mubr.bf16.mxu0 0
    %11028 = vmatmul.mubr.bf16.gmra.mxu0 %v10722
    %v11029 = vpop.f32.mrf.mxu0
    %v11030 = vadd.f32 %v10793, %v11029
    %v11031 = vpop.f32.mrf.mxu0
    %v11032 = vpop.f32.mrf.mxu0
    %v11033 = vadd.f32 %v10793, %v11032
    %v11034 = vpop.f32.mrf.mxu0
    %11035 = vmatprep.mubr.bf16.mxu0 0
    %11036 = vmatmul.mubr.bf16.gmra.mxu0 %v10726
    %v11037 = vpop.f32.mrf.mxu0
    %v11038 = vadd.f32 %v10793, %v11037
    %v11039 = vpop.f32.mrf.mxu0
    %v11040 = vpop.f32.mrf.mxu0
    %v11041 = vadd.f32 %v10793, %v11040
    %v11042 = vpop.f32.mrf.mxu0
    %11043 = vmatprep.mubr.bf16.mxu0 0
    %11044 = vmatmul.mubr.bf16.gmra.mxu0 %v10730
    %v11045 = vpop.f32.mrf.mxu0
    %v11046 = vadd.f32 %v10793, %v11045
    %v11047 = vpop.f32.mrf.mxu0
    %v11048 = vpop.f32.mrf.mxu0
    %v11049 = vadd.f32 %v10793, %v11048
    %v11050 = vpop.f32.mrf.mxu0
    %11051 = vmatprep.mubr.bf16.mxu0 0
    %11052 = vmatmul.mubr.bf16.gmra.mxu0 %v10734
    %v11053 = vpop.f32.mrf.mxu0
    %v11054 = vadd.f32 %v10793, %v11053
    %v11055 = vpop.f32.mrf.mxu0
    %v11056 = vpop.f32.mrf.mxu0
    %v11057 = vadd.f32 %v10793, %v11056
    %v11058 = vpop.f32.mrf.mxu0
    %11059 = vmatprep.mubr.bf16.mxu0 0
    %11060 = vmatmul.mubr.bf16.gmra.mxu0 %v10738
    %v11061 = vpop.f32.mrf.mxu0
    %v11062 = vadd.f32 %v10793, %v11061
    %v11063 = vpop.f32.mrf.mxu0
    %v11064 = vpop.f32.mrf.mxu0
    %v11065 = vadd.f32 %v10793, %v11064
    %v11066 = vpop.f32.mrf.mxu0
    %11067 = vmatprep.mubr.bf16.mxu0 0
    %11068 = vmatmul.mubr.bf16.gmra.mxu0 %v10742
    %v11069 = vpop.f32.mrf.mxu0
    %v11070 = vadd.f32 %v10793, %v11069
    %v11071 = vpop.f32.mrf.mxu0
    %v11072 = vpop.f32.mrf.mxu0
    %v11073 = vadd.f32 %v10793, %v11072
    %v11074 = vpop.f32.mrf.mxu0
    %11075 = vmatprep.mubr.bf16.mxu0 0
    %11076 = vmatmul.mubr.bf16.gmra.mxu0 %v10746
    %v11077 = vpop.f32.mrf.mxu0
    %v11078 = vadd.f32 %v10793, %v11077
    %v11079 = vpop.f32.mrf.mxu0
    %v11080 = vpop.f32.mrf.mxu0
    %v11081 = vadd.f32 %v10793, %v11080
    %v11082 = vpop.f32.mrf.mxu0
    %11083 = vmatprep.mubr.bf16.mxu0 0
    %11084 = vmatmul.mubr.bf16.gmra.mxu0 %v10750
    %v11085 = vpop.f32.mrf.mxu0
    %v11086 = vadd.f32 %v10793, %v11085
    %v11087 = vpop.f32.mrf.mxu0
    %v11088 = vpop.f32.mrf.mxu0
    %v11089 = vadd.f32 %v10793, %v11088
    %v11090 = vpop.f32.mrf.mxu0
    %11091 = vmatprep.mubr.bf16.mxu0 0
    %11092 = vmatmul.mubr.bf16.gmra.mxu0 %v10754
    %v11093 = vpop.f32.mrf.mxu0
    %v11094 = vadd.f32 %v10793, %v11093
    %v11095 = vpop.f32.mrf.mxu0
    %v11096 = vpop.f32.mrf.mxu0
    %v11097 = vadd.f32 %v10793, %v11096
    %v11098 = vpop.f32.mrf.mxu0
    %11099 = vmatprep.mubr.bf16.mxu0 0
    %11100 = vmatmul.mubr.bf16.gmra.mxu0 %v10758
    %v11101 = vpop.f32.mrf.mxu0
    %v11102 = vadd.f32 %v10793, %v11101
    %v11103 = vpop.f32.mrf.mxu0
    %v11104 = vpop.f32.mrf.mxu0
    %v11105 = vadd.f32 %v10793, %v11104
    %v11106 = vpop.f32.mrf.mxu0
    %11107 = vmatprep.mubr.bf16.mxu0 0
    %11108 = vmatmul.mubr.bf16.gmra.mxu0 %v10762
    %v11109 = vpop.f32.mrf.mxu0
    %v11110 = vadd.f32 %v10793, %v11109
    %v11111 = vpop.f32.mrf.mxu0
    %v11112 = vpop.f32.mrf.mxu0
    %v11113 = vadd.f32 %v10793, %v11112
    %v11114 = vpop.f32.mrf.mxu0
    %11115 = vmatprep.mubr.bf16.mxu0 0
    %11116 = vmatmul.mubr.bf16.gmra.mxu0 %v10766
    %v11117 = vpop.f32.mrf.mxu0
    %v11118 = vadd.f32 %v10793, %v11117
    %v11119 = vpop.f32.mrf.mxu0
    %v11120 = vpop.f32.mrf.mxu0
    %v11121 = vadd.f32 %v10793, %v11120
    %v11122 = vpop.f32.mrf.mxu0
    %11123 = vmatprep.mubr.bf16.mxu0 0
    %11124 = vmatmul.mubr.bf16.gmra.mxu0 %v10770
    %v11125 = vpop.f32.mrf.mxu0
    %v11126 = vadd.f32 %v10793, %v11125
    %v11127 = vpop.f32.mrf.mxu0
    %v11128 = vpop.f32.mrf.mxu0
    %v11129 = vadd.f32 %v10793, %v11128
    %v11130 = vpop.f32.mrf.mxu0
    %11131 = vdwg.mxu0
    %11132 = vst [vmem:[#allocation3] sm:$0xff] %v10878
    %11133 = vst [vmem:[#allocation3 + $0x8] sm:$0xff] %v10881
    %11134 = vst [vmem:[#allocation3 + $0x10] sm:$0xff] %v10886
    %11135 = vst [vmem:[#allocation3 + $0x18] sm:$0xff] %v10889
    %11136 = vst [vmem:[#allocation3 + $0x20] sm:$0xff] %v10894
    %11137 = vst [vmem:[#allocation3 + $0x28] sm:$0xff] %v10897
    %11138 = vst [vmem:[#allocation3 + $0x30] sm:$0xff] %v10902
    %11139 = vst [vmem:[#allocation3 + $0x38] sm:$0xff] %v10905
    %11140 = vst [vmem:[#allocation3 + $0x40] sm:$0xff] %v10910
    %11141 = vst [vmem:[#allocation3 + $0x48] sm:$0xff] %v10913
    %11142 = vst [vmem:[#allocation3 + $0x50] sm:$0xff] %v10918
    %11143 = vst [vmem:[#allocation3 + $0x58] sm:$0xff] %v10921
    %11144 = vst [vmem:[#allocation3 + $0x60] sm:$0xff] %v10926
    %11145 = vst [vmem:[#allocation3 + $0x68] sm:$0xff] %v10929
    %11146 = vst [vmem:[#allocation3 + $0x70] sm:$0xff] %v10934
    %11147 = vst [vmem:[#allocation3 + $0x78] sm:$0xff] %v10937
    %11148 = vst [vmem:[#allocation3 + $0x80] sm:$0xff] %v10942
    %11149 = vst [vmem:[#allocation3 + $0x88] sm:$0xff] %v10945
    %11150 = vst [vmem:[#allocation3 + $0x90] sm:$0xff] %v10950
    %11151 = vst [vmem:[#allocation3 + $0x98] sm:$0xff] %v10953
    %11152 = vst [vmem:[#allocation3 + $0xa0] sm:$0xff] %v10958
    %11153 = vst [vmem:[#allocation3 + $0xa8] sm:$0xff] %v10961
    %11154 = vst [vmem:[#allocation3 + $0xb0] sm:$0xff] %v10966
    %11155 = vst [vmem:[#allocation3 + $0xb8] sm:$0xff] %v10969
    %11156 = vst [vmem:[#allocation3 + $0xc0] sm:$0xff] %v10974
    %11157 = vst [vmem:[#allocation3 + $0xc8] sm:$0xff] %v10977
    %11158 = vst [vmem:[#allocation3 + $0xd0] sm:$0xff] %v10982
    %11159 = vst [vmem:[#allocation3 + $0xd8] sm:$0xff] %v10985
    %11160 = vst [vmem:[#allocation3 + $0xe0] sm:$0xff] %v10990
    %11161 = vst [vmem:[#allocation3 + $0xe8] sm:$0xff] %v10993
    %11162 = vst [vmem:[#allocation3 + $0xf0] sm:$0xff] %v10998
    %11163 = vst [vmem:[#allocation3 + $0xf8] sm:$0xff] %v11001
    %11164 = vst [vmem:[#allocation3 + $0x100] sm:$0xff] %v11006
    %11165 = vst [vmem:[#allocation3 + $0x108] sm:$0xff] %v11009
    %11166 = vst [vmem:[#allocation3 + $0x110] sm:$0xff] %v11014
    %11167 = vst [vmem:[#allocation3 + $0x118] sm:$0xff] %v11017
    %11168 = vst [vmem:[#allocation3 + $0x120] sm:$0xff] %v11022
    %11169 = vst [vmem:[#allocation3 + $0x128] sm:$0xff] %v11025
    %11170 = vst [vmem:[#allocation3 + $0x130] sm:$0xff] %v11030
    %11171 = vst [vmem:[#allocation3 + $0x138] sm:$0xff] %v11033
    %11172 = vst [vmem:[#allocation3 + $0x140] sm:$0xff] %v11038
    %11173 = vst [vmem:[#allocation3 + $0x148] sm:$0xff] %v11041
    %11174 = vst [vmem:[#allocation3 + $0x150] sm:$0xff] %v11046
    %11175 = vst [vmem:[#allocation3 + $0x158] sm:$0xff] %v11049
    %11176 = vst [vmem:[#allocation3 + $0x160] sm:$0xff] %v11054
    %11177 = vst [vmem:[#allocation3 + $0x168] sm:$0xff] %v11057
    %11178 = vst [vmem:[#allocation3 + $0x170] sm:$0xff] %v11062
    %11179 = vst [vmem:[#allocation3 + $0x178] sm:$0xff] %v11065
    %11180 = vst [vmem:[#allocation3 + $0x180] sm:$0xff] %v11070
    %11181 = vst [vmem:[#allocation3 + $0x188] sm:$0xff] %v11073
    %11182 = vst [vmem:[#allocation3 + $0x190] sm:$0xff] %v11078
    %11183 = vst [vmem:[#allocation3 + $0x198] sm:$0xff] %v11081
    %11184 = vst [vmem:[#allocation3 + $0x1a0] sm:$0xff] %v11086
    %11185 = vst [vmem:[#allocation3 + $0x1a8] sm:$0xff] %v11089
    %11186 = vst [vmem:[#allocation3 + $0x1b0] sm:$0xff] %v11094
    %11187 = vst [vmem:[#allocation3 + $0x1b8] sm:$0xff] %v11097
    %11188 = vst [vmem:[#allocation3 + $0x1c0] sm:$0xff] %v11102
    %11189 = vst [vmem:[#allocation3 + $0x1c8] sm:$0xff] %v11105
    %11190 = vst [vmem:[#allocation3 + $0x1d0] sm:$0xff] %v11110
    %11191 = vst [vmem:[#allocation3 + $0x1d8] sm:$0xff] %v11113
    %11192 = vst [vmem:[#allocation3 + $0x1e0] sm:$0xff] %v11118
    %11193 = vst [vmem:[#allocation3 + $0x1e8] sm:$0xff] %v11121
    %11194 = vst [vmem:[#allocation3 + $0x1f0] sm:$0xff] %v11126
    %11195 = vst [vmem:[#allocation3 + $0x1f8] sm:$0xff] %v11129
    // Predicated region
    $region54: #{residual_forward.1} parent=1 // pred_check
      _
    $region55: #{residual_forward.1} parent=1 // pred_check_branch
      %11197 = sbr.rel (0) target = $region57
    $region56: #{residual_forward.1} parent=1 // pred_region
      %s11199 = ssub.s32 8192, 8192
      %11200 = vsyncadd [#allocation4], %s11199
      %s11201 = sshll.u32 [#allocation3], 4
      %s11202 = int_to_ptr.vmem [resolvable:$true] %s11201
      %11207 = dma.vmem_to_hbm [thread:$0]  %s11202, 8192, %s13, [#allocation4], 128, 128, 8
    $region57: #{residual_forward.1} parent=1 // pred_fallthru
      _
    // Predicated region
    $region58: #{residual_forward.1} parent=1 // pred_check
      _
    $region59: #{residual_forward.1} parent=1 // pred_check_branch
      %11209 = sbr.rel (0) target = $region61
    $region60: #{residual_forward.1} parent=1 // pred_region
      %11210 = dma.done [#allocation4], 8192
    $region61: #{residual_forward.1} parent=1 // pred_fallthru
      _
    %11211 = vsyncpa [#allocation4], 1

</llo_original>
